<compile_context>
chip_gen: v7x
topology: tpu7x:2x2x1
jax: 0.10.0
libtpu: 0.0.40
codegen_flags: <defaults>
</compile_context>

<pallas_src>
import functools

import jax
import jax.numpy as jnp
from jax.experimental import pallas as pl
from jax.experimental.pallas import tpu as pltpu

GN_EPS = 1e-5       # nn.GroupNorm default
GELU_APPROX = True  # True: tanh GELU on the EUP (fast).  False: exact erf (matches PyTorch F.gelu bitwise).


# --------------------------------- kernel ---------------------------------

def mid_kernel(x_ref, film_ref, masks_ref, w_ref, gn_ref, o_ref,
               *, in_ch, mid_ch, out_ch, spatial_w):
    """One batch element per grid step.

    x_ref:     (1, in_ch, S)   activations, spatial (S = H*W) on lanes.
    film_ref:  (1, out_ch, 2)  precomputed FiLM gamma (col 0) / beta (col 1).
    masks_ref: (9, 1, S)       zero-padding validity mask per 3x3 tap.
    w_ref:     (54, Cmax, Cmax) packed conv weights: conv_idx*9 + tap -> (Cout, Cin) slice.
    gn_ref:    (Cmax, 12)      GroupNorm gamma/beta columns: [g1a,b1a,g1b,b1b,g2a,b2a,g2b,b2b,g3a,b3a,g3b,b3b].
    o_ref:     (1, out_ch, S)
    """
    S = x_ref.shape[2]
    x = x_ref[0]                                      # (in_ch, S) f32

    def gelu(v):
        return jax.nn.gelu(v, approximate=GELU_APPROX)

    def conv3x3(h, conv_idx, cin, cout):
        # 3x3 conv, padding=1, bias=False: per-tap MXU accumulate (no im2col patch materialized).
        acc = None
        for t in range(9):
            ky, kx = t // 3 - 1, t % 3 - 1
            d = ky * spatial_w + kx
            if d == 0:
                tap = h                               # center tap: no shift, mask is all-ones
            else:
                # out[s] needs h[s + d]; circular roll + boundary mask == zero-padded shift
                tap = pltpu.roll(h, (-d) % S, axis=1) * masks_ref[t]
            w_t = w_ref[conv_idx * 9 + t][:cout, :cin]            # static slice of resident weights
            c = jnp.dot(w_t, tap, preferred_element_type=jnp.float32)
            acc = c if acc is None else acc + c
        return acc                                    # (cout, S)

    def gn_coeffs(h, col, c):
        # GroupNorm(1, c) folded to per-channel scale/shift; single-pass E[x^2]-E[x]^2 statistics.
        g = gn_ref[:c, col:col + 1]                   # (c, 1)
        b = gn_ref[:c, col + 1:col + 2]               # (c, 1)
        inv_n = 1.0 / float(c * S)
        s1 = jnp.sum(h, keepdims=True)                # (1, 1)
        s2 = jnp.sum(h * h, keepdims=True)            # (1, 1)
        mu = s1 * inv_n
        var = jnp.maximum(s2 * inv_n - mu * mu, 0.0)  # biased variance
        scale = g * jax.lax.rsqrt(var + GN_EPS)       # (c, 1)
        shift = b - mu * scale                        # (c, 1)
        return scale, shift

    def gn(h, col, c):
        scale, shift = gn_coeffs(h, col, c)
        return h * scale + shift                      # one fused scale/shift pass

    # ---- DoubleConv 1 (residual=True): gelu(x + GN(conv(gelu(GN(conv(x)))))) ----
    h = conv3x3(x, 0, in_ch, mid_ch)
    h = gelu(gn(h, 0, mid_ch))
    h = conv3x3(h, 1, mid_ch, mid_ch)
    h = gn(h, 2, mid_ch)
    x1 = gelu(x + h)

    # ---- DoubleConv 2 (no residual) ----
    h = conv3x3(x1, 2, mid_ch, mid_ch)
    h = gelu(gn(h, 4, mid_ch))
    h = conv3x3(h, 3, mid_ch, mid_ch)
    x2 = gn(h, 6, mid_ch)

    # ---- DoubleConv 3 (mid -> out); final GroupNorm fused with FiLM ----
    h = conv3x3(x2, 4, mid_ch, out_ch)
    h = gelu(gn(h, 8, out_ch))
    h = conv3x3(h, 5, out_ch, out_ch)
    scale, shift = gn_coeffs(h, 10, out_ch)           # GN3b coefficients (not applied yet)
    film = film_ref[0]                                 # (out_ch, 2)
    gamma_f = film[:, 0:1]
    beta_f = film[:, 1:2]
    # gamma*(h*scale + shift) + beta  ==  h*(gamma*scale) + (gamma*shift + beta): single fused pass.
    o_ref[0] = h * (gamma_f * scale) + (gamma_f * shift + beta_f)


# ----------------------------- wrapper-side prep -----------------------------

def _pack_conv_taps(w, cmax):
    """(Cout, Cin, 3, 3) PyTorch conv weight -> (9, Cmax, Cmax), zero-padded, tap-major (ky, kx)."""
    co, ci, kh, kw = w.shape
    wt = jnp.transpose(w.astype(jnp.float32), (2, 3, 0, 1)).reshape(kh * kw, co, ci)
    return jnp.pad(wt, ((0, 0), (0, cmax - co), (0, cmax - ci)))


def _pack_gn(vecs, cmax):
    """12 GroupNorm gamma/beta vectors -> one (Cmax, 12) resident column array."""
    cols = [jnp.pad(v.astype(jnp.float32), (0, cmax - v.shape[0])) for v in vecs]
    return jnp.stack(cols, axis=1)


def _tap_masks(h, w):
    """(9, 1, H*W) validity masks implementing zero padding for each 3x3 tap."""
    yy = jnp.arange(h).reshape(h, 1)
    xx = jnp.arange(w).reshape(1, w)
    rows = []
    for t in range(9):
        ky, kx = t // 3 - 1, t % 3 - 1
        valid = (yy + ky >= 0) & (yy + ky < h) & (xx + kx >= 0) & (xx + kx < w)
        rows.append(valid.reshape(1, h * w))
    return jnp.stack(rows, axis=0).astype(jnp.float32)


def make_params(in_ch, mid_ch, out_ch, cond_dim, key):
    """Deterministic synthetic parameters matching the PyTorch module shapes."""
    ks = list(jax.random.split(key, 12))
    std = 0.1

    def conv_w(k, co, ci):
        return jax.random.normal(k, (co, ci, 3, 3), jnp.float32) * std

    def gn_p(k, c):
        kw, kb = jax.random.split(k)
        return (1.0 + 0.1 * jax.random.normal(kw, (c,), jnp.float32),
                0.1 * jax.random.normal(kb, (c,), jnp.float32))

    p = {}
    p["c1a_w"] = conv_w(ks[0], mid_ch, in_ch)
    p["gn1a_w"], p["gn1a_b"] = gn_p(ks[1], mid_ch)
    p["c1b_w"] = conv_w(ks[2], mid_ch, mid_ch)
    p["gn1b_w"], p["gn1b_b"] = gn_p(ks[3], mid_ch)
    p["c2a_w"] = conv_w(ks[4], mid_ch, mid_ch)
    p["gn2a_w"], p["gn2a_b"] = gn_p(ks[5], mid_ch)
    p["c2b_w"] = conv_w(ks[6], mid_ch, mid_ch)
    p["gn2b_w"], p["gn2b_b"] = gn_p(ks[7], mid_ch)
    p["c3a_w"] = conv_w(ks[8], out_ch, mid_ch)
    p["gn3a_w"], p["gn3a_b"] = gn_p(ks[9], out_ch)
    p["c3b_w"] = conv_w(ks[10], out_ch, out_ch)
    p["gn3b_w"], p["gn3b_b"] = gn_p(ks[11], out_ch)
    kc1, kc2 = jax.random.split(jax.random.fold_in(key, 77))
    p["cond_w"] = jax.random.normal(kc1, (2 * out_ch, cond_dim), jnp.float32) * std
    p["cond_b"] = jax.random.normal(kc2, (2 * out_ch,), jnp.float32) * std
    return p


def mid_forward(x_nchw, cond, params):
    B, Cin, H, Wd = x_nchw.shape
    S = H * Wd
    Mch = params["c1a_w"].shape[0]
    Cout = params["c3b_w"].shape[0]
    assert Cin == Mch, "residual DoubleConv requires in_channels == mid_channels"
    cmax = max(Cin, Mch, Cout)

    # NCHW -> (B, C, S): pure reshape, no transpose / extra HBM pass.
    x_seq = x_nchw.reshape(B, Cin, S).astype(jnp.float32)

    # FiLM branch (Mish -> Linear) depends only on cond: compute in plain XLA, pass gamma/beta per sample.
    cond_f = cond.astype(jnp.float32)
    m = cond_f * jnp.tanh(jax.nn.softplus(cond_f))                    # Mish
    emb = m @ params["cond_w"].T.astype(jnp.float32) + params["cond_b"].astype(jnp.float32)
    film = jnp.stack([emb[:, :Cout], emb[:, Cout:]], axis=-1)         # (B, Cout, 2): gamma, beta

    masks = _tap_masks(H, Wd)                                         # (9, 1, S)
    w_pack = jnp.concatenate([
        _pack_conv_taps(params["c1a_w"], cmax),
        _pack_conv_taps(params["c1b_w"], cmax),
        _pack_conv_taps(params["c2a_w"], cmax),
        _pack_conv_taps(params["c2b_w"], cmax),
        _pack_conv_taps(params["c3a_w"], cmax),
        _pack_conv_taps(params["c3b_w"], cmax),
    ], axis=0)                                                        # (54, cmax, cmax)
    gn_pack = _pack_gn([params[k] for k in (
        "gn1a_w", "gn1a_b", "gn1b_w", "gn1b_b",
        "gn2a_w", "gn2a_b", "gn2b_w", "gn2b_b",
        "gn3a_w", "gn3a_b", "gn3b_w", "gn3b_b")], cmax)               # (cmax, 12)

    kernel = functools.partial(mid_kernel, in_ch=Cin, mid_ch=Mch, out_ch=Cout, spatial_w=Wd)

    def resident(a):
        nd = a.ndim
        return pl.BlockSpec(a.shape, lambda b, nd=nd: (0,) * nd)      # same block every grid step

    out_seq = pl.pallas_call(
        kernel,
        out_shape=jax.ShapeDtypeStruct((B, Cout, S), jnp.float32),
        grid=(B,),
        in_specs=[
            pl.BlockSpec((1, Cin, S), lambda b: (b, 0, 0)),
            pl.BlockSpec((1, Cout, 2), lambda b: (b, 0, 0)),
            resident(masks),
            resident(w_pack),
            resident(gn_pack),
        ],
        out_specs=pl.BlockSpec((1, Cout, S), lambda b: (b, 0, 0)),
        compiler_params=pltpu.CompilerParams(
            dimension_semantics=("parallel",)),
    )(x_seq, film, masks, w_pack, gn_pack)

    return out_seq.reshape(B, Cout, H, Wd)            # (B, Cout, S) -> NCHW: free reshape


# ----------------------------- pure-JAX reference -----------------------------

def _ref_double_conv(x, w_a, g_a, b_a, w_b, g_b, b_b, residual):
    def conv(h, w):
        return jax.lax.conv_general_dilated(
            h, w, window_strides=(1, 1), padding=((1, 1), (1, 1)),
            dimension_numbers=("NCHW", "OIHW", "NCHW"),
            precision=jax.lax.Precision.HIGHEST)

    def gn(h, g, b):
        B = h.shape[0]
        hf = h.reshape(B, -1)
        mu = hf.mean(axis=1).reshape(B, 1, 1, 1)
        var = (hf * hf).mean(axis=1).reshape(B, 1, 1, 1) - mu * mu
        y = (h - mu) * jax.lax.rsqrt(var + GN_EPS)
        return y * g.reshape(1, -1, 1, 1) + b.reshape(1, -1, 1, 1)

    h = conv(x, w_a)
    h = jax.nn.gelu(gn(h, g_a, b_a), approximate=GELU_APPROX)
    h = conv(h, w_b)
    h = gn(h, g_b, b_b)
    if residual:
        return jax.nn.gelu(x + h, approximate=GELU_APPROX)
    return h


def mid_reference(x, cond, p):
    x1 = _ref_double_conv(x, p["c1a_w"], p["gn1a_w"], p["gn1a_b"],
                          p["c1b_w"], p["gn1b_w"], p["gn1b_b"], True)
    x2 = _ref_double_conv(x1, p["c2a_w"], p["gn2a_w"], p["gn2a_b"],
                          p["c2b_w"], p["gn2b_w"], p["gn2b_b"], False)
    x3 = _ref_double_conv(x2, p["c3a_w"], p["gn3a_w"], p["gn3a_b"],
                          p["c3b_w"], p["gn3b_w"], p["gn3b_b"], False)
    m = cond * jnp.tanh(jax.nn.softplus(cond))
    emb = m @ p["cond_w"].T + p["cond_b"]
    out_ch = p["c3b_w"].shape[0]
    gamma = emb[:, :out_ch, None, None]
    beta = emb[:, out_ch:, None, None]
    return gamma * x3 + beta


if __name__ == "__main__":
    key = jax.random.PRNGKey(0)
    k_x, k_c, k_p = jax.random.split(key, 3)

    batch, in_ch, mid_ch, out_ch, size, cond_dim = 2, 8, 8, 16, 16, 64
    x = jax.random.normal(k_x, (batch, in_ch, size, size), jnp.float32)
    cond = jax.random.normal(k_c, (batch, cond_dim), jnp.float32)
    params = make_params(in_ch, mid_ch, out_ch, cond_dim, k_p)

    out = mid_forward(x, cond, params)
    jax.block_until_ready(out)
    assert out.shape == (batch, out_ch, size, size)

    ref = mid_reference(x, cond, params)
    err = float(jnp.max(jnp.abs(out - ref)))
    assert err < 5e-3, f"kernel/reference mismatch: max abs err = {err}"

    print("KERNEL_OK")
</pallas_src>

<mosaic_0001>
module attributes {stable_mosaic.version = 11 : i64} {
  func.func @mid_kernel(%arg0: i32, %arg1: memref<1x8x256xf32, #tpu.memory_space<vmem>>, %arg2: memref<1x16x2xf32, #tpu.memory_space<vmem>>, %arg3: memref<9x1x256xf32, #tpu.memory_space<vmem>>, %arg4: memref<54x16x16xf32, #tpu.memory_space<vmem>>, %arg5: memref<16x12xf32, #tpu.memory_space<vmem>>, %arg6: memref<1x16x256xf32, #tpu.memory_space<vmem>>) attributes {dimension_semantics = [#tpu.dimension_semantics<parallel>], iteration_bounds = array<i64: 2>, scalar_prefetch = 0 : i64, scratch_operands = 0 : i64, tpu.core_type = #tpu.core_type<tc>, window_params = [{transform_indices = @transform_0, window_bounds = array<i64: 1, 8, 256>}, {transform_indices = @transform_1, window_bounds = array<i64: 1, 16, 2>}, {pipeline_mode = #tpu.pipeline_mode<synchronous>, transform_indices = @transform_2, window_bounds = array<i64: 9, 1, 256>}, {pipeline_mode = #tpu.pipeline_mode<synchronous>, transform_indices = @transform_3, window_bounds = array<i64: 54, 16, 16>}, {pipeline_mode = #tpu.pipeline_mode<synchronous>, transform_indices = @transform_4, window_bounds = array<i64: 16, 12>}, {transform_indices = @transform_5, window_bounds = array<i64: 1, 16, 256>}]} {
    %c0 = arith.constant 0 : index
    %c0_0 = arith.constant 0 : index
    %c0_1 = arith.constant 0 : index
    %0 = vector.load %arg1[%c0, %c0_0, %c0_1] : memref<1x8x256xf32, #tpu.memory_space<vmem>>, vector<1x8x256xf32>
    %1 = vector.shape_cast %0 : vector<1x8x256xf32> to vector<8x256xf32>
    %c17_i32 = arith.constant 17 : i32
    %2 = tpu.dynamic_rotate %1 by %c17_i32 dim 1 : vector<8x256xf32>, i32 -> vector<8x256xf32>
    %c0_2 = arith.constant 0 : index
    %c0_3 = arith.constant 0 : index
    %c0_4 = arith.constant 0 : index
    %3 = vector.load %arg3[%c0_2, %c0_3, %c0_4] : memref<9x1x256xf32, #tpu.memory_space<vmem>>, vector<1x1x256xf32>
    %4 = vector.shape_cast %3 : vector<1x1x256xf32> to vector<1x256xf32>
    %5 = vector.broadcast %4 : vector<1x256xf32> to vector<8x256xf32>
    %6 = arith.mulf %2, %5 : vector<8x256xf32>
    %c0_5 = arith.constant 0 : index
    %c0_6 = arith.constant 0 : index
    %c0_7 = arith.constant 0 : index
    %7 = vector.load %arg4[%c0_5, %c0_6, %c0_7] : memref<54x16x16xf32, #tpu.memory_space<vmem>>, vector<1x16x16xf32>
    %8 = vector.shape_cast %7 : vector<1x16x16xf32> to vector<16x16xf32>
    %9 = vector.extract_strided_slice %8 {offsets = [0, 0], sizes = [8, 8], strides = [1, 1]} : vector<16x16xf32> to vector<8x8xf32>
    %cst = arith.constant dense<0.000000e+00> : vector<8x256xf32>
    %10 = tpu.matmul %9, %6, %cst {dimension_numbers = #tpu.dot_dimension_numbers<[1], [0], [0], [1], [0, 0, 1, 1], [], []>} : vector<8x8xf32>, vector<8x256xf32>, vector<8x256xf32> -> vector<8x256xf32>
    %c16_i32 = arith.constant 16 : i32
    %11 = tpu.dynamic_rotate %1 by %c16_i32 dim 1 : vector<8x256xf32>, i32 -> vector<8x256xf32>
    %c1 = arith.constant 1 : index
    %c0_8 = arith.constant 0 : index
    %c0_9 = arith.constant 0 : index
    %12 = vector.load %arg3[%c1, %c0_8, %c0_9] : memref<9x1x256xf32, #tpu.memory_space<vmem>>, vector<1x1x256xf32>
    %13 = vector.shape_cast %12 : vector<1x1x256xf32> to vector<1x256xf32>
    %14 = vector.broadcast %13 : vector<1x256xf32> to vector<8x256xf32>
    %15 = arith.mulf %11, %14 : vector<8x256xf32>
    %c1_10 = arith.constant 1 : index
    %c0_11 = arith.constant 0 : index
    %c0_12 = arith.constant 0 : index
    %16 = vector.load %arg4[%c1_10, %c0_11, %c0_12] : memref<54x16x16xf32, #tpu.memory_space<vmem>>, vector<1x16x16xf32>
    %17 = vector.shape_cast %16 : vector<1x16x16xf32> to vector<16x16xf32>
    %18 = vector.extract_strided_slice %17 {offsets = [0, 0], sizes = [8, 8], strides = [1, 1]} : vector<16x16xf32> to vector<8x8xf32>
    %cst_13 = arith.constant dense<0.000000e+00> : vector<8x256xf32>
    %19 = tpu.matmul %18, %15, %cst_13 {dimension_numbers = #tpu.dot_dimension_numbers<[1], [0], [0], [1], [0, 0, 1, 1], [], []>} : vector<8x8xf32>, vector<8x256xf32>, vector<8x256xf32> -> vector<8x256xf32>
    %20 = arith.addf %10, %19 : vector<8x256xf32>
    %c15_i32 = arith.constant 15 : i32
    %21 = tpu.dynamic_rotate %1 by %c15_i32 dim 1 : vector<8x256xf32>, i32 -> vector<8x256xf32>
    %c2 = arith.constant 2 : index
    %c0_14 = arith.constant 0 : index
    %c0_15 = arith.constant 0 : index
    %22 = vector.load %arg3[%c2, %c0_14, %c0_15] : memref<9x1x256xf32, #tpu.memory_space<vmem>>, vector<1x1x256xf32>
    %23 = vector.shape_cast %22 : vector<1x1x256xf32> to vector<1x256xf32>
    %24 = vector.broadcast %23 : vector<1x256xf32> to vector<8x256xf32>
    %25 = arith.mulf %21, %24 : vector<8x256xf32>
    %c2_16 = arith.constant 2 : index
    %c0_17 = arith.constant 0 : index
    %c0_18 = arith.constant 0 : index
    %26 = vector.load %arg4[%c2_16, %c0_17, %c0_18] : memref<54x16x16xf32, #tpu.memory_space<vmem>>, vector<1x16x16xf32>
    %27 = vector.shape_cast %26 : vector<1x16x16xf32> to vector<16x16xf32>
    %28 = vector.extract_strided_slice %27 {offsets = [0, 0], sizes = [8, 8], strides = [1, 1]} : vector<16x16xf32> to vector<8x8xf32>
    %cst_19 = arith.constant dense<0.000000e+00> : vector<8x256xf32>
    %29 = tpu.matmul %28, %25, %cst_19 {dimension_numbers = #tpu.dot_dimension_numbers<[1], [0], [0], [1], [0, 0, 1, 1], [], []>} : vector<8x8xf32>, vector<8x256xf32>, vector<8x256xf32> -> vector<8x256xf32>
    %30 = arith.addf %20, %29 : vector<8x256xf32>
    %c1_i32 = arith.constant 1 : i32
    %31 = tpu.dynamic_rotate %1 by %c1_i32 dim 1 : vector<8x256xf32>, i32 -> vector<8x256xf32>
    %c3 = arith.constant 3 : index
    %c0_20 = arith.constant 0 : index
    %c0_21 = arith.constant 0 : index
    %32 = vector.load %arg3[%c3, %c0_20, %c0_21] : memref<9x1x256xf32, #tpu.memory_space<vmem>>, vector<1x1x256xf32>
    %33 = vector.shape_cast %32 : vector<1x1x256xf32> to vector<1x256xf32>
    %34 = vector.broadcast %33 : vector<1x256xf32> to vector<8x256xf32>
    %35 = arith.mulf %31, %34 : vector<8x256xf32>
    %c3_22 = arith.constant 3 : index
    %c0_23 = arith.constant 0 : index
    %c0_24 = arith.constant 0 : index
    %36 = vector.load %arg4[%c3_22, %c0_23, %c0_24] : memref<54x16x16xf32, #tpu.memory_space<vmem>>, vector<1x16x16xf32>
    %37 = vector.shape_cast %36 : vector<1x16x16xf32> to vector<16x16xf32>
    %38 = vector.extract_strided_slice %37 {offsets = [0, 0], sizes = [8, 8], strides = [1, 1]} : vector<16x16xf32> to vector<8x8xf32>
    %cst_25 = arith.constant dense<0.000000e+00> : vector<8x256xf32>
    %39 = tpu.matmul %38, %35, %cst_25 {dimension_numbers = #tpu.dot_dimension_numbers<[1], [0], [0], [1], [0, 0, 1, 1], [], []>} : vector<8x8xf32>, vector<8x256xf32>, vector<8x256xf32> -> vector<8x256xf32>
    %40 = arith.addf %30, %39 : vector<8x256xf32>
    %c4 = arith.constant 4 : index
    %c0_26 = arith.constant 0 : index
    %c0_27 = arith.constant 0 : index
    %41 = vector.load %arg4[%c4, %c0_26, %c0_27] : memref<54x16x16xf32, #tpu.memory_space<vmem>>, vector<1x16x16xf32>
    %42 = vector.shape_cast %41 : vector<1x16x16xf32> to vector<16x16xf32>
    %43 = vector.extract_strided_slice %42 {offsets = [0, 0], sizes = [8, 8], strides = [1, 1]} : vector<16x16xf32> to vector<8x8xf32>
    %cst_28 = arith.constant dense<0.000000e+00> : vector<8x256xf32>
    %44 = tpu.matmul %43, %1, %cst_28 {dimension_numbers = #tpu.dot_dimension_numbers<[1], [0], [0], [1], [0, 0, 1, 1], [], []>} : vector<8x8xf32>, vector<8x256xf32>, vector<8x256xf32> -> vector<8x256xf32>
    %45 = arith.addf %40, %44 : vector<8x256xf32>
    %c255_i32 = arith.constant 255 : i32
    %46 = tpu.dynamic_rotate %1 by %c255_i32 dim 1 : vector<8x256xf32>, i32 -> vector<8x256xf32>
    %c5 = arith.constant 5 : index
    %c0_29 = arith.constant 0 : index
    %c0_30 = arith.constant 0 : index
    %47 = vector.load %arg3[%c5, %c0_29, %c0_30] : memref<9x1x256xf32, #tpu.memory_space<vmem>>, vector<1x1x256xf32>
    %48 = vector.shape_cast %47 : vector<1x1x256xf32> to vector<1x256xf32>
    %49 = vector.broadcast %48 : vector<1x256xf32> to vector<8x256xf32>
    %50 = arith.mulf %46, %49 : vector<8x256xf32>
    %c5_31 = arith.constant 5 : index
    %c0_32 = arith.constant 0 : index
    %c0_33 = arith.constant 0 : index
    %51 = vector.load %arg4[%c5_31, %c0_32, %c0_33] : memref<54x16x16xf32, #tpu.memory_space<vmem>>, vector<1x16x16xf32>
    %52 = vector.shape_cast %51 : vector<1x16x16xf32> to vector<16x16xf32>
    %53 = vector.extract_strided_slice %52 {offsets = [0, 0], sizes = [8, 8], strides = [1, 1]} : vector<16x16xf32> to vector<8x8xf32>
    %cst_34 = arith.constant dense<0.000000e+00> : vector<8x256xf32>
    %54 = tpu.matmul %53, %50, %cst_34 {dimension_numbers = #tpu.dot_dimension_numbers<[1], [0], [0], [1], [0, 0, 1, 1], [], []>} : vector<8x8xf32>, vector<8x256xf32>, vector<8x256xf32> -> vector<8x256xf32>
    %55 = arith.addf %45, %54 : vector<8x256xf32>
    %c241_i32 = arith.constant 241 : i32
    %56 = tpu.dynamic_rotate %1 by %c241_i32 dim 1 : vector<8x256xf32>, i32 -> vector<8x256xf32>
    %c6 = arith.constant 6 : index
    %c0_35 = arith.constant 0 : index
    %c0_36 = arith.constant 0 : index
    %57 = vector.load %arg3[%c6, %c0_35, %c0_36] : memref<9x1x256xf32, #tpu.memory_space<vmem>>, vector<1x1x256xf32>
    %58 = vector.shape_cast %57 : vector<1x1x256xf32> to vector<1x256xf32>
    %59 = vector.broadcast %58 : vector<1x256xf32> to vector<8x256xf32>
    %60 = arith.mulf %56, %59 : vector<8x256xf32>
    %c6_37 = arith.constant 6 : index
    %c0_38 = arith.constant 0 : index
    %c0_39 = arith.constant 0 : index
    %61 = vector.load %arg4[%c6_37, %c0_38, %c0_39] : memref<54x16x16xf32, #tpu.memory_space<vmem>>, vector<1x16x16xf32>
    %62 = vector.shape_cast %61 : vector<1x16x16xf32> to vector<16x16xf32>
    %63 = vector.extract_strided_slice %62 {offsets = [0, 0], sizes = [8, 8], strides = [1, 1]} : vector<16x16xf32> to vector<8x8xf32>
    %cst_40 = arith.constant dense<0.000000e+00> : vector<8x256xf32>
    %64 = tpu.matmul %63, %60, %cst_40 {dimension_numbers = #tpu.dot_dimension_numbers<[1], [0], [0], [1], [0, 0, 1, 1], [], []>} : vector<8x8xf32>, vector<8x256xf32>, vector<8x256xf32> -> vector<8x256xf32>
    %65 = arith.addf %55, %64 : vector<8x256xf32>
    %c240_i32 = arith.constant 240 : i32
    %66 = tpu.dynamic_rotate %1 by %c240_i32 dim 1 : vector<8x256xf32>, i32 -> vector<8x256xf32>
    %c7 = arith.constant 7 : index
    %c0_41 = arith.constant 0 : index
    %c0_42 = arith.constant 0 : index
    %67 = vector.load %arg3[%c7, %c0_41, %c0_42] : memref<9x1x256xf32, #tpu.memory_space<vmem>>, vector<1x1x256xf32>
    %68 = vector.shape_cast %67 : vector<1x1x256xf32> to vector<1x256xf32>
    %69 = vector.broadcast %68 : vector<1x256xf32> to vector<8x256xf32>
    %70 = arith.mulf %66, %69 : vector<8x256xf32>
    %c7_43 = arith.constant 7 : index
    %c0_44 = arith.constant 0 : index
    %c0_45 = arith.constant 0 : index
    %71 = vector.load %arg4[%c7_43, %c0_44, %c0_45] : memref<54x16x16xf32, #tpu.memory_space<vmem>>, vector<1x16x16xf32>
    %72 = vector.shape_cast %71 : vector<1x16x16xf32> to vector<16x16xf32>
    %73 = vector.extract_strided_slice %72 {offsets = [0, 0], sizes = [8, 8], strides = [1, 1]} : vector<16x16xf32> to vector<8x8xf32>
    %cst_46 = arith.constant dense<0.000000e+00> : vector<8x256xf32>
    %74 = tpu.matmul %73, %70, %cst_46 {dimension_numbers = #tpu.dot_dimension_numbers<[1], [0], [0], [1], [0, 0, 1, 1], [], []>} : vector<8x8xf32>, vector<8x256xf32>, vector<8x256xf32> -> vector<8x256xf32>
    %75 = arith.addf %65, %74 : vector<8x256xf32>
    %c239_i32 = arith.constant 239 : i32
    %76 = tpu.dynamic_rotate %1 by %c239_i32 dim 1 : vector<8x256xf32>, i32 -> vector<8x256xf32>
    %c8 = arith.constant 8 : index
    %c0_47 = arith.constant 0 : index
    %c0_48 = arith.constant 0 : index
    %77 = vector.load %arg3[%c8, %c0_47, %c0_48] : memref<9x1x256xf32, #tpu.memory_space<vmem>>, vector<1x1x256xf32>
    %78 = vector.shape_cast %77 : vector<1x1x256xf32> to vector<1x256xf32>
    %79 = vector.broadcast %78 : vector<1x256xf32> to vector<8x256xf32>
    %80 = arith.mulf %76, %79 : vector<8x256xf32>
    %c8_49 = arith.constant 8 : index
    %c0_50 = arith.constant 0 : index
    %c0_51 = arith.constant 0 : index
    %81 = vector.load %arg4[%c8_49, %c0_50, %c0_51] : memref<54x16x16xf32, #tpu.memory_space<vmem>>, vector<1x16x16xf32>
    %82 = vector.shape_cast %81 : vector<1x16x16xf32> to vector<16x16xf32>
    %83 = vector.extract_strided_slice %82 {offsets = [0, 0], sizes = [8, 8], strides = [1, 1]} : vector<16x16xf32> to vector<8x8xf32>
    %cst_52 = arith.constant dense<0.000000e+00> : vector<8x256xf32>
    %84 = tpu.matmul %83, %80, %cst_52 {dimension_numbers = #tpu.dot_dimension_numbers<[1], [0], [0], [1], [0, 0, 1, 1], [], []>} : vector<8x8xf32>, vector<8x256xf32>, vector<8x256xf32> -> vector<8x256xf32>
    %85 = arith.addf %75, %84 : vector<8x256xf32>
    %c0_53 = arith.constant 0 : index
    %c0_54 = arith.constant 0 : index
    %86 = vector.load %arg5[%c0_53, %c0_54] : memref<16x12xf32, #tpu.memory_space<vmem>>, vector<8x1xf32>
    %c0_55 = arith.constant 0 : index
    %c1_56 = arith.constant 1 : index
    %87 = vector.load %arg5[%c0_55, %c1_56] : memref<16x12xf32, #tpu.memory_space<vmem>>, vector<8x1xf32>
    %88 = vector.shape_cast %85 : vector<8x256xf32> to vector<1x8x256xf32>
    %cst_57 = arith.constant dense<0.000000e+00> : vector<1xf32>
    %89 = vector.multi_reduction <add>, %88, %cst_57 [1, 2] : vector<1x8x256xf32> to vector<1xf32>
    %90 = vector.shape_cast %89 : vector<1xf32> to vector<1x1x1xf32>
    %91 = vector.extract %90[0, 0, 0] : f32 from vector<1x1x1xf32>
    %92 = vector.broadcast %91 : f32 to vector<1x1xf32>
    %93 = arith.mulf %85, %85 : vector<8x256xf32>
    %94 = vector.shape_cast %93 : vector<8x256xf32> to vector<1x8x256xf32>
    %cst_58 = arith.constant dense<0.000000e+00> : vector<1xf32>
    %95 = vector.multi_reduction <add>, %94, %cst_58 [1, 2] : vector<1x8x256xf32> to vector<1xf32>
    %96 = vector.shape_cast %95 : vector<1xf32> to vector<1x1x1xf32>
    %97 = vector.extract %96[0, 0, 0] : f32 from vector<1x1x1xf32>
    %98 = vector.broadcast %97 : f32 to vector<1x1xf32>
    %cst_59 = arith.constant 4.8828125E-4 : f32
    %99 = vector.broadcast %cst_59 : f32 to vector<1x1xf32>
    %100 = arith.mulf %92, %99 : vector<1x1xf32>
    %cst_60 = arith.constant 4.8828125E-4 : f32
    %101 = vector.broadcast %cst_60 : f32 to vector<1x1xf32>
    %102 = arith.mulf %98, %101 : vector<1x1xf32>
    %103 = arith.mulf %100, %100 : vector<1x1xf32>
    %104 = arith.subf %102, %103 : vector<1x1xf32>
    %cst_61 = arith.constant 0.000000e+00 : f32
    %105 = vector.broadcast %cst_61 : f32 to vector<1x1xf32>
    %106 = arith.maximumf %104, %105 : vector<1x1xf32>
    %cst_62 = arith.constant 9.99999974E-6 : f32
    %107 = vector.broadcast %cst_62 : f32 to vector<1x1xf32>
    %108 = arith.addf %106, %107 : vector<1x1xf32>
    %109 = math.rsqrt %108 : vector<1x1xf32>
    %110 = vector.broadcast %109 : vector<1x1xf32> to vector<8x1xf32>
    %111 = arith.mulf %86, %110 : vector<8x1xf32>
    %112 = vector.broadcast %100 : vector<1x1xf32> to vector<8x1xf32>
    %113 = arith.mulf %112, %111 : vector<8x1xf32>
    %114 = arith.subf %87, %113 : vector<8x1xf32>
    %115 = vector.broadcast %111 : vector<8x1xf32> to vector<8x256xf32>
    %116 = arith.mulf %85, %115 : vector<8x256xf32>
    %117 = vector.broadcast %114 : vector<8x1xf32> to vector<8x256xf32>
    %118 = arith.addf %116, %117 : vector<8x256xf32>
    %119 = arith.mulf %118, %118 : vector<8x256xf32>
    %120 = arith.mulf %118, %119 : vector<8x256xf32>
    %cst_63 = arith.constant 4.471500e-02 : f32
    %121 = vector.broadcast %cst_63 : f32 to vector<8x256xf32>
    %122 = arith.mulf %121, %120 : vector<8x256xf32>
    %123 = arith.addf %118, %122 : vector<8x256xf32>
    %cst_64 = arith.constant 0.797884583 : f32
    %124 = vector.broadcast %cst_64 : f32 to vector<8x256xf32>
    %125 = arith.mulf %124, %123 : vector<8x256xf32>
    %126 = math.tanh %125 : vector<8x256xf32>
    %cst_65 = arith.constant 1.000000e+00 : f32
    %127 = vector.broadcast %cst_65 : f32 to vector<8x256xf32>
    %128 = arith.addf %127, %126 : vector<8x256xf32>
    %cst_66 = arith.constant 5.000000e-01 : f32
    %129 = vector.broadcast %cst_66 : f32 to vector<8x256xf32>
    %130 = arith.mulf %129, %128 : vector<8x256xf32>
    %131 = arith.mulf %118, %130 : vector<8x256xf32>
    %c17_i32_67 = arith.constant 17 : i32
    %132 = tpu.dynamic_rotate %131 by %c17_i32_67 dim 1 : vector<8x256xf32>, i32 -> vector<8x256xf32>
    %c0_68 = arith.constant 0 : index
    %c0_69 = arith.constant 0 : index
    %c0_70 = arith.constant 0 : index
    %133 = vector.load %arg3[%c0_68, %c0_69, %c0_70] : memref<9x1x256xf32, #tpu.memory_space<vmem>>, vector<1x1x256xf32>
    %134 = vector.shape_cast %133 : vector<1x1x256xf32> to vector<1x256xf32>
    %135 = vector.broadcast %134 : vector<1x256xf32> to vector<8x256xf32>
    %136 = arith.mulf %132, %135 : vector<8x256xf32>
    %c9 = arith.constant 9 : index
    %c0_71 = arith.constant 0 : index
    %c0_72 = arith.constant 0 : index
    %137 = vector.load %arg4[%c9, %c0_71, %c0_72] : memref<54x16x16xf32, #tpu.memory_space<vmem>>, vector<1x16x16xf32>
    %138 = vector.shape_cast %137 : vector<1x16x16xf32> to vector<16x16xf32>
    %139 = vector.extract_strided_slice %138 {offsets = [0, 0], sizes = [8, 8], strides = [1, 1]} : vector<16x16xf32> to vector<8x8xf32>
    %cst_73 = arith.constant dense<0.000000e+00> : vector<8x256xf32>
    %140 = tpu.matmul %139, %136, %cst_73 {dimension_numbers = #tpu.dot_dimension_numbers<[1], [0], [0], [1], [0, 0, 1, 1], [], []>} : vector<8x8xf32>, vector<8x256xf32>, vector<8x256xf32> -> vector<8x256xf32>
    %c16_i32_74 = arith.constant 16 : i32
    %141 = tpu.dynamic_rotate %131 by %c16_i32_74 dim 1 : vector<8x256xf32>, i32 -> vector<8x256xf32>
    %c1_75 = arith.constant 1 : index
    %c0_76 = arith.constant 0 : index
    %c0_77 = arith.constant 0 : index
    %142 = vector.load %arg3[%c1_75, %c0_76, %c0_77] : memref<9x1x256xf32, #tpu.memory_space<vmem>>, vector<1x1x256xf32>
    %143 = vector.shape_cast %142 : vector<1x1x256xf32> to vector<1x256xf32>
    %144 = vector.broadcast %143 : vector<1x256xf32> to vector<8x256xf32>
    %145 = arith.mulf %141, %144 : vector<8x256xf32>
    %c10 = arith.constant 10 : index
    %c0_78 = arith.constant 0 : index
    %c0_79 = arith.constant 0 : index
    %146 = vector.load %arg4[%c10, %c0_78, %c0_79] : memref<54x16x16xf32, #tpu.memory_space<vmem>>, vector<1x16x16xf32>
    %147 = vector.shape_cast %146 : vector<1x16x16xf32> to vector<16x16xf32>
    %148 = vector.extract_strided_slice %147 {offsets = [0, 0], sizes = [8, 8], strides = [1, 1]} : vector<16x16xf32> to vector<8x8xf32>
    %cst_80 = arith.constant dense<0.000000e+00> : vector<8x256xf32>
    %149 = tpu.matmul %148, %145, %cst_80 {dimension_numbers = #tpu.dot_dimension_numbers<[1], [0], [0], [1], [0, 0, 1, 1], [], []>} : vector<8x8xf32>, vector<8x256xf32>, vector<8x256xf32> -> vector<8x256xf32>
    %150 = arith.addf %140, %149 : vector<8x256xf32>
    %c15_i32_81 = arith.constant 15 : i32
    %151 = tpu.dynamic_rotate %131 by %c15_i32_81 dim 1 : vector<8x256xf32>, i32 -> vector<8x256xf32>
    %c2_82 = arith.constant 2 : index
    %c0_83 = arith.constant 0 : index
    %c0_84 = arith.constant 0 : index
    %152 = vector.load %arg3[%c2_82, %c0_83, %c0_84] : memref<9x1x256xf32, #tpu.memory_space<vmem>>, vector<1x1x256xf32>
    %153 = vector.shape_cast %152 : vector<1x1x256xf32> to vector<1x256xf32>
    %154 = vector.broadcast %153 : vector<1x256xf32> to vector<8x256xf32>
    %155 = arith.mulf %151, %154 : vector<8x256xf32>
    %c11 = arith.constant 11 : index
    %c0_85 = arith.constant 0 : index
    %c0_86 = arith.constant 0 : index
    %156 = vector.load %arg4[%c11, %c0_85, %c0_86] : memref<54x16x16xf32, #tpu.memory_space<vmem>>, vector<1x16x16xf32>
    %157 = vector.shape_cast %156 : vector<1x16x16xf32> to vector<16x16xf32>
    %158 = vector.extract_strided_slice %157 {offsets = [0, 0], sizes = [8, 8], strides = [1, 1]} : vector<16x16xf32> to vector<8x8xf32>
    %cst_87 = arith.constant dense<0.000000e+00> : vector<8x256xf32>
    %159 = tpu.matmul %158, %155, %cst_87 {dimension_numbers = #tpu.dot_dimension_numbers<[1], [0], [0], [1], [0, 0, 1, 1], [], []>} : vector<8x8xf32>, vector<8x256xf32>, vector<8x256xf32> -> vector<8x256xf32>
    %160 = arith.addf %150, %159 : vector<8x256xf32>
    %c1_i32_88 = arith.constant 1 : i32
    %161 = tpu.dynamic_rotate %131 by %c1_i32_88 dim 1 : vector<8x256xf32>, i32 -> vector<8x256xf32>
    %c3_89 = arith.constant 3 : index
    %c0_90 = arith.constant 0 : index
    %c0_91 = arith.constant 0 : index
    %162 = vector.load %arg3[%c3_89, %c0_90, %c0_91] : memref<9x1x256xf32, #tpu.memory_space<vmem>>, vector<1x1x256xf32>
    %163 = vector.shape_cast %162 : vector<1x1x256xf32> to vector<1x256xf32>
    %164 = vector.broadcast %163 : vector<1x256xf32> to vector<8x256xf32>
    %165 = arith.mulf %161, %164 : vector<8x256xf32>
    %c12 = arith.constant 12 : index
    %c0_92 = arith.constant 0 : index
    %c0_93 = arith.constant 0 : index
    %166 = vector.load %arg4[%c12, %c0_92, %c0_93] : memref<54x16x16xf32, #tpu.memory_space<vmem>>, vector<1x16x16xf32>
    %167 = vector.shape_cast %166 : vector<1x16x16xf32> to vector<16x16xf32>
    %168 = vector.extract_strided_slice %167 {offsets = [0, 0], sizes = [8, 8], strides = [1, 1]} : vector<16x16xf32> to vector<8x8xf32>
    %cst_94 = arith.constant dense<0.000000e+00> : vector<8x256xf32>
    %169 = tpu.matmul %168, %165, %cst_94 {dimension_numbers = #tpu.dot_dimension_numbers<[1], [0], [0], [1], [0, 0, 1, 1], [], []>} : vector<8x8xf32>, vector<8x256xf32>, vector<8x256xf32> -> vector<8x256xf32>
    %170 = arith.addf %160, %169 : vector<8x256xf32>
    %c13 = arith.constant 13 : index
    %c0_95 = arith.constant 0 : index
    %c0_96 = arith.constant 0 : index
    %171 = vector.load %arg4[%c13, %c0_95, %c0_96] : memref<54x16x16xf32, #tpu.memory_space<vmem>>, vector<1x16x16xf32>
    %172 = vector.shape_cast %171 : vector<1x16x16xf32> to vector<16x16xf32>
    %173 = vector.extract_strided_slice %172 {offsets = [0, 0], sizes = [8, 8], strides = [1, 1]} : vector<16x16xf32> to vector<8x8xf32>
    %cst_97 = arith.constant dense<0.000000e+00> : vector<8x256xf32>
    %174 = tpu.matmul %173, %131, %cst_97 {dimension_numbers = #tpu.dot_dimension_numbers<[1], [0], [0], [1], [0, 0, 1, 1], [], []>} : vector<8x8xf32>, vector<8x256xf32>, vector<8x256xf32> -> vector<8x256xf32>
    %175 = arith.addf %170, %174 : vector<8x256xf32>
    %c255_i32_98 = arith.constant 255 : i32
    %176 = tpu.dynamic_rotate %131 by %c255_i32_98 dim 1 : vector<8x256xf32>, i32 -> vector<8x256xf32>
    %c5_99 = arith.constant 5 : index
    %c0_100 = arith.constant 0 : index
    %c0_101 = arith.constant 0 : index
    %177 = vector.load %arg3[%c5_99, %c0_100, %c0_101] : memref<9x1x256xf32, #tpu.memory_space<vmem>>, vector<1x1x256xf32>
    %178 = vector.shape_cast %177 : vector<1x1x256xf32> to vector<1x256xf32>
    %179 = vector.broadcast %178 : vector<1x256xf32> to vector<8x256xf32>
    %180 = arith.mulf %176, %179 : vector<8x256xf32>
    %c14 = arith.constant 14 : index
    %c0_102 = arith.constant 0 : index
    %c0_103 = arith.constant 0 : index
    %181 = vector.load %arg4[%c14, %c0_102, %c0_103] : memref<54x16x16xf32, #tpu.memory_space<vmem>>, vector<1x16x16xf32>
    %182 = vector.shape_cast %181 : vector<1x16x16xf32> to vector<16x16xf32>
    %183 = vector.extract_strided_slice %182 {offsets = [0, 0], sizes = [8, 8], strides = [1, 1]} : vector<16x16xf32> to vector<8x8xf32>
    %cst_104 = arith.constant dense<0.000000e+00> : vector<8x256xf32>
    %184 = tpu.matmul %183, %180, %cst_104 {dimension_numbers = #tpu.dot_dimension_numbers<[1], [0], [0], [1], [0, 0, 1, 1], [], []>} : vector<8x8xf32>, vector<8x256xf32>, vector<8x256xf32> -> vector<8x256xf32>
    %185 = arith.addf %175, %184 : vector<8x256xf32>
    %c241_i32_105 = arith.constant 241 : i32
    %186 = tpu.dynamic_rotate %131 by %c241_i32_105 dim 1 : vector<8x256xf32>, i32 -> vector<8x256xf32>
    %c6_106 = arith.constant 6 : index
    %c0_107 = arith.constant 0 : index
    %c0_108 = arith.constant 0 : index
    %187 = vector.load %arg3[%c6_106, %c0_107, %c0_108] : memref<9x1x256xf32, #tpu.memory_space<vmem>>, vector<1x1x256xf32>
    %188 = vector.shape_cast %187 : vector<1x1x256xf32> to vector<1x256xf32>
    %189 = vector.broadcast %188 : vector<1x256xf32> to vector<8x256xf32>
    %190 = arith.mulf %186, %189 : vector<8x256xf32>
    %c15 = arith.constant 15 : index
    %c0_109 = arith.constant 0 : index
    %c0_110 = arith.constant 0 : index
    %191 = vector.load %arg4[%c15, %c0_109, %c0_110] : memref<54x16x16xf32, #tpu.memory_space<vmem>>, vector<1x16x16xf32>
    %192 = vector.shape_cast %191 : vector<1x16x16xf32> to vector<16x16xf32>
    %193 = vector.extract_strided_slice %192 {offsets = [0, 0], sizes = [8, 8], strides = [1, 1]} : vector<16x16xf32> to vector<8x8xf32>
    %cst_111 = arith.constant dense<0.000000e+00> : vector<8x256xf32>
    %194 = tpu.matmul %193, %190, %cst_111 {dimension_numbers = #tpu.dot_dimension_numbers<[1], [0], [0], [1], [0, 0, 1, 1], [], []>} : vector<8x8xf32>, vector<8x256xf32>, vector<8x256xf32> -> vector<8x256xf32>
    %195 = arith.addf %185, %194 : vector<8x256xf32>
    %c240_i32_112 = arith.constant 240 : i32
    %196 = tpu.dynamic_rotate %131 by %c240_i32_112 dim 1 : vector<8x256xf32>, i32 -> vector<8x256xf32>
    %c7_113 = arith.constant 7 : index
    %c0_114 = arith.constant 0 : index
    %c0_115 = arith.constant 0 : index
    %197 = vector.load %arg3[%c7_113, %c0_114, %c0_115] : memref<9x1x256xf32, #tpu.memory_space<vmem>>, vector<1x1x256xf32>
    %198 = vector.shape_cast %197 : vector<1x1x256xf32> to vector<1x256xf32>
    %199 = vector.broadcast %198 : vector<1x256xf32> to vector<8x256xf32>
    %200 = arith.mulf %196, %199 : vector<8x256xf32>
    %c16 = arith.constant 16 : index
    %c0_116 = arith.constant 0 : index
    %c0_117 = arith.constant 0 : index
    %201 = vector.load %arg4[%c16, %c0_116, %c0_117] : memref<54x16x16xf32, #tpu.memory_space<vmem>>, vector<1x16x16xf32>
    %202 = vector.shape_cast %201 : vector<1x16x16xf32> to vector<16x16xf32>
    %203 = vector.extract_strided_slice %202 {offsets = [0, 0], sizes = [8, 8], strides = [1, 1]} : vector<16x16xf32> to vector<8x8xf32>
    %cst_118 = arith.constant dense<0.000000e+00> : vector<8x256xf32>
    %204 = tpu.matmul %203, %200, %cst_118 {dimension_numbers = #tpu.dot_dimension_numbers<[1], [0], [0], [1], [0, 0, 1, 1], [], []>} : vector<8x8xf32>, vector<8x256xf32>, vector<8x256xf32> -> vector<8x256xf32>
    %205 = arith.addf %195, %204 : vector<8x256xf32>
    %c239_i32_119 = arith.constant 239 : i32
    %206 = tpu.dynamic_rotate %131 by %c239_i32_119 dim 1 : vector<8x256xf32>, i32 -> vector<8x256xf32>
    %c8_120 = arith.constant 8 : index
    %c0_121 = arith.constant 0 : index
    %c0_122 = arith.constant 0 : index
    %207 = vector.load %arg3[%c8_120, %c0_121, %c0_122] : memref<9x1x256xf32, #tpu.memory_space<vmem>>, vector<1x1x256xf32>
    %208 = vector.shape_cast %207 : vector<1x1x256xf32> to vector<1x256xf32>
    %209 = vector.broadcast %208 : vector<1x256xf32> to vector<8x256xf32>
    %210 = arith.mulf %206, %209 : vector<8x256xf32>
    %c17 = arith.constant 17 : index
    %c0_123 = arith.constant 0 : index
    %c0_124 = arith.constant 0 : index
    %211 = vector.load %arg4[%c17, %c0_123, %c0_124] : memref<54x16x16xf32, #tpu.memory_space<vmem>>, vector<1x16x16xf32>
    %212 = vector.shape_cast %211 : vector<1x16x16xf32> to vector<16x16xf32>
    %213 = vector.extract_strided_slice %212 {offsets = [0, 0], sizes = [8, 8], strides = [1, 1]} : vector<16x16xf32> to vector<8x8xf32>
    %cst_125 = arith.constant dense<0.000000e+00> : vector<8x256xf32>
    %214 = tpu.matmul %213, %210, %cst_125 {dimension_numbers = #tpu.dot_dimension_numbers<[1], [0], [0], [1], [0, 0, 1, 1], [], []>} : vector<8x8xf32>, vector<8x256xf32>, vector<8x256xf32> -> vector<8x256xf32>
    %215 = arith.addf %205, %214 : vector<8x256xf32>
    %c0_126 = arith.constant 0 : index
    %c2_127 = arith.constant 2 : index
    %216 = vector.load %arg5[%c0_126, %c2_127] : memref<16x12xf32, #tpu.memory_space<vmem>>, vector<8x1xf32>
    %c0_128 = arith.constant 0 : index
    %c3_129 = arith.constant 3 : index
    %217 = vector.load %arg5[%c0_128, %c3_129] : memref<16x12xf32, #tpu.memory_space<vmem>>, vector<8x1xf32>
    %218 = vector.shape_cast %215 : vector<8x256xf32> to vector<1x8x256xf32>
    %cst_130 = arith.constant dense<0.000000e+00> : vector<1xf32>
    %219 = vector.multi_reduction <add>, %218, %cst_130 [1, 2] : vector<1x8x256xf32> to vector<1xf32>
    %220 = vector.shape_cast %219 : vector<1xf32> to vector<1x1x1xf32>
    %221 = vector.extract %220[0, 0, 0] : f32 from vector<1x1x1xf32>
    %222 = vector.broadcast %221 : f32 to vector<1x1xf32>
    %223 = arith.mulf %215, %215 : vector<8x256xf32>
    %224 = vector.shape_cast %223 : vector<8x256xf32> to vector<1x8x256xf32>
    %cst_131 = arith.constant dense<0.000000e+00> : vector<1xf32>
    %225 = vector.multi_reduction <add>, %224, %cst_131 [1, 2] : vector<1x8x256xf32> to vector<1xf32>
    %226 = vector.shape_cast %225 : vector<1xf32> to vector<1x1x1xf32>
    %227 = vector.extract %226[0, 0, 0] : f32 from vector<1x1x1xf32>
    %228 = vector.broadcast %227 : f32 to vector<1x1xf32>
    %cst_132 = arith.constant 4.8828125E-4 : f32
    %229 = vector.broadcast %cst_132 : f32 to vector<1x1xf32>
    %230 = arith.mulf %222, %229 : vector<1x1xf32>
    %cst_133 = arith.constant 4.8828125E-4 : f32
    %231 = vector.broadcast %cst_133 : f32 to vector<1x1xf32>
    %232 = arith.mulf %228, %231 : vector<1x1xf32>
    %233 = arith.mulf %230, %230 : vector<1x1xf32>
    %234 = arith.subf %232, %233 : vector<1x1xf32>
    %cst_134 = arith.constant 0.000000e+00 : f32
    %235 = vector.broadcast %cst_134 : f32 to vector<1x1xf32>
    %236 = arith.maximumf %234, %235 : vector<1x1xf32>
    %cst_135 = arith.constant 9.99999974E-6 : f32
    %237 = vector.broadcast %cst_135 : f32 to vector<1x1xf32>
    %238 = arith.addf %236, %237 : vector<1x1xf32>
    %239 = math.rsqrt %238 : vector<1x1xf32>
    %240 = vector.broadcast %239 : vector<1x1xf32> to vector<8x1xf32>
    %241 = arith.mulf %216, %240 : vector<8x1xf32>
    %242 = vector.broadcast %230 : vector<1x1xf32> to vector<8x1xf32>
    %243 = arith.mulf %242, %241 : vector<8x1xf32>
    %244 = arith.subf %217, %243 : vector<8x1xf32>
    %245 = vector.broadcast %241 : vector<8x1xf32> to vector<8x256xf32>
    %246 = arith.mulf %215, %245 : vector<8x256xf32>
    %247 = vector.broadcast %244 : vector<8x1xf32> to vector<8x256xf32>
    %248 = arith.addf %246, %247 : vector<8x256xf32>
    %249 = arith.addf %1, %248 : vector<8x256xf32>
    %250 = arith.mulf %249, %249 : vector<8x256xf32>
    %251 = arith.mulf %249, %250 : vector<8x256xf32>
    %cst_136 = arith.constant 4.471500e-02 : f32
    %252 = vector.broadcast %cst_136 : f32 to vector<8x256xf32>
    %253 = arith.mulf %252, %251 : vector<8x256xf32>
    %254 = arith.addf %249, %253 : vector<8x256xf32>
    %cst_137 = arith.constant 0.797884583 : f32
    %255 = vector.broadcast %cst_137 : f32 to vector<8x256xf32>
    %256 = arith.mulf %255, %254 : vector<8x256xf32>
    %257 = math.tanh %256 : vector<8x256xf32>
    %cst_138 = arith.constant 1.000000e+00 : f32
    %258 = vector.broadcast %cst_138 : f32 to vector<8x256xf32>
    %259 = arith.addf %258, %257 : vector<8x256xf32>
    %cst_139 = arith.constant 5.000000e-01 : f32
    %260 = vector.broadcast %cst_139 : f32 to vector<8x256xf32>
    %261 = arith.mulf %260, %259 : vector<8x256xf32>
    %262 = arith.mulf %249, %261 : vector<8x256xf32>
    %c17_i32_140 = arith.constant 17 : i32
    %263 = tpu.dynamic_rotate %262 by %c17_i32_140 dim 1 : vector<8x256xf32>, i32 -> vector<8x256xf32>
    %c0_141 = arith.constant 0 : index
    %c0_142 = arith.constant 0 : index
    %c0_143 = arith.constant 0 : index
    %264 = vector.load %arg3[%c0_141, %c0_142, %c0_143] : memref<9x1x256xf32, #tpu.memory_space<vmem>>, vector<1x1x256xf32>
    %265 = vector.shape_cast %264 : vector<1x1x256xf32> to vector<1x256xf32>
    %266 = vector.broadcast %265 : vector<1x256xf32> to vector<8x256xf32>
    %267 = arith.mulf %263, %266 : vector<8x256xf32>
    %c18 = arith.constant 18 : index
    %c0_144 = arith.constant 0 : index
    %c0_145 = arith.constant 0 : index
    %268 = vector.load %arg4[%c18, %c0_144, %c0_145] : memref<54x16x16xf32, #tpu.memory_space<vmem>>, vector<1x16x16xf32>
    %269 = vector.shape_cast %268 : vector<1x16x16xf32> to vector<16x16xf32>
    %270 = vector.extract_strided_slice %269 {offsets = [0, 0], sizes = [8, 8], strides = [1, 1]} : vector<16x16xf32> to vector<8x8xf32>
    %cst_146 = arith.constant dense<0.000000e+00> : vector<8x256xf32>
    %271 = tpu.matmul %270, %267, %cst_146 {dimension_numbers = #tpu.dot_dimension_numbers<[1], [0], [0], [1], [0, 0, 1, 1], [], []>} : vector<8x8xf32>, vector<8x256xf32>, vector<8x256xf32> -> vector<8x256xf32>
    %c16_i32_147 = arith.constant 16 : i32
    %272 = tpu.dynamic_rotate %262 by %c16_i32_147 dim 1 : vector<8x256xf32>, i32 -> vector<8x256xf32>
    %c1_148 = arith.constant 1 : index
    %c0_149 = arith.constant 0 : index
    %c0_150 = arith.constant 0 : index
    %273 = vector.load %arg3[%c1_148, %c0_149, %c0_150] : memref<9x1x256xf32, #tpu.memory_space<vmem>>, vector<1x1x256xf32>
    %274 = vector.shape_cast %273 : vector<1x1x256xf32> to vector<1x256xf32>
    %275 = vector.broadcast %274 : vector<1x256xf32> to vector<8x256xf32>
    %276 = arith.mulf %272, %275 : vector<8x256xf32>
    %c19 = arith.constant 19 : index
    %c0_151 = arith.constant 0 : index
    %c0_152 = arith.constant 0 : index
    %277 = vector.load %arg4[%c19, %c0_151, %c0_152] : memref<54x16x16xf32, #tpu.memory_space<vmem>>, vector<1x16x16xf32>
    %278 = vector.shape_cast %277 : vector<1x16x16xf32> to vector<16x16xf32>
    %279 = vector.extract_strided_slice %278 {offsets = [0, 0], sizes = [8, 8], strides = [1, 1]} : vector<16x16xf32> to vector<8x8xf32>
    %cst_153 = arith.constant dense<0.000000e+00> : vector<8x256xf32>
    %280 = tpu.matmul %279, %276, %cst_153 {dimension_numbers = #tpu.dot_dimension_numbers<[1], [0], [0], [1], [0, 0, 1, 1], [], []>} : vector<8x8xf32>, vector<8x256xf32>, vector<8x256xf32> -> vector<8x256xf32>
    %281 = arith.addf %271, %280 : vector<8x256xf32>
    %c15_i32_154 = arith.constant 15 : i32
    %282 = tpu.dynamic_rotate %262 by %c15_i32_154 dim 1 : vector<8x256xf32>, i32 -> vector<8x256xf32>
    %c2_155 = arith.constant 2 : index
    %c0_156 = arith.constant 0 : index
    %c0_157 = arith.constant 0 : index
    %283 = vector.load %arg3[%c2_155, %c0_156, %c0_157] : memref<9x1x256xf32, #tpu.memory_space<vmem>>, vector<1x1x256xf32>
    %284 = vector.shape_cast %283 : vector<1x1x256xf32> to vector<1x256xf32>
    %285 = vector.broadcast %284 : vector<1x256xf32> to vector<8x256xf32>
    %286 = arith.mulf %282, %285 : vector<8x256xf32>
    %c20 = arith.constant 20 : index
    %c0_158 = arith.constant 0 : index
    %c0_159 = arith.constant 0 : index
    %287 = vector.load %arg4[%c20, %c0_158, %c0_159] : memref<54x16x16xf32, #tpu.memory_space<vmem>>, vector<1x16x16xf32>
    %288 = vector.shape_cast %287 : vector<1x16x16xf32> to vector<16x16xf32>
    %289 = vector.extract_strided_slice %288 {offsets = [0, 0], sizes = [8, 8], strides = [1, 1]} : vector<16x16xf32> to vector<8x8xf32>
    %cst_160 = arith.constant dense<0.000000e+00> : vector<8x256xf32>
    %290 = tpu.matmul %289, %286, %cst_160 {dimension_numbers = #tpu.dot_dimension_numbers<[1], [0], [0], [1], [0, 0, 1, 1], [], []>} : vector<8x8xf32>, vector<8x256xf32>, vector<8x256xf32> -> vector<8x256xf32>
    %291 = arith.addf %281, %290 : vector<8x256xf32>
    %c1_i32_161 = arith.constant 1 : i32
    %292 = tpu.dynamic_rotate %262 by %c1_i32_161 dim 1 : vector<8x256xf32>, i32 -> vector<8x256xf32>
    %c3_162 = arith.constant 3 : index
    %c0_163 = arith.constant 0 : index
    %c0_164 = arith.constant 0 : index
    %293 = vector.load %arg3[%c3_162, %c0_163, %c0_164] : memref<9x1x256xf32, #tpu.memory_space<vmem>>, vector<1x1x256xf32>
    %294 = vector.shape_cast %293 : vector<1x1x256xf32> to vector<1x256xf32>
    %295 = vector.broadcast %294 : vector<1x256xf32> to vector<8x256xf32>
    %296 = arith.mulf %292, %295 : vector<8x256xf32>
    %c21 = arith.constant 21 : index
    %c0_165 = arith.constant 0 : index
    %c0_166 = arith.constant 0 : index
    %297 = vector.load %arg4[%c21, %c0_165, %c0_166] : memref<54x16x16xf32, #tpu.memory_space<vmem>>, vector<1x16x16xf32>
    %298 = vector.shape_cast %297 : vector<1x16x16xf32> to vector<16x16xf32>
    %299 = vector.extract_strided_slice %298 {offsets = [0, 0], sizes = [8, 8], strides = [1, 1]} : vector<16x16xf32> to vector<8x8xf32>
    %cst_167 = arith.constant dense<0.000000e+00> : vector<8x256xf32>
    %300 = tpu.matmul %299, %296, %cst_167 {dimension_numbers = #tpu.dot_dimension_numbers<[1], [0], [0], [1], [0, 0, 1, 1], [], []>} : vector<8x8xf32>, vector<8x256xf32>, vector<8x256xf32> -> vector<8x256xf32>
    %301 = arith.addf %291, %300 : vector<8x256xf32>
    %c22 = arith.constant 22 : index
    %c0_168 = arith.constant 0 : index
    %c0_169 = arith.constant 0 : index
    %302 = vector.load %arg4[%c22, %c0_168, %c0_169] : memref<54x16x16xf32, #tpu.memory_space<vmem>>, vector<1x16x16xf32>
    %303 = vector.shape_cast %302 : vector<1x16x16xf32> to vector<16x16xf32>
    %304 = vector.extract_strided_slice %303 {offsets = [0, 0], sizes = [8, 8], strides = [1, 1]} : vector<16x16xf32> to vector<8x8xf32>
    %cst_170 = arith.constant dense<0.000000e+00> : vector<8x256xf32>
    %305 = tpu.matmul %304, %262, %cst_170 {dimension_numbers = #tpu.dot_dimension_numbers<[1], [0], [0], [1], [0, 0, 1, 1], [], []>} : vector<8x8xf32>, vector<8x256xf32>, vector<8x256xf32> -> vector<8x256xf32>
    %306 = arith.addf %301, %305 : vector<8x256xf32>
    %c255_i32_171 = arith.constant 255 : i32
    %307 = tpu.dynamic_rotate %262 by %c255_i32_171 dim 1 : vector<8x256xf32>, i32 -> vector<8x256xf32>
    %c5_172 = arith.constant 5 : index
    %c0_173 = arith.constant 0 : index
    %c0_174 = arith.constant 0 : index
    %308 = vector.load %arg3[%c5_172, %c0_173, %c0_174] : memref<9x1x256xf32, #tpu.memory_space<vmem>>, vector<1x1x256xf32>
    %309 = vector.shape_cast %308 : vector<1x1x256xf32> to vector<1x256xf32>
    %310 = vector.broadcast %309 : vector<1x256xf32> to vector<8x256xf32>
    %311 = arith.mulf %307, %310 : vector<8x256xf32>
    %c23 = arith.constant 23 : index
    %c0_175 = arith.constant 0 : index
    %c0_176 = arith.constant 0 : index
    %312 = vector.load %arg4[%c23, %c0_175, %c0_176] : memref<54x16x16xf32, #tpu.memory_space<vmem>>, vector<1x16x16xf32>
    %313 = vector.shape_cast %312 : vector<1x16x16xf32> to vector<16x16xf32>
    %314 = vector.extract_strided_slice %313 {offsets = [0, 0], sizes = [8, 8], strides = [1, 1]} : vector<16x16xf32> to vector<8x8xf32>
    %cst_177 = arith.constant dense<0.000000e+00> : vector<8x256xf32>
    %315 = tpu.matmul %314, %311, %cst_177 {dimension_numbers = #tpu.dot_dimension_numbers<[1], [0], [0], [1], [0, 0, 1, 1], [], []>} : vector<8x8xf32>, vector<8x256xf32>, vector<8x256xf32> -> vector<8x256xf32>
    %316 = arith.addf %306, %315 : vector<8x256xf32>
    %c241_i32_178 = arith.constant 241 : i32
    %317 = tpu.dynamic_rotate %262 by %c241_i32_178 dim 1 : vector<8x256xf32>, i32 -> vector<8x256xf32>
    %c6_179 = arith.constant 6 : index
    %c0_180 = arith.constant 0 : index
    %c0_181 = arith.constant 0 : index
    %318 = vector.load %arg3[%c6_179, %c0_180, %c0_181] : memref<9x1x256xf32, #tpu.memory_space<vmem>>, vector<1x1x256xf32>
    %319 = vector.shape_cast %318 : vector<1x1x256xf32> to vector<1x256xf32>
    %320 = vector.broadcast %319 : vector<1x256xf32> to vector<8x256xf32>
    %321 = arith.mulf %317, %320 : vector<8x256xf32>
    %c24 = arith.constant 24 : index
    %c0_182 = arith.constant 0 : index
    %c0_183 = arith.constant 0 : index
    %322 = vector.load %arg4[%c24, %c0_182, %c0_183] : memref<54x16x16xf32, #tpu.memory_space<vmem>>, vector<1x16x16xf32>
    %323 = vector.shape_cast %322 : vector<1x16x16xf32> to vector<16x16xf32>
    %324 = vector.extract_strided_slice %323 {offsets = [0, 0], sizes = [8, 8], strides = [1, 1]} : vector<16x16xf32> to vector<8x8xf32>
    %cst_184 = arith.constant dense<0.000000e+00> : vector<8x256xf32>
    %325 = tpu.matmul %324, %321, %cst_184 {dimension_numbers = #tpu.dot_dimension_numbers<[1], [0], [0], [1], [0, 0, 1, 1], [], []>} : vector<8x8xf32>, vector<8x256xf32>, vector<8x256xf32> -> vector<8x256xf32>
    %326 = arith.addf %316, %325 : vector<8x256xf32>
    %c240_i32_185 = arith.constant 240 : i32
    %327 = tpu.dynamic_rotate %262 by %c240_i32_185 dim 1 : vector<8x256xf32>, i32 -> vector<8x256xf32>
    %c7_186 = arith.constant 7 : index
    %c0_187 = arith.constant 0 : index
    %c0_188 = arith.constant 0 : index
    %328 = vector.load %arg3[%c7_186, %c0_187, %c0_188] : memref<9x1x256xf32, #tpu.memory_space<vmem>>, vector<1x1x256xf32>
    %329 = vector.shape_cast %328 : vector<1x1x256xf32> to vector<1x256xf32>
    %330 = vector.broadcast %329 : vector<1x256xf32> to vector<8x256xf32>
    %331 = arith.mulf %327, %330 : vector<8x256xf32>
    %c25 = arith.constant 25 : index
    %c0_189 = arith.constant 0 : index
    %c0_190 = arith.constant 0 : index
    %332 = vector.load %arg4[%c25, %c0_189, %c0_190] : memref<54x16x16xf32, #tpu.memory_space<vmem>>, vector<1x16x16xf32>
    %333 = vector.shape_cast %332 : vector<1x16x16xf32> to vector<16x16xf32>
    %334 = vector.extract_strided_slice %333 {offsets = [0, 0], sizes = [8, 8], strides = [1, 1]} : vector<16x16xf32> to vector<8x8xf32>
    %cst_191 = arith.constant dense<0.000000e+00> : vector<8x256xf32>
    %335 = tpu.matmul %334, %331, %cst_191 {dimension_numbers = #tpu.dot_dimension_numbers<[1], [0], [0], [1], [0, 0, 1, 1], [], []>} : vector<8x8xf32>, vector<8x256xf32>, vector<8x256xf32> -> vector<8x256xf32>
    %336 = arith.addf %326, %335 : vector<8x256xf32>
    %c239_i32_192 = arith.constant 239 : i32
    %337 = tpu.dynamic_rotate %262 by %c239_i32_192 dim 1 : vector<8x256xf32>, i32 -> vector<8x256xf32>
    %c8_193 = arith.constant 8 : index
    %c0_194 = arith.constant 0 : index
    %c0_195 = arith.constant 0 : index
    %338 = vector.load %arg3[%c8_193, %c0_194, %c0_195] : memref<9x1x256xf32, #tpu.memory_space<vmem>>, vector<1x1x256xf32>
    %339 = vector.shape_cast %338 : vector<1x1x256xf32> to vector<1x256xf32>
    %340 = vector.broadcast %339 : vector<1x256xf32> to vector<8x256xf32>
    %341 = arith.mulf %337, %340 : vector<8x256xf32>
    %c26 = arith.constant 26 : index
    %c0_196 = arith.constant 0 : index
    %c0_197 = arith.constant 0 : index
    %342 = vector.load %arg4[%c26, %c0_196, %c0_197] : memref<54x16x16xf32, #tpu.memory_space<vmem>>, vector<1x16x16xf32>
    %343 = vector.shape_cast %342 : vector<1x16x16xf32> to vector<16x16xf32>
    %344 = vector.extract_strided_slice %343 {offsets = [0, 0], sizes = [8, 8], strides = [1, 1]} : vector<16x16xf32> to vector<8x8xf32>
    %cst_198 = arith.constant dense<0.000000e+00> : vector<8x256xf32>
    %345 = tpu.matmul %344, %341, %cst_198 {dimension_numbers = #tpu.dot_dimension_numbers<[1], [0], [0], [1], [0, 0, 1, 1], [], []>} : vector<8x8xf32>, vector<8x256xf32>, vector<8x256xf32> -> vector<8x256xf32>
    %346 = arith.addf %336, %345 : vector<8x256xf32>
    %c0_199 = arith.constant 0 : index
    %c4_200 = arith.constant 4 : index
    %347 = vector.load %arg5[%c0_199, %c4_200] : memref<16x12xf32, #tpu.memory_space<vmem>>, vector<8x1xf32>
    %c0_201 = arith.constant 0 : index
    %c5_202 = arith.constant 5 : index
    %348 = vector.load %arg5[%c0_201, %c5_202] : memref<16x12xf32, #tpu.memory_space<vmem>>, vector<8x1xf32>
    %349 = vector.shape_cast %346 : vector<8x256xf32> to vector<1x8x256xf32>
    %cst_203 = arith.constant dense<0.000000e+00> : vector<1xf32>
    %350 = vector.multi_reduction <add>, %349, %cst_203 [1, 2] : vector<1x8x256xf32> to vector<1xf32>
    %351 = vector.shape_cast %350 : vector<1xf32> to vector<1x1x1xf32>
    %352 = vector.extract %351[0, 0, 0] : f32 from vector<1x1x1xf32>
    %353 = vector.broadcast %352 : f32 to vector<1x1xf32>
    %354 = arith.mulf %346, %346 : vector<8x256xf32>
    %355 = vector.shape_cast %354 : vector<8x256xf32> to vector<1x8x256xf32>
    %cst_204 = arith.constant dense<0.000000e+00> : vector<1xf32>
    %356 = vector.multi_reduction <add>, %355, %cst_204 [1, 2] : vector<1x8x256xf32> to vector<1xf32>
    %357 = vector.shape_cast %356 : vector<1xf32> to vector<1x1x1xf32>
    %358 = vector.extract %357[0, 0, 0] : f32 from vector<1x1x1xf32>
    %359 = vector.broadcast %358 : f32 to vector<1x1xf32>
    %cst_205 = arith.constant 4.8828125E-4 : f32
    %360 = vector.broadcast %cst_205 : f32 to vector<1x1xf32>
    %361 = arith.mulf %353, %360 : vector<1x1xf32>
    %cst_206 = arith.constant 4.8828125E-4 : f32
    %362 = vector.broadcast %cst_206 : f32 to vector<1x1xf32>
    %363 = arith.mulf %359, %362 : vector<1x1xf32>
    %364 = arith.mulf %361, %361 : vector<1x1xf32>
    %365 = arith.subf %363, %364 : vector<1x1xf32>
    %cst_207 = arith.constant 0.000000e+00 : f32
    %366 = vector.broadcast %cst_207 : f32 to vector<1x1xf32>
    %367 = arith.maximumf %365, %366 : vector<1x1xf32>
    %cst_208 = arith.constant 9.99999974E-6 : f32
    %368 = vector.broadcast %cst_208 : f32 to vector<1x1xf32>
    %369 = arith.addf %367, %368 : vector<1x1xf32>
    %370 = math.rsqrt %369 : vector<1x1xf32>
    %371 = vector.broadcast %370 : vector<1x1xf32> to vector<8x1xf32>
    %372 = arith.mulf %347, %371 : vector<8x1xf32>
    %373 = vector.broadcast %361 : vector<1x1xf32> to vector<8x1xf32>
    %374 = arith.mulf %373, %372 : vector<8x1xf32>
    %375 = arith.subf %348, %374 : vector<8x1xf32>
    %376 = vector.broadcast %372 : vector<8x1xf32> to vector<8x256xf32>
    %377 = arith.mulf %346, %376 : vector<8x256xf32>
    %378 = vector.broadcast %375 : vector<8x1xf32> to vector<8x256xf32>
    %379 = arith.addf %377, %378 : vector<8x256xf32>
    %380 = arith.mulf %379, %379 : vector<8x256xf32>
    %381 = arith.mulf %379, %380 : vector<8x256xf32>
    %cst_209 = arith.constant 4.471500e-02 : f32
    %382 = vector.broadcast %cst_209 : f32 to vector<8x256xf32>
    %383 = arith.mulf %382, %381 : vector<8x256xf32>
    %384 = arith.addf %379, %383 : vector<8x256xf32>
    %cst_210 = arith.constant 0.797884583 : f32
    %385 = vector.broadcast %cst_210 : f32 to vector<8x256xf32>
    %386 = arith.mulf %385, %384 : vector<8x256xf32>
    %387 = math.tanh %386 : vector<8x256xf32>
    %cst_211 = arith.constant 1.000000e+00 : f32
    %388 = vector.broadcast %cst_211 : f32 to vector<8x256xf32>
    %389 = arith.addf %388, %387 : vector<8x256xf32>
    %cst_212 = arith.constant 5.000000e-01 : f32
    %390 = vector.broadcast %cst_212 : f32 to vector<8x256xf32>
    %391 = arith.mulf %390, %389 : vector<8x256xf32>
    %392 = arith.mulf %379, %391 : vector<8x256xf32>
    %c17_i32_213 = arith.constant 17 : i32
    %393 = tpu.dynamic_rotate %392 by %c17_i32_213 dim 1 : vector<8x256xf32>, i32 -> vector<8x256xf32>
    %c0_214 = arith.constant 0 : index
    %c0_215 = arith.constant 0 : index
    %c0_216 = arith.constant 0 : index
    %394 = vector.load %arg3[%c0_214, %c0_215, %c0_216] : memref<9x1x256xf32, #tpu.memory_space<vmem>>, vector<1x1x256xf32>
    %395 = vector.shape_cast %394 : vector<1x1x256xf32> to vector<1x256xf32>
    %396 = vector.broadcast %395 : vector<1x256xf32> to vector<8x256xf32>
    %397 = arith.mulf %393, %396 : vector<8x256xf32>
    %c27 = arith.constant 27 : index
    %c0_217 = arith.constant 0 : index
    %c0_218 = arith.constant 0 : index
    %398 = vector.load %arg4[%c27, %c0_217, %c0_218] : memref<54x16x16xf32, #tpu.memory_space<vmem>>, vector<1x16x16xf32>
    %399 = vector.shape_cast %398 : vector<1x16x16xf32> to vector<16x16xf32>
    %400 = vector.extract_strided_slice %399 {offsets = [0, 0], sizes = [8, 8], strides = [1, 1]} : vector<16x16xf32> to vector<8x8xf32>
    %cst_219 = arith.constant dense<0.000000e+00> : vector<8x256xf32>
    %401 = tpu.matmul %400, %397, %cst_219 {dimension_numbers = #tpu.dot_dimension_numbers<[1], [0], [0], [1], [0, 0, 1, 1], [], []>} : vector<8x8xf32>, vector<8x256xf32>, vector<8x256xf32> -> vector<8x256xf32>
    %c16_i32_220 = arith.constant 16 : i32
    %402 = tpu.dynamic_rotate %392 by %c16_i32_220 dim 1 : vector<8x256xf32>, i32 -> vector<8x256xf32>
    %c1_221 = arith.constant 1 : index
    %c0_222 = arith.constant 0 : index
    %c0_223 = arith.constant 0 : index
    %403 = vector.load %arg3[%c1_221, %c0_222, %c0_223] : memref<9x1x256xf32, #tpu.memory_space<vmem>>, vector<1x1x256xf32>
    %404 = vector.shape_cast %403 : vector<1x1x256xf32> to vector<1x256xf32>
    %405 = vector.broadcast %404 : vector<1x256xf32> to vector<8x256xf32>
    %406 = arith.mulf %402, %405 : vector<8x256xf32>
    %c28 = arith.constant 28 : index
    %c0_224 = arith.constant 0 : index
    %c0_225 = arith.constant 0 : index
    %407 = vector.load %arg4[%c28, %c0_224, %c0_225] : memref<54x16x16xf32, #tpu.memory_space<vmem>>, vector<1x16x16xf32>
    %408 = vector.shape_cast %407 : vector<1x16x16xf32> to vector<16x16xf32>
    %409 = vector.extract_strided_slice %408 {offsets = [0, 0], sizes = [8, 8], strides = [1, 1]} : vector<16x16xf32> to vector<8x8xf32>
    %cst_226 = arith.constant dense<0.000000e+00> : vector<8x256xf32>
    %410 = tpu.matmul %409, %406, %cst_226 {dimension_numbers = #tpu.dot_dimension_numbers<[1], [0], [0], [1], [0, 0, 1, 1], [], []>} : vector<8x8xf32>, vector<8x256xf32>, vector<8x256xf32> -> vector<8x256xf32>
    %411 = arith.addf %401, %410 : vector<8x256xf32>
    %c15_i32_227 = arith.constant 15 : i32
    %412 = tpu.dynamic_rotate %392 by %c15_i32_227 dim 1 : vector<8x256xf32>, i32 -> vector<8x256xf32>
    %c2_228 = arith.constant 2 : index
    %c0_229 = arith.constant 0 : index
    %c0_230 = arith.constant 0 : index
    %413 = vector.load %arg3[%c2_228, %c0_229, %c0_230] : memref<9x1x256xf32, #tpu.memory_space<vmem>>, vector<1x1x256xf32>
    %414 = vector.shape_cast %413 : vector<1x1x256xf32> to vector<1x256xf32>
    %415 = vector.broadcast %414 : vector<1x256xf32> to vector<8x256xf32>
    %416 = arith.mulf %412, %415 : vector<8x256xf32>
    %c29 = arith.constant 29 : index
    %c0_231 = arith.constant 0 : index
    %c0_232 = arith.constant 0 : index
    %417 = vector.load %arg4[%c29, %c0_231, %c0_232] : memref<54x16x16xf32, #tpu.memory_space<vmem>>, vector<1x16x16xf32>
    %418 = vector.shape_cast %417 : vector<1x16x16xf32> to vector<16x16xf32>
    %419 = vector.extract_strided_slice %418 {offsets = [0, 0], sizes = [8, 8], strides = [1, 1]} : vector<16x16xf32> to vector<8x8xf32>
    %cst_233 = arith.constant dense<0.000000e+00> : vector<8x256xf32>
    %420 = tpu.matmul %419, %416, %cst_233 {dimension_numbers = #tpu.dot_dimension_numbers<[1], [0], [0], [1], [0, 0, 1, 1], [], []>} : vector<8x8xf32>, vector<8x256xf32>, vector<8x256xf32> -> vector<8x256xf32>
    %421 = arith.addf %411, %420 : vector<8x256xf32>
    %c1_i32_234 = arith.constant 1 : i32
    %422 = tpu.dynamic_rotate %392 by %c1_i32_234 dim 1 : vector<8x256xf32>, i32 -> vector<8x256xf32>
    %c3_235 = arith.constant 3 : index
    %c0_236 = arith.constant 0 : index
    %c0_237 = arith.constant 0 : index
    %423 = vector.load %arg3[%c3_235, %c0_236, %c0_237] : memref<9x1x256xf32, #tpu.memory_space<vmem>>, vector<1x1x256xf32>
    %424 = vector.shape_cast %423 : vector<1x1x256xf32> to vector<1x256xf32>
    %425 = vector.broadcast %424 : vector<1x256xf32> to vector<8x256xf32>
    %426 = arith.mulf %422, %425 : vector<8x256xf32>
    %c30 = arith.constant 30 : index
    %c0_238 = arith.constant 0 : index
    %c0_239 = arith.constant 0 : index
    %427 = vector.load %arg4[%c30, %c0_238, %c0_239] : memref<54x16x16xf32, #tpu.memory_space<vmem>>, vector<1x16x16xf32>
    %428 = vector.shape_cast %427 : vector<1x16x16xf32> to vector<16x16xf32>
    %429 = vector.extract_strided_slice %428 {offsets = [0, 0], sizes = [8, 8], strides = [1, 1]} : vector<16x16xf32> to vector<8x8xf32>
    %cst_240 = arith.constant dense<0.000000e+00> : vector<8x256xf32>
    %430 = tpu.matmul %429, %426, %cst_240 {dimension_numbers = #tpu.dot_dimension_numbers<[1], [0], [0], [1], [0, 0, 1, 1], [], []>} : vector<8x8xf32>, vector<8x256xf32>, vector<8x256xf32> -> vector<8x256xf32>
    %431 = arith.addf %421, %430 : vector<8x256xf32>
    %c31 = arith.constant 31 : index
    %c0_241 = arith.constant 0 : index
    %c0_242 = arith.constant 0 : index
    %432 = vector.load %arg4[%c31, %c0_241, %c0_242] : memref<54x16x16xf32, #tpu.memory_space<vmem>>, vector<1x16x16xf32>
    %433 = vector.shape_cast %432 : vector<1x16x16xf32> to vector<16x16xf32>
    %434 = vector.extract_strided_slice %433 {offsets = [0, 0], sizes = [8, 8], strides = [1, 1]} : vector<16x16xf32> to vector<8x8xf32>
    %cst_243 = arith.constant dense<0.000000e+00> : vector<8x256xf32>
    %435 = tpu.matmul %434, %392, %cst_243 {dimension_numbers = #tpu.dot_dimension_numbers<[1], [0], [0], [1], [0, 0, 1, 1], [], []>} : vector<8x8xf32>, vector<8x256xf32>, vector<8x256xf32> -> vector<8x256xf32>
    %436 = arith.addf %431, %435 : vector<8x256xf32>
    %c255_i32_244 = arith.constant 255 : i32
    %437 = tpu.dynamic_rotate %392 by %c255_i32_244 dim 1 : vector<8x256xf32>, i32 -> vector<8x256xf32>
    %c5_245 = arith.constant 5 : index
    %c0_246 = arith.constant 0 : index
    %c0_247 = arith.constant 0 : index
    %438 = vector.load %arg3[%c5_245, %c0_246, %c0_247] : memref<9x1x256xf32, #tpu.memory_space<vmem>>, vector<1x1x256xf32>
    %439 = vector.shape_cast %438 : vector<1x1x256xf32> to vector<1x256xf32>
    %440 = vector.broadcast %439 : vector<1x256xf32> to vector<8x256xf32>
    %441 = arith.mulf %437, %440 : vector<8x256xf32>
    %c32 = arith.constant 32 : index
    %c0_248 = arith.constant 0 : index
    %c0_249 = arith.constant 0 : index
    %442 = vector.load %arg4[%c32, %c0_248, %c0_249] : memref<54x16x16xf32, #tpu.memory_space<vmem>>, vector<1x16x16xf32>
    %443 = vector.shape_cast %442 : vector<1x16x16xf32> to vector<16x16xf32>
    %444 = vector.extract_strided_slice %443 {offsets = [0, 0], sizes = [8, 8], strides = [1, 1]} : vector<16x16xf32> to vector<8x8xf32>
    %cst_250 = arith.constant dense<0.000000e+00> : vector<8x256xf32>
    %445 = tpu.matmul %444, %441, %cst_250 {dimension_numbers = #tpu.dot_dimension_numbers<[1], [0], [0], [1], [0, 0, 1, 1], [], []>} : vector<8x8xf32>, vector<8x256xf32>, vector<8x256xf32> -> vector<8x256xf32>
    %446 = arith.addf %436, %445 : vector<8x256xf32>
    %c241_i32_251 = arith.constant 241 : i32
    %447 = tpu.dynamic_rotate %392 by %c241_i32_251 dim 1 : vector<8x256xf32>, i32 -> vector<8x256xf32>
    %c6_252 = arith.constant 6 : index
    %c0_253 = arith.constant 0 : index
    %c0_254 = arith.constant 0 : index
    %448 = vector.load %arg3[%c6_252, %c0_253, %c0_254] : memref<9x1x256xf32, #tpu.memory_space<vmem>>, vector<1x1x256xf32>
    %449 = vector.shape_cast %448 : vector<1x1x256xf32> to vector<1x256xf32>
    %450 = vector.broadcast %449 : vector<1x256xf32> to vector<8x256xf32>
    %451 = arith.mulf %447, %450 : vector<8x256xf32>
    %c33 = arith.constant 33 : index
    %c0_255 = arith.constant 0 : index
    %c0_256 = arith.constant 0 : index
    %452 = vector.load %arg4[%c33, %c0_255, %c0_256] : memref<54x16x16xf32, #tpu.memory_space<vmem>>, vector<1x16x16xf32>
    %453 = vector.shape_cast %452 : vector<1x16x16xf32> to vector<16x16xf32>
    %454 = vector.extract_strided_slice %453 {offsets = [0, 0], sizes = [8, 8], strides = [1, 1]} : vector<16x16xf32> to vector<8x8xf32>
    %cst_257 = arith.constant dense<0.000000e+00> : vector<8x256xf32>
    %455 = tpu.matmul %454, %451, %cst_257 {dimension_numbers = #tpu.dot_dimension_numbers<[1], [0], [0], [1], [0, 0, 1, 1], [], []>} : vector<8x8xf32>, vector<8x256xf32>, vector<8x256xf32> -> vector<8x256xf32>
    %456 = arith.addf %446, %455 : vector<8x256xf32>
    %c240_i32_258 = arith.constant 240 : i32
    %457 = tpu.dynamic_rotate %392 by %c240_i32_258 dim 1 : vector<8x256xf32>, i32 -> vector<8x256xf32>
    %c7_259 = arith.constant 7 : index
    %c0_260 = arith.constant 0 : index
    %c0_261 = arith.constant 0 : index
    %458 = vector.load %arg3[%c7_259, %c0_260, %c0_261] : memref<9x1x256xf32, #tpu.memory_space<vmem>>, vector<1x1x256xf32>
    %459 = vector.shape_cast %458 : vector<1x1x256xf32> to vector<1x256xf32>
    %460 = vector.broadcast %459 : vector<1x256xf32> to vector<8x256xf32>
    %461 = arith.mulf %457, %460 : vector<8x256xf32>
    %c34 = arith.constant 34 : index
    %c0_262 = arith.constant 0 : index
    %c0_263 = arith.constant 0 : index
    %462 = vector.load %arg4[%c34, %c0_262, %c0_263] : memref<54x16x16xf32, #tpu.memory_space<vmem>>, vector<1x16x16xf32>
    %463 = vector.shape_cast %462 : vector<1x16x16xf32> to vector<16x16xf32>
    %464 = vector.extract_strided_slice %463 {offsets = [0, 0], sizes = [8, 8], strides = [1, 1]} : vector<16x16xf32> to vector<8x8xf32>
    %cst_264 = arith.constant dense<0.000000e+00> : vector<8x256xf32>
    %465 = tpu.matmul %464, %461, %cst_264 {dimension_numbers = #tpu.dot_dimension_numbers<[1], [0], [0], [1], [0, 0, 1, 1], [], []>} : vector<8x8xf32>, vector<8x256xf32>, vector<8x256xf32> -> vector<8x256xf32>
    %466 = arith.addf %456, %465 : vector<8x256xf32>
    %c239_i32_265 = arith.constant 239 : i32
    %467 = tpu.dynamic_rotate %392 by %c239_i32_265 dim 1 : vector<8x256xf32>, i32 -> vector<8x256xf32>
    %c8_266 = arith.constant 8 : index
    %c0_267 = arith.constant 0 : index
    %c0_268 = arith.constant 0 : index
    %468 = vector.load %arg3[%c8_266, %c0_267, %c0_268] : memref<9x1x256xf32, #tpu.memory_space<vmem>>, vector<1x1x256xf32>
    %469 = vector.shape_cast %468 : vector<1x1x256xf32> to vector<1x256xf32>
    %470 = vector.broadcast %469 : vector<1x256xf32> to vector<8x256xf32>
    %471 = arith.mulf %467, %470 : vector<8x256xf32>
    %c35 = arith.constant 35 : index
    %c0_269 = arith.constant 0 : index
    %c0_270 = arith.constant 0 : index
    %472 = vector.load %arg4[%c35, %c0_269, %c0_270] : memref<54x16x16xf32, #tpu.memory_space<vmem>>, vector<1x16x16xf32>
    %473 = vector.shape_cast %472 : vector<1x16x16xf32> to vector<16x16xf32>
    %474 = vector.extract_strided_slice %473 {offsets = [0, 0], sizes = [8, 8], strides = [1, 1]} : vector<16x16xf32> to vector<8x8xf32>
    %cst_271 = arith.constant dense<0.000000e+00> : vector<8x256xf32>
    %475 = tpu.matmul %474, %471, %cst_271 {dimension_numbers = #tpu.dot_dimension_numbers<[1], [0], [0], [1], [0, 0, 1, 1], [], []>} : vector<8x8xf32>, vector<8x256xf32>, vector<8x256xf32> -> vector<8x256xf32>
    %476 = arith.addf %466, %475 : vector<8x256xf32>
    %c0_272 = arith.constant 0 : index
    %c6_273 = arith.constant 6 : index
    %477 = vector.load %arg5[%c0_272, %c6_273] : memref<16x12xf32, #tpu.memory_space<vmem>>, vector<8x1xf32>
    %c0_274 = arith.constant 0 : index
    %c7_275 = arith.constant 7 : index
    %478 = vector.load %arg5[%c0_274, %c7_275] : memref<16x12xf32, #tpu.memory_space<vmem>>, vector<8x1xf32>
    %479 = vector.shape_cast %476 : vector<8x256xf32> to vector<1x8x256xf32>
    %cst_276 = arith.constant dense<0.000000e+00> : vector<1xf32>
    %480 = vector.multi_reduction <add>, %479, %cst_276 [1, 2] : vector<1x8x256xf32> to vector<1xf32>
    %481 = vector.shape_cast %480 : vector<1xf32> to vector<1x1x1xf32>
    %482 = vector.extract %481[0, 0, 0] : f32 from vector<1x1x1xf32>
    %483 = vector.broadcast %482 : f32 to vector<1x1xf32>
    %484 = arith.mulf %476, %476 : vector<8x256xf32>
    %485 = vector.shape_cast %484 : vector<8x256xf32> to vector<1x8x256xf32>
    %cst_277 = arith.constant dense<0.000000e+00> : vector<1xf32>
    %486 = vector.multi_reduction <add>, %485, %cst_277 [1, 2] : vector<1x8x256xf32> to vector<1xf32>
    %487 = vector.shape_cast %486 : vector<1xf32> to vector<1x1x1xf32>
    %488 = vector.extract %487[0, 0, 0] : f32 from vector<1x1x1xf32>
    %489 = vector.broadcast %488 : f32 to vector<1x1xf32>
    %cst_278 = arith.constant 4.8828125E-4 : f32
    %490 = vector.broadcast %cst_278 : f32 to vector<1x1xf32>
    %491 = arith.mulf %483, %490 : vector<1x1xf32>
    %cst_279 = arith.constant 4.8828125E-4 : f32
    %492 = vector.broadcast %cst_279 : f32 to vector<1x1xf32>
    %493 = arith.mulf %489, %492 : vector<1x1xf32>
    %494 = arith.mulf %491, %491 : vector<1x1xf32>
    %495 = arith.subf %493, %494 : vector<1x1xf32>
    %cst_280 = arith.constant 0.000000e+00 : f32
    %496 = vector.broadcast %cst_280 : f32 to vector<1x1xf32>
    %497 = arith.maximumf %495, %496 : vector<1x1xf32>
    %cst_281 = arith.constant 9.99999974E-6 : f32
    %498 = vector.broadcast %cst_281 : f32 to vector<1x1xf32>
    %499 = arith.addf %497, %498 : vector<1x1xf32>
    %500 = math.rsqrt %499 : vector<1x1xf32>
    %501 = vector.broadcast %500 : vector<1x1xf32> to vector<8x1xf32>
    %502 = arith.mulf %477, %501 : vector<8x1xf32>
    %503 = vector.broadcast %491 : vector<1x1xf32> to vector<8x1xf32>
    %504 = arith.mulf %503, %502 : vector<8x1xf32>
    %505 = arith.subf %478, %504 : vector<8x1xf32>
    %506 = vector.broadcast %502 : vector<8x1xf32> to vector<8x256xf32>
    %507 = arith.mulf %476, %506 : vector<8x256xf32>
    %508 = vector.broadcast %505 : vector<8x1xf32> to vector<8x256xf32>
    %509 = arith.addf %507, %508 : vector<8x256xf32>
    %c17_i32_282 = arith.constant 17 : i32
    %510 = tpu.dynamic_rotate %509 by %c17_i32_282 dim 1 : vector<8x256xf32>, i32 -> vector<8x256xf32>
    %c0_283 = arith.constant 0 : index
    %c0_284 = arith.constant 0 : index
    %c0_285 = arith.constant 0 : index
    %511 = vector.load %arg3[%c0_283, %c0_284, %c0_285] : memref<9x1x256xf32, #tpu.memory_space<vmem>>, vector<1x1x256xf32>
    %512 = vector.shape_cast %511 : vector<1x1x256xf32> to vector<1x256xf32>
    %513 = vector.broadcast %512 : vector<1x256xf32> to vector<8x256xf32>
    %514 = arith.mulf %510, %513 : vector<8x256xf32>
    %c36 = arith.constant 36 : index
    %c0_286 = arith.constant 0 : index
    %c0_287 = arith.constant 0 : index
    %515 = vector.load %arg4[%c36, %c0_286, %c0_287] : memref<54x16x16xf32, #tpu.memory_space<vmem>>, vector<1x16x16xf32>
    %516 = vector.shape_cast %515 : vector<1x16x16xf32> to vector<16x16xf32>
    %517 = vector.extract_strided_slice %516 {offsets = [0, 0], sizes = [16, 8], strides = [1, 1]} : vector<16x16xf32> to vector<16x8xf32>
    %cst_288 = arith.constant dense<0.000000e+00> : vector<16x256xf32>
    %518 = tpu.matmul %517, %514, %cst_288 {dimension_numbers = #tpu.dot_dimension_numbers<[1], [0], [0], [1], [0, 0, 1, 1], [], []>} : vector<16x8xf32>, vector<8x256xf32>, vector<16x256xf32> -> vector<16x256xf32>
    %c16_i32_289 = arith.constant 16 : i32
    %519 = tpu.dynamic_rotate %509 by %c16_i32_289 dim 1 : vector<8x256xf32>, i32 -> vector<8x256xf32>
    %c1_290 = arith.constant 1 : index
    %c0_291 = arith.constant 0 : index
    %c0_292 = arith.constant 0 : index
    %520 = vector.load %arg3[%c1_290, %c0_291, %c0_292] : memref<9x1x256xf32, #tpu.memory_space<vmem>>, vector<1x1x256xf32>
    %521 = vector.shape_cast %520 : vector<1x1x256xf32> to vector<1x256xf32>
    %522 = vector.broadcast %521 : vector<1x256xf32> to vector<8x256xf32>
    %523 = arith.mulf %519, %522 : vector<8x256xf32>
    %c37 = arith.constant 37 : index
    %c0_293 = arith.constant 0 : index
    %c0_294 = arith.constant 0 : index
    %524 = vector.load %arg4[%c37, %c0_293, %c0_294] : memref<54x16x16xf32, #tpu.memory_space<vmem>>, vector<1x16x16xf32>
    %525 = vector.shape_cast %524 : vector<1x16x16xf32> to vector<16x16xf32>
    %526 = vector.extract_strided_slice %525 {offsets = [0, 0], sizes = [16, 8], strides = [1, 1]} : vector<16x16xf32> to vector<16x8xf32>
    %cst_295 = arith.constant dense<0.000000e+00> : vector<16x256xf32>
    %527 = tpu.matmul %526, %523, %cst_295 {dimension_numbers = #tpu.dot_dimension_numbers<[1], [0], [0], [1], [0, 0, 1, 1], [], []>} : vector<16x8xf32>, vector<8x256xf32>, vector<16x256xf32> -> vector<16x256xf32>
    %528 = arith.addf %518, %527 : vector<16x256xf32>
    %c15_i32_296 = arith.constant 15 : i32
    %529 = tpu.dynamic_rotate %509 by %c15_i32_296 dim 1 : vector<8x256xf32>, i32 -> vector<8x256xf32>
    %c2_297 = arith.constant 2 : index
    %c0_298 = arith.constant 0 : index
    %c0_299 = arith.constant 0 : index
    %530 = vector.load %arg3[%c2_297, %c0_298, %c0_299] : memref<9x1x256xf32, #tpu.memory_space<vmem>>, vector<1x1x256xf32>
    %531 = vector.shape_cast %530 : vector<1x1x256xf32> to vector<1x256xf32>
    %532 = vector.broadcast %531 : vector<1x256xf32> to vector<8x256xf32>
    %533 = arith.mulf %529, %532 : vector<8x256xf32>
    %c38 = arith.constant 38 : index
    %c0_300 = arith.constant 0 : index
    %c0_301 = arith.constant 0 : index
    %534 = vector.load %arg4[%c38, %c0_300, %c0_301] : memref<54x16x16xf32, #tpu.memory_space<vmem>>, vector<1x16x16xf32>
    %535 = vector.shape_cast %534 : vector<1x16x16xf32> to vector<16x16xf32>
    %536 = vector.extract_strided_slice %535 {offsets = [0, 0], sizes = [16, 8], strides = [1, 1]} : vector<16x16xf32> to vector<16x8xf32>
    %cst_302 = arith.constant dense<0.000000e+00> : vector<16x256xf32>
    %537 = tpu.matmul %536, %533, %cst_302 {dimension_numbers = #tpu.dot_dimension_numbers<[1], [0], [0], [1], [0, 0, 1, 1], [], []>} : vector<16x8xf32>, vector<8x256xf32>, vector<16x256xf32> -> vector<16x256xf32>
    %538 = arith.addf %528, %537 : vector<16x256xf32>
    %c1_i32_303 = arith.constant 1 : i32
    %539 = tpu.dynamic_rotate %509 by %c1_i32_303 dim 1 : vector<8x256xf32>, i32 -> vector<8x256xf32>
    %c3_304 = arith.constant 3 : index
    %c0_305 = arith.constant 0 : index
    %c0_306 = arith.constant 0 : index
    %540 = vector.load %arg3[%c3_304, %c0_305, %c0_306] : memref<9x1x256xf32, #tpu.memory_space<vmem>>, vector<1x1x256xf32>
    %541 = vector.shape_cast %540 : vector<1x1x256xf32> to vector<1x256xf32>
    %542 = vector.broadcast %541 : vector<1x256xf32> to vector<8x256xf32>
    %543 = arith.mulf %539, %542 : vector<8x256xf32>
    %c39 = arith.constant 39 : index
    %c0_307 = arith.constant 0 : index
    %c0_308 = arith.constant 0 : index
    %544 = vector.load %arg4[%c39, %c0_307, %c0_308] : memref<54x16x16xf32, #tpu.memory_space<vmem>>, vector<1x16x16xf32>
    %545 = vector.shape_cast %544 : vector<1x16x16xf32> to vector<16x16xf32>
    %546 = vector.extract_strided_slice %545 {offsets = [0, 0], sizes = [16, 8], strides = [1, 1]} : vector<16x16xf32> to vector<16x8xf32>
    %cst_309 = arith.constant dense<0.000000e+00> : vector<16x256xf32>
    %547 = tpu.matmul %546, %543, %cst_309 {dimension_numbers = #tpu.dot_dimension_numbers<[1], [0], [0], [1], [0, 0, 1, 1], [], []>} : vector<16x8xf32>, vector<8x256xf32>, vector<16x256xf32> -> vector<16x256xf32>
    %548 = arith.addf %538, %547 : vector<16x256xf32>
    %c40 = arith.constant 40 : index
    %c0_310 = arith.constant 0 : index
    %c0_311 = arith.constant 0 : index
    %549 = vector.load %arg4[%c40, %c0_310, %c0_311] : memref<54x16x16xf32, #tpu.memory_space<vmem>>, vector<1x16x16xf32>
    %550 = vector.shape_cast %549 : vector<1x16x16xf32> to vector<16x16xf32>
    %551 = vector.extract_strided_slice %550 {offsets = [0, 0], sizes = [16, 8], strides = [1, 1]} : vector<16x16xf32> to vector<16x8xf32>
    %cst_312 = arith.constant dense<0.000000e+00> : vector<16x256xf32>
    %552 = tpu.matmul %551, %509, %cst_312 {dimension_numbers = #tpu.dot_dimension_numbers<[1], [0], [0], [1], [0, 0, 1, 1], [], []>} : vector<16x8xf32>, vector<8x256xf32>, vector<16x256xf32> -> vector<16x256xf32>
    %553 = arith.addf %548, %552 : vector<16x256xf32>
    %c255_i32_313 = arith.constant 255 : i32
    %554 = tpu.dynamic_rotate %509 by %c255_i32_313 dim 1 : vector<8x256xf32>, i32 -> vector<8x256xf32>
    %c5_314 = arith.constant 5 : index
    %c0_315 = arith.constant 0 : index
    %c0_316 = arith.constant 0 : index
    %555 = vector.load %arg3[%c5_314, %c0_315, %c0_316] : memref<9x1x256xf32, #tpu.memory_space<vmem>>, vector<1x1x256xf32>
    %556 = vector.shape_cast %555 : vector<1x1x256xf32> to vector<1x256xf32>
    %557 = vector.broadcast %556 : vector<1x256xf32> to vector<8x256xf32>
    %558 = arith.mulf %554, %557 : vector<8x256xf32>
    %c41 = arith.constant 41 : index
    %c0_317 = arith.constant 0 : index
    %c0_318 = arith.constant 0 : index
    %559 = vector.load %arg4[%c41, %c0_317, %c0_318] : memref<54x16x16xf32, #tpu.memory_space<vmem>>, vector<1x16x16xf32>
    %560 = vector.shape_cast %559 : vector<1x16x16xf32> to vector<16x16xf32>
    %561 = vector.extract_strided_slice %560 {offsets = [0, 0], sizes = [16, 8], strides = [1, 1]} : vector<16x16xf32> to vector<16x8xf32>
    %cst_319 = arith.constant dense<0.000000e+00> : vector<16x256xf32>
    %562 = tpu.matmul %561, %558, %cst_319 {dimension_numbers = #tpu.dot_dimension_numbers<[1], [0], [0], [1], [0, 0, 1, 1], [], []>} : vector<16x8xf32>, vector<8x256xf32>, vector<16x256xf32> -> vector<16x256xf32>
    %563 = arith.addf %553, %562 : vector<16x256xf32>
    %c241_i32_320 = arith.constant 241 : i32
    %564 = tpu.dynamic_rotate %509 by %c241_i32_320 dim 1 : vector<8x256xf32>, i32 -> vector<8x256xf32>
    %c6_321 = arith.constant 6 : index
    %c0_322 = arith.constant 0 : index
    %c0_323 = arith.constant 0 : index
    %565 = vector.load %arg3[%c6_321, %c0_322, %c0_323] : memref<9x1x256xf32, #tpu.memory_space<vmem>>, vector<1x1x256xf32>
    %566 = vector.shape_cast %565 : vector<1x1x256xf32> to vector<1x256xf32>
    %567 = vector.broadcast %566 : vector<1x256xf32> to vector<8x256xf32>
    %568 = arith.mulf %564, %567 : vector<8x256xf32>
    %c42 = arith.constant 42 : index
    %c0_324 = arith.constant 0 : index
    %c0_325 = arith.constant 0 : index
    %569 = vector.load %arg4[%c42, %c0_324, %c0_325] : memref<54x16x16xf32, #tpu.memory_space<vmem>>, vector<1x16x16xf32>
    %570 = vector.shape_cast %569 : vector<1x16x16xf32> to vector<16x16xf32>
    %571 = vector.extract_strided_slice %570 {offsets = [0, 0], sizes = [16, 8], strides = [1, 1]} : vector<16x16xf32> to vector<16x8xf32>
    %cst_326 = arith.constant dense<0.000000e+00> : vector<16x256xf32>
    %572 = tpu.matmul %571, %568, %cst_326 {dimension_numbers = #tpu.dot_dimension_numbers<[1], [0], [0], [1], [0, 0, 1, 1], [], []>} : vector<16x8xf32>, vector<8x256xf32>, vector<16x256xf32> -> vector<16x256xf32>
    %573 = arith.addf %563, %572 : vector<16x256xf32>
    %c240_i32_327 = arith.constant 240 : i32
    %574 = tpu.dynamic_rotate %509 by %c240_i32_327 dim 1 : vector<8x256xf32>, i32 -> vector<8x256xf32>
    %c7_328 = arith.constant 7 : index
    %c0_329 = arith.constant 0 : index
    %c0_330 = arith.constant 0 : index
    %575 = vector.load %arg3[%c7_328, %c0_329, %c0_330] : memref<9x1x256xf32, #tpu.memory_space<vmem>>, vector<1x1x256xf32>
    %576 = vector.shape_cast %575 : vector<1x1x256xf32> to vector<1x256xf32>
    %577 = vector.broadcast %576 : vector<1x256xf32> to vector<8x256xf32>
    %578 = arith.mulf %574, %577 : vector<8x256xf32>
    %c43 = arith.constant 43 : index
    %c0_331 = arith.constant 0 : index
    %c0_332 = arith.constant 0 : index
    %579 = vector.load %arg4[%c43, %c0_331, %c0_332] : memref<54x16x16xf32, #tpu.memory_space<vmem>>, vector<1x16x16xf32>
    %580 = vector.shape_cast %579 : vector<1x16x16xf32> to vector<16x16xf32>
    %581 = vector.extract_strided_slice %580 {offsets = [0, 0], sizes = [16, 8], strides = [1, 1]} : vector<16x16xf32> to vector<16x8xf32>
    %cst_333 = arith.constant dense<0.000000e+00> : vector<16x256xf32>
    %582 = tpu.matmul %581, %578, %cst_333 {dimension_numbers = #tpu.dot_dimension_numbers<[1], [0], [0], [1], [0, 0, 1, 1], [], []>} : vector<16x8xf32>, vector<8x256xf32>, vector<16x256xf32> -> vector<16x256xf32>
    %583 = arith.addf %573, %582 : vector<16x256xf32>
    %c239_i32_334 = arith.constant 239 : i32
    %584 = tpu.dynamic_rotate %509 by %c239_i32_334 dim 1 : vector<8x256xf32>, i32 -> vector<8x256xf32>
    %c8_335 = arith.constant 8 : index
    %c0_336 = arith.constant 0 : index
    %c0_337 = arith.constant 0 : index
    %585 = vector.load %arg3[%c8_335, %c0_336, %c0_337] : memref<9x1x256xf32, #tpu.memory_space<vmem>>, vector<1x1x256xf32>
    %586 = vector.shape_cast %585 : vector<1x1x256xf32> to vector<1x256xf32>
    %587 = vector.broadcast %586 : vector<1x256xf32> to vector<8x256xf32>
    %588 = arith.mulf %584, %587 : vector<8x256xf32>
    %c44 = arith.constant 44 : index
    %c0_338 = arith.constant 0 : index
    %c0_339 = arith.constant 0 : index
    %589 = vector.load %arg4[%c44, %c0_338, %c0_339] : memref<54x16x16xf32, #tpu.memory_space<vmem>>, vector<1x16x16xf32>
    %590 = vector.shape_cast %589 : vector<1x16x16xf32> to vector<16x16xf32>
    %591 = vector.extract_strided_slice %590 {offsets = [0, 0], sizes = [16, 8], strides = [1, 1]} : vector<16x16xf32> to vector<16x8xf32>
    %cst_340 = arith.constant dense<0.000000e+00> : vector<16x256xf32>
    %592 = tpu.matmul %591, %588, %cst_340 {dimension_numbers = #tpu.dot_dimension_numbers<[1], [0], [0], [1], [0, 0, 1, 1], [], []>} : vector<16x8xf32>, vector<8x256xf32>, vector<16x256xf32> -> vector<16x256xf32>
    %593 = arith.addf %583, %592 : vector<16x256xf32>
    %c0_341 = arith.constant 0 : index
    %c8_342 = arith.constant 8 : index
    %594 = vector.load %arg5[%c0_341, %c8_342] : memref<16x12xf32, #tpu.memory_space<vmem>>, vector<16x1xf32>
    %c0_343 = arith.constant 0 : index
    %c9_344 = arith.constant 9 : index
    %595 = vector.load %arg5[%c0_343, %c9_344] : memref<16x12xf32, #tpu.memory_space<vmem>>, vector<16x1xf32>
    %596 = vector.shape_cast %593 : vector<16x256xf32> to vector<1x16x256xf32>
    %cst_345 = arith.constant dense<0.000000e+00> : vector<1xf32>
    %597 = vector.multi_reduction <add>, %596, %cst_345 [1, 2] : vector<1x16x256xf32> to vector<1xf32>
    %598 = vector.shape_cast %597 : vector<1xf32> to vector<1x1x1xf32>
    %599 = vector.extract %598[0, 0, 0] : f32 from vector<1x1x1xf32>
    %600 = vector.broadcast %599 : f32 to vector<1x1xf32>
    %601 = arith.mulf %593, %593 : vector<16x256xf32>
    %602 = vector.shape_cast %601 : vector<16x256xf32> to vector<1x16x256xf32>
    %cst_346 = arith.constant dense<0.000000e+00> : vector<1xf32>
    %603 = vector.multi_reduction <add>, %602, %cst_346 [1, 2] : vector<1x16x256xf32> to vector<1xf32>
    %604 = vector.shape_cast %603 : vector<1xf32> to vector<1x1x1xf32>
    %605 = vector.extract %604[0, 0, 0] : f32 from vector<1x1x1xf32>
    %606 = vector.broadcast %605 : f32 to vector<1x1xf32>
    %cst_347 = arith.constant 2.44140625E-4 : f32
    %607 = vector.broadcast %cst_347 : f32 to vector<1x1xf32>
    %608 = arith.mulf %600, %607 : vector<1x1xf32>
    %cst_348 = arith.constant 2.44140625E-4 : f32
    %609 = vector.broadcast %cst_348 : f32 to vector<1x1xf32>
    %610 = arith.mulf %606, %609 : vector<1x1xf32>
    %611 = arith.mulf %608, %608 : vector<1x1xf32>
    %612 = arith.subf %610, %611 : vector<1x1xf32>
    %cst_349 = arith.constant 0.000000e+00 : f32
    %613 = vector.broadcast %cst_349 : f32 to vector<1x1xf32>
    %614 = arith.maximumf %612, %613 : vector<1x1xf32>
    %cst_350 = arith.constant 9.99999974E-6 : f32
    %615 = vector.broadcast %cst_350 : f32 to vector<1x1xf32>
    %616 = arith.addf %614, %615 : vector<1x1xf32>
    %617 = math.rsqrt %616 : vector<1x1xf32>
    %618 = vector.broadcast %617 : vector<1x1xf32> to vector<16x1xf32>
    %619 = arith.mulf %594, %618 : vector<16x1xf32>
    %620 = vector.broadcast %608 : vector<1x1xf32> to vector<16x1xf32>
    %621 = arith.mulf %620, %619 : vector<16x1xf32>
    %622 = arith.subf %595, %621 : vector<16x1xf32>
    %623 = vector.broadcast %619 : vector<16x1xf32> to vector<16x256xf32>
    %624 = arith.mulf %593, %623 : vector<16x256xf32>
    %625 = vector.broadcast %622 : vector<16x1xf32> to vector<16x256xf32>
    %626 = arith.addf %624, %625 : vector<16x256xf32>
    %627 = arith.mulf %626, %626 : vector<16x256xf32>
    %628 = arith.mulf %626, %627 : vector<16x256xf32>
    %cst_351 = arith.constant 4.471500e-02 : f32
    %629 = vector.broadcast %cst_351 : f32 to vector<16x256xf32>
    %630 = arith.mulf %629, %628 : vector<16x256xf32>
    %631 = arith.addf %626, %630 : vector<16x256xf32>
    %cst_352 = arith.constant 0.797884583 : f32
    %632 = vector.broadcast %cst_352 : f32 to vector<16x256xf32>
    %633 = arith.mulf %632, %631 : vector<16x256xf32>
    %634 = math.tanh %633 : vector<16x256xf32>
    %cst_353 = arith.constant 1.000000e+00 : f32
    %635 = vector.broadcast %cst_353 : f32 to vector<16x256xf32>
    %636 = arith.addf %635, %634 : vector<16x256xf32>
    %cst_354 = arith.constant 5.000000e-01 : f32
    %637 = vector.broadcast %cst_354 : f32 to vector<16x256xf32>
    %638 = arith.mulf %637, %636 : vector<16x256xf32>
    %639 = arith.mulf %626, %638 : vector<16x256xf32>
    %c17_i32_355 = arith.constant 17 : i32
    %640 = tpu.dynamic_rotate %639 by %c17_i32_355 dim 1 : vector<16x256xf32>, i32 -> vector<16x256xf32>
    %c0_356 = arith.constant 0 : index
    %c0_357 = arith.constant 0 : index
    %c0_358 = arith.constant 0 : index
    %641 = vector.load %arg3[%c0_356, %c0_357, %c0_358] : memref<9x1x256xf32, #tpu.memory_space<vmem>>, vector<1x1x256xf32>
    %642 = vector.shape_cast %641 : vector<1x1x256xf32> to vector<1x256xf32>
    %643 = vector.broadcast %642 : vector<1x256xf32> to vector<16x256xf32>
    %644 = arith.mulf %640, %643 : vector<16x256xf32>
    %c45 = arith.constant 45 : index
    %c0_359 = arith.constant 0 : index
    %c0_360 = arith.constant 0 : index
    %645 = vector.load %arg4[%c45, %c0_359, %c0_360] : memref<54x16x16xf32, #tpu.memory_space<vmem>>, vector<1x16x16xf32>
    %646 = vector.shape_cast %645 : vector<1x16x16xf32> to vector<16x16xf32>
    %cst_361 = arith.constant dense<0.000000e+00> : vector<16x256xf32>
    %647 = tpu.matmul %646, %644, %cst_361 {dimension_numbers = #tpu.dot_dimension_numbers<[1], [0], [0], [1], [0, 0, 1, 1], [], []>} : vector<16x16xf32>, vector<16x256xf32>, vector<16x256xf32> -> vector<16x256xf32>
    %c16_i32_362 = arith.constant 16 : i32
    %648 = tpu.dynamic_rotate %639 by %c16_i32_362 dim 1 : vector<16x256xf32>, i32 -> vector<16x256xf32>
    %c1_363 = arith.constant 1 : index
    %c0_364 = arith.constant 0 : index
    %c0_365 = arith.constant 0 : index
    %649 = vector.load %arg3[%c1_363, %c0_364, %c0_365] : memref<9x1x256xf32, #tpu.memory_space<vmem>>, vector<1x1x256xf32>
    %650 = vector.shape_cast %649 : vector<1x1x256xf32> to vector<1x256xf32>
    %651 = vector.broadcast %650 : vector<1x256xf32> to vector<16x256xf32>
    %652 = arith.mulf %648, %651 : vector<16x256xf32>
    %c46 = arith.constant 46 : index
    %c0_366 = arith.constant 0 : index
    %c0_367 = arith.constant 0 : index
    %653 = vector.load %arg4[%c46, %c0_366, %c0_367] : memref<54x16x16xf32, #tpu.memory_space<vmem>>, vector<1x16x16xf32>
    %654 = vector.shape_cast %653 : vector<1x16x16xf32> to vector<16x16xf32>
    %cst_368 = arith.constant dense<0.000000e+00> : vector<16x256xf32>
    %655 = tpu.matmul %654, %652, %cst_368 {dimension_numbers = #tpu.dot_dimension_numbers<[1], [0], [0], [1], [0, 0, 1, 1], [], []>} : vector<16x16xf32>, vector<16x256xf32>, vector<16x256xf32> -> vector<16x256xf32>
    %656 = arith.addf %647, %655 : vector<16x256xf32>
    %c15_i32_369 = arith.constant 15 : i32
    %657 = tpu.dynamic_rotate %639 by %c15_i32_369 dim 1 : vector<16x256xf32>, i32 -> vector<16x256xf32>
    %c2_370 = arith.constant 2 : index
    %c0_371 = arith.constant 0 : index
    %c0_372 = arith.constant 0 : index
    %658 = vector.load %arg3[%c2_370, %c0_371, %c0_372] : memref<9x1x256xf32, #tpu.memory_space<vmem>>, vector<1x1x256xf32>
    %659 = vector.shape_cast %658 : vector<1x1x256xf32> to vector<1x256xf32>
    %660 = vector.broadcast %659 : vector<1x256xf32> to vector<16x256xf32>
    %661 = arith.mulf %657, %660 : vector<16x256xf32>
    %c47 = arith.constant 47 : index
    %c0_373 = arith.constant 0 : index
    %c0_374 = arith.constant 0 : index
    %662 = vector.load %arg4[%c47, %c0_373, %c0_374] : memref<54x16x16xf32, #tpu.memory_space<vmem>>, vector<1x16x16xf32>
    %663 = vector.shape_cast %662 : vector<1x16x16xf32> to vector<16x16xf32>
    %cst_375 = arith.constant dense<0.000000e+00> : vector<16x256xf32>
    %664 = tpu.matmul %663, %661, %cst_375 {dimension_numbers = #tpu.dot_dimension_numbers<[1], [0], [0], [1], [0, 0, 1, 1], [], []>} : vector<16x16xf32>, vector<16x256xf32>, vector<16x256xf32> -> vector<16x256xf32>
    %665 = arith.addf %656, %664 : vector<16x256xf32>
    %c1_i32_376 = arith.constant 1 : i32
    %666 = tpu.dynamic_rotate %639 by %c1_i32_376 dim 1 : vector<16x256xf32>, i32 -> vector<16x256xf32>
    %c3_377 = arith.constant 3 : index
    %c0_378 = arith.constant 0 : index
    %c0_379 = arith.constant 0 : index
    %667 = vector.load %arg3[%c3_377, %c0_378, %c0_379] : memref<9x1x256xf32, #tpu.memory_space<vmem>>, vector<1x1x256xf32>
    %668 = vector.shape_cast %667 : vector<1x1x256xf32> to vector<1x256xf32>
    %669 = vector.broadcast %668 : vector<1x256xf32> to vector<16x256xf32>
    %670 = arith.mulf %666, %669 : vector<16x256xf32>
    %c48 = arith.constant 48 : index
    %c0_380 = arith.constant 0 : index
    %c0_381 = arith.constant 0 : index
    %671 = vector.load %arg4[%c48, %c0_380, %c0_381] : memref<54x16x16xf32, #tpu.memory_space<vmem>>, vector<1x16x16xf32>
    %672 = vector.shape_cast %671 : vector<1x16x16xf32> to vector<16x16xf32>
    %cst_382 = arith.constant dense<0.000000e+00> : vector<16x256xf32>
    %673 = tpu.matmul %672, %670, %cst_382 {dimension_numbers = #tpu.dot_dimension_numbers<[1], [0], [0], [1], [0, 0, 1, 1], [], []>} : vector<16x16xf32>, vector<16x256xf32>, vector<16x256xf32> -> vector<16x256xf32>
    %674 = arith.addf %665, %673 : vector<16x256xf32>
    %c49 = arith.constant 49 : index
    %c0_383 = arith.constant 0 : index
    %c0_384 = arith.constant 0 : index
    %675 = vector.load %arg4[%c49, %c0_383, %c0_384] : memref<54x16x16xf32, #tpu.memory_space<vmem>>, vector<1x16x16xf32>
    %676 = vector.shape_cast %675 : vector<1x16x16xf32> to vector<16x16xf32>
    %cst_385 = arith.constant dense<0.000000e+00> : vector<16x256xf32>
    %677 = tpu.matmul %676, %639, %cst_385 {dimension_numbers = #tpu.dot_dimension_numbers<[1], [0], [0], [1], [0, 0, 1, 1], [], []>} : vector<16x16xf32>, vector<16x256xf32>, vector<16x256xf32> -> vector<16x256xf32>
    %678 = arith.addf %674, %677 : vector<16x256xf32>
    %c255_i32_386 = arith.constant 255 : i32
    %679 = tpu.dynamic_rotate %639 by %c255_i32_386 dim 1 : vector<16x256xf32>, i32 -> vector<16x256xf32>
    %c5_387 = arith.constant 5 : index
    %c0_388 = arith.constant 0 : index
    %c0_389 = arith.constant 0 : index
    %680 = vector.load %arg3[%c5_387, %c0_388, %c0_389] : memref<9x1x256xf32, #tpu.memory_space<vmem>>, vector<1x1x256xf32>
    %681 = vector.shape_cast %680 : vector<1x1x256xf32> to vector<1x256xf32>
    %682 = vector.broadcast %681 : vector<1x256xf32> to vector<16x256xf32>
    %683 = arith.mulf %679, %682 : vector<16x256xf32>
    %c50 = arith.constant 50 : index
    %c0_390 = arith.constant 0 : index
    %c0_391 = arith.constant 0 : index
    %684 = vector.load %arg4[%c50, %c0_390, %c0_391] : memref<54x16x16xf32, #tpu.memory_space<vmem>>, vector<1x16x16xf32>
    %685 = vector.shape_cast %684 : vector<1x16x16xf32> to vector<16x16xf32>
    %cst_392 = arith.constant dense<0.000000e+00> : vector<16x256xf32>
    %686 = tpu.matmul %685, %683, %cst_392 {dimension_numbers = #tpu.dot_dimension_numbers<[1], [0], [0], [1], [0, 0, 1, 1], [], []>} : vector<16x16xf32>, vector<16x256xf32>, vector<16x256xf32> -> vector<16x256xf32>
    %687 = arith.addf %678, %686 : vector<16x256xf32>
    %c241_i32_393 = arith.constant 241 : i32
    %688 = tpu.dynamic_rotate %639 by %c241_i32_393 dim 1 : vector<16x256xf32>, i32 -> vector<16x256xf32>
    %c6_394 = arith.constant 6 : index
    %c0_395 = arith.constant 0 : index
    %c0_396 = arith.constant 0 : index
    %689 = vector.load %arg3[%c6_394, %c0_395, %c0_396] : memref<9x1x256xf32, #tpu.memory_space<vmem>>, vector<1x1x256xf32>
    %690 = vector.shape_cast %689 : vector<1x1x256xf32> to vector<1x256xf32>
    %691 = vector.broadcast %690 : vector<1x256xf32> to vector<16x256xf32>
    %692 = arith.mulf %688, %691 : vector<16x256xf32>
    %c51 = arith.constant 51 : index
    %c0_397 = arith.constant 0 : index
    %c0_398 = arith.constant 0 : index
    %693 = vector.load %arg4[%c51, %c0_397, %c0_398] : memref<54x16x16xf32, #tpu.memory_space<vmem>>, vector<1x16x16xf32>
    %694 = vector.shape_cast %693 : vector<1x16x16xf32> to vector<16x16xf32>
    %cst_399 = arith.constant dense<0.000000e+00> : vector<16x256xf32>
    %695 = tpu.matmul %694, %692, %cst_399 {dimension_numbers = #tpu.dot_dimension_numbers<[1], [0], [0], [1], [0, 0, 1, 1], [], []>} : vector<16x16xf32>, vector<16x256xf32>, vector<16x256xf32> -> vector<16x256xf32>
    %696 = arith.addf %687, %695 : vector<16x256xf32>
    %c240_i32_400 = arith.constant 240 : i32
    %697 = tpu.dynamic_rotate %639 by %c240_i32_400 dim 1 : vector<16x256xf32>, i32 -> vector<16x256xf32>
    %c7_401 = arith.constant 7 : index
    %c0_402 = arith.constant 0 : index
    %c0_403 = arith.constant 0 : index
    %698 = vector.load %arg3[%c7_401, %c0_402, %c0_403] : memref<9x1x256xf32, #tpu.memory_space<vmem>>, vector<1x1x256xf32>
    %699 = vector.shape_cast %698 : vector<1x1x256xf32> to vector<1x256xf32>
    %700 = vector.broadcast %699 : vector<1x256xf32> to vector<16x256xf32>
    %701 = arith.mulf %697, %700 : vector<16x256xf32>
    %c52 = arith.constant 52 : index
    %c0_404 = arith.constant 0 : index
    %c0_405 = arith.constant 0 : index
    %702 = vector.load %arg4[%c52, %c0_404, %c0_405] : memref<54x16x16xf32, #tpu.memory_space<vmem>>, vector<1x16x16xf32>
    %703 = vector.shape_cast %702 : vector<1x16x16xf32> to vector<16x16xf32>
    %cst_406 = arith.constant dense<0.000000e+00> : vector<16x256xf32>
    %704 = tpu.matmul %703, %701, %cst_406 {dimension_numbers = #tpu.dot_dimension_numbers<[1], [0], [0], [1], [0, 0, 1, 1], [], []>} : vector<16x16xf32>, vector<16x256xf32>, vector<16x256xf32> -> vector<16x256xf32>
    %705 = arith.addf %696, %704 : vector<16x256xf32>
    %c239_i32_407 = arith.constant 239 : i32
    %706 = tpu.dynamic_rotate %639 by %c239_i32_407 dim 1 : vector<16x256xf32>, i32 -> vector<16x256xf32>
    %c8_408 = arith.constant 8 : index
    %c0_409 = arith.constant 0 : index
    %c0_410 = arith.constant 0 : index
    %707 = vector.load %arg3[%c8_408, %c0_409, %c0_410] : memref<9x1x256xf32, #tpu.memory_space<vmem>>, vector<1x1x256xf32>
    %708 = vector.shape_cast %707 : vector<1x1x256xf32> to vector<1x256xf32>
    %709 = vector.broadcast %708 : vector<1x256xf32> to vector<16x256xf32>
    %710 = arith.mulf %706, %709 : vector<16x256xf32>
    %c53 = arith.constant 53 : index
    %c0_411 = arith.constant 0 : index
    %c0_412 = arith.constant 0 : index
    %711 = vector.load %arg4[%c53, %c0_411, %c0_412] : memref<54x16x16xf32, #tpu.memory_space<vmem>>, vector<1x16x16xf32>
    %712 = vector.shape_cast %711 : vector<1x16x16xf32> to vector<16x16xf32>
    %cst_413 = arith.constant dense<0.000000e+00> : vector<16x256xf32>
    %713 = tpu.matmul %712, %710, %cst_413 {dimension_numbers = #tpu.dot_dimension_numbers<[1], [0], [0], [1], [0, 0, 1, 1], [], []>} : vector<16x16xf32>, vector<16x256xf32>, vector<16x256xf32> -> vector<16x256xf32>
    %714 = arith.addf %705, %713 : vector<16x256xf32>
    %c0_414 = arith.constant 0 : index
    %c10_415 = arith.constant 10 : index
    %715 = vector.load %arg5[%c0_414, %c10_415] : memref<16x12xf32, #tpu.memory_space<vmem>>, vector<16x1xf32>
    %c0_416 = arith.constant 0 : index
    %c11_417 = arith.constant 11 : index
    %716 = vector.load %arg5[%c0_416, %c11_417] : memref<16x12xf32, #tpu.memory_space<vmem>>, vector<16x1xf32>
    %717 = vector.shape_cast %714 : vector<16x256xf32> to vector<1x16x256xf32>
    %cst_418 = arith.constant dense<0.000000e+00> : vector<1xf32>
    %718 = vector.multi_reduction <add>, %717, %cst_418 [1, 2] : vector<1x16x256xf32> to vector<1xf32>
    %719 = vector.shape_cast %718 : vector<1xf32> to vector<1x1x1xf32>
    %720 = vector.extract %719[0, 0, 0] : f32 from vector<1x1x1xf32>
    %721 = vector.broadcast %720 : f32 to vector<1x1xf32>
    %722 = arith.mulf %714, %714 : vector<16x256xf32>
    %723 = vector.shape_cast %722 : vector<16x256xf32> to vector<1x16x256xf32>
    %cst_419 = arith.constant dense<0.000000e+00> : vector<1xf32>
    %724 = vector.multi_reduction <add>, %723, %cst_419 [1, 2] : vector<1x16x256xf32> to vector<1xf32>
    %725 = vector.shape_cast %724 : vector<1xf32> to vector<1x1x1xf32>
    %726 = vector.extract %725[0, 0, 0] : f32 from vector<1x1x1xf32>
    %727 = vector.broadcast %726 : f32 to vector<1x1xf32>
    %cst_420 = arith.constant 2.44140625E-4 : f32
    %728 = vector.broadcast %cst_420 : f32 to vector<1x1xf32>
    %729 = arith.mulf %721, %728 : vector<1x1xf32>
    %cst_421 = arith.constant 2.44140625E-4 : f32
    %730 = vector.broadcast %cst_421 : f32 to vector<1x1xf32>
    %731 = arith.mulf %727, %730 : vector<1x1xf32>
    %732 = arith.mulf %729, %729 : vector<1x1xf32>
    %733 = arith.subf %731, %732 : vector<1x1xf32>
    %cst_422 = arith.constant 0.000000e+00 : f32
    %734 = vector.broadcast %cst_422 : f32 to vector<1x1xf32>
    %735 = arith.maximumf %733, %734 : vector<1x1xf32>
    %cst_423 = arith.constant 9.99999974E-6 : f32
    %736 = vector.broadcast %cst_423 : f32 to vector<1x1xf32>
    %737 = arith.addf %735, %736 : vector<1x1xf32>
    %738 = math.rsqrt %737 : vector<1x1xf32>
    %739 = vector.broadcast %738 : vector<1x1xf32> to vector<16x1xf32>
    %740 = arith.mulf %715, %739 : vector<16x1xf32>
    %741 = vector.broadcast %729 : vector<1x1xf32> to vector<16x1xf32>
    %742 = arith.mulf %741, %740 : vector<16x1xf32>
    %743 = arith.subf %716, %742 : vector<16x1xf32>
    %c0_424 = arith.constant 0 : index
    %c0_425 = arith.constant 0 : index
    %c0_426 = arith.constant 0 : index
    %744 = vector.load %arg2[%c0_424, %c0_425, %c0_426] : memref<1x16x2xf32, #tpu.memory_space<vmem>>, vector<1x16x2xf32>
    %745 = vector.shape_cast %744 : vector<1x16x2xf32> to vector<16x2xf32>
    %746 = vector.extract_strided_slice %745 {offsets = [0, 0], sizes = [16, 1], strides = [1, 1]} : vector<16x2xf32> to vector<16x1xf32>
    %747 = vector.extract_strided_slice %745 {offsets = [0, 1], sizes = [16, 1], strides = [1, 1]} : vector<16x2xf32> to vector<16x1xf32>
    %748 = arith.mulf %746, %740 : vector<16x1xf32>
    %749 = vector.broadcast %748 : vector<16x1xf32> to vector<16x256xf32>
    %750 = arith.mulf %714, %749 : vector<16x256xf32>
    %751 = arith.mulf %746, %743 : vector<16x1xf32>
    %752 = arith.addf %751, %747 : vector<16x1xf32>
    %753 = vector.broadcast %752 : vector<16x1xf32> to vector<16x256xf32>
    %754 = arith.addf %750, %753 : vector<16x256xf32>
    %c0_427 = arith.constant 0 : index
    %c0_428 = arith.constant 0 : index
    %c0_429 = arith.constant 0 : index
    %755 = vector.load %arg6[%c0_427, %c0_428, %c0_429] : memref<1x16x256xf32, #tpu.memory_space<vmem>>, vector<1x16x256xf32>
    %756 = vector.shape_cast %755 : vector<1x16x256xf32> to vector<16x256xf32>
    %757 = vector.shape_cast %754 : vector<16x256xf32> to vector<1x16x256xf32>
    tpu.vector_store %arg6[%c0_427, %c0_428, %c0_429], %757 {strides = array<i32>} : memref<1x16x256xf32, #tpu.memory_space<vmem>>, vector<1x16x256xf32>,
    return
  }
  func.func @transform_0(%arg0: i32) -> (i32, i32, i32) {
    %c0_i32 = arith.constant 0 : i32
    %c0_i32_0 = arith.constant 0 : i32
    %c0_i32_1 = arith.constant 0 : i32
    return %arg0, %c0_i32, %c0_i32_0 : i32, i32, i32
  }
  func.func @transform_1(%arg0: i32) -> (i32, i32, i32) {
    %c0_i32 = arith.constant 0 : i32
    %c0_i32_0 = arith.constant 0 : i32
    %c0_i32_1 = arith.constant 0 : i32
    return %arg0, %c0_i32, %c0_i32_0 : i32, i32, i32
  }
  func.func @transform_2(%arg0: i32) -> (i32, i32, i32) {
    %c0_i32 = arith.constant 0 : i32
    %c0_i32_0 = arith.constant 0 : i32
    %c0_i32_1 = arith.constant 0 : i32
    %c0_i32_2 = arith.constant 0 : i32
    return %c0_i32, %c0_i32_0, %c0_i32_1 : i32, i32, i32
  }
  func.func @transform_3(%arg0: i32) -> (i32, i32, i32) {
    %c0_i32 = arith.constant 0 : i32
    %c0_i32_0 = arith.constant 0 : i32
    %c0_i32_1 = arith.constant 0 : i32
    %c0_i32_2 = arith.constant 0 : i32
    return %c0_i32, %c0_i32_0, %c0_i32_1 : i32, i32, i32
  }
  func.func @transform_4(%arg0: i32) -> (i32, i32) {
    %c0_i32 = arith.constant 0 : i32
    %c0_i32_0 = arith.constant 0 : i32
    %c0_i32_1 = arith.constant 0 : i32
    return %c0_i32, %c0_i32_0 : i32, i32
  }
  func.func @transform_5(%arg0: i32) -> (i32, i32, i32) {
    %c0_i32 = arith.constant 0 : i32
    %c0_i32_0 = arith.constant 0 : i32
    %c0_i32_1 = arith.constant 0 : i32
    return %arg0, %c0_i32, %c0_i32_0 : i32, i32, i32
  }
}

</mosaic_0001>

<llo_original>
// kernel: tpu_custom_call.1
$region0: #{tpu_custom_call.1}
  #allocation0 [shape = 'u32[]', space=smem, size = 0x4, offset = 0x4, fixed_abs, tag = 'smem constant byte address 0x4 - core index']
  #allocation1 [shape = 'u32[144,128]{1,0:T(1,128)}', space=vmem, size = 0x12000, scoped, tag = 'internal scratch']
  %s0 = inlined_call_operand.vmem [shape: f32[2,8,256], index: 0, kind: input, shape index: {}]
  %s1 = inlined_call_operand.vmem [shape: f32[2,16,2], index: 1, kind: input, shape index: {}]
  %s2 = inlined_call_operand.vmem [shape: f32[9,1,256], index: 2, kind: input, shape index: {}]
  %s3 = inlined_call_operand.vmem [shape: f32[54,16,16], index: 3, kind: input, shape index: {}]
  %s4 = inlined_call_operand.vmem [shape: f32[16,12], index: 4, kind: input, shape index: {}]
  %s5 = inlined_call_operand.hbm [shape: f32[2,16,256], index: 5, kind: output, shape index: {}]
  %s6 = sld [smem:[#allocation0]]
  $region53: #{tpu_custom_call.1} parent=0
    _
  %s8 = ssub.s32 1, %s6
  %s9 = scalar_select 0, %s8, %s6
  $region1: #{tpu_custom_call.1} parent=0
    #allocation2 [shape = 'u8[32768]{0}', space=vmem, size = 0x8000, scoped, tag = 'output window, operand 0']
    #allocation3 [shape = 's32[2]{0}', space=sflag, size = 0x8, scoped, tag = 'scoped memory for tpu_custom_call.1']
    %10 = vsyncpa [#allocation3], 0
    %s11 = scalar_lea.sflag [#allocation3], 1
    %12 = vsyncpa %s11, 0
    loop: start=0, step=1, limit=4
    $region2: #{tpu_custom_call.1} parent=1 // loop_pre_header
      _
    $region3: #{tpu_custom_call.1} parent=1 // loop_header
      %s14 = sphi 0, %s18
      %p15 = scmp.ge.s32.totalorder %s14, 4
      %s24 = sphi 0, %s26
      %s27 = sphi 0, %s24
      %s28 = sphi 0, %s27
      %s44 = sphi 0, %s28
      %s50 = sphi 0, %s52
      %s53 = sphi 0, %s50
      %s54 = sphi 0, %s53
      %s70 = sphi 0, %s54
      %s74 = sphi 0, %s74
      %s76 = sphi 0, %s74
      %s77 = sphi 0, %s76
      %s91 = sphi 0, %s77
      %s95 = sphi 0, %s95
      %s97 = sphi 0, %s95
      %s98 = sphi 0, %s97
      %s112 = sphi 0, %s98
      %s116 = sphi 0, %s116
      %s118 = sphi 0, %s116
      %s119 = sphi 0, %s118
      %s133 = sphi 0, %s119
      %s139 = sphi 0, %s141
      %s142 = sphi 0, %s139
      %s143 = sphi 0, %s142
      %s159 = sphi 0, %s143
    $region4: #{tpu_custom_call.1} parent=1 // loop_header_branch
      %17 = sbr.rel (%p15) target = $region8
    $region5: #{tpu_custom_call.1} parent=1 // loop_body
      %s19 = ssub.s32 %s14, 1
      %s20 = ssub.s32 %s14, 2
      %s21 = sadd.s32 %s14, 1
      %s22 = ssub.s32 %s14, %s21
      %p23 = scmp.eq.s32.totalorder %s22, 0
      %s25 = sadd.s32 %s24, 1
      %s26 = scalar_select %p23, %s24, %s25
      %p29 = pneg %p23
      %p30 = scmp.eq.s32.totalorder %s14, 1
      %p31 = por %p29, %p30
      %p32 = scmp.ne.s32.totalorder %s24, %s27
      %p33 = scmp.eq.s32.totalorder %s14, 0
      %p34 = por %p32, %p33
      %p35 = scmp.ne.s32.totalorder %s24, %s27
      %p36 = scmp.eq.s32.totalorder %s19, 1
      %p37 = por %p35, %p36
      %p38 = scmp.ne.s32.totalorder %s27, %s28
      %p39 = scmp.eq.s32.totalorder %s19, 0
      %p40 = por %p38, %p39
      %p41 = scmp.ne.s32.totalorder %s27, %s28
      %p42 = scmp.eq.s32.totalorder %s20, 1
      %p43 = por %p41, %p42
      %p45 = scmp.ne.s32.totalorder %s28, %s44
      %p46 = scmp.eq.s32.totalorder %s20, 0
      %p47 = por %p45, %p46
      %s48 = ssub.s32 %s14, %s21
      %p49 = scmp.eq.s32.totalorder %s48, 0
      %s51 = sadd.s32 %s50, 1
      %s52 = scalar_select %p49, %s50, %s51
      %p55 = pneg %p49
      %p56 = scmp.eq.s32.totalorder %s14, 1
      %p57 = por %p55, %p56
      %p58 = scmp.ne.s32.totalorder %s50, %s53
      %p59 = scmp.eq.s32.totalorder %s14, 0
      %p60 = por %p58, %p59
      %p61 = scmp.ne.s32.totalorder %s50, %s53
      %p62 = scmp.eq.s32.totalorder %s19, 1
      %p63 = por %p61, %p62
      %p64 = scmp.ne.s32.totalorder %s53, %s54
      %p65 = scmp.eq.s32.totalorder %s19, 0
      %p66 = por %p64, %p65
      %p67 = scmp.ne.s32.totalorder %s53, %s54
      %p68 = scmp.eq.s32.totalorder %s20, 1
      %p69 = por %p67, %p68
      %p71 = scmp.ne.s32.totalorder %s54, %s70
      %p72 = scmp.eq.s32.totalorder %s20, 0
      %p73 = por %p71, %p72
      %s75 = sadd.s32 %s74, 1
      %p78 = scmp.eq.s32.totalorder %s14, 1
      %p79 = scmp.ne.s32.totalorder %s74, %s76
      %p80 = scmp.eq.s32.totalorder %s14, 0
      %p81 = por %p79, %p80
      %p82 = scmp.ne.s32.totalorder %s74, %s76
      %p83 = scmp.eq.s32.totalorder %s19, 1
      %p84 = por %p82, %p83
      %p85 = scmp.ne.s32.totalorder %s76, %s77
      %p86 = scmp.eq.s32.totalorder %s19, 0
      %p87 = por %p85, %p86
      %p88 = scmp.ne.s32.totalorder %s76, %s77
      %p89 = scmp.eq.s32.totalorder %s20, 1
      %p90 = por %p88, %p89
      %p92 = scmp.ne.s32.totalorder %s77, %s91
      %p93 = scmp.eq.s32.totalorder %s20, 0
      %p94 = por %p92, %p93
      %s96 = sadd.s32 %s95, 1
      %p99 = scmp.eq.s32.totalorder %s14, 1
      %p100 = scmp.ne.s32.totalorder %s95, %s97
      %p101 = scmp.eq.s32.totalorder %s14, 0
      %p102 = por %p100, %p101
      %p103 = scmp.ne.s32.totalorder %s95, %s97
      %p104 = scmp.eq.s32.totalorder %s19, 1
      %p105 = por %p103, %p104
      %p106 = scmp.ne.s32.totalorder %s97, %s98
      %p107 = scmp.eq.s32.totalorder %s19, 0
      %p108 = por %p106, %p107
      %p109 = scmp.ne.s32.totalorder %s97, %s98
      %p110 = scmp.eq.s32.totalorder %s20, 1
      %p111 = por %p109, %p110
      %p113 = scmp.ne.s32.totalorder %s98, %s112
      %p114 = scmp.eq.s32.totalorder %s20, 0
      %p115 = por %p113, %p114
      %s117 = sadd.s32 %s116, 1
      %p120 = scmp.eq.s32.totalorder %s14, 1
      %p121 = scmp.ne.s32.totalorder %s116, %s118
      %p122 = scmp.eq.s32.totalorder %s14, 0
      %p123 = por %p121, %p122
      %p124 = scmp.ne.s32.totalorder %s116, %s118
      %p125 = scmp.eq.s32.totalorder %s19, 1
      %p126 = por %p124, %p125
      %p127 = scmp.ne.s32.totalorder %s118, %s119
      %p128 = scmp.eq.s32.totalorder %s19, 0
      %p129 = por %p127, %p128
      %p130 = scmp.ne.s32.totalorder %s118, %s119
      %p131 = scmp.eq.s32.totalorder %s20, 1
      %p132 = por %p130, %p131
      %p134 = scmp.ne.s32.totalorder %s119, %s133
      %p135 = scmp.eq.s32.totalorder %s20, 0
      %p136 = por %p134, %p135
      %s137 = ssub.s32 %s14, %s21
      %p138 = scmp.eq.s32.totalorder %s137, 0
      %s140 = sadd.s32 %s139, 1
      %s141 = scalar_select %p138, %s139, %s140
      %p144 = pneg %p138
      %p145 = scmp.eq.s32.totalorder %s14, 1
      %p146 = por %p144, %p145
      %p147 = scmp.ne.s32.totalorder %s139, %s142
      %p148 = scmp.eq.s32.totalorder %s14, 0
      %p149 = por %p147, %p148
      %p150 = scmp.ne.s32.totalorder %s139, %s142
      %p151 = scmp.eq.s32.totalorder %s19, 1
      %p152 = por %p150, %p151
      %p153 = scmp.ne.s32.totalorder %s142, %s143
      %p154 = scmp.eq.s32.totalorder %s19, 0
      %p155 = por %p153, %p154
      %p156 = scmp.ne.s32.totalorder %s142, %s143
      %p157 = scmp.eq.s32.totalorder %s20, 1
      %p158 = por %p156, %p157
      %p160 = scmp.ne.s32.totalorder %s143, %s159
      %p161 = scmp.eq.s32.totalorder %s20, 0
      %p162 = por %p160, %p161
      %p163 = scmp.le.s32.totalorder 1, %s14
      %p164 = scmp.lt.s32.totalorder %s14, 3
      %p165 = pnand %p163, %p164
      %p166 = pneg %p165
      // Predicated region
      $region9: #{tpu_custom_call.1} parent=5 // pred_check
        _
      $region10: #{tpu_custom_call.1} parent=5 // pred_check_branch
        %168 = sbr.rel (%p165) target = $region12
      $region11: #{tpu_custom_call.1} parent=5 // pred_region
        %s169 = ssub.s32 %s14, 1
        // Predicated region
        $region13: #{tpu_custom_call.1} parent=11 // pred_check
          %p170 = pneg %p87
        $region14: #{tpu_custom_call.1} parent=11 // pred_check_branch
          %172 = sbr.rel (%p170) target = $region16
        $region15: #{tpu_custom_call.1} parent=11 // pred_region
          _
        $region16: #{tpu_custom_call.1} parent=11 // pred_fallthru
          _
        // Predicated region
        $region17: #{tpu_custom_call.1} parent=11 // pred_check
          %p173 = pneg %p108
        $region18: #{tpu_custom_call.1} parent=11 // pred_check_branch
          %175 = sbr.rel (%p173) target = $region20
        $region19: #{tpu_custom_call.1} parent=11 // pred_region
          _
        $region20: #{tpu_custom_call.1} parent=11 // pred_fallthru
          _
        // Predicated region
        $region21: #{tpu_custom_call.1} parent=11 // pred_check
          %p176 = pneg %p129
        $region22: #{tpu_custom_call.1} parent=11 // pred_check_branch
          %178 = sbr.rel (%p176) target = $region24
        $region23: #{tpu_custom_call.1} parent=11 // pred_region
          _
        $region24: #{tpu_custom_call.1} parent=11 // pred_fallthru
          _
      $region12: #{tpu_custom_call.1} parent=5 // pred_fallthru
        _
      %p179 = scmp.lt.s32.totalorder %s14, 2
      // Predicated region
      $region25: #{tpu_custom_call.1} parent=5 // pred_check
        %p180 = pneg %p179
      $region26: #{tpu_custom_call.1} parent=5 // pred_check_branch
        %182 = sbr.rel (%p180) target = $region28
      $region27: #{tpu_custom_call.1} parent=5 // pred_region
        // Predicated region
        $region29: #{tpu_custom_call.1} parent=27 // pred_check
          %p183 = pneg %p34
        $region30: #{tpu_custom_call.1} parent=27 // pred_check_branch
          %185 = sbr.rel (%p183) target = $region32
        $region31: #{tpu_custom_call.1} parent=27 // pred_region
          %p186 = scmp.lt.s32.totalorder %s14, 1
          %s187 = scalar_select %p186, %s14, 1
          %s188 = smul.addr %s187, 2
          %s189 = smul.addr %s188, 8
          %s190 = scalar_lea.vmem %s0, %s189
        $region32: #{tpu_custom_call.1} parent=27 // pred_fallthru
          _
        // Predicated region
        $region33: #{tpu_custom_call.1} parent=27 // pred_check
          %p191 = pneg %p60
        $region34: #{tpu_custom_call.1} parent=27 // pred_check_branch
          %193 = sbr.rel (%p191) target = $region36
        $region35: #{tpu_custom_call.1} parent=27 // pred_region
          %p194 = scmp.lt.s32.totalorder %s14, 1
          %s195 = scalar_select %p194, %s14, 1
          %s196 = smul.addr %s195, 2
          %s197 = smul.addr %s196, 8
          %s198 = scalar_lea.vmem %s1, %s197
        $region36: #{tpu_custom_call.1} parent=27 // pred_fallthru
          _
      $region28: #{tpu_custom_call.1} parent=5 // pred_fallthru
        _
      %p199 = scmp.le.s32.totalorder 1, %s14
      %p200 = scmp.lt.s32.totalorder %s14, 3
      %p201 = pnand %p199, %p200
      %p202 = pneg %p201
      // Predicated region
      $region37: #{tpu_custom_call.1} parent=5 // pred_check
        _
      $region38: #{tpu_custom_call.1} parent=5 // pred_check_branch
        %204 = sbr.rel (%p201) target = $region40
      $region39: #{tpu_custom_call.1} parent=5 // pred_region
        %s205 = ssub.s32 %s14, 1
        %p206 = scmp.lt.s32.totalorder %s19, 1
        %s207 = scalar_select %p206, %s19, 1
        %s208 = smul.addr %s207, 2
        %s209 = smul.addr %s208, 8
        %s210 = scalar_lea.vmem %s0, %s209
        %p211 = pneg %p40
        %p212 = pneg %p37
        %p213 = scmp.lt.s32.totalorder %s19, 1
        %s214 = scalar_select %p213, %s19, 1
        %s215 = smul.addr %s214, 2
        %s216 = smul.addr %s215, 8
        %s217 = scalar_lea.vmem %s1, %s216
        %p218 = pneg %p66
        %p219 = pneg %p63
        %p220 = pneg %p87
        %p221 = pneg %p84
        %p222 = pneg %p108
        %p223 = pneg %p105
        %p224 = pneg %p129
        %p225 = pneg %p126
        %p226 = pneg %p155
        %p227 = pneg %p152
        %s228 = sand.u32 %s142, 1
        %s229 = scalar_lea.sflag [#allocation3], %s228
        %s230 = sand.u32 %s142, 1
        %s231 = smul.addr %s230, 32
        %s232 = scalar_lea.vmem [#allocation2], %s231
        %p233 = scmp.lt.s32.totalorder %s19, 1
        %s234 = scalar_select %p233, %s19, 1
        %s235 = smul.addr %s234, 2
        %s236 = smul.addr %s235, 8
        %s237 = scalar_lea.vmem %s0, %s236
        %p238 = scmp.lt.s32.totalorder %s19, 1
        %s239 = scalar_select %p238, %s19, 1
        %s240 = smul.addr %s239, 2
        %s241 = smul.addr %s240, 8
        %s242 = scalar_lea.vmem %s1, %s241
        %v243 = vld [vmem:[%s237] sm:$0xff]
        %v244 = vld [vmem:[%s237 + $0x8] sm:$0xff]
        %245 = vrot.lane.b32.xlu0 %v243, 17
        %v246 = vpop.permute.xlu0 %245
        %247 = vrot.lane.b32.xlu0 %v244, 17
        %v248 = vpop.permute.xlu0 %247
        %v249 = vlaneseq
        %v250 = vand.u32 %v249, 127
        %vm251 = vcmp.lt.s32.totalorder %v250, 17
        %v252 = vsel %vm251, %v246, %v248
        %v253 = vsel %vm251, %v248, %v246
        %v254 = vld [vmem:[%s2] sm:$0x3]
        %v256 = vlaneseq
        %v257 = vshrl.u32 %v256, 7
        %v258 = vsub.s32 0, %v257
        %v259 = vrot.slane %v254, %v258
        %v260 = vlaneseq
        %v261 = vshrl.u32 %v260, 7
        %v262 = vsub.s32 1, %v261
        %v263 = vrot.slane %v254, %v262
        %v266 = vmul.f32 %v253, %v259
        %v267 = vmul.f32 %v252, %v263
        %v268 = vld [vmem:[%s3] sm:$0xff]
        %269 = vrot.lane.b32.xlu0 %v243, 16
        %v270 = vpop.permute.xlu0 %269
        %271 = vrot.lane.b32.xlu0 %v244, 16
        %v272 = vpop.permute.xlu0 %271
        %vm273 = vcmp.lt.s32.totalorder %v250, 16
        %v274 = vsel %vm273, %v270, %v272
        %v275 = vsel %vm273, %v272, %v270
        %s276 = scalar_lea.vmem %s2, 2
        %v277 = vld [vmem:[%s276] sm:$0x3]
        %v279 = vlaneseq
        %v280 = vshrl.u32 %v279, 7
        %v281 = vsub.s32 0, %v280
        %v282 = vrot.slane %v277, %v281
        %v283 = vlaneseq
        %v284 = vshrl.u32 %v283, 7
        %v285 = vsub.s32 1, %v284
        %v286 = vrot.slane %v277, %v285
        %v289 = vmul.f32 %v275, %v282
        %v290 = vmul.f32 %v274, %v286
        %s291 = scalar_lea.vmem %s3, 16
        %v292 = vld [vmem:[%s291] sm:$0xff]
        %vm293 = vcmask 64512
        %v295 = vsel %vm293, %v292, 0
        %297 = vmatprep.subr.mxu0 %v290
        %298 = vmatpush1.msra.mxu0 %v289
        %299 = vmatprep.subr.mxu0 0.0
        %300 = vmatpush1.msra.mxu0 0.0
        %301 = vmatprep.subr.mxu0 0.0
        %302 = vmatpush1.msra.mxu0 0.0
        %303 = vmatprep.subr.mxu0 0.0
        %304 = vmatpush1.msra.mxu0 0.0
        %305 = vmatprep.subr.mxu0 0.0
        %306 = vmatpush1.msra.mxu0 0.0
        %307 = vmatprep.subr.mxu0 0.0
        %308 = vmatpush1.msra.mxu0 0.0
        %309 = vmatprep.subr.mxu0 0.0
        %310 = vmatpush1.msra.mxu0 0.0
        %311 = vmatprep.subr.mxu0 0.0
        %312 = vmatpush1.msra.mxu0 0.0
        %313 = vmatprep.subr.mxu0 0.0
        %314 = vmatpush1.msra.mxu0 0.0
        %315 = vmatprep.subr.mxu0 0.0
        %316 = vmatpush1.msra.mxu0 0.0
        %317 = vmatprep.subr.mxu0 0.0
        %318 = vmatpush1.msra.mxu0 0.0
        %319 = vmatprep.subr.mxu0 0.0
        %320 = vmatpush1.msra.mxu0 0.0
        %321 = vmatprep.subr.mxu0 0.0
        %322 = vmatpush1.msra.mxu0 0.0
        %323 = vmatprep.subr.mxu0 0.0
        %324 = vmatpush1.msra.mxu0 0.0
        %325 = vmatprep.subr.mxu0 0.0
        %326 = vmatpush1.msra.mxu0 0.0
        %327 = vmatprep.subr.mxu0 0.0
        %328 = vmatpush1.msra.mxu0 0.0
        %329 = vmatprep.subr.mxu0 0.0
        %330 = vmatpush1.msra.mxu0 0.0
        %331 = vmatprep.subr.mxu0 0.0
        %332 = vmatpush1.msra.mxu0 0.0
        %333 = vmatprep.subr.mxu0 0.0
        %334 = vmatpush1.msra.mxu0 0.0
        %335 = vmatprep.subr.mxu0 0.0
        %336 = vmatpush1.msra.mxu0 0.0
        %337 = vmatprep.subr.mxu0 0.0
        %338 = vmatpush1.msra.mxu0 0.0
        %339 = vmatprep.subr.mxu0 0.0
        %340 = vmatpush1.msra.mxu0 0.0
        %341 = vmatprep.subr.mxu0 0.0
        %342 = vmatpush1.msra.mxu0 0.0
        %343 = vmatprep.subr.mxu0 0.0
        %344 = vmatpush1.msra.mxu0 0.0
        %345 = vmatprep.subr.mxu0 0.0
        %346 = vmatpush1.msra.mxu0 0.0
        %347 = vmatprep.subr.mxu0 0.0
        %348 = vmatpush1.msra.mxu0 0.0
        %349 = vmatprep.subr.mxu0 0.0
        %350 = vmatpush1.msra.mxu0 0.0
        %351 = vmatprep.subr.mxu0 0.0
        %352 = vmatpush1.msra.mxu0 0.0
        %353 = vmatprep.subr.mxu0 0.0
        %354 = vmatpush1.msra.mxu0 0.0
        %355 = vmatprep.subr.mxu0 0.0
        %356 = vmatpush1.msra.mxu0 0.0
        %357 = vmatprep.subr.mxu0 0.0
        %358 = vmatpush1.msra.mxu0 0.0
        %359 = vmatprep.subr.mxu0 0.0
        %360 = vmatpush1.msra.mxu0 0.0
        %361 = vmatprep.mubr.f32.mxu0 0.0
        %362 = vmatmul.mubr.f32.gmra.mrb[0].mxu0 %v295
        %v363 = vpop.f32.mrb[0].mxu0
        %v364 = vadd.f32 0.0, %v363
        %v365 = vpop.f32.mrb[0].mxu0
        %v366 = vadd.f32 0.0, %v365
        %367 = vdwg.mxu0
        %v369 = vsel %vm293, %v268, 0
        %371 = vmatprep.subr.mxu0 %v267
        %372 = vmatpush1.msra.mxu0 %v266
        %373 = vmatprep.subr.mxu0 0.0
        %374 = vmatpush1.msra.mxu0 0.0
        %375 = vmatprep.subr.mxu0 0.0
        %376 = vmatpush1.msra.mxu0 0.0
        %377 = vmatprep.subr.mxu0 0.0
        %378 = vmatpush1.msra.mxu0 0.0
        %379 = vmatprep.subr.mxu0 0.0
        %380 = vmatpush1.msra.mxu0 0.0
        %381 = vmatprep.subr.mxu0 0.0
        %382 = vmatpush1.msra.mxu0 0.0
        %383 = vmatprep.subr.mxu0 0.0
        %384 = vmatpush1.msra.mxu0 0.0
        %385 = vmatprep.subr.mxu0 0.0
        %386 = vmatpush1.msra.mxu0 0.0
        %387 = vmatprep.subr.mxu0 0.0
        %388 = vmatpush1.msra.mxu0 0.0
        %389 = vmatprep.subr.mxu0 0.0
        %390 = vmatpush1.msra.mxu0 0.0
        %391 = vmatprep.subr.mxu0 0.0
        %392 = vmatpush1.msra.mxu0 0.0
        %393 = vmatprep.subr.mxu0 0.0
        %394 = vmatpush1.msra.mxu0 0.0
        %395 = vmatprep.subr.mxu0 0.0
        %396 = vmatpush1.msra.mxu0 0.0
        %397 = vmatprep.subr.mxu0 0.0
        %398 = vmatpush1.msra.mxu0 0.0
        %399 = vmatprep.subr.mxu0 0.0
        %400 = vmatpush1.msra.mxu0 0.0
        %401 = vmatprep.subr.mxu0 0.0
        %402 = vmatpush1.msra.mxu0 0.0
        %403 = vmatprep.subr.mxu0 0.0
        %404 = vmatpush1.msra.mxu0 0.0
        %405 = vmatprep.subr.mxu0 0.0
        %406 = vmatpush1.msra.mxu0 0.0
        %407 = vmatprep.subr.mxu0 0.0
        %408 = vmatpush1.msra.mxu0 0.0
        %409 = vmatprep.subr.mxu0 0.0
        %410 = vmatpush1.msra.mxu0 0.0
        %411 = vmatprep.subr.mxu0 0.0
        %412 = vmatpush1.msra.mxu0 0.0
        %413 = vmatprep.subr.mxu0 0.0
        %414 = vmatpush1.msra.mxu0 0.0
        %415 = vmatprep.subr.mxu0 0.0
        %416 = vmatpush1.msra.mxu0 0.0
        %417 = vmatprep.subr.mxu0 0.0
        %418 = vmatpush1.msra.mxu0 0.0
        %419 = vmatprep.subr.mxu0 0.0
        %420 = vmatpush1.msra.mxu0 0.0
        %421 = vmatprep.subr.mxu0 0.0
        %422 = vmatpush1.msra.mxu0 0.0
        %423 = vmatprep.subr.mxu0 0.0
        %424 = vmatpush1.msra.mxu0 0.0
        %425 = vmatprep.subr.mxu0 0.0
        %426 = vmatpush1.msra.mxu0 0.0
        %427 = vmatprep.subr.mxu0 0.0
        %428 = vmatpush1.msra.mxu0 0.0
        %429 = vmatprep.subr.mxu0 0.0
        %430 = vmatpush1.msra.mxu0 0.0
        %431 = vmatprep.subr.mxu0 0.0
        %432 = vmatpush1.msra.mxu0 0.0
        %433 = vmatprep.subr.mxu0 0.0
        %434 = vmatpush1.msra.mxu0 0.0
        %435 = vmatprep.mubr.f32.mxu0 0.0
        %436 = vmatmul.mubr.f32.gmra.mrb[0].mxu0 %v369
        %v437 = vpop.f32.mrb[0].mxu0
        %v438 = vadd.f32 %v364, %v437
        %v439 = vpop.f32.mrb[0].mxu0
        %v440 = vadd.f32 %v366, %v439
        %441 = vdwg.mxu0
        %442 = vrot.lane.b32.xlu0 %v243, 15
        %v443 = vpop.permute.xlu0 %442
        %444 = vrot.lane.b32.xlu0 %v244, 15
        %v445 = vpop.permute.xlu0 %444
        %vm446 = vcmp.lt.s32.totalorder %v250, 15
        %v447 = vsel %vm446, %v443, %v445
        %v448 = vsel %vm446, %v445, %v443
        %s449 = scalar_lea.vmem %s2, 4
        %v450 = vld [vmem:[%s449] sm:$0x3]
        %v452 = vlaneseq
        %v453 = vshrl.u32 %v452, 7
        %v454 = vsub.s32 0, %v453
        %v455 = vrot.slane %v450, %v454
        %v456 = vlaneseq
        %v457 = vshrl.u32 %v456, 7
        %v458 = vsub.s32 1, %v457
        %v459 = vrot.slane %v450, %v458
        %v462 = vmul.f32 %v448, %v455
        %v463 = vmul.f32 %v447, %v459
        %s464 = scalar_lea.vmem %s3, 32
        %v465 = vld [vmem:[%s464] sm:$0xff]
        %v467 = vsel %vm293, %v465, 0
        %469 = vmatprep.subr.mxu0 %v463
        %470 = vmatpush1.msra.mxu0 %v462
        %471 = vmatprep.subr.mxu0 0.0
        %472 = vmatpush1.msra.mxu0 0.0
        %473 = vmatprep.subr.mxu0 0.0
        %474 = vmatpush1.msra.mxu0 0.0
        %475 = vmatprep.subr.mxu0 0.0
        %476 = vmatpush1.msra.mxu0 0.0
        %477 = vmatprep.subr.mxu0 0.0
        %478 = vmatpush1.msra.mxu0 0.0
        %479 = vmatprep.subr.mxu0 0.0
        %480 = vmatpush1.msra.mxu0 0.0
        %481 = vmatprep.subr.mxu0 0.0
        %482 = vmatpush1.msra.mxu0 0.0
        %483 = vmatprep.subr.mxu0 0.0
        %484 = vmatpush1.msra.mxu0 0.0
        %485 = vmatprep.subr.mxu0 0.0
        %486 = vmatpush1.msra.mxu0 0.0
        %487 = vmatprep.subr.mxu0 0.0
        %488 = vmatpush1.msra.mxu0 0.0
        %489 = vmatprep.subr.mxu0 0.0
        %490 = vmatpush1.msra.mxu0 0.0
        %491 = vmatprep.subr.mxu0 0.0
        %492 = vmatpush1.msra.mxu0 0.0
        %493 = vmatprep.subr.mxu0 0.0
        %494 = vmatpush1.msra.mxu0 0.0
        %495 = vmatprep.subr.mxu0 0.0
        %496 = vmatpush1.msra.mxu0 0.0
        %497 = vmatprep.subr.mxu0 0.0
        %498 = vmatpush1.msra.mxu0 0.0
        %499 = vmatprep.subr.mxu0 0.0
        %500 = vmatpush1.msra.mxu0 0.0
        %501 = vmatprep.subr.mxu0 0.0
        %502 = vmatpush1.msra.mxu0 0.0
        %503 = vmatprep.subr.mxu0 0.0
        %504 = vmatpush1.msra.mxu0 0.0
        %505 = vmatprep.subr.mxu0 0.0
        %506 = vmatpush1.msra.mxu0 0.0
        %507 = vmatprep.subr.mxu0 0.0
        %508 = vmatpush1.msra.mxu0 0.0
        %509 = vmatprep.subr.mxu0 0.0
        %510 = vmatpush1.msra.mxu0 0.0
        %511 = vmatprep.subr.mxu0 0.0
        %512 = vmatpush1.msra.mxu0 0.0
        %513 = vmatprep.subr.mxu0 0.0
        %514 = vmatpush1.msra.mxu0 0.0
        %515 = vmatprep.subr.mxu0 0.0
        %516 = vmatpush1.msra.mxu0 0.0
        %517 = vmatprep.subr.mxu0 0.0
        %518 = vmatpush1.msra.mxu0 0.0
        %519 = vmatprep.subr.mxu0 0.0
        %520 = vmatpush1.msra.mxu0 0.0
        %521 = vmatprep.subr.mxu0 0.0
        %522 = vmatpush1.msra.mxu0 0.0
        %523 = vmatprep.subr.mxu0 0.0
        %524 = vmatpush1.msra.mxu0 0.0
        %525 = vmatprep.subr.mxu0 0.0
        %526 = vmatpush1.msra.mxu0 0.0
        %527 = vmatprep.subr.mxu0 0.0
        %528 = vmatpush1.msra.mxu0 0.0
        %529 = vmatprep.subr.mxu0 0.0
        %530 = vmatpush1.msra.mxu0 0.0
        %531 = vmatprep.subr.mxu0 0.0
        %532 = vmatpush1.msra.mxu0 0.0
        %533 = vmatprep.mubr.f32.mxu0 0.0
        %534 = vmatmul.mubr.f32.gmra.mrb[0].mxu0 %v467
        %v535 = vpop.f32.mrb[0].mxu0
        %v536 = vadd.f32 0.0, %v535
        %v537 = vpop.f32.mrb[0].mxu0
        %v538 = vadd.f32 0.0, %v537
        %539 = vdwg.mxu0
        %v540 = vadd.f32 %v438, %v536
        %v541 = vadd.f32 %v440, %v538
        %542 = vrot.lane.b32.xlu0 %v243, 1
        %v543 = vpop.permute.xlu0 %542
        %544 = vrot.lane.b32.xlu0 %v244, 1
        %v545 = vpop.permute.xlu0 %544
        %vm546 = vcmp.lt.s32.totalorder %v250, 1
        %v547 = vsel %vm546, %v543, %v545
        %v548 = vsel %vm546, %v545, %v543
        %s549 = scalar_lea.vmem %s2, 6
        %v550 = vld [vmem:[%s549] sm:$0x3]
        %v552 = vlaneseq
        %v553 = vshrl.u32 %v552, 7
        %v554 = vsub.s32 0, %v553
        %v555 = vrot.slane %v550, %v554
        %v556 = vlaneseq
        %v557 = vshrl.u32 %v556, 7
        %v558 = vsub.s32 1, %v557
        %v559 = vrot.slane %v550, %v558
        %v562 = vmul.f32 %v548, %v555
        %v563 = vmul.f32 %v547, %v559
        %s564 = scalar_lea.vmem %s3, 48
        %v565 = vld [vmem:[%s564] sm:$0xff]
        %v567 = vsel %vm293, %v565, 0
        %569 = vmatprep.subr.mxu0 %v563
        %570 = vmatpush1.msra.mxu0 %v562
        %571 = vmatprep.subr.mxu0 0.0
        %572 = vmatpush1.msra.mxu0 0.0
        %573 = vmatprep.subr.mxu0 0.0
        %574 = vmatpush1.msra.mxu0 0.0
        %575 = vmatprep.subr.mxu0 0.0
        %576 = vmatpush1.msra.mxu0 0.0
        %577 = vmatprep.subr.mxu0 0.0
        %578 = vmatpush1.msra.mxu0 0.0
        %579 = vmatprep.subr.mxu0 0.0
        %580 = vmatpush1.msra.mxu0 0.0
        %581 = vmatprep.subr.mxu0 0.0
        %582 = vmatpush1.msra.mxu0 0.0
        %583 = vmatprep.subr.mxu0 0.0
        %584 = vmatpush1.msra.mxu0 0.0
        %585 = vmatprep.subr.mxu0 0.0
        %586 = vmatpush1.msra.mxu0 0.0
        %587 = vmatprep.subr.mxu0 0.0
        %588 = vmatpush1.msra.mxu0 0.0
        %589 = vmatprep.subr.mxu0 0.0
        %590 = vmatpush1.msra.mxu0 0.0
        %591 = vmatprep.subr.mxu0 0.0
        %592 = vmatpush1.msra.mxu0 0.0
        %593 = vmatprep.subr.mxu0 0.0
        %594 = vmatpush1.msra.mxu0 0.0
        %595 = vmatprep.subr.mxu0 0.0
        %596 = vmatpush1.msra.mxu0 0.0
        %597 = vmatprep.subr.mxu0 0.0
        %598 = vmatpush1.msra.mxu0 0.0
        %599 = vmatprep.subr.mxu0 0.0
        %600 = vmatpush1.msra.mxu0 0.0
        %601 = vmatprep.subr.mxu0 0.0
        %602 = vmatpush1.msra.mxu0 0.0
        %603 = vmatprep.subr.mxu0 0.0
        %604 = vmatpush1.msra.mxu0 0.0
        %605 = vmatprep.subr.mxu0 0.0
        %606 = vmatpush1.msra.mxu0 0.0
        %607 = vmatprep.subr.mxu0 0.0
        %608 = vmatpush1.msra.mxu0 0.0
        %609 = vmatprep.subr.mxu0 0.0
        %610 = vmatpush1.msra.mxu0 0.0
        %611 = vmatprep.subr.mxu0 0.0
        %612 = vmatpush1.msra.mxu0 0.0
        %613 = vmatprep.subr.mxu0 0.0
        %614 = vmatpush1.msra.mxu0 0.0
        %615 = vmatprep.subr.mxu0 0.0
        %616 = vmatpush1.msra.mxu0 0.0
        %617 = vmatprep.subr.mxu0 0.0
        %618 = vmatpush1.msra.mxu0 0.0
        %619 = vmatprep.subr.mxu0 0.0
        %620 = vmatpush1.msra.mxu0 0.0
        %621 = vmatprep.subr.mxu0 0.0
        %622 = vmatpush1.msra.mxu0 0.0
        %623 = vmatprep.subr.mxu0 0.0
        %624 = vmatpush1.msra.mxu0 0.0
        %625 = vmatprep.subr.mxu0 0.0
        %626 = vmatpush1.msra.mxu0 0.0
        %627 = vmatprep.subr.mxu0 0.0
        %628 = vmatpush1.msra.mxu0 0.0
        %629 = vmatprep.subr.mxu0 0.0
        %630 = vmatpush1.msra.mxu0 0.0
        %631 = vmatprep.subr.mxu0 0.0
        %632 = vmatpush1.msra.mxu0 0.0
        %633 = vmatprep.mubr.f32.mxu0 0.0
        %634 = vmatmul.mubr.f32.gmra.mrb[0].mxu0 %v567
        %v635 = vpop.f32.mrb[0].mxu0
        %v636 = vadd.f32 0.0, %v635
        %v637 = vpop.f32.mrb[0].mxu0
        %v638 = vadd.f32 0.0, %v637
        %639 = vdwg.mxu0
        %v640 = vadd.f32 %v540, %v636
        %v641 = vadd.f32 %v541, %v638
        %s642 = scalar_lea.vmem %s3, 64
        %v643 = vld [vmem:[%s642] sm:$0xff]
        %v645 = vsel %vm293, %v643, 0
        %647 = vmatprep.subr.mxu0 %v244
        %648 = vmatpush1.msra.mxu0 %v243
        %649 = vmatprep.subr.mxu0 0.0
        %650 = vmatpush1.msra.mxu0 0.0
        %651 = vmatprep.subr.mxu0 0.0
        %652 = vmatpush1.msra.mxu0 0.0
        %653 = vmatprep.subr.mxu0 0.0
        %654 = vmatpush1.msra.mxu0 0.0
        %655 = vmatprep.subr.mxu0 0.0
        %656 = vmatpush1.msra.mxu0 0.0
        %657 = vmatprep.subr.mxu0 0.0
        %658 = vmatpush1.msra.mxu0 0.0
        %659 = vmatprep.subr.mxu0 0.0
        %660 = vmatpush1.msra.mxu0 0.0
        %661 = vmatprep.subr.mxu0 0.0
        %662 = vmatpush1.msra.mxu0 0.0
        %663 = vmatprep.subr.mxu0 0.0
        %664 = vmatpush1.msra.mxu0 0.0
        %665 = vmatprep.subr.mxu0 0.0
        %666 = vmatpush1.msra.mxu0 0.0
        %667 = vmatprep.subr.mxu0 0.0
        %668 = vmatpush1.msra.mxu0 0.0
        %669 = vmatprep.subr.mxu0 0.0
        %670 = vmatpush1.msra.mxu0 0.0
        %671 = vmatprep.subr.mxu0 0.0
        %672 = vmatpush1.msra.mxu0 0.0
        %673 = vmatprep.subr.mxu0 0.0
        %674 = vmatpush1.msra.mxu0 0.0
        %675 = vmatprep.subr.mxu0 0.0
        %676 = vmatpush1.msra.mxu0 0.0
        %677 = vmatprep.subr.mxu0 0.0
        %678 = vmatpush1.msra.mxu0 0.0
        %679 = vmatprep.subr.mxu0 0.0
        %680 = vmatpush1.msra.mxu0 0.0
        %681 = vmatprep.subr.mxu0 0.0
        %682 = vmatpush1.msra.mxu0 0.0
        %683 = vmatprep.subr.mxu0 0.0
        %684 = vmatpush1.msra.mxu0 0.0
        %685 = vmatprep.subr.mxu0 0.0
        %686 = vmatpush1.msra.mxu0 0.0
        %687 = vmatprep.subr.mxu0 0.0
        %688 = vmatpush1.msra.mxu0 0.0
        %689 = vmatprep.subr.mxu0 0.0
        %690 = vmatpush1.msra.mxu0 0.0
        %691 = vmatprep.subr.mxu0 0.0
        %692 = vmatpush1.msra.mxu0 0.0
        %693 = vmatprep.subr.mxu0 0.0
        %694 = vmatpush1.msra.mxu0 0.0
        %695 = vmatprep.subr.mxu0 0.0
        %696 = vmatpush1.msra.mxu0 0.0
        %697 = vmatprep.subr.mxu0 0.0
        %698 = vmatpush1.msra.mxu0 0.0
        %699 = vmatprep.subr.mxu0 0.0
        %700 = vmatpush1.msra.mxu0 0.0
        %701 = vmatprep.subr.mxu0 0.0
        %702 = vmatpush1.msra.mxu0 0.0
        %703 = vmatprep.subr.mxu0 0.0
        %704 = vmatpush1.msra.mxu0 0.0
        %705 = vmatprep.subr.mxu0 0.0
        %706 = vmatpush1.msra.mxu0 0.0
        %707 = vmatprep.subr.mxu0 0.0
        %708 = vmatpush1.msra.mxu0 0.0
        %709 = vmatprep.subr.mxu0 0.0
        %710 = vmatpush1.msra.mxu0 0.0
        %711 = vmatprep.mubr.f32.mxu0 0.0
        %712 = vmatmul.mubr.f32.gmra.mrb[0].mxu0 %v645
        %v713 = vpop.f32.mrb[0].mxu0
        %v714 = vadd.f32 0.0, %v713
        %v715 = vpop.f32.mrb[0].mxu0
        %v716 = vadd.f32 0.0, %v715
        %717 = vdwg.mxu0
        %v718 = vadd.f32 %v640, %v714
        %v719 = vadd.f32 %v641, %v716
        %720 = vrot.lane.b32.xlu0 %v243, 127
        %v721 = vpop.permute.xlu0 %720
        %722 = vrot.lane.b32.xlu0 %v244, 127
        %v723 = vpop.permute.xlu0 %722
        %vm724 = vcmp.lt.s32.totalorder %v250, 127
        %v725 = vsel %vm724, %v721, %v723
        %v726 = vsel %vm724, %v723, %v721
        %s727 = scalar_lea.vmem %s2, 10
        %v728 = vld [vmem:[%s727] sm:$0x3]
        %v730 = vlaneseq
        %v731 = vshrl.u32 %v730, 7
        %v732 = vsub.s32 0, %v731
        %v733 = vrot.slane %v728, %v732
        %v734 = vlaneseq
        %v735 = vshrl.u32 %v734, 7
        %v736 = vsub.s32 1, %v735
        %v737 = vrot.slane %v728, %v736
        %v740 = vmul.f32 %v725, %v733
        %v741 = vmul.f32 %v726, %v737
        %s742 = scalar_lea.vmem %s3, 80
        %v743 = vld [vmem:[%s742] sm:$0xff]
        %v745 = vsel %vm293, %v743, 0
        %747 = vmatprep.subr.mxu0 %v741
        %748 = vmatpush1.msra.mxu0 %v740
        %749 = vmatprep.subr.mxu0 0.0
        %750 = vmatpush1.msra.mxu0 0.0
        %751 = vmatprep.subr.mxu0 0.0
        %752 = vmatpush1.msra.mxu0 0.0
        %753 = vmatprep.subr.mxu0 0.0
        %754 = vmatpush1.msra.mxu0 0.0
        %755 = vmatprep.subr.mxu0 0.0
        %756 = vmatpush1.msra.mxu0 0.0
        %757 = vmatprep.subr.mxu0 0.0
        %758 = vmatpush1.msra.mxu0 0.0
        %759 = vmatprep.subr.mxu0 0.0
        %760 = vmatpush1.msra.mxu0 0.0
        %761 = vmatprep.subr.mxu0 0.0
        %762 = vmatpush1.msra.mxu0 0.0
        %763 = vmatprep.subr.mxu0 0.0
        %764 = vmatpush1.msra.mxu0 0.0
        %765 = vmatprep.subr.mxu0 0.0
        %766 = vmatpush1.msra.mxu0 0.0
        %767 = vmatprep.subr.mxu0 0.0
        %768 = vmatpush1.msra.mxu0 0.0
        %769 = vmatprep.subr.mxu0 0.0
        %770 = vmatpush1.msra.mxu0 0.0
        %771 = vmatprep.subr.mxu0 0.0
        %772 = vmatpush1.msra.mxu0 0.0
        %773 = vmatprep.subr.mxu0 0.0
        %774 = vmatpush1.msra.mxu0 0.0
        %775 = vmatprep.subr.mxu0 0.0
        %776 = vmatpush1.msra.mxu0 0.0
        %777 = vmatprep.subr.mxu0 0.0
        %778 = vmatpush1.msra.mxu0 0.0
        %779 = vmatprep.subr.mxu0 0.0
        %780 = vmatpush1.msra.mxu0 0.0
        %781 = vmatprep.subr.mxu0 0.0
        %782 = vmatpush1.msra.mxu0 0.0
        %783 = vmatprep.subr.mxu0 0.0
        %784 = vmatpush1.msra.mxu0 0.0
        %785 = vmatprep.subr.mxu0 0.0
        %786 = vmatpush1.msra.mxu0 0.0
        %787 = vmatprep.subr.mxu0 0.0
        %788 = vmatpush1.msra.mxu0 0.0
        %789 = vmatprep.subr.mxu0 0.0
        %790 = vmatpush1.msra.mxu0 0.0
        %791 = vmatprep.subr.mxu0 0.0
        %792 = vmatpush1.msra.mxu0 0.0
        %793 = vmatprep.subr.mxu0 0.0
        %794 = vmatpush1.msra.mxu0 0.0
        %795 = vmatprep.subr.mxu0 0.0
        %796 = vmatpush1.msra.mxu0 0.0
        %797 = vmatprep.subr.mxu0 0.0
        %798 = vmatpush1.msra.mxu0 0.0
        %799 = vmatprep.subr.mxu0 0.0
        %800 = vmatpush1.msra.mxu0 0.0
        %801 = vmatprep.subr.mxu0 0.0
        %802 = vmatpush1.msra.mxu0 0.0
        %803 = vmatprep.subr.mxu0 0.0
        %804 = vmatpush1.msra.mxu0 0.0
        %805 = vmatprep.subr.mxu0 0.0
        %806 = vmatpush1.msra.mxu0 0.0
        %807 = vmatprep.subr.mxu0 0.0
        %808 = vmatpush1.msra.mxu0 0.0
        %809 = vmatprep.subr.mxu0 0.0
        %810 = vmatpush1.msra.mxu0 0.0
        %811 = vmatprep.mubr.f32.mxu0 0.0
        %812 = vmatmul.mubr.f32.gmra.mrb[0].mxu0 %v745
        %v813 = vpop.f32.mrb[0].mxu0
        %v814 = vadd.f32 0.0, %v813
        %v815 = vpop.f32.mrb[0].mxu0
        %v816 = vadd.f32 0.0, %v815
        %817 = vdwg.mxu0
        %v818 = vadd.f32 %v718, %v814
        %v819 = vadd.f32 %v719, %v816
        %820 = vrot.lane.b32.xlu0 %v243, 113
        %v821 = vpop.permute.xlu0 %820
        %822 = vrot.lane.b32.xlu0 %v244, 113
        %v823 = vpop.permute.xlu0 %822
        %vm824 = vcmp.lt.s32.totalorder %v250, 113
        %v825 = vsel %vm824, %v821, %v823
        %v826 = vsel %vm824, %v823, %v821
        %s827 = scalar_lea.vmem %s2, 12
        %v828 = vld [vmem:[%s827] sm:$0x3]
        %v830 = vlaneseq
        %v831 = vshrl.u32 %v830, 7
        %v832 = vsub.s32 0, %v831
        %v833 = vrot.slane %v828, %v832
        %v834 = vlaneseq
        %v835 = vshrl.u32 %v834, 7
        %v836 = vsub.s32 1, %v835
        %v837 = vrot.slane %v828, %v836
        %v840 = vmul.f32 %v825, %v833
        %v841 = vmul.f32 %v826, %v837
        %s842 = scalar_lea.vmem %s3, 96
        %v843 = vld [vmem:[%s842] sm:$0xff]
        %v845 = vsel %vm293, %v843, 0
        %847 = vmatprep.subr.mxu0 %v841
        %848 = vmatpush1.msra.mxu0 %v840
        %849 = vmatprep.subr.mxu0 0.0
        %850 = vmatpush1.msra.mxu0 0.0
        %851 = vmatprep.subr.mxu0 0.0
        %852 = vmatpush1.msra.mxu0 0.0
        %853 = vmatprep.subr.mxu0 0.0
        %854 = vmatpush1.msra.mxu0 0.0
        %855 = vmatprep.subr.mxu0 0.0
        %856 = vmatpush1.msra.mxu0 0.0
        %857 = vmatprep.subr.mxu0 0.0
        %858 = vmatpush1.msra.mxu0 0.0
        %859 = vmatprep.subr.mxu0 0.0
        %860 = vmatpush1.msra.mxu0 0.0
        %861 = vmatprep.subr.mxu0 0.0
        %862 = vmatpush1.msra.mxu0 0.0
        %863 = vmatprep.subr.mxu0 0.0
        %864 = vmatpush1.msra.mxu0 0.0
        %865 = vmatprep.subr.mxu0 0.0
        %866 = vmatpush1.msra.mxu0 0.0
        %867 = vmatprep.subr.mxu0 0.0
        %868 = vmatpush1.msra.mxu0 0.0
        %869 = vmatprep.subr.mxu0 0.0
        %870 = vmatpush1.msra.mxu0 0.0
        %871 = vmatprep.subr.mxu0 0.0
        %872 = vmatpush1.msra.mxu0 0.0
        %873 = vmatprep.subr.mxu0 0.0
        %874 = vmatpush1.msra.mxu0 0.0
        %875 = vmatprep.subr.mxu0 0.0
        %876 = vmatpush1.msra.mxu0 0.0
        %877 = vmatprep.subr.mxu0 0.0
        %878 = vmatpush1.msra.mxu0 0.0
        %879 = vmatprep.subr.mxu0 0.0
        %880 = vmatpush1.msra.mxu0 0.0
        %881 = vmatprep.subr.mxu0 0.0
        %882 = vmatpush1.msra.mxu0 0.0
        %883 = vmatprep.subr.mxu0 0.0
        %884 = vmatpush1.msra.mxu0 0.0
        %885 = vmatprep.subr.mxu0 0.0
        %886 = vmatpush1.msra.mxu0 0.0
        %887 = vmatprep.subr.mxu0 0.0
        %888 = vmatpush1.msra.mxu0 0.0
        %889 = vmatprep.subr.mxu0 0.0
        %890 = vmatpush1.msra.mxu0 0.0
        %891 = vmatprep.subr.mxu0 0.0
        %892 = vmatpush1.msra.mxu0 0.0
        %893 = vmatprep.subr.mxu0 0.0
        %894 = vmatpush1.msra.mxu0 0.0
        %895 = vmatprep.subr.mxu0 0.0
        %896 = vmatpush1.msra.mxu0 0.0
        %897 = vmatprep.subr.mxu0 0.0
        %898 = vmatpush1.msra.mxu0 0.0
        %899 = vmatprep.subr.mxu0 0.0
        %900 = vmatpush1.msra.mxu0 0.0
        %901 = vmatprep.subr.mxu0 0.0
        %902 = vmatpush1.msra.mxu0 0.0
        %903 = vmatprep.subr.mxu0 0.0
        %904 = vmatpush1.msra.mxu0 0.0
        %905 = vmatprep.subr.mxu0 0.0
        %906 = vmatpush1.msra.mxu0 0.0
        %907 = vmatprep.subr.mxu0 0.0
        %908 = vmatpush1.msra.mxu0 0.0
        %909 = vmatprep.subr.mxu0 0.0
        %910 = vmatpush1.msra.mxu0 0.0
        %911 = vmatprep.mubr.f32.mxu0 0.0
        %912 = vmatmul.mubr.f32.gmra.mrb[0].mxu0 %v845
        %v913 = vpop.f32.mrb[0].mxu0
        %v914 = vadd.f32 0.0, %v913
        %v915 = vpop.f32.mrb[0].mxu0
        %v916 = vadd.f32 0.0, %v915
        %917 = vdwg.mxu0
        %v918 = vadd.f32 %v818, %v914
        %v919 = vadd.f32 %v819, %v916
        %920 = vrot.lane.b32.xlu0 %v243, 112
        %v921 = vpop.permute.xlu0 %920
        %922 = vrot.lane.b32.xlu0 %v244, 112
        %v923 = vpop.permute.xlu0 %922
        %vm924 = vcmp.lt.s32.totalorder %v250, 112
        %v925 = vsel %vm924, %v921, %v923
        %v926 = vsel %vm924, %v923, %v921
        %s927 = scalar_lea.vmem %s2, 14
        %v928 = vld [vmem:[%s927] sm:$0x3]
        %v930 = vlaneseq
        %v931 = vshrl.u32 %v930, 7
        %v932 = vsub.s32 0, %v931
        %v933 = vrot.slane %v928, %v932
        %v934 = vlaneseq
        %v935 = vshrl.u32 %v934, 7
        %v936 = vsub.s32 1, %v935
        %v937 = vrot.slane %v928, %v936
        %v940 = vmul.f32 %v925, %v933
        %v941 = vmul.f32 %v926, %v937
        %s942 = scalar_lea.vmem %s3, 112
        %v943 = vld [vmem:[%s942] sm:$0xff]
        %v945 = vsel %vm293, %v943, 0
        %947 = vmatprep.subr.mxu0 %v941
        %948 = vmatpush1.msra.mxu0 %v940
        %949 = vmatprep.subr.mxu0 0.0
        %950 = vmatpush1.msra.mxu0 0.0
        %951 = vmatprep.subr.mxu0 0.0
        %952 = vmatpush1.msra.mxu0 0.0
        %953 = vmatprep.subr.mxu0 0.0
        %954 = vmatpush1.msra.mxu0 0.0
        %955 = vmatprep.subr.mxu0 0.0
        %956 = vmatpush1.msra.mxu0 0.0
        %957 = vmatprep.subr.mxu0 0.0
        %958 = vmatpush1.msra.mxu0 0.0
        %959 = vmatprep.subr.mxu0 0.0
        %960 = vmatpush1.msra.mxu0 0.0
        %961 = vmatprep.subr.mxu0 0.0
        %962 = vmatpush1.msra.mxu0 0.0
        %963 = vmatprep.subr.mxu0 0.0
        %964 = vmatpush1.msra.mxu0 0.0
        %965 = vmatprep.subr.mxu0 0.0
        %966 = vmatpush1.msra.mxu0 0.0
        %967 = vmatprep.subr.mxu0 0.0
        %968 = vmatpush1.msra.mxu0 0.0
        %969 = vmatprep.subr.mxu0 0.0
        %970 = vmatpush1.msra.mxu0 0.0
        %971 = vmatprep.subr.mxu0 0.0
        %972 = vmatpush1.msra.mxu0 0.0
        %973 = vmatprep.subr.mxu0 0.0
        %974 = vmatpush1.msra.mxu0 0.0
        %975 = vmatprep.subr.mxu0 0.0
        %976 = vmatpush1.msra.mxu0 0.0
        %977 = vmatprep.subr.mxu0 0.0
        %978 = vmatpush1.msra.mxu0 0.0
        %979 = vmatprep.subr.mxu0 0.0
        %980 = vmatpush1.msra.mxu0 0.0
        %981 = vmatprep.subr.mxu0 0.0
        %982 = vmatpush1.msra.mxu0 0.0
        %983 = vmatprep.subr.mxu0 0.0
        %984 = vmatpush1.msra.mxu0 0.0
        %985 = vmatprep.subr.mxu0 0.0
        %986 = vmatpush1.msra.mxu0 0.0
        %987 = vmatprep.subr.mxu0 0.0
        %988 = vmatpush1.msra.mxu0 0.0
        %989 = vmatprep.subr.mxu0 0.0
        %990 = vmatpush1.msra.mxu0 0.0
        %991 = vmatprep.subr.mxu0 0.0
        %992 = vmatpush1.msra.mxu0 0.0
        %993 = vmatprep.subr.mxu0 0.0
        %994 = vmatpush1.msra.mxu0 0.0
        %995 = vmatprep.subr.mxu0 0.0
        %996 = vmatpush1.msra.mxu0 0.0
        %997 = vmatprep.subr.mxu0 0.0
        %998 = vmatpush1.msra.mxu0 0.0
        %999 = vmatprep.subr.mxu0 0.0
        %1000 = vmatpush1.msra.mxu0 0.0
        %1001 = vmatprep.subr.mxu0 0.0
        %1002 = vmatpush1.msra.mxu0 0.0
        %1003 = vmatprep.subr.mxu0 0.0
        %1004 = vmatpush1.msra.mxu0 0.0
        %1005 = vmatprep.subr.mxu0 0.0
        %1006 = vmatpush1.msra.mxu0 0.0
        %1007 = vmatprep.subr.mxu0 0.0
        %1008 = vmatpush1.msra.mxu0 0.0
        %1009 = vmatprep.subr.mxu0 0.0
        %1010 = vmatpush1.msra.mxu0 0.0
        %1011 = vmatprep.mubr.f32.mxu0 0.0
        %1012 = vmatmul.mubr.f32.gmra.mrb[0].mxu0 %v945
        %v1013 = vpop.f32.mrb[0].mxu0
        %v1014 = vadd.f32 0.0, %v1013
        %v1015 = vpop.f32.mrb[0].mxu0
        %v1016 = vadd.f32 0.0, %v1015
        %1017 = vdwg.mxu0
        %v1018 = vadd.f32 %v918, %v1014
        %v1019 = vadd.f32 %v919, %v1016
        %1020 = vrot.lane.b32.xlu0 %v243, 111
        %v1021 = vpop.permute.xlu0 %1020
        %1022 = vrot.lane.b32.xlu0 %v244, 111
        %v1023 = vpop.permute.xlu0 %1022
        %vm1024 = vcmp.lt.s32.totalorder %v250, 111
        %v1025 = vsel %vm1024, %v1021, %v1023
        %v1026 = vsel %vm1024, %v1023, %v1021
        %s1027 = scalar_lea.vmem %s2, 16
        %v1028 = vld [vmem:[%s1027] sm:$0x3]
        %v1030 = vlaneseq
        %v1031 = vshrl.u32 %v1030, 7
        %v1032 = vsub.s32 0, %v1031
        %v1033 = vrot.slane %v1028, %v1032
        %v1034 = vlaneseq
        %v1035 = vshrl.u32 %v1034, 7
        %v1036 = vsub.s32 1, %v1035
        %v1037 = vrot.slane %v1028, %v1036
        %v1040 = vmul.f32 %v1025, %v1033
        %v1041 = vmul.f32 %v1026, %v1037
        %s1042 = scalar_lea.vmem %s3, 128
        %v1043 = vld [vmem:[%s1042] sm:$0xff]
        %v1045 = vsel %vm293, %v1043, 0
        %1047 = vmatprep.subr.mxu0 %v1041
        %1048 = vmatpush1.msra.mxu0 %v1040
        %1049 = vmatprep.subr.mxu0 0.0
        %1050 = vmatpush1.msra.mxu0 0.0
        %1051 = vmatprep.subr.mxu0 0.0
        %1052 = vmatpush1.msra.mxu0 0.0
        %1053 = vmatprep.subr.mxu0 0.0
        %1054 = vmatpush1.msra.mxu0 0.0
        %1055 = vmatprep.subr.mxu0 0.0
        %1056 = vmatpush1.msra.mxu0 0.0
        %1057 = vmatprep.subr.mxu0 0.0
        %1058 = vmatpush1.msra.mxu0 0.0
        %1059 = vmatprep.subr.mxu0 0.0
        %1060 = vmatpush1.msra.mxu0 0.0
        %1061 = vmatprep.subr.mxu0 0.0
        %1062 = vmatpush1.msra.mxu0 0.0
        %1063 = vmatprep.subr.mxu0 0.0
        %1064 = vmatpush1.msra.mxu0 0.0
        %1065 = vmatprep.subr.mxu0 0.0
        %1066 = vmatpush1.msra.mxu0 0.0
        %1067 = vmatprep.subr.mxu0 0.0
        %1068 = vmatpush1.msra.mxu0 0.0
        %1069 = vmatprep.subr.mxu0 0.0
        %1070 = vmatpush1.msra.mxu0 0.0
        %1071 = vmatprep.subr.mxu0 0.0
        %1072 = vmatpush1.msra.mxu0 0.0
        %1073 = vmatprep.subr.mxu0 0.0
        %1074 = vmatpush1.msra.mxu0 0.0
        %1075 = vmatprep.subr.mxu0 0.0
        %1076 = vmatpush1.msra.mxu0 0.0
        %1077 = vmatprep.subr.mxu0 0.0
        %1078 = vmatpush1.msra.mxu0 0.0
        %1079 = vmatprep.subr.mxu0 0.0
        %1080 = vmatpush1.msra.mxu0 0.0
        %1081 = vmatprep.subr.mxu0 0.0
        %1082 = vmatpush1.msra.mxu0 0.0
        %1083 = vmatprep.subr.mxu0 0.0
        %1084 = vmatpush1.msra.mxu0 0.0
        %1085 = vmatprep.subr.mxu0 0.0
        %1086 = vmatpush1.msra.mxu0 0.0
        %1087 = vmatprep.subr.mxu0 0.0
        %1088 = vmatpush1.msra.mxu0 0.0
        %1089 = vmatprep.subr.mxu0 0.0
        %1090 = vmatpush1.msra.mxu0 0.0
        %1091 = vmatprep.subr.mxu0 0.0
        %1092 = vmatpush1.msra.mxu0 0.0
        %1093 = vmatprep.subr.mxu0 0.0
        %1094 = vmatpush1.msra.mxu0 0.0
        %1095 = vmatprep.subr.mxu0 0.0
        %1096 = vmatpush1.msra.mxu0 0.0
        %1097 = vmatprep.subr.mxu0 0.0
        %1098 = vmatpush1.msra.mxu0 0.0
        %1099 = vmatprep.subr.mxu0 0.0
        %1100 = vmatpush1.msra.mxu0 0.0
        %1101 = vmatprep.subr.mxu0 0.0
        %1102 = vmatpush1.msra.mxu0 0.0
        %1103 = vmatprep.subr.mxu0 0.0
        %1104 = vmatpush1.msra.mxu0 0.0
        %1105 = vmatprep.subr.mxu0 0.0
        %1106 = vmatpush1.msra.mxu0 0.0
        %1107 = vmatprep.subr.mxu0 0.0
        %1108 = vmatpush1.msra.mxu0 0.0
        %1109 = vmatprep.subr.mxu0 0.0
        %1110 = vmatpush1.msra.mxu0 0.0
        %1111 = vmatprep.mubr.f32.mxu0 0.0
        %1112 = vmatmul.mubr.f32.gmra.mrb[0].mxu0 %v1045
        %v1113 = vpop.f32.mrb[0].mxu0
        %v1114 = vadd.f32 0.0, %v1113
        %v1115 = vpop.f32.mrb[0].mxu0
        %v1116 = vadd.f32 0.0, %v1115
        %1117 = vdwg.mxu0
        %v1118 = vadd.f32 %v1018, %v1114
        %v1119 = vadd.f32 %v1019, %v1116
        %v1120 = vld [vmem:[%s4] sm:$0xff]
        %v1121 = vadd.f32 %v1118, %v1119
        %1122 = vadd.xlane.f32.xlu0 %v1121
        %v1123 = vpop.xlane.xlu0 %1122
        %v1124 = vrot.slane %v1123, 4
        %v1125 = vadd.f32 %v1123, %v1124
        %v1126 = vrot.slane %v1125, 2
        %v1127 = vadd.f32 %v1125, %v1126
        %v1128 = vrot.slane %v1127, 1
        %v1129 = vadd.f32 %v1127, %v1128
        %s1130 = vtos %v1129
        %v1131 = vstv %s1130
        %v1132 = vmul.f32 %v1118, %v1118
        %v1133 = vmul.f32 %v1119, %v1119
        %v1134 = vadd.f32 %v1132, %v1133
        %1135 = vadd.xlane.f32.xlu0 %v1134
        %v1136 = vpop.xlane.xlu0 %1135
        %v1137 = vrot.slane %v1136, 4
        %v1138 = vadd.f32 %v1136, %v1137
        %v1139 = vrot.slane %v1138, 2
        %v1140 = vadd.f32 %v1138, %v1139
        %v1141 = vrot.slane %v1140, 1
        %v1142 = vadd.f32 %v1140, %v1141
        %s1143 = vtos %v1142
        %v1144 = vstv %s1143
        %v1145 = vmul.f32 %v1131, 0.00048828125
        %v1146 = vmul.f32 %v1144, 0.00048828125
        %v1147 = vmul.f32 %v1145, %v1145
        %v1148 = vsub.f32 %v1146, %v1147
        %v1149 = vmax.f32 %v1148, 0.0
        %v1150 = vadd.f32 %v1149, 1e-05
        %v1151 = vrsqrt.pop %v1150
        %v1152 = vmul.f32 %v1120, %v1151
        %v1153 = vmul.f32 %v1145, %v1152
        %1155 = vrot.lane.b32.xlu0 %v1153, 1
        %v1156 = vpop.permute.xlu0 %1155
        %v1158 = vsub.f32 %v1120, %v1156
        %1160 = vset.pattern.permute.xlu0 0
        %1161 = vperm.xlu0 %1160, %v1152
        %v1162 = vpop.permute.xlu0 %1161
        %v1164 = vmul.f32 %v1118, %v1162
        %v1165 = vmul.f32 %v1119, %v1162
        %1167 = vset.pattern.permute.xlu0 1
        %1168 = vperm.xlu0 %1167, %v1158
        %v1169 = vpop.permute.xlu0 %1168
        %v1171 = vadd.f32 %v1164, %v1169
        %v1172 = vadd.f32 %v1165, %v1169
        %v1173 = vmul.f32 %v1171, %v1171
        %v1174 = vmul.f32 %v1172, %v1172
        %v1175 = vmul.f32 %v1171, %v1173
        %v1176 = vmul.f32 %v1172, %v1174
        %v1177 = vmul.f32 %v1175, 0.044715
        %v1178 = vmul.f32 %v1176, 0.044715
        %v1179 = vadd.f32 %v1171, %v1177
        %v1180 = vadd.f32 %v1172, %v1178
        %v1181 = vmul.f32 %v1179, 0.7978846
        %v1182 = vmul.f32 %v1180, 0.7978846
        %v1183 = vtanh.pop %v1181
        %v1184 = vtanh.pop %v1182
        %v1185 = vadd.f32 %v1183, 1.0
        %v1186 = vadd.f32 %v1184, 1.0
        %v1187 = vmul.f32 %v1185, 0.5
        %v1188 = vmul.f32 %v1186, 0.5
        %v1189 = vmul.f32 %v1171, %v1187
        %v1190 = vmul.f32 %v1172, %v1188
        %1191 = vrot.lane.b32.xlu0 %v1189, 17
        %v1192 = vpop.permute.xlu0 %1191
        %1193 = vrot.lane.b32.xlu0 %v1190, 17
        %v1194 = vpop.permute.xlu0 %1193
        %v1195 = vsel %vm251, %v1192, %v1194
        %v1196 = vsel %vm251, %v1194, %v1192
        %v1197 = vmul.f32 %v1196, %v259
        %v1198 = vmul.f32 %v1195, %v263
        %s1199 = scalar_lea.vmem %s3, 144
        %v1200 = vld [vmem:[%s1199] sm:$0xff]
        %1201 = vrot.lane.b32.xlu0 %v1189, 16
        %v1202 = vpop.permute.xlu0 %1201
        %1203 = vrot.lane.b32.xlu0 %v1190, 16
        %v1204 = vpop.permute.xlu0 %1203
        %v1205 = vsel %vm273, %v1202, %v1204
        %v1206 = vsel %vm273, %v1204, %v1202
        %v1207 = vmul.f32 %v1206, %v282
        %v1208 = vmul.f32 %v1205, %v286
        %s1209 = scalar_lea.vmem %s3, 160
        %v1210 = vld [vmem:[%s1209] sm:$0xff]
        %v1212 = vsel %vm293, %v1210, 0
        %1214 = vmatprep.subr.mxu0 %v1208
        %1215 = vmatpush1.msra.mxu0 %v1207
        %1216 = vmatprep.subr.mxu0 0.0
        %1217 = vmatpush1.msra.mxu0 0.0
        %1218 = vmatprep.subr.mxu0 0.0
        %1219 = vmatpush1.msra.mxu0 0.0
        %1220 = vmatprep.subr.mxu0 0.0
        %1221 = vmatpush1.msra.mxu0 0.0
        %1222 = vmatprep.subr.mxu0 0.0
        %1223 = vmatpush1.msra.mxu0 0.0
        %1224 = vmatprep.subr.mxu0 0.0
        %1225 = vmatpush1.msra.mxu0 0.0
        %1226 = vmatprep.subr.mxu0 0.0
        %1227 = vmatpush1.msra.mxu0 0.0
        %1228 = vmatprep.subr.mxu0 0.0
        %1229 = vmatpush1.msra.mxu0 0.0
        %1230 = vmatprep.subr.mxu0 0.0
        %1231 = vmatpush1.msra.mxu0 0.0
        %1232 = vmatprep.subr.mxu0 0.0
        %1233 = vmatpush1.msra.mxu0 0.0
        %1234 = vmatprep.subr.mxu0 0.0
        %1235 = vmatpush1.msra.mxu0 0.0
        %1236 = vmatprep.subr.mxu0 0.0
        %1237 = vmatpush1.msra.mxu0 0.0
        %1238 = vmatprep.subr.mxu0 0.0
        %1239 = vmatpush1.msra.mxu0 0.0
        %1240 = vmatprep.subr.mxu0 0.0
        %1241 = vmatpush1.msra.mxu0 0.0
        %1242 = vmatprep.subr.mxu0 0.0
        %1243 = vmatpush1.msra.mxu0 0.0
        %1244 = vmatprep.subr.mxu0 0.0
        %1245 = vmatpush1.msra.mxu0 0.0
        %1246 = vmatprep.subr.mxu0 0.0
        %1247 = vmatpush1.msra.mxu0 0.0
        %1248 = vmatprep.subr.mxu0 0.0
        %1249 = vmatpush1.msra.mxu0 0.0
        %1250 = vmatprep.subr.mxu0 0.0
        %1251 = vmatpush1.msra.mxu0 0.0
        %1252 = vmatprep.subr.mxu0 0.0
        %1253 = vmatpush1.msra.mxu0 0.0
        %1254 = vmatprep.subr.mxu0 0.0
        %1255 = vmatpush1.msra.mxu0 0.0
        %1256 = vmatprep.subr.mxu0 0.0
        %1257 = vmatpush1.msra.mxu0 0.0
        %1258 = vmatprep.subr.mxu0 0.0
        %1259 = vmatpush1.msra.mxu0 0.0
        %1260 = vmatprep.subr.mxu0 0.0
        %1261 = vmatpush1.msra.mxu0 0.0
        %1262 = vmatprep.subr.mxu0 0.0
        %1263 = vmatpush1.msra.mxu0 0.0
        %1264 = vmatprep.subr.mxu0 0.0
        %1265 = vmatpush1.msra.mxu0 0.0
        %1266 = vmatprep.subr.mxu0 0.0
        %1267 = vmatpush1.msra.mxu0 0.0
        %1268 = vmatprep.subr.mxu0 0.0
        %1269 = vmatpush1.msra.mxu0 0.0
        %1270 = vmatprep.subr.mxu0 0.0
        %1271 = vmatpush1.msra.mxu0 0.0
        %1272 = vmatprep.subr.mxu0 0.0
        %1273 = vmatpush1.msra.mxu0 0.0
        %1274 = vmatprep.subr.mxu0 0.0
        %1275 = vmatpush1.msra.mxu0 0.0
        %1276 = vmatprep.subr.mxu0 0.0
        %1277 = vmatpush1.msra.mxu0 0.0
        %1278 = vmatprep.mubr.f32.mxu0 0.0
        %1279 = vmatmul.mubr.f32.gmra.mrb[0].mxu0 %v1212
        %v1280 = vpop.f32.mrb[0].mxu0
        %v1281 = vadd.f32 0.0, %v1280
        %v1282 = vpop.f32.mrb[0].mxu0
        %v1283 = vadd.f32 0.0, %v1282
        %1284 = vdwg.mxu0
        %v1286 = vsel %vm293, %v1200, 0
        %1288 = vmatprep.subr.mxu0 %v1198
        %1289 = vmatpush1.msra.mxu0 %v1197
        %1290 = vmatprep.subr.mxu0 0.0
        %1291 = vmatpush1.msra.mxu0 0.0
        %1292 = vmatprep.subr.mxu0 0.0
        %1293 = vmatpush1.msra.mxu0 0.0
        %1294 = vmatprep.subr.mxu0 0.0
        %1295 = vmatpush1.msra.mxu0 0.0
        %1296 = vmatprep.subr.mxu0 0.0
        %1297 = vmatpush1.msra.mxu0 0.0
        %1298 = vmatprep.subr.mxu0 0.0
        %1299 = vmatpush1.msra.mxu0 0.0
        %1300 = vmatprep.subr.mxu0 0.0
        %1301 = vmatpush1.msra.mxu0 0.0
        %1302 = vmatprep.subr.mxu0 0.0
        %1303 = vmatpush1.msra.mxu0 0.0
        %1304 = vmatprep.subr.mxu0 0.0
        %1305 = vmatpush1.msra.mxu0 0.0
        %1306 = vmatprep.subr.mxu0 0.0
        %1307 = vmatpush1.msra.mxu0 0.0
        %1308 = vmatprep.subr.mxu0 0.0
        %1309 = vmatpush1.msra.mxu0 0.0
        %1310 = vmatprep.subr.mxu0 0.0
        %1311 = vmatpush1.msra.mxu0 0.0
        %1312 = vmatprep.subr.mxu0 0.0
        %1313 = vmatpush1.msra.mxu0 0.0
        %1314 = vmatprep.subr.mxu0 0.0
        %1315 = vmatpush1.msra.mxu0 0.0
        %1316 = vmatprep.subr.mxu0 0.0
        %1317 = vmatpush1.msra.mxu0 0.0
        %1318 = vmatprep.subr.mxu0 0.0
        %1319 = vmatpush1.msra.mxu0 0.0
        %1320 = vmatprep.subr.mxu0 0.0
        %1321 = vmatpush1.msra.mxu0 0.0
        %1322 = vmatprep.subr.mxu0 0.0
        %1323 = vmatpush1.msra.mxu0 0.0
        %1324 = vmatprep.subr.mxu0 0.0
        %1325 = vmatpush1.msra.mxu0 0.0
        %1326 = vmatprep.subr.mxu0 0.0
        %1327 = vmatpush1.msra.mxu0 0.0
        %1328 = vmatprep.subr.mxu0 0.0
        %1329 = vmatpush1.msra.mxu0 0.0
        %1330 = vmatprep.subr.mxu0 0.0
        %1331 = vmatpush1.msra.mxu0 0.0
        %1332 = vmatprep.subr.mxu0 0.0
        %1333 = vmatpush1.msra.mxu0 0.0
        %1334 = vmatprep.subr.mxu0 0.0
        %1335 = vmatpush1.msra.mxu0 0.0
        %1336 = vmatprep.subr.mxu0 0.0
        %1337 = vmatpush1.msra.mxu0 0.0
        %1338 = vmatprep.subr.mxu0 0.0
        %1339 = vmatpush1.msra.mxu0 0.0
        %1340 = vmatprep.subr.mxu0 0.0
        %1341 = vmatpush1.msra.mxu0 0.0
        %1342 = vmatprep.subr.mxu0 0.0
        %1343 = vmatpush1.msra.mxu0 0.0
        %1344 = vmatprep.subr.mxu0 0.0
        %1345 = vmatpush1.msra.mxu0 0.0
        %1346 = vmatprep.subr.mxu0 0.0
        %1347 = vmatpush1.msra.mxu0 0.0
        %1348 = vmatprep.subr.mxu0 0.0
        %1349 = vmatpush1.msra.mxu0 0.0
        %1350 = vmatprep.subr.mxu0 0.0
        %1351 = vmatpush1.msra.mxu0 0.0
        %1352 = vmatprep.mubr.f32.mxu0 0.0
        %1353 = vmatmul.mubr.f32.gmra.mrb[0].mxu0 %v1286
        %v1354 = vpop.f32.mrb[0].mxu0
        %v1355 = vadd.f32 %v1281, %v1354
        %v1356 = vpop.f32.mrb[0].mxu0
        %v1357 = vadd.f32 %v1283, %v1356
        %1358 = vdwg.mxu0
        %1359 = vrot.lane.b32.xlu0 %v1189, 15
        %v1360 = vpop.permute.xlu0 %1359
        %1361 = vrot.lane.b32.xlu0 %v1190, 15
        %v1362 = vpop.permute.xlu0 %1361
        %v1363 = vsel %vm446, %v1360, %v1362
        %v1364 = vsel %vm446, %v1362, %v1360
        %v1365 = vmul.f32 %v1364, %v455
        %v1366 = vmul.f32 %v1363, %v459
        %s1367 = scalar_lea.vmem %s3, 176
        %v1368 = vld [vmem:[%s1367] sm:$0xff]
        %v1370 = vsel %vm293, %v1368, 0
        %1372 = vmatprep.subr.mxu0 %v1366
        %1373 = vmatpush1.msra.mxu0 %v1365
        %1374 = vmatprep.subr.mxu0 0.0
        %1375 = vmatpush1.msra.mxu0 0.0
        %1376 = vmatprep.subr.mxu0 0.0
        %1377 = vmatpush1.msra.mxu0 0.0
        %1378 = vmatprep.subr.mxu0 0.0
        %1379 = vmatpush1.msra.mxu0 0.0
        %1380 = vmatprep.subr.mxu0 0.0
        %1381 = vmatpush1.msra.mxu0 0.0
        %1382 = vmatprep.subr.mxu0 0.0
        %1383 = vmatpush1.msra.mxu0 0.0
        %1384 = vmatprep.subr.mxu0 0.0
        %1385 = vmatpush1.msra.mxu0 0.0
        %1386 = vmatprep.subr.mxu0 0.0
        %1387 = vmatpush1.msra.mxu0 0.0
        %1388 = vmatprep.subr.mxu0 0.0
        %1389 = vmatpush1.msra.mxu0 0.0
        %1390 = vmatprep.subr.mxu0 0.0
        %1391 = vmatpush1.msra.mxu0 0.0
        %1392 = vmatprep.subr.mxu0 0.0
        %1393 = vmatpush1.msra.mxu0 0.0
        %1394 = vmatprep.subr.mxu0 0.0
        %1395 = vmatpush1.msra.mxu0 0.0
        %1396 = vmatprep.subr.mxu0 0.0
        %1397 = vmatpush1.msra.mxu0 0.0
        %1398 = vmatprep.subr.mxu0 0.0
        %1399 = vmatpush1.msra.mxu0 0.0
        %1400 = vmatprep.subr.mxu0 0.0
        %1401 = vmatpush1.msra.mxu0 0.0
        %1402 = vmatprep.subr.mxu0 0.0
        %1403 = vmatpush1.msra.mxu0 0.0
        %1404 = vmatprep.subr.mxu0 0.0
        %1405 = vmatpush1.msra.mxu0 0.0
        %1406 = vmatprep.subr.mxu0 0.0
        %1407 = vmatpush1.msra.mxu0 0.0
        %1408 = vmatprep.subr.mxu0 0.0
        %1409 = vmatpush1.msra.mxu0 0.0
        %1410 = vmatprep.subr.mxu0 0.0
        %1411 = vmatpush1.msra.mxu0 0.0
        %1412 = vmatprep.subr.mxu0 0.0
        %1413 = vmatpush1.msra.mxu0 0.0
        %1414 = vmatprep.subr.mxu0 0.0
        %1415 = vmatpush1.msra.mxu0 0.0
        %1416 = vmatprep.subr.mxu0 0.0
        %1417 = vmatpush1.msra.mxu0 0.0
        %1418 = vmatprep.subr.mxu0 0.0
        %1419 = vmatpush1.msra.mxu0 0.0
        %1420 = vmatprep.subr.mxu0 0.0
        %1421 = vmatpush1.msra.mxu0 0.0
        %1422 = vmatprep.subr.mxu0 0.0
        %1423 = vmatpush1.msra.mxu0 0.0
        %1424 = vmatprep.subr.mxu0 0.0
        %1425 = vmatpush1.msra.mxu0 0.0
        %1426 = vmatprep.subr.mxu0 0.0
        %1427 = vmatpush1.msra.mxu0 0.0
        %1428 = vmatprep.subr.mxu0 0.0
        %1429 = vmatpush1.msra.mxu0 0.0
        %1430 = vmatprep.subr.mxu0 0.0
        %1431 = vmatpush1.msra.mxu0 0.0
        %1432 = vmatprep.subr.mxu0 0.0
        %1433 = vmatpush1.msra.mxu0 0.0
        %1434 = vmatprep.subr.mxu0 0.0
        %1435 = vmatpush1.msra.mxu0 0.0
        %1436 = vmatprep.mubr.f32.mxu0 0.0
        %1437 = vmatmul.mubr.f32.gmra.mrb[0].mxu0 %v1370
        %v1438 = vpop.f32.mrb[0].mxu0
        %v1439 = vadd.f32 0.0, %v1438
        %v1440 = vpop.f32.mrb[0].mxu0
        %v1441 = vadd.f32 0.0, %v1440
        %1442 = vdwg.mxu0
        %v1443 = vadd.f32 %v1355, %v1439
        %v1444 = vadd.f32 %v1357, %v1441
        %1445 = vrot.lane.b32.xlu0 %v1189, 1
        %v1446 = vpop.permute.xlu0 %1445
        %1447 = vrot.lane.b32.xlu0 %v1190, 1
        %v1448 = vpop.permute.xlu0 %1447
        %v1449 = vsel %vm546, %v1446, %v1448
        %v1450 = vsel %vm546, %v1448, %v1446
        %v1451 = vmul.f32 %v1450, %v555
        %v1452 = vmul.f32 %v1449, %v559
        %s1453 = scalar_lea.vmem %s3, 192
        %v1454 = vld [vmem:[%s1453] sm:$0xff]
        %v1456 = vsel %vm293, %v1454, 0
        %1458 = vmatprep.subr.mxu0 %v1452
        %1459 = vmatpush1.msra.mxu0 %v1451
        %1460 = vmatprep.subr.mxu0 0.0
        %1461 = vmatpush1.msra.mxu0 0.0
        %1462 = vmatprep.subr.mxu0 0.0
        %1463 = vmatpush1.msra.mxu0 0.0
        %1464 = vmatprep.subr.mxu0 0.0
        %1465 = vmatpush1.msra.mxu0 0.0
        %1466 = vmatprep.subr.mxu0 0.0
        %1467 = vmatpush1.msra.mxu0 0.0
        %1468 = vmatprep.subr.mxu0 0.0
        %1469 = vmatpush1.msra.mxu0 0.0
        %1470 = vmatprep.subr.mxu0 0.0
        %1471 = vmatpush1.msra.mxu0 0.0
        %1472 = vmatprep.subr.mxu0 0.0
        %1473 = vmatpush1.msra.mxu0 0.0
        %1474 = vmatprep.subr.mxu0 0.0
        %1475 = vmatpush1.msra.mxu0 0.0
        %1476 = vmatprep.subr.mxu0 0.0
        %1477 = vmatpush1.msra.mxu0 0.0
        %1478 = vmatprep.subr.mxu0 0.0
        %1479 = vmatpush1.msra.mxu0 0.0
        %1480 = vmatprep.subr.mxu0 0.0
        %1481 = vmatpush1.msra.mxu0 0.0
        %1482 = vmatprep.subr.mxu0 0.0
        %1483 = vmatpush1.msra.mxu0 0.0
        %1484 = vmatprep.subr.mxu0 0.0
        %1485 = vmatpush1.msra.mxu0 0.0
        %1486 = vmatprep.subr.mxu0 0.0
        %1487 = vmatpush1.msra.mxu0 0.0
        %1488 = vmatprep.subr.mxu0 0.0
        %1489 = vmatpush1.msra.mxu0 0.0
        %1490 = vmatprep.subr.mxu0 0.0
        %1491 = vmatpush1.msra.mxu0 0.0
        %1492 = vmatprep.subr.mxu0 0.0
        %1493 = vmatpush1.msra.mxu0 0.0
        %1494 = vmatprep.subr.mxu0 0.0
        %1495 = vmatpush1.msra.mxu0 0.0
        %1496 = vmatprep.subr.mxu0 0.0
        %1497 = vmatpush1.msra.mxu0 0.0
        %1498 = vmatprep.subr.mxu0 0.0
        %1499 = vmatpush1.msra.mxu0 0.0
        %1500 = vmatprep.subr.mxu0 0.0
        %1501 = vmatpush1.msra.mxu0 0.0
        %1502 = vmatprep.subr.mxu0 0.0
        %1503 = vmatpush1.msra.mxu0 0.0
        %1504 = vmatprep.subr.mxu0 0.0
        %1505 = vmatpush1.msra.mxu0 0.0
        %1506 = vmatprep.subr.mxu0 0.0
        %1507 = vmatpush1.msra.mxu0 0.0
        %1508 = vmatprep.subr.mxu0 0.0
        %1509 = vmatpush1.msra.mxu0 0.0
        %1510 = vmatprep.subr.mxu0 0.0
        %1511 = vmatpush1.msra.mxu0 0.0
        %1512 = vmatprep.subr.mxu0 0.0
        %1513 = vmatpush1.msra.mxu0 0.0
        %1514 = vmatprep.subr.mxu0 0.0
        %1515 = vmatpush1.msra.mxu0 0.0
        %1516 = vmatprep.subr.mxu0 0.0
        %1517 = vmatpush1.msra.mxu0 0.0
        %1518 = vmatprep.subr.mxu0 0.0
        %1519 = vmatpush1.msra.mxu0 0.0
        %1520 = vmatprep.subr.mxu0 0.0
        %1521 = vmatpush1.msra.mxu0 0.0
        %1522 = vmatprep.mubr.f32.mxu0 0.0
        %1523 = vmatmul.mubr.f32.gmra.mrb[0].mxu0 %v1456
        %v1524 = vpop.f32.mrb[0].mxu0
        %v1525 = vadd.f32 0.0, %v1524
        %v1526 = vpop.f32.mrb[0].mxu0
        %v1527 = vadd.f32 0.0, %v1526
        %1528 = vdwg.mxu0
        %v1529 = vadd.f32 %v1443, %v1525
        %v1530 = vadd.f32 %v1444, %v1527
        %s1531 = scalar_lea.vmem %s3, 208
        %v1532 = vld [vmem:[%s1531] sm:$0xff]
        %v1534 = vsel %vm293, %v1532, 0
        %1536 = vmatprep.subr.mxu0 %v1190
        %1537 = vmatpush1.msra.mxu0 %v1189
        %1538 = vmatprep.subr.mxu0 0.0
        %1539 = vmatpush1.msra.mxu0 0.0
        %1540 = vmatprep.subr.mxu0 0.0
        %1541 = vmatpush1.msra.mxu0 0.0
        %1542 = vmatprep.subr.mxu0 0.0
        %1543 = vmatpush1.msra.mxu0 0.0
        %1544 = vmatprep.subr.mxu0 0.0
        %1545 = vmatpush1.msra.mxu0 0.0
        %1546 = vmatprep.subr.mxu0 0.0
        %1547 = vmatpush1.msra.mxu0 0.0
        %1548 = vmatprep.subr.mxu0 0.0
        %1549 = vmatpush1.msra.mxu0 0.0
        %1550 = vmatprep.subr.mxu0 0.0
        %1551 = vmatpush1.msra.mxu0 0.0
        %1552 = vmatprep.subr.mxu0 0.0
        %1553 = vmatpush1.msra.mxu0 0.0
        %1554 = vmatprep.subr.mxu0 0.0
        %1555 = vmatpush1.msra.mxu0 0.0
        %1556 = vmatprep.subr.mxu0 0.0
        %1557 = vmatpush1.msra.mxu0 0.0
        %1558 = vmatprep.subr.mxu0 0.0
        %1559 = vmatpush1.msra.mxu0 0.0
        %1560 = vmatprep.subr.mxu0 0.0
        %1561 = vmatpush1.msra.mxu0 0.0
        %1562 = vmatprep.subr.mxu0 0.0
        %1563 = vmatpush1.msra.mxu0 0.0
        %1564 = vmatprep.subr.mxu0 0.0
        %1565 = vmatpush1.msra.mxu0 0.0
        %1566 = vmatprep.subr.mxu0 0.0
        %1567 = vmatpush1.msra.mxu0 0.0
        %1568 = vmatprep.subr.mxu0 0.0
        %1569 = vmatpush1.msra.mxu0 0.0
        %1570 = vmatprep.subr.mxu0 0.0
        %1571 = vmatpush1.msra.mxu0 0.0
        %1572 = vmatprep.subr.mxu0 0.0
        %1573 = vmatpush1.msra.mxu0 0.0
        %1574 = vmatprep.subr.mxu0 0.0
        %1575 = vmatpush1.msra.mxu0 0.0
        %1576 = vmatprep.subr.mxu0 0.0
        %1577 = vmatpush1.msra.mxu0 0.0
        %1578 = vmatprep.subr.mxu0 0.0
        %1579 = vmatpush1.msra.mxu0 0.0
        %1580 = vmatprep.subr.mxu0 0.0
        %1581 = vmatpush1.msra.mxu0 0.0
        %1582 = vmatprep.subr.mxu0 0.0
        %1583 = vmatpush1.msra.mxu0 0.0
        %1584 = vmatprep.subr.mxu0 0.0
        %1585 = vmatpush1.msra.mxu0 0.0
        %1586 = vmatprep.subr.mxu0 0.0
        %1587 = vmatpush1.msra.mxu0 0.0
        %1588 = vmatprep.subr.mxu0 0.0
        %1589 = vmatpush1.msra.mxu0 0.0
        %1590 = vmatprep.subr.mxu0 0.0
        %1591 = vmatpush1.msra.mxu0 0.0
        %1592 = vmatprep.subr.mxu0 0.0
        %1593 = vmatpush1.msra.mxu0 0.0
        %1594 = vmatprep.subr.mxu0 0.0
        %1595 = vmatpush1.msra.mxu0 0.0
        %1596 = vmatprep.subr.mxu0 0.0
        %1597 = vmatpush1.msra.mxu0 0.0
        %1598 = vmatprep.subr.mxu0 0.0
        %1599 = vmatpush1.msra.mxu0 0.0
        %1600 = vmatprep.mubr.f32.mxu0 0.0
        %1601 = vmatmul.mubr.f32.gmra.mrb[0].mxu0 %v1534
        %v1602 = vpop.f32.mrb[0].mxu0
        %v1603 = vadd.f32 0.0, %v1602
        %v1604 = vpop.f32.mrb[0].mxu0
        %v1605 = vadd.f32 0.0, %v1604
        %1606 = vdwg.mxu0
        %v1607 = vadd.f32 %v1529, %v1603
        %v1608 = vadd.f32 %v1530, %v1605
        %1609 = vrot.lane.b32.xlu0 %v1189, 127
        %v1610 = vpop.permute.xlu0 %1609
        %1611 = vrot.lane.b32.xlu0 %v1190, 127
        %v1612 = vpop.permute.xlu0 %1611
        %v1613 = vsel %vm724, %v1610, %v1612
        %v1614 = vsel %vm724, %v1612, %v1610
        %v1615 = vmul.f32 %v1613, %v733
        %v1616 = vmul.f32 %v1614, %v737
        %s1617 = scalar_lea.vmem %s3, 224
        %v1618 = vld [vmem:[%s1617] sm:$0xff]
        %v1620 = vsel %vm293, %v1618, 0
        %1622 = vmatprep.subr.mxu0 %v1616
        %1623 = vmatpush1.msra.mxu0 %v1615
        %1624 = vmatprep.subr.mxu0 0.0
        %1625 = vmatpush1.msra.mxu0 0.0
        %1626 = vmatprep.subr.mxu0 0.0
        %1627 = vmatpush1.msra.mxu0 0.0
        %1628 = vmatprep.subr.mxu0 0.0
        %1629 = vmatpush1.msra.mxu0 0.0
        %1630 = vmatprep.subr.mxu0 0.0
        %1631 = vmatpush1.msra.mxu0 0.0
        %1632 = vmatprep.subr.mxu0 0.0
        %1633 = vmatpush1.msra.mxu0 0.0
        %1634 = vmatprep.subr.mxu0 0.0
        %1635 = vmatpush1.msra.mxu0 0.0
        %1636 = vmatprep.subr.mxu0 0.0
        %1637 = vmatpush1.msra.mxu0 0.0
        %1638 = vmatprep.subr.mxu0 0.0
        %1639 = vmatpush1.msra.mxu0 0.0
        %1640 = vmatprep.subr.mxu0 0.0
        %1641 = vmatpush1.msra.mxu0 0.0
        %1642 = vmatprep.subr.mxu0 0.0
        %1643 = vmatpush1.msra.mxu0 0.0
        %1644 = vmatprep.subr.mxu0 0.0
        %1645 = vmatpush1.msra.mxu0 0.0
        %1646 = vmatprep.subr.mxu0 0.0
        %1647 = vmatpush1.msra.mxu0 0.0
        %1648 = vmatprep.subr.mxu0 0.0
        %1649 = vmatpush1.msra.mxu0 0.0
        %1650 = vmatprep.subr.mxu0 0.0
        %1651 = vmatpush1.msra.mxu0 0.0
        %1652 = vmatprep.subr.mxu0 0.0
        %1653 = vmatpush1.msra.mxu0 0.0
        %1654 = vmatprep.subr.mxu0 0.0
        %1655 = vmatpush1.msra.mxu0 0.0
        %1656 = vmatprep.subr.mxu0 0.0
        %1657 = vmatpush1.msra.mxu0 0.0
        %1658 = vmatprep.subr.mxu0 0.0
        %1659 = vmatpush1.msra.mxu0 0.0
        %1660 = vmatprep.subr.mxu0 0.0
        %1661 = vmatpush1.msra.mxu0 0.0
        %1662 = vmatprep.subr.mxu0 0.0
        %1663 = vmatpush1.msra.mxu0 0.0
        %1664 = vmatprep.subr.mxu0 0.0
        %1665 = vmatpush1.msra.mxu0 0.0
        %1666 = vmatprep.subr.mxu0 0.0
        %1667 = vmatpush1.msra.mxu0 0.0
        %1668 = vmatprep.subr.mxu0 0.0
        %1669 = vmatpush1.msra.mxu0 0.0
        %1670 = vmatprep.subr.mxu0 0.0
        %1671 = vmatpush1.msra.mxu0 0.0
        %1672 = vmatprep.subr.mxu0 0.0
        %1673 = vmatpush1.msra.mxu0 0.0
        %1674 = vmatprep.subr.mxu0 0.0
        %1675 = vmatpush1.msra.mxu0 0.0
        %1676 = vmatprep.subr.mxu0 0.0
        %1677 = vmatpush1.msra.mxu0 0.0
        %1678 = vmatprep.subr.mxu0 0.0
        %1679 = vmatpush1.msra.mxu0 0.0
        %1680 = vmatprep.subr.mxu0 0.0
        %1681 = vmatpush1.msra.mxu0 0.0
        %1682 = vmatprep.subr.mxu0 0.0
        %1683 = vmatpush1.msra.mxu0 0.0
        %1684 = vmatprep.subr.mxu0 0.0
        %1685 = vmatpush1.msra.mxu0 0.0
        %1686 = vmatprep.mubr.f32.mxu0 0.0
        %1687 = vmatmul.mubr.f32.gmra.mrb[0].mxu0 %v1620
        %v1688 = vpop.f32.mrb[0].mxu0
        %v1689 = vadd.f32 0.0, %v1688
        %v1690 = vpop.f32.mrb[0].mxu0
        %v1691 = vadd.f32 0.0, %v1690
        %1692 = vdwg.mxu0
        %v1693 = vadd.f32 %v1607, %v1689
        %v1694 = vadd.f32 %v1608, %v1691
        %1695 = vrot.lane.b32.xlu0 %v1189, 113
        %v1696 = vpop.permute.xlu0 %1695
        %1697 = vrot.lane.b32.xlu0 %v1190, 113
        %v1698 = vpop.permute.xlu0 %1697
        %v1699 = vsel %vm824, %v1696, %v1698
        %v1700 = vsel %vm824, %v1698, %v1696
        %v1701 = vmul.f32 %v1699, %v833
        %v1702 = vmul.f32 %v1700, %v837
        %s1703 = scalar_lea.vmem %s3, 240
        %v1704 = vld [vmem:[%s1703] sm:$0xff]
        %v1706 = vsel %vm293, %v1704, 0
        %1708 = vmatprep.subr.mxu0 %v1702
        %1709 = vmatpush1.msra.mxu0 %v1701
        %1710 = vmatprep.subr.mxu0 0.0
        %1711 = vmatpush1.msra.mxu0 0.0
        %1712 = vmatprep.subr.mxu0 0.0
        %1713 = vmatpush1.msra.mxu0 0.0
        %1714 = vmatprep.subr.mxu0 0.0
        %1715 = vmatpush1.msra.mxu0 0.0
        %1716 = vmatprep.subr.mxu0 0.0
        %1717 = vmatpush1.msra.mxu0 0.0
        %1718 = vmatprep.subr.mxu0 0.0
        %1719 = vmatpush1.msra.mxu0 0.0
        %1720 = vmatprep.subr.mxu0 0.0
        %1721 = vmatpush1.msra.mxu0 0.0
        %1722 = vmatprep.subr.mxu0 0.0
        %1723 = vmatpush1.msra.mxu0 0.0
        %1724 = vmatprep.subr.mxu0 0.0
        %1725 = vmatpush1.msra.mxu0 0.0
        %1726 = vmatprep.subr.mxu0 0.0
        %1727 = vmatpush1.msra.mxu0 0.0
        %1728 = vmatprep.subr.mxu0 0.0
        %1729 = vmatpush1.msra.mxu0 0.0
        %1730 = vmatprep.subr.mxu0 0.0
        %1731 = vmatpush1.msra.mxu0 0.0
        %1732 = vmatprep.subr.mxu0 0.0
        %1733 = vmatpush1.msra.mxu0 0.0
        %1734 = vmatprep.subr.mxu0 0.0
        %1735 = vmatpush1.msra.mxu0 0.0
        %1736 = vmatprep.subr.mxu0 0.0
        %1737 = vmatpush1.msra.mxu0 0.0
        %1738 = vmatprep.subr.mxu0 0.0
        %1739 = vmatpush1.msra.mxu0 0.0
        %1740 = vmatprep.subr.mxu0 0.0
        %1741 = vmatpush1.msra.mxu0 0.0
        %1742 = vmatprep.subr.mxu0 0.0
        %1743 = vmatpush1.msra.mxu0 0.0
        %1744 = vmatprep.subr.mxu0 0.0
        %1745 = vmatpush1.msra.mxu0 0.0
        %1746 = vmatprep.subr.mxu0 0.0
        %1747 = vmatpush1.msra.mxu0 0.0
        %1748 = vmatprep.subr.mxu0 0.0
        %1749 = vmatpush1.msra.mxu0 0.0
        %1750 = vmatprep.subr.mxu0 0.0
        %1751 = vmatpush1.msra.mxu0 0.0
        %1752 = vmatprep.subr.mxu0 0.0
        %1753 = vmatpush1.msra.mxu0 0.0
        %1754 = vmatprep.subr.mxu0 0.0
        %1755 = vmatpush1.msra.mxu0 0.0
        %1756 = vmatprep.subr.mxu0 0.0
        %1757 = vmatpush1.msra.mxu0 0.0
        %1758 = vmatprep.subr.mxu0 0.0
        %1759 = vmatpush1.msra.mxu0 0.0
        %1760 = vmatprep.subr.mxu0 0.0
        %1761 = vmatpush1.msra.mxu0 0.0
        %1762 = vmatprep.subr.mxu0 0.0
        %1763 = vmatpush1.msra.mxu0 0.0
        %1764 = vmatprep.subr.mxu0 0.0
        %1765 = vmatpush1.msra.mxu0 0.0
        %1766 = vmatprep.subr.mxu0 0.0
        %1767 = vmatpush1.msra.mxu0 0.0
        %1768 = vmatprep.subr.mxu0 0.0
        %1769 = vmatpush1.msra.mxu0 0.0
        %1770 = vmatprep.subr.mxu0 0.0
        %1771 = vmatpush1.msra.mxu0 0.0
        %1772 = vmatprep.mubr.f32.mxu0 0.0
        %1773 = vmatmul.mubr.f32.gmra.mrb[0].mxu0 %v1706
        %v1774 = vpop.f32.mrb[0].mxu0
        %v1775 = vadd.f32 0.0, %v1774
        %v1776 = vpop.f32.mrb[0].mxu0
        %v1777 = vadd.f32 0.0, %v1776
        %1778 = vdwg.mxu0
        %v1779 = vadd.f32 %v1693, %v1775
        %v1780 = vadd.f32 %v1694, %v1777
        %1781 = vrot.lane.b32.xlu0 %v1189, 112
        %v1782 = vpop.permute.xlu0 %1781
        %1783 = vrot.lane.b32.xlu0 %v1190, 112
        %v1784 = vpop.permute.xlu0 %1783
        %v1785 = vsel %vm924, %v1782, %v1784
        %v1786 = vsel %vm924, %v1784, %v1782
        %v1787 = vmul.f32 %v1785, %v933
        %v1788 = vmul.f32 %v1786, %v937
        %s1789 = scalar_lea.vmem %s3, 256
        %v1790 = vld [vmem:[%s1789] sm:$0xff]
        %v1792 = vsel %vm293, %v1790, 0
        %1794 = vmatprep.subr.mxu0 %v1788
        %1795 = vmatpush1.msra.mxu0 %v1787
        %1796 = vmatprep.subr.mxu0 0.0
        %1797 = vmatpush1.msra.mxu0 0.0
        %1798 = vmatprep.subr.mxu0 0.0
        %1799 = vmatpush1.msra.mxu0 0.0
        %1800 = vmatprep.subr.mxu0 0.0
        %1801 = vmatpush1.msra.mxu0 0.0
        %1802 = vmatprep.subr.mxu0 0.0
        %1803 = vmatpush1.msra.mxu0 0.0
        %1804 = vmatprep.subr.mxu0 0.0
        %1805 = vmatpush1.msra.mxu0 0.0
        %1806 = vmatprep.subr.mxu0 0.0
        %1807 = vmatpush1.msra.mxu0 0.0
        %1808 = vmatprep.subr.mxu0 0.0
        %1809 = vmatpush1.msra.mxu0 0.0
        %1810 = vmatprep.subr.mxu0 0.0
        %1811 = vmatpush1.msra.mxu0 0.0
        %1812 = vmatprep.subr.mxu0 0.0
        %1813 = vmatpush1.msra.mxu0 0.0
        %1814 = vmatprep.subr.mxu0 0.0
        %1815 = vmatpush1.msra.mxu0 0.0
        %1816 = vmatprep.subr.mxu0 0.0
        %1817 = vmatpush1.msra.mxu0 0.0
        %1818 = vmatprep.subr.mxu0 0.0
        %1819 = vmatpush1.msra.mxu0 0.0
        %1820 = vmatprep.subr.mxu0 0.0
        %1821 = vmatpush1.msra.mxu0 0.0
        %1822 = vmatprep.subr.mxu0 0.0
        %1823 = vmatpush1.msra.mxu0 0.0
        %1824 = vmatprep.subr.mxu0 0.0
        %1825 = vmatpush1.msra.mxu0 0.0
        %1826 = vmatprep.subr.mxu0 0.0
        %1827 = vmatpush1.msra.mxu0 0.0
        %1828 = vmatprep.subr.mxu0 0.0
        %1829 = vmatpush1.msra.mxu0 0.0
        %1830 = vmatprep.subr.mxu0 0.0
        %1831 = vmatpush1.msra.mxu0 0.0
        %1832 = vmatprep.subr.mxu0 0.0
        %1833 = vmatpush1.msra.mxu0 0.0
        %1834 = vmatprep.subr.mxu0 0.0
        %1835 = vmatpush1.msra.mxu0 0.0
        %1836 = vmatprep.subr.mxu0 0.0
        %1837 = vmatpush1.msra.mxu0 0.0
        %1838 = vmatprep.subr.mxu0 0.0
        %1839 = vmatpush1.msra.mxu0 0.0
        %1840 = vmatprep.subr.mxu0 0.0
        %1841 = vmatpush1.msra.mxu0 0.0
        %1842 = vmatprep.subr.mxu0 0.0
        %1843 = vmatpush1.msra.mxu0 0.0
        %1844 = vmatprep.subr.mxu0 0.0
        %1845 = vmatpush1.msra.mxu0 0.0
        %1846 = vmatprep.subr.mxu0 0.0
        %1847 = vmatpush1.msra.mxu0 0.0
        %1848 = vmatprep.subr.mxu0 0.0
        %1849 = vmatpush1.msra.mxu0 0.0
        %1850 = vmatprep.subr.mxu0 0.0
        %1851 = vmatpush1.msra.mxu0 0.0
        %1852 = vmatprep.subr.mxu0 0.0
        %1853 = vmatpush1.msra.mxu0 0.0
        %1854 = vmatprep.subr.mxu0 0.0
        %1855 = vmatpush1.msra.mxu0 0.0
        %1856 = vmatprep.subr.mxu0 0.0
        %1857 = vmatpush1.msra.mxu0 0.0
        %1858 = vmatprep.mubr.f32.mxu0 0.0
        %1859 = vmatmul.mubr.f32.gmra.mrb[0].mxu0 %v1792
        %v1860 = vpop.f32.mrb[0].mxu0
        %v1861 = vadd.f32 0.0, %v1860
        %v1862 = vpop.f32.mrb[0].mxu0
        %v1863 = vadd.f32 0.0, %v1862
        %1864 = vdwg.mxu0
        %v1865 = vadd.f32 %v1779, %v1861
        %v1866 = vadd.f32 %v1780, %v1863
        %1867 = vrot.lane.b32.xlu0 %v1189, 111
        %v1868 = vpop.permute.xlu0 %1867
        %1869 = vrot.lane.b32.xlu0 %v1190, 111
        %v1870 = vpop.permute.xlu0 %1869
        %v1871 = vsel %vm1024, %v1868, %v1870
        %v1872 = vsel %vm1024, %v1870, %v1868
        %v1873 = vmul.f32 %v1871, %v1033
        %v1874 = vmul.f32 %v1872, %v1037
        %s1875 = scalar_lea.vmem %s3, 272
        %v1876 = vld [vmem:[%s1875] sm:$0xff]
        %v1878 = vsel %vm293, %v1876, 0
        %1880 = vmatprep.subr.mxu0 %v1874
        %1881 = vmatpush1.msra.mxu0 %v1873
        %1882 = vmatprep.subr.mxu0 0.0
        %1883 = vmatpush1.msra.mxu0 0.0
        %1884 = vmatprep.subr.mxu0 0.0
        %1885 = vmatpush1.msra.mxu0 0.0
        %1886 = vmatprep.subr.mxu0 0.0
        %1887 = vmatpush1.msra.mxu0 0.0
        %1888 = vmatprep.subr.mxu0 0.0
        %1889 = vmatpush1.msra.mxu0 0.0
        %1890 = vmatprep.subr.mxu0 0.0
        %1891 = vmatpush1.msra.mxu0 0.0
        %1892 = vmatprep.subr.mxu0 0.0
        %1893 = vmatpush1.msra.mxu0 0.0
        %1894 = vmatprep.subr.mxu0 0.0
        %1895 = vmatpush1.msra.mxu0 0.0
        %1896 = vmatprep.subr.mxu0 0.0
        %1897 = vmatpush1.msra.mxu0 0.0
        %1898 = vmatprep.subr.mxu0 0.0
        %1899 = vmatpush1.msra.mxu0 0.0
        %1900 = vmatprep.subr.mxu0 0.0
        %1901 = vmatpush1.msra.mxu0 0.0
        %1902 = vmatprep.subr.mxu0 0.0
        %1903 = vmatpush1.msra.mxu0 0.0
        %1904 = vmatprep.subr.mxu0 0.0
        %1905 = vmatpush1.msra.mxu0 0.0
        %1906 = vmatprep.subr.mxu0 0.0
        %1907 = vmatpush1.msra.mxu0 0.0
        %1908 = vmatprep.subr.mxu0 0.0
        %1909 = vmatpush1.msra.mxu0 0.0
        %1910 = vmatprep.subr.mxu0 0.0
        %1911 = vmatpush1.msra.mxu0 0.0
        %1912 = vmatprep.subr.mxu0 0.0
        %1913 = vmatpush1.msra.mxu0 0.0
        %1914 = vmatprep.subr.mxu0 0.0
        %1915 = vmatpush1.msra.mxu0 0.0
        %1916 = vmatprep.subr.mxu0 0.0
        %1917 = vmatpush1.msra.mxu0 0.0
        %1918 = vmatprep.subr.mxu0 0.0
        %1919 = vmatpush1.msra.mxu0 0.0
        %1920 = vmatprep.subr.mxu0 0.0
        %1921 = vmatpush1.msra.mxu0 0.0
        %1922 = vmatprep.subr.mxu0 0.0
        %1923 = vmatpush1.msra.mxu0 0.0
        %1924 = vmatprep.subr.mxu0 0.0
        %1925 = vmatpush1.msra.mxu0 0.0
        %1926 = vmatprep.subr.mxu0 0.0
        %1927 = vmatpush1.msra.mxu0 0.0
        %1928 = vmatprep.subr.mxu0 0.0
        %1929 = vmatpush1.msra.mxu0 0.0
        %1930 = vmatprep.subr.mxu0 0.0
        %1931 = vmatpush1.msra.mxu0 0.0
        %1932 = vmatprep.subr.mxu0 0.0
        %1933 = vmatpush1.msra.mxu0 0.0
        %1934 = vmatprep.subr.mxu0 0.0
        %1935 = vmatpush1.msra.mxu0 0.0
        %1936 = vmatprep.subr.mxu0 0.0
        %1937 = vmatpush1.msra.mxu0 0.0
        %1938 = vmatprep.subr.mxu0 0.0
        %1939 = vmatpush1.msra.mxu0 0.0
        %1940 = vmatprep.subr.mxu0 0.0
        %1941 = vmatpush1.msra.mxu0 0.0
        %1942 = vmatprep.subr.mxu0 0.0
        %1943 = vmatpush1.msra.mxu0 0.0
        %1944 = vmatprep.mubr.f32.mxu0 0.0
        %1945 = vmatmul.mubr.f32.gmra.mrb[0].mxu0 %v1878
        %v1946 = vpop.f32.mrb[0].mxu0
        %v1947 = vadd.f32 0.0, %v1946
        %v1948 = vpop.f32.mrb[0].mxu0
        %v1949 = vadd.f32 0.0, %v1948
        %1950 = vdwg.mxu0
        %v1951 = vadd.f32 %v1865, %v1947
        %v1952 = vadd.f32 %v1866, %v1949
        %v1953 = vadd.f32 %v1951, %v1952
        %1954 = vadd.xlane.f32.xlu0 %v1953
        %v1955 = vpop.xlane.xlu0 %1954
        %v1956 = vrot.slane %v1955, 4
        %v1957 = vadd.f32 %v1955, %v1956
        %v1958 = vrot.slane %v1957, 2
        %v1959 = vadd.f32 %v1957, %v1958
        %v1960 = vrot.slane %v1959, 1
        %v1961 = vadd.f32 %v1959, %v1960
        %s1962 = vtos %v1961
        %v1963 = vstv %s1962
        %v1964 = vmul.f32 %v1951, %v1951
        %v1965 = vmul.f32 %v1952, %v1952
        %v1966 = vadd.f32 %v1964, %v1965
        %1967 = vadd.xlane.f32.xlu0 %v1966
        %v1968 = vpop.xlane.xlu0 %1967
        %v1969 = vrot.slane %v1968, 4
        %v1970 = vadd.f32 %v1968, %v1969
        %v1971 = vrot.slane %v1970, 2
        %v1972 = vadd.f32 %v1970, %v1971
        %v1973 = vrot.slane %v1972, 1
        %v1974 = vadd.f32 %v1972, %v1973
        %s1975 = vtos %v1974
        %v1976 = vstv %s1975
        %v1977 = vmul.f32 %v1963, 0.00048828125
        %v1978 = vmul.f32 %v1976, 0.00048828125
        %v1979 = vmul.f32 %v1977, %v1977
        %v1980 = vsub.f32 %v1978, %v1979
        %v1981 = vmax.f32 %v1980, 0.0
        %v1982 = vadd.f32 %v1981, 1e-05
        %v1983 = vrsqrt.pop %v1982
        %v1984 = vmul.f32 %v1120, %v1983
        %v1985 = vmul.f32 %v1977, %v1984
        %1987 = vrot.lane.b32.xlu0 %v1985, 1
        %v1988 = vpop.permute.xlu0 %1987
        %v1990 = vsub.f32 %v1120, %v1988
        %1992 = vset.pattern.permute.xlu0 2
        %1993 = vperm.xlu0 %1992, %v1984
        %v1994 = vpop.permute.xlu0 %1993
        %v1996 = vmul.f32 %v1951, %v1994
        %v1997 = vmul.f32 %v1952, %v1994
        %1999 = vset.pattern.permute.xlu0 3
        %2000 = vperm.xlu0 %1999, %v1990
        %v2001 = vpop.permute.xlu0 %2000
        %v2003 = vadd.f32 %v1996, %v2001
        %v2004 = vadd.f32 %v1997, %v2001
        %v2005 = vadd.f32 %v243, %v2003
        %v2006 = vadd.f32 %v244, %v2004
        %v2007 = vmul.f32 %v2005, %v2005
        %v2008 = vmul.f32 %v2006, %v2006
        %v2009 = vmul.f32 %v2005, %v2007
        %v2010 = vmul.f32 %v2006, %v2008
        %v2011 = vmul.f32 %v2009, 0.044715
        %v2012 = vmul.f32 %v2010, 0.044715
        %v2013 = vadd.f32 %v2005, %v2011
        %v2014 = vadd.f32 %v2006, %v2012
        %v2015 = vmul.f32 %v2013, 0.7978846
        %v2016 = vmul.f32 %v2014, 0.7978846
        %v2017 = vtanh.pop %v2015
        %v2018 = vtanh.pop %v2016
        %v2019 = vadd.f32 %v2017, 1.0
        %v2020 = vadd.f32 %v2018, 1.0
        %v2021 = vmul.f32 %v2019, 0.5
        %v2022 = vmul.f32 %v2020, 0.5
        %v2023 = vmul.f32 %v2005, %v2021
        %v2024 = vmul.f32 %v2006, %v2022
        %2025 = vrot.lane.b32.xlu0 %v2023, 17
        %v2026 = vpop.permute.xlu0 %2025
        %2027 = vrot.lane.b32.xlu0 %v2024, 17
        %v2028 = vpop.permute.xlu0 %2027
        %v2029 = vsel %vm251, %v2026, %v2028
        %v2030 = vsel %vm251, %v2028, %v2026
        %v2031 = vmul.f32 %v2030, %v259
        %v2032 = vmul.f32 %v2029, %v263
        %s2033 = scalar_lea.vmem %s3, 288
        %v2034 = vld [vmem:[%s2033] sm:$0xff]
        %2035 = vrot.lane.b32.xlu0 %v2023, 16
        %v2036 = vpop.permute.xlu0 %2035
        %2037 = vrot.lane.b32.xlu0 %v2024, 16
        %v2038 = vpop.permute.xlu0 %2037
        %v2039 = vsel %vm273, %v2036, %v2038
        %v2040 = vsel %vm273, %v2038, %v2036
        %v2041 = vmul.f32 %v2040, %v282
        %v2042 = vmul.f32 %v2039, %v286
        %s2043 = scalar_lea.vmem %s3, 304
        %v2044 = vld [vmem:[%s2043] sm:$0xff]
        %v2046 = vsel %vm293, %v2044, 0
        %2048 = vmatprep.subr.mxu0 %v2042
        %2049 = vmatpush1.msra.mxu0 %v2041
        %2050 = vmatprep.subr.mxu0 0.0
        %2051 = vmatpush1.msra.mxu0 0.0
        %2052 = vmatprep.subr.mxu0 0.0
        %2053 = vmatpush1.msra.mxu0 0.0
        %2054 = vmatprep.subr.mxu0 0.0
        %2055 = vmatpush1.msra.mxu0 0.0
        %2056 = vmatprep.subr.mxu0 0.0
        %2057 = vmatpush1.msra.mxu0 0.0
        %2058 = vmatprep.subr.mxu0 0.0
        %2059 = vmatpush1.msra.mxu0 0.0
        %2060 = vmatprep.subr.mxu0 0.0
        %2061 = vmatpush1.msra.mxu0 0.0
        %2062 = vmatprep.subr.mxu0 0.0
        %2063 = vmatpush1.msra.mxu0 0.0
        %2064 = vmatprep.subr.mxu0 0.0
        %2065 = vmatpush1.msra.mxu0 0.0
        %2066 = vmatprep.subr.mxu0 0.0
        %2067 = vmatpush1.msra.mxu0 0.0
        %2068 = vmatprep.subr.mxu0 0.0
        %2069 = vmatpush1.msra.mxu0 0.0
        %2070 = vmatprep.subr.mxu0 0.0
        %2071 = vmatpush1.msra.mxu0 0.0
        %2072 = vmatprep.subr.mxu0 0.0
        %2073 = vmatpush1.msra.mxu0 0.0
        %2074 = vmatprep.subr.mxu0 0.0
        %2075 = vmatpush1.msra.mxu0 0.0
        %2076 = vmatprep.subr.mxu0 0.0
        %2077 = vmatpush1.msra.mxu0 0.0
        %2078 = vmatprep.subr.mxu0 0.0
        %2079 = vmatpush1.msra.mxu0 0.0
        %2080 = vmatprep.subr.mxu0 0.0
        %2081 = vmatpush1.msra.mxu0 0.0
        %2082 = vmatprep.subr.mxu0 0.0
        %2083 = vmatpush1.msra.mxu0 0.0
        %2084 = vmatprep.subr.mxu0 0.0
        %2085 = vmatpush1.msra.mxu0 0.0
        %2086 = vmatprep.subr.mxu0 0.0
        %2087 = vmatpush1.msra.mxu0 0.0
        %2088 = vmatprep.subr.mxu0 0.0
        %2089 = vmatpush1.msra.mxu0 0.0
        %2090 = vmatprep.subr.mxu0 0.0
        %2091 = vmatpush1.msra.mxu0 0.0
        %2092 = vmatprep.subr.mxu0 0.0
        %2093 = vmatpush1.msra.mxu0 0.0
        %2094 = vmatprep.subr.mxu0 0.0
        %2095 = vmatpush1.msra.mxu0 0.0
        %2096 = vmatprep.subr.mxu0 0.0
        %2097 = vmatpush1.msra.mxu0 0.0
        %2098 = vmatprep.subr.mxu0 0.0
        %2099 = vmatpush1.msra.mxu0 0.0
        %2100 = vmatprep.subr.mxu0 0.0
        %2101 = vmatpush1.msra.mxu0 0.0
        %2102 = vmatprep.subr.mxu0 0.0
        %2103 = vmatpush1.msra.mxu0 0.0
        %2104 = vmatprep.subr.mxu0 0.0
        %2105 = vmatpush1.msra.mxu0 0.0
        %2106 = vmatprep.subr.mxu0 0.0
        %2107 = vmatpush1.msra.mxu0 0.0
        %2108 = vmatprep.subr.mxu0 0.0
        %2109 = vmatpush1.msra.mxu0 0.0
        %2110 = vmatprep.subr.mxu0 0.0
        %2111 = vmatpush1.msra.mxu0 0.0
        %2112 = vmatprep.mubr.f32.mxu0 0.0
        %2113 = vmatmul.mubr.f32.gmra.mrb[0].mxu0 %v2046
        %v2114 = vpop.f32.mrb[0].mxu0
        %v2115 = vadd.f32 0.0, %v2114
        %v2116 = vpop.f32.mrb[0].mxu0
        %v2117 = vadd.f32 0.0, %v2116
        %2118 = vdwg.mxu0
        %v2120 = vsel %vm293, %v2034, 0
        %2122 = vmatprep.subr.mxu0 %v2032
        %2123 = vmatpush1.msra.mxu0 %v2031
        %2124 = vmatprep.subr.mxu0 0.0
        %2125 = vmatpush1.msra.mxu0 0.0
        %2126 = vmatprep.subr.mxu0 0.0
        %2127 = vmatpush1.msra.mxu0 0.0
        %2128 = vmatprep.subr.mxu0 0.0
        %2129 = vmatpush1.msra.mxu0 0.0
        %2130 = vmatprep.subr.mxu0 0.0
        %2131 = vmatpush1.msra.mxu0 0.0
        %2132 = vmatprep.subr.mxu0 0.0
        %2133 = vmatpush1.msra.mxu0 0.0
        %2134 = vmatprep.subr.mxu0 0.0
        %2135 = vmatpush1.msra.mxu0 0.0
        %2136 = vmatprep.subr.mxu0 0.0
        %2137 = vmatpush1.msra.mxu0 0.0
        %2138 = vmatprep.subr.mxu0 0.0
        %2139 = vmatpush1.msra.mxu0 0.0
        %2140 = vmatprep.subr.mxu0 0.0
        %2141 = vmatpush1.msra.mxu0 0.0
        %2142 = vmatprep.subr.mxu0 0.0
        %2143 = vmatpush1.msra.mxu0 0.0
        %2144 = vmatprep.subr.mxu0 0.0
        %2145 = vmatpush1.msra.mxu0 0.0
        %2146 = vmatprep.subr.mxu0 0.0
        %2147 = vmatpush1.msra.mxu0 0.0
        %2148 = vmatprep.subr.mxu0 0.0
        %2149 = vmatpush1.msra.mxu0 0.0
        %2150 = vmatprep.subr.mxu0 0.0
        %2151 = vmatpush1.msra.mxu0 0.0
        %2152 = vmatprep.subr.mxu0 0.0
        %2153 = vmatpush1.msra.mxu0 0.0
        %2154 = vmatprep.subr.mxu0 0.0
        %2155 = vmatpush1.msra.mxu0 0.0
        %2156 = vmatprep.subr.mxu0 0.0
        %2157 = vmatpush1.msra.mxu0 0.0
        %2158 = vmatprep.subr.mxu0 0.0
        %2159 = vmatpush1.msra.mxu0 0.0
        %2160 = vmatprep.subr.mxu0 0.0
        %2161 = vmatpush1.msra.mxu0 0.0
        %2162 = vmatprep.subr.mxu0 0.0
        %2163 = vmatpush1.msra.mxu0 0.0
        %2164 = vmatprep.subr.mxu0 0.0
        %2165 = vmatpush1.msra.mxu0 0.0
        %2166 = vmatprep.subr.mxu0 0.0
        %2167 = vmatpush1.msra.mxu0 0.0
        %2168 = vmatprep.subr.mxu0 0.0
        %2169 = vmatpush1.msra.mxu0 0.0
        %2170 = vmatprep.subr.mxu0 0.0
        %2171 = vmatpush1.msra.mxu0 0.0
        %2172 = vmatprep.subr.mxu0 0.0
        %2173 = vmatpush1.msra.mxu0 0.0
        %2174 = vmatprep.subr.mxu0 0.0
        %2175 = vmatpush1.msra.mxu0 0.0
        %2176 = vmatprep.subr.mxu0 0.0
        %2177 = vmatpush1.msra.mxu0 0.0
        %2178 = vmatprep.subr.mxu0 0.0
        %2179 = vmatpush1.msra.mxu0 0.0
        %2180 = vmatprep.subr.mxu0 0.0
        %2181 = vmatpush1.msra.mxu0 0.0
        %2182 = vmatprep.subr.mxu0 0.0
        %2183 = vmatpush1.msra.mxu0 0.0
        %2184 = vmatprep.subr.mxu0 0.0
        %2185 = vmatpush1.msra.mxu0 0.0
        %2186 = vmatprep.mubr.f32.mxu0 0.0
        %2187 = vmatmul.mubr.f32.gmra.mrb[0].mxu0 %v2120
        %v2188 = vpop.f32.mrb[0].mxu0
        %v2189 = vadd.f32 %v2115, %v2188
        %v2190 = vpop.f32.mrb[0].mxu0
        %v2191 = vadd.f32 %v2117, %v2190
        %2192 = vdwg.mxu0
        %2193 = vrot.lane.b32.xlu0 %v2023, 15
        %v2194 = vpop.permute.xlu0 %2193
        %2195 = vrot.lane.b32.xlu0 %v2024, 15
        %v2196 = vpop.permute.xlu0 %2195
        %v2197 = vsel %vm446, %v2194, %v2196
        %v2198 = vsel %vm446, %v2196, %v2194
        %v2199 = vmul.f32 %v2198, %v455
        %v2200 = vmul.f32 %v2197, %v459
        %s2201 = scalar_lea.vmem %s3, 320
        %v2202 = vld [vmem:[%s2201] sm:$0xff]
        %v2204 = vsel %vm293, %v2202, 0
        %2206 = vmatprep.subr.mxu0 %v2200
        %2207 = vmatpush1.msra.mxu0 %v2199
        %2208 = vmatprep.subr.mxu0 0.0
        %2209 = vmatpush1.msra.mxu0 0.0
        %2210 = vmatprep.subr.mxu0 0.0
        %2211 = vmatpush1.msra.mxu0 0.0
        %2212 = vmatprep.subr.mxu0 0.0
        %2213 = vmatpush1.msra.mxu0 0.0
        %2214 = vmatprep.subr.mxu0 0.0
        %2215 = vmatpush1.msra.mxu0 0.0
        %2216 = vmatprep.subr.mxu0 0.0
        %2217 = vmatpush1.msra.mxu0 0.0
        %2218 = vmatprep.subr.mxu0 0.0
        %2219 = vmatpush1.msra.mxu0 0.0
        %2220 = vmatprep.subr.mxu0 0.0
        %2221 = vmatpush1.msra.mxu0 0.0
        %2222 = vmatprep.subr.mxu0 0.0
        %2223 = vmatpush1.msra.mxu0 0.0
        %2224 = vmatprep.subr.mxu0 0.0
        %2225 = vmatpush1.msra.mxu0 0.0
        %2226 = vmatprep.subr.mxu0 0.0
        %2227 = vmatpush1.msra.mxu0 0.0
        %2228 = vmatprep.subr.mxu0 0.0
        %2229 = vmatpush1.msra.mxu0 0.0
        %2230 = vmatprep.subr.mxu0 0.0
        %2231 = vmatpush1.msra.mxu0 0.0
        %2232 = vmatprep.subr.mxu0 0.0
        %2233 = vmatpush1.msra.mxu0 0.0
        %2234 = vmatprep.subr.mxu0 0.0
        %2235 = vmatpush1.msra.mxu0 0.0
        %2236 = vmatprep.subr.mxu0 0.0
        %2237 = vmatpush1.msra.mxu0 0.0
        %2238 = vmatprep.subr.mxu0 0.0
        %2239 = vmatpush1.msra.mxu0 0.0
        %2240 = vmatprep.subr.mxu0 0.0
        %2241 = vmatpush1.msra.mxu0 0.0
        %2242 = vmatprep.subr.mxu0 0.0
        %2243 = vmatpush1.msra.mxu0 0.0
        %2244 = vmatprep.subr.mxu0 0.0
        %2245 = vmatpush1.msra.mxu0 0.0
        %2246 = vmatprep.subr.mxu0 0.0
        %2247 = vmatpush1.msra.mxu0 0.0
        %2248 = vmatprep.subr.mxu0 0.0
        %2249 = vmatpush1.msra.mxu0 0.0
        %2250 = vmatprep.subr.mxu0 0.0
        %2251 = vmatpush1.msra.mxu0 0.0
        %2252 = vmatprep.subr.mxu0 0.0
        %2253 = vmatpush1.msra.mxu0 0.0
        %2254 = vmatprep.subr.mxu0 0.0
        %2255 = vmatpush1.msra.mxu0 0.0
        %2256 = vmatprep.subr.mxu0 0.0
        %2257 = vmatpush1.msra.mxu0 0.0
        %2258 = vmatprep.subr.mxu0 0.0
        %2259 = vmatpush1.msra.mxu0 0.0
        %2260 = vmatprep.subr.mxu0 0.0
        %2261 = vmatpush1.msra.mxu0 0.0
        %2262 = vmatprep.subr.mxu0 0.0
        %2263 = vmatpush1.msra.mxu0 0.0
        %2264 = vmatprep.subr.mxu0 0.0
        %2265 = vmatpush1.msra.mxu0 0.0
        %2266 = vmatprep.subr.mxu0 0.0
        %2267 = vmatpush1.msra.mxu0 0.0
        %2268 = vmatprep.subr.mxu0 0.0
        %2269 = vmatpush1.msra.mxu0 0.0
        %2270 = vmatprep.mubr.f32.mxu0 0.0
        %2271 = vmatmul.mubr.f32.gmra.mrb[0].mxu0 %v2204
        %v2272 = vpop.f32.mrb[0].mxu0
        %v2273 = vadd.f32 0.0, %v2272
        %v2274 = vpop.f32.mrb[0].mxu0
        %v2275 = vadd.f32 0.0, %v2274
        %2276 = vdwg.mxu0
        %v2277 = vadd.f32 %v2189, %v2273
        %v2278 = vadd.f32 %v2191, %v2275
        %2279 = vrot.lane.b32.xlu0 %v2023, 1
        %v2280 = vpop.permute.xlu0 %2279
        %2281 = vrot.lane.b32.xlu0 %v2024, 1
        %v2282 = vpop.permute.xlu0 %2281
        %v2283 = vsel %vm546, %v2280, %v2282
        %v2284 = vsel %vm546, %v2282, %v2280
        %v2285 = vmul.f32 %v2284, %v555
        %v2286 = vmul.f32 %v2283, %v559
        %s2287 = scalar_lea.vmem %s3, 336
        %v2288 = vld [vmem:[%s2287] sm:$0xff]
        %v2290 = vsel %vm293, %v2288, 0
        %2292 = vmatprep.subr.mxu0 %v2286
        %2293 = vmatpush1.msra.mxu0 %v2285
        %2294 = vmatprep.subr.mxu0 0.0
        %2295 = vmatpush1.msra.mxu0 0.0
        %2296 = vmatprep.subr.mxu0 0.0
        %2297 = vmatpush1.msra.mxu0 0.0
        %2298 = vmatprep.subr.mxu0 0.0
        %2299 = vmatpush1.msra.mxu0 0.0
        %2300 = vmatprep.subr.mxu0 0.0
        %2301 = vmatpush1.msra.mxu0 0.0
        %2302 = vmatprep.subr.mxu0 0.0
        %2303 = vmatpush1.msra.mxu0 0.0
        %2304 = vmatprep.subr.mxu0 0.0
        %2305 = vmatpush1.msra.mxu0 0.0
        %2306 = vmatprep.subr.mxu0 0.0
        %2307 = vmatpush1.msra.mxu0 0.0
        %2308 = vmatprep.subr.mxu0 0.0
        %2309 = vmatpush1.msra.mxu0 0.0
        %2310 = vmatprep.subr.mxu0 0.0
        %2311 = vmatpush1.msra.mxu0 0.0
        %2312 = vmatprep.subr.mxu0 0.0
        %2313 = vmatpush1.msra.mxu0 0.0
        %2314 = vmatprep.subr.mxu0 0.0
        %2315 = vmatpush1.msra.mxu0 0.0
        %2316 = vmatprep.subr.mxu0 0.0
        %2317 = vmatpush1.msra.mxu0 0.0
        %2318 = vmatprep.subr.mxu0 0.0
        %2319 = vmatpush1.msra.mxu0 0.0
        %2320 = vmatprep.subr.mxu0 0.0
        %2321 = vmatpush1.msra.mxu0 0.0
        %2322 = vmatprep.subr.mxu0 0.0
        %2323 = vmatpush1.msra.mxu0 0.0
        %2324 = vmatprep.subr.mxu0 0.0
        %2325 = vmatpush1.msra.mxu0 0.0
        %2326 = vmatprep.subr.mxu0 0.0
        %2327 = vmatpush1.msra.mxu0 0.0
        %2328 = vmatprep.subr.mxu0 0.0
        %2329 = vmatpush1.msra.mxu0 0.0
        %2330 = vmatprep.subr.mxu0 0.0
        %2331 = vmatpush1.msra.mxu0 0.0
        %2332 = vmatprep.subr.mxu0 0.0
        %2333 = vmatpush1.msra.mxu0 0.0
        %2334 = vmatprep.subr.mxu0 0.0
        %2335 = vmatpush1.msra.mxu0 0.0
        %2336 = vmatprep.subr.mxu0 0.0
        %2337 = vmatpush1.msra.mxu0 0.0
        %2338 = vmatprep.subr.mxu0 0.0
        %2339 = vmatpush1.msra.mxu0 0.0
        %2340 = vmatprep.subr.mxu0 0.0
        %2341 = vmatpush1.msra.mxu0 0.0
        %2342 = vmatprep.subr.mxu0 0.0
        %2343 = vmatpush1.msra.mxu0 0.0
        %2344 = vmatprep.subr.mxu0 0.0
        %2345 = vmatpush1.msra.mxu0 0.0
        %2346 = vmatprep.subr.mxu0 0.0
        %2347 = vmatpush1.msra.mxu0 0.0
        %2348 = vmatprep.subr.mxu0 0.0
        %2349 = vmatpush1.msra.mxu0 0.0
        %2350 = vmatprep.subr.mxu0 0.0
        %2351 = vmatpush1.msra.mxu0 0.0
        %2352 = vmatprep.subr.mxu0 0.0
        %2353 = vmatpush1.msra.mxu0 0.0
        %2354 = vmatprep.subr.mxu0 0.0
        %2355 = vmatpush1.msra.mxu0 0.0
        %2356 = vmatprep.mubr.f32.mxu0 0.0
        %2357 = vmatmul.mubr.f32.gmra.mrb[0].mxu0 %v2290
        %v2358 = vpop.f32.mrb[0].mxu0
        %v2359 = vadd.f32 0.0, %v2358
        %v2360 = vpop.f32.mrb[0].mxu0
        %v2361 = vadd.f32 0.0, %v2360
        %2362 = vdwg.mxu0
        %v2363 = vadd.f32 %v2277, %v2359
        %v2364 = vadd.f32 %v2278, %v2361
        %s2365 = scalar_lea.vmem %s3, 352
        %v2366 = vld [vmem:[%s2365] sm:$0xff]
        %v2368 = vsel %vm293, %v2366, 0
        %2370 = vmatprep.subr.mxu0 %v2024
        %2371 = vmatpush1.msra.mxu0 %v2023
        %2372 = vmatprep.subr.mxu0 0.0
        %2373 = vmatpush1.msra.mxu0 0.0
        %2374 = vmatprep.subr.mxu0 0.0
        %2375 = vmatpush1.msra.mxu0 0.0
        %2376 = vmatprep.subr.mxu0 0.0
        %2377 = vmatpush1.msra.mxu0 0.0
        %2378 = vmatprep.subr.mxu0 0.0
        %2379 = vmatpush1.msra.mxu0 0.0
        %2380 = vmatprep.subr.mxu0 0.0
        %2381 = vmatpush1.msra.mxu0 0.0
        %2382 = vmatprep.subr.mxu0 0.0
        %2383 = vmatpush1.msra.mxu0 0.0
        %2384 = vmatprep.subr.mxu0 0.0
        %2385 = vmatpush1.msra.mxu0 0.0
        %2386 = vmatprep.subr.mxu0 0.0
        %2387 = vmatpush1.msra.mxu0 0.0
        %2388 = vmatprep.subr.mxu0 0.0
        %2389 = vmatpush1.msra.mxu0 0.0
        %2390 = vmatprep.subr.mxu0 0.0
        %2391 = vmatpush1.msra.mxu0 0.0
        %2392 = vmatprep.subr.mxu0 0.0
        %2393 = vmatpush1.msra.mxu0 0.0
        %2394 = vmatprep.subr.mxu0 0.0
        %2395 = vmatpush1.msra.mxu0 0.0
        %2396 = vmatprep.subr.mxu0 0.0
        %2397 = vmatpush1.msra.mxu0 0.0
        %2398 = vmatprep.subr.mxu0 0.0
        %2399 = vmatpush1.msra.mxu0 0.0
        %2400 = vmatprep.subr.mxu0 0.0
        %2401 = vmatpush1.msra.mxu0 0.0
        %2402 = vmatprep.subr.mxu0 0.0
        %2403 = vmatpush1.msra.mxu0 0.0
        %2404 = vmatprep.subr.mxu0 0.0
        %2405 = vmatpush1.msra.mxu0 0.0
        %2406 = vmatprep.subr.mxu0 0.0
        %2407 = vmatpush1.msra.mxu0 0.0
        %2408 = vmatprep.subr.mxu0 0.0
        %2409 = vmatpush1.msra.mxu0 0.0
        %2410 = vmatprep.subr.mxu0 0.0
        %2411 = vmatpush1.msra.mxu0 0.0
        %2412 = vmatprep.subr.mxu0 0.0
        %2413 = vmatpush1.msra.mxu0 0.0
        %2414 = vmatprep.subr.mxu0 0.0
        %2415 = vmatpush1.msra.mxu0 0.0
        %2416 = vmatprep.subr.mxu0 0.0
        %2417 = vmatpush1.msra.mxu0 0.0
        %2418 = vmatprep.subr.mxu0 0.0
        %2419 = vmatpush1.msra.mxu0 0.0
        %2420 = vmatprep.subr.mxu0 0.0
        %2421 = vmatpush1.msra.mxu0 0.0
        %2422 = vmatprep.subr.mxu0 0.0
        %2423 = vmatpush1.msra.mxu0 0.0
        %2424 = vmatprep.subr.mxu0 0.0
        %2425 = vmatpush1.msra.mxu0 0.0
        %2426 = vmatprep.subr.mxu0 0.0
        %2427 = vmatpush1.msra.mxu0 0.0
        %2428 = vmatprep.subr.mxu0 0.0
        %2429 = vmatpush1.msra.mxu0 0.0
        %2430 = vmatprep.subr.mxu0 0.0
        %2431 = vmatpush1.msra.mxu0 0.0
        %2432 = vmatprep.subr.mxu0 0.0
        %2433 = vmatpush1.msra.mxu0 0.0
        %2434 = vmatprep.mubr.f32.mxu0 0.0
        %2435 = vmatmul.mubr.f32.gmra.mrb[0].mxu0 %v2368
        %v2436 = vpop.f32.mrb[0].mxu0
        %v2437 = vadd.f32 0.0, %v2436
        %v2438 = vpop.f32.mrb[0].mxu0
        %v2439 = vadd.f32 0.0, %v2438
        %2440 = vdwg.mxu0
        %v2441 = vadd.f32 %v2363, %v2437
        %v2442 = vadd.f32 %v2364, %v2439
        %2443 = vrot.lane.b32.xlu0 %v2023, 127
        %v2444 = vpop.permute.xlu0 %2443
        %2445 = vrot.lane.b32.xlu0 %v2024, 127
        %v2446 = vpop.permute.xlu0 %2445
        %v2447 = vsel %vm724, %v2444, %v2446
        %v2448 = vsel %vm724, %v2446, %v2444
        %v2449 = vmul.f32 %v2447, %v733
        %v2450 = vmul.f32 %v2448, %v737
        %s2451 = scalar_lea.vmem %s3, 368
        %v2452 = vld [vmem:[%s2451] sm:$0xff]
        %v2454 = vsel %vm293, %v2452, 0
        %2456 = vmatprep.subr.mxu0 %v2450
        %2457 = vmatpush1.msra.mxu0 %v2449
        %2458 = vmatprep.subr.mxu0 0.0
        %2459 = vmatpush1.msra.mxu0 0.0
        %2460 = vmatprep.subr.mxu0 0.0
        %2461 = vmatpush1.msra.mxu0 0.0
        %2462 = vmatprep.subr.mxu0 0.0
        %2463 = vmatpush1.msra.mxu0 0.0
        %2464 = vmatprep.subr.mxu0 0.0
        %2465 = vmatpush1.msra.mxu0 0.0
        %2466 = vmatprep.subr.mxu0 0.0
        %2467 = vmatpush1.msra.mxu0 0.0
        %2468 = vmatprep.subr.mxu0 0.0
        %2469 = vmatpush1.msra.mxu0 0.0
        %2470 = vmatprep.subr.mxu0 0.0
        %2471 = vmatpush1.msra.mxu0 0.0
        %2472 = vmatprep.subr.mxu0 0.0
        %2473 = vmatpush1.msra.mxu0 0.0
        %2474 = vmatprep.subr.mxu0 0.0
        %2475 = vmatpush1.msra.mxu0 0.0
        %2476 = vmatprep.subr.mxu0 0.0
        %2477 = vmatpush1.msra.mxu0 0.0
        %2478 = vmatprep.subr.mxu0 0.0
        %2479 = vmatpush1.msra.mxu0 0.0
        %2480 = vmatprep.subr.mxu0 0.0
        %2481 = vmatpush1.msra.mxu0 0.0
        %2482 = vmatprep.subr.mxu0 0.0
        %2483 = vmatpush1.msra.mxu0 0.0
        %2484 = vmatprep.subr.mxu0 0.0
        %2485 = vmatpush1.msra.mxu0 0.0
        %2486 = vmatprep.subr.mxu0 0.0
        %2487 = vmatpush1.msra.mxu0 0.0
        %2488 = vmatprep.subr.mxu0 0.0
        %2489 = vmatpush1.msra.mxu0 0.0
        %2490 = vmatprep.subr.mxu0 0.0
        %2491 = vmatpush1.msra.mxu0 0.0
        %2492 = vmatprep.subr.mxu0 0.0
        %2493 = vmatpush1.msra.mxu0 0.0
        %2494 = vmatprep.subr.mxu0 0.0
        %2495 = vmatpush1.msra.mxu0 0.0
        %2496 = vmatprep.subr.mxu0 0.0
        %2497 = vmatpush1.msra.mxu0 0.0
        %2498 = vmatprep.subr.mxu0 0.0
        %2499 = vmatpush1.msra.mxu0 0.0
        %2500 = vmatprep.subr.mxu0 0.0
        %2501 = vmatpush1.msra.mxu0 0.0
        %2502 = vmatprep.subr.mxu0 0.0
        %2503 = vmatpush1.msra.mxu0 0.0
        %2504 = vmatprep.subr.mxu0 0.0
        %2505 = vmatpush1.msra.mxu0 0.0
        %2506 = vmatprep.subr.mxu0 0.0
        %2507 = vmatpush1.msra.mxu0 0.0
        %2508 = vmatprep.subr.mxu0 0.0
        %2509 = vmatpush1.msra.mxu0 0.0
        %2510 = vmatprep.subr.mxu0 0.0
        %2511 = vmatpush1.msra.mxu0 0.0
        %2512 = vmatprep.subr.mxu0 0.0
        %2513 = vmatpush1.msra.mxu0 0.0
        %2514 = vmatprep.subr.mxu0 0.0
        %2515 = vmatpush1.msra.mxu0 0.0
        %2516 = vmatprep.subr.mxu0 0.0
        %2517 = vmatpush1.msra.mxu0 0.0
        %2518 = vmatprep.subr.mxu0 0.0
        %2519 = vmatpush1.msra.mxu0 0.0
        %2520 = vmatprep.mubr.f32.mxu0 0.0
        %2521 = vmatmul.mubr.f32.gmra.mrb[0].mxu0 %v2454
        %v2522 = vpop.f32.mrb[0].mxu0
        %v2523 = vadd.f32 0.0, %v2522
        %v2524 = vpop.f32.mrb[0].mxu0
        %v2525 = vadd.f32 0.0, %v2524
        %2526 = vdwg.mxu0
        %v2527 = vadd.f32 %v2441, %v2523
        %v2528 = vadd.f32 %v2442, %v2525
        %2529 = vrot.lane.b32.xlu0 %v2023, 113
        %v2530 = vpop.permute.xlu0 %2529
        %2531 = vrot.lane.b32.xlu0 %v2024, 113
        %v2532 = vpop.permute.xlu0 %2531
        %v2533 = vsel %vm824, %v2530, %v2532
        %v2534 = vsel %vm824, %v2532, %v2530
        %v2535 = vmul.f32 %v2533, %v833
        %v2536 = vmul.f32 %v2534, %v837
        %s2537 = scalar_lea.vmem %s3, 384
        %v2538 = vld [vmem:[%s2537] sm:$0xff]
        %v2540 = vsel %vm293, %v2538, 0
        %2542 = vmatprep.subr.mxu0 %v2536
        %2543 = vmatpush1.msra.mxu0 %v2535
        %2544 = vmatprep.subr.mxu0 0.0
        %2545 = vmatpush1.msra.mxu0 0.0
        %2546 = vmatprep.subr.mxu0 0.0
        %2547 = vmatpush1.msra.mxu0 0.0
        %2548 = vmatprep.subr.mxu0 0.0
        %2549 = vmatpush1.msra.mxu0 0.0
        %2550 = vmatprep.subr.mxu0 0.0
        %2551 = vmatpush1.msra.mxu0 0.0
        %2552 = vmatprep.subr.mxu0 0.0
        %2553 = vmatpush1.msra.mxu0 0.0
        %2554 = vmatprep.subr.mxu0 0.0
        %2555 = vmatpush1.msra.mxu0 0.0
        %2556 = vmatprep.subr.mxu0 0.0
        %2557 = vmatpush1.msra.mxu0 0.0
        %2558 = vmatprep.subr.mxu0 0.0
        %2559 = vmatpush1.msra.mxu0 0.0
        %2560 = vmatprep.subr.mxu0 0.0
        %2561 = vmatpush1.msra.mxu0 0.0
        %2562 = vmatprep.subr.mxu0 0.0
        %2563 = vmatpush1.msra.mxu0 0.0
        %2564 = vmatprep.subr.mxu0 0.0
        %2565 = vmatpush1.msra.mxu0 0.0
        %2566 = vmatprep.subr.mxu0 0.0
        %2567 = vmatpush1.msra.mxu0 0.0
        %2568 = vmatprep.subr.mxu0 0.0
        %2569 = vmatpush1.msra.mxu0 0.0
        %2570 = vmatprep.subr.mxu0 0.0
        %2571 = vmatpush1.msra.mxu0 0.0
        %2572 = vmatprep.subr.mxu0 0.0
        %2573 = vmatpush1.msra.mxu0 0.0
        %2574 = vmatprep.subr.mxu0 0.0
        %2575 = vmatpush1.msra.mxu0 0.0
        %2576 = vmatprep.subr.mxu0 0.0
        %2577 = vmatpush1.msra.mxu0 0.0
        %2578 = vmatprep.subr.mxu0 0.0
        %2579 = vmatpush1.msra.mxu0 0.0
        %2580 = vmatprep.subr.mxu0 0.0
        %2581 = vmatpush1.msra.mxu0 0.0
        %2582 = vmatprep.subr.mxu0 0.0
        %2583 = vmatpush1.msra.mxu0 0.0
        %2584 = vmatprep.subr.mxu0 0.0
        %2585 = vmatpush1.msra.mxu0 0.0
        %2586 = vmatprep.subr.mxu0 0.0
        %2587 = vmatpush1.msra.mxu0 0.0
        %2588 = vmatprep.subr.mxu0 0.0
        %2589 = vmatpush1.msra.mxu0 0.0
        %2590 = vmatprep.subr.mxu0 0.0
        %2591 = vmatpush1.msra.mxu0 0.0
        %2592 = vmatprep.subr.mxu0 0.0
        %2593 = vmatpush1.msra.mxu0 0.0
        %2594 = vmatprep.subr.mxu0 0.0
        %2595 = vmatpush1.msra.mxu0 0.0
        %2596 = vmatprep.subr.mxu0 0.0
        %2597 = vmatpush1.msra.mxu0 0.0
        %2598 = vmatprep.subr.mxu0 0.0
        %2599 = vmatpush1.msra.mxu0 0.0
        %2600 = vmatprep.subr.mxu0 0.0
        %2601 = vmatpush1.msra.mxu0 0.0
        %2602 = vmatprep.subr.mxu0 0.0
        %2603 = vmatpush1.msra.mxu0 0.0
        %2604 = vmatprep.subr.mxu0 0.0
        %2605 = vmatpush1.msra.mxu0 0.0
        %2606 = vmatprep.mubr.f32.mxu0 0.0
        %2607 = vmatmul.mubr.f32.gmra.mrb[0].mxu0 %v2540
        %v2608 = vpop.f32.mrb[0].mxu0
        %v2609 = vadd.f32 0.0, %v2608
        %v2610 = vpop.f32.mrb[0].mxu0
        %v2611 = vadd.f32 0.0, %v2610
        %2612 = vdwg.mxu0
        %v2613 = vadd.f32 %v2527, %v2609
        %v2614 = vadd.f32 %v2528, %v2611
        %2615 = vrot.lane.b32.xlu0 %v2023, 112
        %v2616 = vpop.permute.xlu0 %2615
        %2617 = vrot.lane.b32.xlu0 %v2024, 112
        %v2618 = vpop.permute.xlu0 %2617
        %v2619 = vsel %vm924, %v2616, %v2618
        %v2620 = vsel %vm924, %v2618, %v2616
        %v2621 = vmul.f32 %v2619, %v933
        %v2622 = vmul.f32 %v2620, %v937
        %s2623 = scalar_lea.vmem %s3, 400
        %v2624 = vld [vmem:[%s2623] sm:$0xff]
        %v2626 = vsel %vm293, %v2624, 0
        %2628 = vmatprep.subr.mxu0 %v2622
        %2629 = vmatpush1.msra.mxu0 %v2621
        %2630 = vmatprep.subr.mxu0 0.0
        %2631 = vmatpush1.msra.mxu0 0.0
        %2632 = vmatprep.subr.mxu0 0.0
        %2633 = vmatpush1.msra.mxu0 0.0
        %2634 = vmatprep.subr.mxu0 0.0
        %2635 = vmatpush1.msra.mxu0 0.0
        %2636 = vmatprep.subr.mxu0 0.0
        %2637 = vmatpush1.msra.mxu0 0.0
        %2638 = vmatprep.subr.mxu0 0.0
        %2639 = vmatpush1.msra.mxu0 0.0
        %2640 = vmatprep.subr.mxu0 0.0
        %2641 = vmatpush1.msra.mxu0 0.0
        %2642 = vmatprep.subr.mxu0 0.0
        %2643 = vmatpush1.msra.mxu0 0.0
        %2644 = vmatprep.subr.mxu0 0.0
        %2645 = vmatpush1.msra.mxu0 0.0
        %2646 = vmatprep.subr.mxu0 0.0
        %2647 = vmatpush1.msra.mxu0 0.0
        %2648 = vmatprep.subr.mxu0 0.0
        %2649 = vmatpush1.msra.mxu0 0.0
        %2650 = vmatprep.subr.mxu0 0.0
        %2651 = vmatpush1.msra.mxu0 0.0
        %2652 = vmatprep.subr.mxu0 0.0
        %2653 = vmatpush1.msra.mxu0 0.0
        %2654 = vmatprep.subr.mxu0 0.0
        %2655 = vmatpush1.msra.mxu0 0.0
        %2656 = vmatprep.subr.mxu0 0.0
        %2657 = vmatpush1.msra.mxu0 0.0
        %2658 = vmatprep.subr.mxu0 0.0
        %2659 = vmatpush1.msra.mxu0 0.0
        %2660 = vmatprep.subr.mxu0 0.0
        %2661 = vmatpush1.msra.mxu0 0.0
        %2662 = vmatprep.subr.mxu0 0.0
        %2663 = vmatpush1.msra.mxu0 0.0
        %2664 = vmatprep.subr.mxu0 0.0
        %2665 = vmatpush1.msra.mxu0 0.0
        %2666 = vmatprep.subr.mxu0 0.0
        %2667 = vmatpush1.msra.mxu0 0.0
        %2668 = vmatprep.subr.mxu0 0.0
        %2669 = vmatpush1.msra.mxu0 0.0
        %2670 = vmatprep.subr.mxu0 0.0
        %2671 = vmatpush1.msra.mxu0 0.0
        %2672 = vmatprep.subr.mxu0 0.0
        %2673 = vmatpush1.msra.mxu0 0.0
        %2674 = vmatprep.subr.mxu0 0.0
        %2675 = vmatpush1.msra.mxu0 0.0
        %2676 = vmatprep.subr.mxu0 0.0
        %2677 = vmatpush1.msra.mxu0 0.0
        %2678 = vmatprep.subr.mxu0 0.0
        %2679 = vmatpush1.msra.mxu0 0.0
        %2680 = vmatprep.subr.mxu0 0.0
        %2681 = vmatpush1.msra.mxu0 0.0
        %2682 = vmatprep.subr.mxu0 0.0
        %2683 = vmatpush1.msra.mxu0 0.0
        %2684 = vmatprep.subr.mxu0 0.0
        %2685 = vmatpush1.msra.mxu0 0.0
        %2686 = vmatprep.subr.mxu0 0.0
        %2687 = vmatpush1.msra.mxu0 0.0
        %2688 = vmatprep.subr.mxu0 0.0
        %2689 = vmatpush1.msra.mxu0 0.0
        %2690 = vmatprep.subr.mxu0 0.0
        %2691 = vmatpush1.msra.mxu0 0.0
        %2692 = vmatprep.mubr.f32.mxu0 0.0
        %2693 = vmatmul.mubr.f32.gmra.mrb[0].mxu0 %v2626
        %v2694 = vpop.f32.mrb[0].mxu0
        %v2695 = vadd.f32 0.0, %v2694
        %v2696 = vpop.f32.mrb[0].mxu0
        %v2697 = vadd.f32 0.0, %v2696
        %2698 = vdwg.mxu0
        %v2699 = vadd.f32 %v2613, %v2695
        %v2700 = vadd.f32 %v2614, %v2697
        %2701 = vrot.lane.b32.xlu0 %v2023, 111
        %v2702 = vpop.permute.xlu0 %2701
        %2703 = vrot.lane.b32.xlu0 %v2024, 111
        %v2704 = vpop.permute.xlu0 %2703
        %v2705 = vsel %vm1024, %v2702, %v2704
        %v2706 = vsel %vm1024, %v2704, %v2702
        %v2707 = vmul.f32 %v2705, %v1033
        %v2708 = vmul.f32 %v2706, %v1037
        %s2709 = scalar_lea.vmem %s3, 416
        %v2710 = vld [vmem:[%s2709] sm:$0xff]
        %v2712 = vsel %vm293, %v2710, 0
        %2714 = vmatprep.subr.mxu0 %v2708
        %2715 = vmatpush1.msra.mxu0 %v2707
        %2716 = vmatprep.subr.mxu0 0.0
        %2717 = vmatpush1.msra.mxu0 0.0
        %2718 = vmatprep.subr.mxu0 0.0
        %2719 = vmatpush1.msra.mxu0 0.0
        %2720 = vmatprep.subr.mxu0 0.0
        %2721 = vmatpush1.msra.mxu0 0.0
        %2722 = vmatprep.subr.mxu0 0.0
        %2723 = vmatpush1.msra.mxu0 0.0
        %2724 = vmatprep.subr.mxu0 0.0
        %2725 = vmatpush1.msra.mxu0 0.0
        %2726 = vmatprep.subr.mxu0 0.0
        %2727 = vmatpush1.msra.mxu0 0.0
        %2728 = vmatprep.subr.mxu0 0.0
        %2729 = vmatpush1.msra.mxu0 0.0
        %2730 = vmatprep.subr.mxu0 0.0
        %2731 = vmatpush1.msra.mxu0 0.0
        %2732 = vmatprep.subr.mxu0 0.0
        %2733 = vmatpush1.msra.mxu0 0.0
        %2734 = vmatprep.subr.mxu0 0.0
        %2735 = vmatpush1.msra.mxu0 0.0
        %2736 = vmatprep.subr.mxu0 0.0
        %2737 = vmatpush1.msra.mxu0 0.0
        %2738 = vmatprep.subr.mxu0 0.0
        %2739 = vmatpush1.msra.mxu0 0.0
        %2740 = vmatprep.subr.mxu0 0.0
        %2741 = vmatpush1.msra.mxu0 0.0
        %2742 = vmatprep.subr.mxu0 0.0
        %2743 = vmatpush1.msra.mxu0 0.0
        %2744 = vmatprep.subr.mxu0 0.0
        %2745 = vmatpush1.msra.mxu0 0.0
        %2746 = vmatprep.subr.mxu0 0.0
        %2747 = vmatpush1.msra.mxu0 0.0
        %2748 = vmatprep.subr.mxu0 0.0
        %2749 = vmatpush1.msra.mxu0 0.0
        %2750 = vmatprep.subr.mxu0 0.0
        %2751 = vmatpush1.msra.mxu0 0.0
        %2752 = vmatprep.subr.mxu0 0.0
        %2753 = vmatpush1.msra.mxu0 0.0
        %2754 = vmatprep.subr.mxu0 0.0
        %2755 = vmatpush1.msra.mxu0 0.0
        %2756 = vmatprep.subr.mxu0 0.0
        %2757 = vmatpush1.msra.mxu0 0.0
        %2758 = vmatprep.subr.mxu0 0.0
        %2759 = vmatpush1.msra.mxu0 0.0
        %2760 = vmatprep.subr.mxu0 0.0
        %2761 = vmatpush1.msra.mxu0 0.0
        %2762 = vmatprep.subr.mxu0 0.0
        %2763 = vmatpush1.msra.mxu0 0.0
        %2764 = vmatprep.subr.mxu0 0.0
        %2765 = vmatpush1.msra.mxu0 0.0
        %2766 = vmatprep.subr.mxu0 0.0
        %2767 = vmatpush1.msra.mxu0 0.0
        %2768 = vmatprep.subr.mxu0 0.0
        %2769 = vmatpush1.msra.mxu0 0.0
        %2770 = vmatprep.subr.mxu0 0.0
        %2771 = vmatpush1.msra.mxu0 0.0
        %2772 = vmatprep.subr.mxu0 0.0
        %2773 = vmatpush1.msra.mxu0 0.0
        %2774 = vmatprep.subr.mxu0 0.0
        %2775 = vmatpush1.msra.mxu0 0.0
        %2776 = vmatprep.subr.mxu0 0.0
        %2777 = vmatpush1.msra.mxu0 0.0
        %2778 = vmatprep.mubr.f32.mxu0 0.0
        %2779 = vmatmul.mubr.f32.gmra.mrb[0].mxu0 %v2712
        %v2780 = vpop.f32.mrb[0].mxu0
        %v2781 = vadd.f32 0.0, %v2780
        %v2782 = vpop.f32.mrb[0].mxu0
        %v2783 = vadd.f32 0.0, %v2782
        %2784 = vdwg.mxu0
        %v2785 = vadd.f32 %v2699, %v2781
        %v2786 = vadd.f32 %v2700, %v2783
        %v2787 = vadd.f32 %v2785, %v2786
        %2788 = vadd.xlane.f32.xlu0 %v2787
        %v2789 = vpop.xlane.xlu0 %2788
        %v2790 = vrot.slane %v2789, 4
        %v2791 = vadd.f32 %v2789, %v2790
        %v2792 = vrot.slane %v2791, 2
        %v2793 = vadd.f32 %v2791, %v2792
        %v2794 = vrot.slane %v2793, 1
        %v2795 = vadd.f32 %v2793, %v2794
        %s2796 = vtos %v2795
        %v2797 = vstv %s2796
        %v2798 = vmul.f32 %v2785, %v2785
        %v2799 = vmul.f32 %v2786, %v2786
        %v2800 = vadd.f32 %v2798, %v2799
        %2801 = vadd.xlane.f32.xlu0 %v2800
        %v2802 = vpop.xlane.xlu0 %2801
        %v2803 = vrot.slane %v2802, 4
        %v2804 = vadd.f32 %v2802, %v2803
        %v2805 = vrot.slane %v2804, 2
        %v2806 = vadd.f32 %v2804, %v2805
        %v2807 = vrot.slane %v2806, 1
        %v2808 = vadd.f32 %v2806, %v2807
        %s2809 = vtos %v2808
        %v2810 = vstv %s2809
        %v2811 = vmul.f32 %v2797, 0.00048828125
        %v2812 = vmul.f32 %v2810, 0.00048828125
        %v2813 = vmul.f32 %v2811, %v2811
        %v2814 = vsub.f32 %v2812, %v2813
        %v2815 = vmax.f32 %v2814, 0.0
        %v2816 = vadd.f32 %v2815, 1e-05
        %v2817 = vrsqrt.pop %v2816
        %v2818 = vmul.f32 %v1120, %v2817
        %v2819 = vmul.f32 %v2811, %v2818
        %2821 = vrot.lane.b32.xlu0 %v2819, 1
        %v2822 = vpop.permute.xlu0 %2821
        %v2824 = vsub.f32 %v1120, %v2822
        %2826 = vset.pattern.permute.xlu0 4
        %2827 = vperm.xlu0 %2826, %v2818
        %v2828 = vpop.permute.xlu0 %2827
        %v2830 = vmul.f32 %v2785, %v2828
        %v2831 = vmul.f32 %v2786, %v2828
        %2833 = vset.pattern.permute.xlu0 5
        %2834 = vperm.xlu0 %2833, %v2824
        %v2835 = vpop.permute.xlu0 %2834
        %v2837 = vadd.f32 %v2830, %v2835
        %v2838 = vadd.f32 %v2831, %v2835
        %v2839 = vmul.f32 %v2837, %v2837
        %v2840 = vmul.f32 %v2838, %v2838
        %v2841 = vmul.f32 %v2837, %v2839
        %v2842 = vmul.f32 %v2838, %v2840
        %v2843 = vmul.f32 %v2841, 0.044715
        %v2844 = vmul.f32 %v2842, 0.044715
        %v2845 = vadd.f32 %v2837, %v2843
        %v2846 = vadd.f32 %v2838, %v2844
        %v2847 = vmul.f32 %v2845, 0.7978846
        %v2848 = vmul.f32 %v2846, 0.7978846
        %v2849 = vtanh.pop %v2847
        %v2850 = vtanh.pop %v2848
        %v2851 = vadd.f32 %v2849, 1.0
        %v2852 = vadd.f32 %v2850, 1.0
        %v2853 = vmul.f32 %v2851, 0.5
        %v2854 = vmul.f32 %v2852, 0.5
        %v2855 = vmul.f32 %v2837, %v2853
        %v2856 = vmul.f32 %v2838, %v2854
        %2857 = vrot.lane.b32.xlu0 %v2855, 17
        %v2858 = vpop.permute.xlu0 %2857
        %2859 = vrot.lane.b32.xlu0 %v2856, 17
        %v2860 = vpop.permute.xlu0 %2859
        %v2861 = vsel %vm251, %v2858, %v2860
        %v2862 = vsel %vm251, %v2860, %v2858
        %v2863 = vmul.f32 %v2862, %v259
        %v2864 = vmul.f32 %v2861, %v263
        %s2865 = scalar_lea.vmem %s3, 432
        %v2866 = vld [vmem:[%s2865] sm:$0xff]
        %2867 = vrot.lane.b32.xlu0 %v2855, 16
        %v2868 = vpop.permute.xlu0 %2867
        %2869 = vrot.lane.b32.xlu0 %v2856, 16
        %v2870 = vpop.permute.xlu0 %2869
        %v2871 = vsel %vm273, %v2868, %v2870
        %v2872 = vsel %vm273, %v2870, %v2868
        %v2873 = vmul.f32 %v2872, %v282
        %v2874 = vmul.f32 %v2871, %v286
        %s2875 = scalar_lea.vmem %s3, 448
        %v2876 = vld [vmem:[%s2875] sm:$0xff]
        %v2878 = vsel %vm293, %v2876, 0
        %2880 = vmatprep.subr.mxu0 %v2874
        %2881 = vmatpush1.msra.mxu0 %v2873
        %2882 = vmatprep.subr.mxu0 0.0
        %2883 = vmatpush1.msra.mxu0 0.0
        %2884 = vmatprep.subr.mxu0 0.0
        %2885 = vmatpush1.msra.mxu0 0.0
        %2886 = vmatprep.subr.mxu0 0.0
        %2887 = vmatpush1.msra.mxu0 0.0
        %2888 = vmatprep.subr.mxu0 0.0
        %2889 = vmatpush1.msra.mxu0 0.0
        %2890 = vmatprep.subr.mxu0 0.0
        %2891 = vmatpush1.msra.mxu0 0.0
        %2892 = vmatprep.subr.mxu0 0.0
        %2893 = vmatpush1.msra.mxu0 0.0
        %2894 = vmatprep.subr.mxu0 0.0
        %2895 = vmatpush1.msra.mxu0 0.0
        %2896 = vmatprep.subr.mxu0 0.0
        %2897 = vmatpush1.msra.mxu0 0.0
        %2898 = vmatprep.subr.mxu0 0.0
        %2899 = vmatpush1.msra.mxu0 0.0
        %2900 = vmatprep.subr.mxu0 0.0
        %2901 = vmatpush1.msra.mxu0 0.0
        %2902 = vmatprep.subr.mxu0 0.0
        %2903 = vmatpush1.msra.mxu0 0.0
        %2904 = vmatprep.subr.mxu0 0.0
        %2905 = vmatpush1.msra.mxu0 0.0
        %2906 = vmatprep.subr.mxu0 0.0
        %2907 = vmatpush1.msra.mxu0 0.0
        %2908 = vmatprep.subr.mxu0 0.0
        %2909 = vmatpush1.msra.mxu0 0.0
        %2910 = vmatprep.subr.mxu0 0.0
        %2911 = vmatpush1.msra.mxu0 0.0
        %2912 = vmatprep.subr.mxu0 0.0
        %2913 = vmatpush1.msra.mxu0 0.0
        %2914 = vmatprep.subr.mxu0 0.0
        %2915 = vmatpush1.msra.mxu0 0.0
        %2916 = vmatprep.subr.mxu0 0.0
        %2917 = vmatpush1.msra.mxu0 0.0
        %2918 = vmatprep.subr.mxu0 0.0
        %2919 = vmatpush1.msra.mxu0 0.0
        %2920 = vmatprep.subr.mxu0 0.0
        %2921 = vmatpush1.msra.mxu0 0.0
        %2922 = vmatprep.subr.mxu0 0.0
        %2923 = vmatpush1.msra.mxu0 0.0
        %2924 = vmatprep.subr.mxu0 0.0
        %2925 = vmatpush1.msra.mxu0 0.0
        %2926 = vmatprep.subr.mxu0 0.0
        %2927 = vmatpush1.msra.mxu0 0.0
        %2928 = vmatprep.subr.mxu0 0.0
        %2929 = vmatpush1.msra.mxu0 0.0
        %2930 = vmatprep.subr.mxu0 0.0
        %2931 = vmatpush1.msra.mxu0 0.0
        %2932 = vmatprep.subr.mxu0 0.0
        %2933 = vmatpush1.msra.mxu0 0.0
        %2934 = vmatprep.subr.mxu0 0.0
        %2935 = vmatpush1.msra.mxu0 0.0
        %2936 = vmatprep.subr.mxu0 0.0
        %2937 = vmatpush1.msra.mxu0 0.0
        %2938 = vmatprep.subr.mxu0 0.0
        %2939 = vmatpush1.msra.mxu0 0.0
        %2940 = vmatprep.subr.mxu0 0.0
        %2941 = vmatpush1.msra.mxu0 0.0
        %2942 = vmatprep.subr.mxu0 0.0
        %2943 = vmatpush1.msra.mxu0 0.0
        %2944 = vmatprep.mubr.f32.mxu0 0.0
        %2945 = vmatmul.mubr.f32.gmra.mrb[0].mxu0 %v2878
        %v2946 = vpop.f32.mrb[0].mxu0
        %v2947 = vadd.f32 0.0, %v2946
        %v2948 = vpop.f32.mrb[0].mxu0
        %v2949 = vadd.f32 0.0, %v2948
        %2950 = vdwg.mxu0
        %v2952 = vsel %vm293, %v2866, 0
        %2954 = vmatprep.subr.mxu0 %v2864
        %2955 = vmatpush1.msra.mxu0 %v2863
        %2956 = vmatprep.subr.mxu0 0.0
        %2957 = vmatpush1.msra.mxu0 0.0
        %2958 = vmatprep.subr.mxu0 0.0
        %2959 = vmatpush1.msra.mxu0 0.0
        %2960 = vmatprep.subr.mxu0 0.0
        %2961 = vmatpush1.msra.mxu0 0.0
        %2962 = vmatprep.subr.mxu0 0.0
        %2963 = vmatpush1.msra.mxu0 0.0
        %2964 = vmatprep.subr.mxu0 0.0
        %2965 = vmatpush1.msra.mxu0 0.0
        %2966 = vmatprep.subr.mxu0 0.0
        %2967 = vmatpush1.msra.mxu0 0.0
        %2968 = vmatprep.subr.mxu0 0.0
        %2969 = vmatpush1.msra.mxu0 0.0
        %2970 = vmatprep.subr.mxu0 0.0
        %2971 = vmatpush1.msra.mxu0 0.0
        %2972 = vmatprep.subr.mxu0 0.0
        %2973 = vmatpush1.msra.mxu0 0.0
        %2974 = vmatprep.subr.mxu0 0.0
        %2975 = vmatpush1.msra.mxu0 0.0
        %2976 = vmatprep.subr.mxu0 0.0
        %2977 = vmatpush1.msra.mxu0 0.0
        %2978 = vmatprep.subr.mxu0 0.0
        %2979 = vmatpush1.msra.mxu0 0.0
        %2980 = vmatprep.subr.mxu0 0.0
        %2981 = vmatpush1.msra.mxu0 0.0
        %2982 = vmatprep.subr.mxu0 0.0
        %2983 = vmatpush1.msra.mxu0 0.0
        %2984 = vmatprep.subr.mxu0 0.0
        %2985 = vmatpush1.msra.mxu0 0.0
        %2986 = vmatprep.subr.mxu0 0.0
        %2987 = vmatpush1.msra.mxu0 0.0
        %2988 = vmatprep.subr.mxu0 0.0
        %2989 = vmatpush1.msra.mxu0 0.0
        %2990 = vmatprep.subr.mxu0 0.0
        %2991 = vmatpush1.msra.mxu0 0.0
        %2992 = vmatprep.subr.mxu0 0.0
        %2993 = vmatpush1.msra.mxu0 0.0
        %2994 = vmatprep.subr.mxu0 0.0
        %2995 = vmatpush1.msra.mxu0 0.0
        %2996 = vmatprep.subr.mxu0 0.0
        %2997 = vmatpush1.msra.mxu0 0.0
        %2998 = vmatprep.subr.mxu0 0.0
        %2999 = vmatpush1.msra.mxu0 0.0
        %3000 = vmatprep.subr.mxu0 0.0
        %3001 = vmatpush1.msra.mxu0 0.0
        %3002 = vmatprep.subr.mxu0 0.0
        %3003 = vmatpush1.msra.mxu0 0.0
        %3004 = vmatprep.subr.mxu0 0.0
        %3005 = vmatpush1.msra.mxu0 0.0
        %3006 = vmatprep.subr.mxu0 0.0
        %3007 = vmatpush1.msra.mxu0 0.0
        %3008 = vmatprep.subr.mxu0 0.0
        %3009 = vmatpush1.msra.mxu0 0.0
        %3010 = vmatprep.subr.mxu0 0.0
        %3011 = vmatpush1.msra.mxu0 0.0
        %3012 = vmatprep.subr.mxu0 0.0
        %3013 = vmatpush1.msra.mxu0 0.0
        %3014 = vmatprep.subr.mxu0 0.0
        %3015 = vmatpush1.msra.mxu0 0.0
        %3016 = vmatprep.subr.mxu0 0.0
        %3017 = vmatpush1.msra.mxu0 0.0
        %3018 = vmatprep.mubr.f32.mxu0 0.0
        %3019 = vmatmul.mubr.f32.gmra.mrb[0].mxu0 %v2952
        %v3020 = vpop.f32.mrb[0].mxu0
        %v3021 = vadd.f32 %v2947, %v3020
        %v3022 = vpop.f32.mrb[0].mxu0
        %v3023 = vadd.f32 %v2949, %v3022
        %3024 = vdwg.mxu0
        %3025 = vrot.lane.b32.xlu0 %v2855, 15
        %v3026 = vpop.permute.xlu0 %3025
        %3027 = vrot.lane.b32.xlu0 %v2856, 15
        %v3028 = vpop.permute.xlu0 %3027
        %v3029 = vsel %vm446, %v3026, %v3028
        %v3030 = vsel %vm446, %v3028, %v3026
        %v3031 = vmul.f32 %v3030, %v455
        %v3032 = vmul.f32 %v3029, %v459
        %s3033 = scalar_lea.vmem %s3, 464
        %v3034 = vld [vmem:[%s3033] sm:$0xff]
        %v3036 = vsel %vm293, %v3034, 0
        %3038 = vmatprep.subr.mxu0 %v3032
        %3039 = vmatpush1.msra.mxu0 %v3031
        %3040 = vmatprep.subr.mxu0 0.0
        %3041 = vmatpush1.msra.mxu0 0.0
        %3042 = vmatprep.subr.mxu0 0.0
        %3043 = vmatpush1.msra.mxu0 0.0
        %3044 = vmatprep.subr.mxu0 0.0
        %3045 = vmatpush1.msra.mxu0 0.0
        %3046 = vmatprep.subr.mxu0 0.0
        %3047 = vmatpush1.msra.mxu0 0.0
        %3048 = vmatprep.subr.mxu0 0.0
        %3049 = vmatpush1.msra.mxu0 0.0
        %3050 = vmatprep.subr.mxu0 0.0
        %3051 = vmatpush1.msra.mxu0 0.0
        %3052 = vmatprep.subr.mxu0 0.0
        %3053 = vmatpush1.msra.mxu0 0.0
        %3054 = vmatprep.subr.mxu0 0.0
        %3055 = vmatpush1.msra.mxu0 0.0
        %3056 = vmatprep.subr.mxu0 0.0
        %3057 = vmatpush1.msra.mxu0 0.0
        %3058 = vmatprep.subr.mxu0 0.0
        %3059 = vmatpush1.msra.mxu0 0.0
        %3060 = vmatprep.subr.mxu0 0.0
        %3061 = vmatpush1.msra.mxu0 0.0
        %3062 = vmatprep.subr.mxu0 0.0
        %3063 = vmatpush1.msra.mxu0 0.0
        %3064 = vmatprep.subr.mxu0 0.0
        %3065 = vmatpush1.msra.mxu0 0.0
        %3066 = vmatprep.subr.mxu0 0.0
        %3067 = vmatpush1.msra.mxu0 0.0
        %3068 = vmatprep.subr.mxu0 0.0
        %3069 = vmatpush1.msra.mxu0 0.0
        %3070 = vmatprep.subr.mxu0 0.0
        %3071 = vmatpush1.msra.mxu0 0.0
        %3072 = vmatprep.subr.mxu0 0.0
        %3073 = vmatpush1.msra.mxu0 0.0
        %3074 = vmatprep.subr.mxu0 0.0
        %3075 = vmatpush1.msra.mxu0 0.0
        %3076 = vmatprep.subr.mxu0 0.0
        %3077 = vmatpush1.msra.mxu0 0.0
        %3078 = vmatprep.subr.mxu0 0.0
        %3079 = vmatpush1.msra.mxu0 0.0
        %3080 = vmatprep.subr.mxu0 0.0
        %3081 = vmatpush1.msra.mxu0 0.0
        %3082 = vmatprep.subr.mxu0 0.0
        %3083 = vmatpush1.msra.mxu0 0.0
        %3084 = vmatprep.subr.mxu0 0.0
        %3085 = vmatpush1.msra.mxu0 0.0
        %3086 = vmatprep.subr.mxu0 0.0
        %3087 = vmatpush1.msra.mxu0 0.0
        %3088 = vmatprep.subr.mxu0 0.0
        %3089 = vmatpush1.msra.mxu0 0.0
        %3090 = vmatprep.subr.mxu0 0.0
        %3091 = vmatpush1.msra.mxu0 0.0
        %3092 = vmatprep.subr.mxu0 0.0
        %3093 = vmatpush1.msra.mxu0 0.0
        %3094 = vmatprep.subr.mxu0 0.0
        %3095 = vmatpush1.msra.mxu0 0.0
        %3096 = vmatprep.subr.mxu0 0.0
        %3097 = vmatpush1.msra.mxu0 0.0
        %3098 = vmatprep.subr.mxu0 0.0
        %3099 = vmatpush1.msra.mxu0 0.0
        %3100 = vmatprep.subr.mxu0 0.0
        %3101 = vmatpush1.msra.mxu0 0.0
        %3102 = vmatprep.mubr.f32.mxu0 0.0
        %3103 = vmatmul.mubr.f32.gmra.mrb[0].mxu0 %v3036
        %v3104 = vpop.f32.mrb[0].mxu0
        %v3105 = vadd.f32 0.0, %v3104
        %v3106 = vpop.f32.mrb[0].mxu0
        %v3107 = vadd.f32 0.0, %v3106
        %3108 = vdwg.mxu0
        %v3109 = vadd.f32 %v3021, %v3105
        %v3110 = vadd.f32 %v3023, %v3107
        %3111 = vrot.lane.b32.xlu0 %v2855, 1
        %v3112 = vpop.permute.xlu0 %3111
        %3113 = vrot.lane.b32.xlu0 %v2856, 1
        %v3114 = vpop.permute.xlu0 %3113
        %v3115 = vsel %vm546, %v3112, %v3114
        %v3116 = vsel %vm546, %v3114, %v3112
        %v3117 = vmul.f32 %v3116, %v555
        %v3118 = vmul.f32 %v3115, %v559
        %s3119 = scalar_lea.vmem %s3, 480
        %v3120 = vld [vmem:[%s3119] sm:$0xff]
        %v3122 = vsel %vm293, %v3120, 0
        %3124 = vmatprep.subr.mxu0 %v3118
        %3125 = vmatpush1.msra.mxu0 %v3117
        %3126 = vmatprep.subr.mxu0 0.0
        %3127 = vmatpush1.msra.mxu0 0.0
        %3128 = vmatprep.subr.mxu0 0.0
        %3129 = vmatpush1.msra.mxu0 0.0
        %3130 = vmatprep.subr.mxu0 0.0
        %3131 = vmatpush1.msra.mxu0 0.0
        %3132 = vmatprep.subr.mxu0 0.0
        %3133 = vmatpush1.msra.mxu0 0.0
        %3134 = vmatprep.subr.mxu0 0.0
        %3135 = vmatpush1.msra.mxu0 0.0
        %3136 = vmatprep.subr.mxu0 0.0
        %3137 = vmatpush1.msra.mxu0 0.0
        %3138 = vmatprep.subr.mxu0 0.0
        %3139 = vmatpush1.msra.mxu0 0.0
        %3140 = vmatprep.subr.mxu0 0.0
        %3141 = vmatpush1.msra.mxu0 0.0
        %3142 = vmatprep.subr.mxu0 0.0
        %3143 = vmatpush1.msra.mxu0 0.0
        %3144 = vmatprep.subr.mxu0 0.0
        %3145 = vmatpush1.msra.mxu0 0.0
        %3146 = vmatprep.subr.mxu0 0.0
        %3147 = vmatpush1.msra.mxu0 0.0
        %3148 = vmatprep.subr.mxu0 0.0
        %3149 = vmatpush1.msra.mxu0 0.0
        %3150 = vmatprep.subr.mxu0 0.0
        %3151 = vmatpush1.msra.mxu0 0.0
        %3152 = vmatprep.subr.mxu0 0.0
        %3153 = vmatpush1.msra.mxu0 0.0
        %3154 = vmatprep.subr.mxu0 0.0
        %3155 = vmatpush1.msra.mxu0 0.0
        %3156 = vmatprep.subr.mxu0 0.0
        %3157 = vmatpush1.msra.mxu0 0.0
        %3158 = vmatprep.subr.mxu0 0.0
        %3159 = vmatpush1.msra.mxu0 0.0
        %3160 = vmatprep.subr.mxu0 0.0
        %3161 = vmatpush1.msra.mxu0 0.0
        %3162 = vmatprep.subr.mxu0 0.0
        %3163 = vmatpush1.msra.mxu0 0.0
        %3164 = vmatprep.subr.mxu0 0.0
        %3165 = vmatpush1.msra.mxu0 0.0
        %3166 = vmatprep.subr.mxu0 0.0
        %3167 = vmatpush1.msra.mxu0 0.0
        %3168 = vmatprep.subr.mxu0 0.0
        %3169 = vmatpush1.msra.mxu0 0.0
        %3170 = vmatprep.subr.mxu0 0.0
        %3171 = vmatpush1.msra.mxu0 0.0
        %3172 = vmatprep.subr.mxu0 0.0
        %3173 = vmatpush1.msra.mxu0 0.0
        %3174 = vmatprep.subr.mxu0 0.0
        %3175 = vmatpush1.msra.mxu0 0.0
        %3176 = vmatprep.subr.mxu0 0.0
        %3177 = vmatpush1.msra.mxu0 0.0
        %3178 = vmatprep.subr.mxu0 0.0
        %3179 = vmatpush1.msra.mxu0 0.0
        %3180 = vmatprep.subr.mxu0 0.0
        %3181 = vmatpush1.msra.mxu0 0.0
        %3182 = vmatprep.subr.mxu0 0.0
        %3183 = vmatpush1.msra.mxu0 0.0
        %3184 = vmatprep.subr.mxu0 0.0
        %3185 = vmatpush1.msra.mxu0 0.0
        %3186 = vmatprep.subr.mxu0 0.0
        %3187 = vmatpush1.msra.mxu0 0.0
        %3188 = vmatprep.mubr.f32.mxu0 0.0
        %3189 = vmatmul.mubr.f32.gmra.mrb[0].mxu0 %v3122
        %v3190 = vpop.f32.mrb[0].mxu0
        %v3191 = vadd.f32 0.0, %v3190
        %v3192 = vpop.f32.mrb[0].mxu0
        %v3193 = vadd.f32 0.0, %v3192
        %3194 = vdwg.mxu0
        %v3195 = vadd.f32 %v3109, %v3191
        %v3196 = vadd.f32 %v3110, %v3193
        %s3197 = scalar_lea.vmem %s3, 496
        %v3198 = vld [vmem:[%s3197] sm:$0xff]
        %v3200 = vsel %vm293, %v3198, 0
        %3202 = vmatprep.subr.mxu0 %v2856
        %3203 = vmatpush1.msra.mxu0 %v2855
        %3204 = vmatprep.subr.mxu0 0.0
        %3205 = vmatpush1.msra.mxu0 0.0
        %3206 = vmatprep.subr.mxu0 0.0
        %3207 = vmatpush1.msra.mxu0 0.0
        %3208 = vmatprep.subr.mxu0 0.0
        %3209 = vmatpush1.msra.mxu0 0.0
        %3210 = vmatprep.subr.mxu0 0.0
        %3211 = vmatpush1.msra.mxu0 0.0
        %3212 = vmatprep.subr.mxu0 0.0
        %3213 = vmatpush1.msra.mxu0 0.0
        %3214 = vmatprep.subr.mxu0 0.0
        %3215 = vmatpush1.msra.mxu0 0.0
        %3216 = vmatprep.subr.mxu0 0.0
        %3217 = vmatpush1.msra.mxu0 0.0
        %3218 = vmatprep.subr.mxu0 0.0
        %3219 = vmatpush1.msra.mxu0 0.0
        %3220 = vmatprep.subr.mxu0 0.0
        %3221 = vmatpush1.msra.mxu0 0.0
        %3222 = vmatprep.subr.mxu0 0.0
        %3223 = vmatpush1.msra.mxu0 0.0
        %3224 = vmatprep.subr.mxu0 0.0
        %3225 = vmatpush1.msra.mxu0 0.0
        %3226 = vmatprep.subr.mxu0 0.0
        %3227 = vmatpush1.msra.mxu0 0.0
        %3228 = vmatprep.subr.mxu0 0.0
        %3229 = vmatpush1.msra.mxu0 0.0
        %3230 = vmatprep.subr.mxu0 0.0
        %3231 = vmatpush1.msra.mxu0 0.0
        %3232 = vmatprep.subr.mxu0 0.0
        %3233 = vmatpush1.msra.mxu0 0.0
        %3234 = vmatprep.subr.mxu0 0.0
        %3235 = vmatpush1.msra.mxu0 0.0
        %3236 = vmatprep.subr.mxu0 0.0
        %3237 = vmatpush1.msra.mxu0 0.0
        %3238 = vmatprep.subr.mxu0 0.0
        %3239 = vmatpush1.msra.mxu0 0.0
        %3240 = vmatprep.subr.mxu0 0.0
        %3241 = vmatpush1.msra.mxu0 0.0
        %3242 = vmatprep.subr.mxu0 0.0
        %3243 = vmatpush1.msra.mxu0 0.0
        %3244 = vmatprep.subr.mxu0 0.0
        %3245 = vmatpush1.msra.mxu0 0.0
        %3246 = vmatprep.subr.mxu0 0.0
        %3247 = vmatpush1.msra.mxu0 0.0
        %3248 = vmatprep.subr.mxu0 0.0
        %3249 = vmatpush1.msra.mxu0 0.0
        %3250 = vmatprep.subr.mxu0 0.0
        %3251 = vmatpush1.msra.mxu0 0.0
        %3252 = vmatprep.subr.mxu0 0.0
        %3253 = vmatpush1.msra.mxu0 0.0
        %3254 = vmatprep.subr.mxu0 0.0
        %3255 = vmatpush1.msra.mxu0 0.0
        %3256 = vmatprep.subr.mxu0 0.0
        %3257 = vmatpush1.msra.mxu0 0.0
        %3258 = vmatprep.subr.mxu0 0.0
        %3259 = vmatpush1.msra.mxu0 0.0
        %3260 = vmatprep.subr.mxu0 0.0
        %3261 = vmatpush1.msra.mxu0 0.0
        %3262 = vmatprep.subr.mxu0 0.0
        %3263 = vmatpush1.msra.mxu0 0.0
        %3264 = vmatprep.subr.mxu0 0.0
        %3265 = vmatpush1.msra.mxu0 0.0
        %3266 = vmatprep.mubr.f32.mxu0 0.0
        %3267 = vmatmul.mubr.f32.gmra.mrb[0].mxu0 %v3200
        %v3268 = vpop.f32.mrb[0].mxu0
        %v3269 = vadd.f32 0.0, %v3268
        %v3270 = vpop.f32.mrb[0].mxu0
        %v3271 = vadd.f32 0.0, %v3270
        %3272 = vdwg.mxu0
        %v3273 = vadd.f32 %v3195, %v3269
        %v3274 = vadd.f32 %v3196, %v3271
        %3275 = vrot.lane.b32.xlu0 %v2855, 127
        %v3276 = vpop.permute.xlu0 %3275
        %3277 = vrot.lane.b32.xlu0 %v2856, 127
        %v3278 = vpop.permute.xlu0 %3277
        %v3279 = vsel %vm724, %v3276, %v3278
        %v3280 = vsel %vm724, %v3278, %v3276
        %v3281 = vmul.f32 %v3279, %v733
        %v3282 = vmul.f32 %v3280, %v737
        %s3283 = scalar_lea.vmem %s3, 512
        %v3284 = vld [vmem:[%s3283] sm:$0xff]
        %v3286 = vsel %vm293, %v3284, 0
        %3288 = vmatprep.subr.mxu0 %v3282
        %3289 = vmatpush1.msra.mxu0 %v3281
        %3290 = vmatprep.subr.mxu0 0.0
        %3291 = vmatpush1.msra.mxu0 0.0
        %3292 = vmatprep.subr.mxu0 0.0
        %3293 = vmatpush1.msra.mxu0 0.0
        %3294 = vmatprep.subr.mxu0 0.0
        %3295 = vmatpush1.msra.mxu0 0.0
        %3296 = vmatprep.subr.mxu0 0.0
        %3297 = vmatpush1.msra.mxu0 0.0
        %3298 = vmatprep.subr.mxu0 0.0
        %3299 = vmatpush1.msra.mxu0 0.0
        %3300 = vmatprep.subr.mxu0 0.0
        %3301 = vmatpush1.msra.mxu0 0.0
        %3302 = vmatprep.subr.mxu0 0.0
        %3303 = vmatpush1.msra.mxu0 0.0
        %3304 = vmatprep.subr.mxu0 0.0
        %3305 = vmatpush1.msra.mxu0 0.0
        %3306 = vmatprep.subr.mxu0 0.0
        %3307 = vmatpush1.msra.mxu0 0.0
        %3308 = vmatprep.subr.mxu0 0.0
        %3309 = vmatpush1.msra.mxu0 0.0
        %3310 = vmatprep.subr.mxu0 0.0
        %3311 = vmatpush1.msra.mxu0 0.0
        %3312 = vmatprep.subr.mxu0 0.0
        %3313 = vmatpush1.msra.mxu0 0.0
        %3314 = vmatprep.subr.mxu0 0.0
        %3315 = vmatpush1.msra.mxu0 0.0
        %3316 = vmatprep.subr.mxu0 0.0
        %3317 = vmatpush1.msra.mxu0 0.0
        %3318 = vmatprep.subr.mxu0 0.0
        %3319 = vmatpush1.msra.mxu0 0.0
        %3320 = vmatprep.subr.mxu0 0.0
        %3321 = vmatpush1.msra.mxu0 0.0
        %3322 = vmatprep.subr.mxu0 0.0
        %3323 = vmatpush1.msra.mxu0 0.0
        %3324 = vmatprep.subr.mxu0 0.0
        %3325 = vmatpush1.msra.mxu0 0.0
        %3326 = vmatprep.subr.mxu0 0.0
        %3327 = vmatpush1.msra.mxu0 0.0
        %3328 = vmatprep.subr.mxu0 0.0
        %3329 = vmatpush1.msra.mxu0 0.0
        %3330 = vmatprep.subr.mxu0 0.0
        %3331 = vmatpush1.msra.mxu0 0.0
        %3332 = vmatprep.subr.mxu0 0.0
        %3333 = vmatpush1.msra.mxu0 0.0
        %3334 = vmatprep.subr.mxu0 0.0
        %3335 = vmatpush1.msra.mxu0 0.0
        %3336 = vmatprep.subr.mxu0 0.0
        %3337 = vmatpush1.msra.mxu0 0.0
        %3338 = vmatprep.subr.mxu0 0.0
        %3339 = vmatpush1.msra.mxu0 0.0
        %3340 = vmatprep.subr.mxu0 0.0
        %3341 = vmatpush1.msra.mxu0 0.0
        %3342 = vmatprep.subr.mxu0 0.0
        %3343 = vmatpush1.msra.mxu0 0.0
        %3344 = vmatprep.subr.mxu0 0.0
        %3345 = vmatpush1.msra.mxu0 0.0
        %3346 = vmatprep.subr.mxu0 0.0
        %3347 = vmatpush1.msra.mxu0 0.0
        %3348 = vmatprep.subr.mxu0 0.0
        %3349 = vmatpush1.msra.mxu0 0.0
        %3350 = vmatprep.subr.mxu0 0.0
        %3351 = vmatpush1.msra.mxu0 0.0
        %3352 = vmatprep.mubr.f32.mxu0 0.0
        %3353 = vmatmul.mubr.f32.gmra.mrb[0].mxu0 %v3286
        %v3354 = vpop.f32.mrb[0].mxu0
        %v3355 = vadd.f32 0.0, %v3354
        %v3356 = vpop.f32.mrb[0].mxu0
        %v3357 = vadd.f32 0.0, %v3356
        %3358 = vdwg.mxu0
        %v3359 = vadd.f32 %v3273, %v3355
        %v3360 = vadd.f32 %v3274, %v3357
        %3361 = vrot.lane.b32.xlu0 %v2855, 113
        %v3362 = vpop.permute.xlu0 %3361
        %3363 = vrot.lane.b32.xlu0 %v2856, 113
        %v3364 = vpop.permute.xlu0 %3363
        %v3365 = vsel %vm824, %v3362, %v3364
        %v3366 = vsel %vm824, %v3364, %v3362
        %v3367 = vmul.f32 %v3365, %v833
        %v3368 = vmul.f32 %v3366, %v837
        %s3369 = scalar_lea.vmem %s3, 528
        %v3370 = vld [vmem:[%s3369] sm:$0xff]
        %v3372 = vsel %vm293, %v3370, 0
        %3374 = vmatprep.subr.mxu0 %v3368
        %3375 = vmatpush1.msra.mxu0 %v3367
        %3376 = vmatprep.subr.mxu0 0.0
        %3377 = vmatpush1.msra.mxu0 0.0
        %3378 = vmatprep.subr.mxu0 0.0
        %3379 = vmatpush1.msra.mxu0 0.0
        %3380 = vmatprep.subr.mxu0 0.0
        %3381 = vmatpush1.msra.mxu0 0.0
        %3382 = vmatprep.subr.mxu0 0.0
        %3383 = vmatpush1.msra.mxu0 0.0
        %3384 = vmatprep.subr.mxu0 0.0
        %3385 = vmatpush1.msra.mxu0 0.0
        %3386 = vmatprep.subr.mxu0 0.0
        %3387 = vmatpush1.msra.mxu0 0.0
        %3388 = vmatprep.subr.mxu0 0.0
        %3389 = vmatpush1.msra.mxu0 0.0
        %3390 = vmatprep.subr.mxu0 0.0
        %3391 = vmatpush1.msra.mxu0 0.0
        %3392 = vmatprep.subr.mxu0 0.0
        %3393 = vmatpush1.msra.mxu0 0.0
        %3394 = vmatprep.subr.mxu0 0.0
        %3395 = vmatpush1.msra.mxu0 0.0
        %3396 = vmatprep.subr.mxu0 0.0
        %3397 = vmatpush1.msra.mxu0 0.0
        %3398 = vmatprep.subr.mxu0 0.0
        %3399 = vmatpush1.msra.mxu0 0.0
        %3400 = vmatprep.subr.mxu0 0.0
        %3401 = vmatpush1.msra.mxu0 0.0
        %3402 = vmatprep.subr.mxu0 0.0
        %3403 = vmatpush1.msra.mxu0 0.0
        %3404 = vmatprep.subr.mxu0 0.0
        %3405 = vmatpush1.msra.mxu0 0.0
        %3406 = vmatprep.subr.mxu0 0.0
        %3407 = vmatpush1.msra.mxu0 0.0
        %3408 = vmatprep.subr.mxu0 0.0
        %3409 = vmatpush1.msra.mxu0 0.0
        %3410 = vmatprep.subr.mxu0 0.0
        %3411 = vmatpush1.msra.mxu0 0.0
        %3412 = vmatprep.subr.mxu0 0.0
        %3413 = vmatpush1.msra.mxu0 0.0
        %3414 = vmatprep.subr.mxu0 0.0
        %3415 = vmatpush1.msra.mxu0 0.0
        %3416 = vmatprep.subr.mxu0 0.0
        %3417 = vmatpush1.msra.mxu0 0.0
        %3418 = vmatprep.subr.mxu0 0.0
        %3419 = vmatpush1.msra.mxu0 0.0
        %3420 = vmatprep.subr.mxu0 0.0
        %3421 = vmatpush1.msra.mxu0 0.0
        %3422 = vmatprep.subr.mxu0 0.0
        %3423 = vmatpush1.msra.mxu0 0.0
        %3424 = vmatprep.subr.mxu0 0.0
        %3425 = vmatpush1.msra.mxu0 0.0
        %3426 = vmatprep.subr.mxu0 0.0
        %3427 = vmatpush1.msra.mxu0 0.0
        %3428 = vmatprep.subr.mxu0 0.0
        %3429 = vmatpush1.msra.mxu0 0.0
        %3430 = vmatprep.subr.mxu0 0.0
        %3431 = vmatpush1.msra.mxu0 0.0
        %3432 = vmatprep.subr.mxu0 0.0
        %3433 = vmatpush1.msra.mxu0 0.0
        %3434 = vmatprep.subr.mxu0 0.0
        %3435 = vmatpush1.msra.mxu0 0.0
        %3436 = vmatprep.subr.mxu0 0.0
        %3437 = vmatpush1.msra.mxu0 0.0
        %3438 = vmatprep.mubr.f32.mxu0 0.0
        %3439 = vmatmul.mubr.f32.gmra.mrb[0].mxu0 %v3372
        %v3440 = vpop.f32.mrb[0].mxu0
        %v3441 = vadd.f32 0.0, %v3440
        %v3442 = vpop.f32.mrb[0].mxu0
        %v3443 = vadd.f32 0.0, %v3442
        %3444 = vdwg.mxu0
        %v3445 = vadd.f32 %v3359, %v3441
        %v3446 = vadd.f32 %v3360, %v3443
        %3447 = vrot.lane.b32.xlu0 %v2855, 112
        %v3448 = vpop.permute.xlu0 %3447
        %3449 = vrot.lane.b32.xlu0 %v2856, 112
        %v3450 = vpop.permute.xlu0 %3449
        %v3451 = vsel %vm924, %v3448, %v3450
        %v3452 = vsel %vm924, %v3450, %v3448
        %v3453 = vmul.f32 %v3451, %v933
        %v3454 = vmul.f32 %v3452, %v937
        %s3455 = scalar_lea.vmem %s3, 544
        %v3456 = vld [vmem:[%s3455] sm:$0xff]
        %v3458 = vsel %vm293, %v3456, 0
        %3460 = vmatprep.subr.mxu0 %v3454
        %3461 = vmatpush1.msra.mxu0 %v3453
        %3462 = vmatprep.subr.mxu0 0.0
        %3463 = vmatpush1.msra.mxu0 0.0
        %3464 = vmatprep.subr.mxu0 0.0
        %3465 = vmatpush1.msra.mxu0 0.0
        %3466 = vmatprep.subr.mxu0 0.0
        %3467 = vmatpush1.msra.mxu0 0.0
        %3468 = vmatprep.subr.mxu0 0.0
        %3469 = vmatpush1.msra.mxu0 0.0
        %3470 = vmatprep.subr.mxu0 0.0
        %3471 = vmatpush1.msra.mxu0 0.0
        %3472 = vmatprep.subr.mxu0 0.0
        %3473 = vmatpush1.msra.mxu0 0.0
        %3474 = vmatprep.subr.mxu0 0.0
        %3475 = vmatpush1.msra.mxu0 0.0
        %3476 = vmatprep.subr.mxu0 0.0
        %3477 = vmatpush1.msra.mxu0 0.0
        %3478 = vmatprep.subr.mxu0 0.0
        %3479 = vmatpush1.msra.mxu0 0.0
        %3480 = vmatprep.subr.mxu0 0.0
        %3481 = vmatpush1.msra.mxu0 0.0
        %3482 = vmatprep.subr.mxu0 0.0
        %3483 = vmatpush1.msra.mxu0 0.0
        %3484 = vmatprep.subr.mxu0 0.0
        %3485 = vmatpush1.msra.mxu0 0.0
        %3486 = vmatprep.subr.mxu0 0.0
        %3487 = vmatpush1.msra.mxu0 0.0
        %3488 = vmatprep.subr.mxu0 0.0
        %3489 = vmatpush1.msra.mxu0 0.0
        %3490 = vmatprep.subr.mxu0 0.0
        %3491 = vmatpush1.msra.mxu0 0.0
        %3492 = vmatprep.subr.mxu0 0.0
        %3493 = vmatpush1.msra.mxu0 0.0
        %3494 = vmatprep.subr.mxu0 0.0
        %3495 = vmatpush1.msra.mxu0 0.0
        %3496 = vmatprep.subr.mxu0 0.0
        %3497 = vmatpush1.msra.mxu0 0.0
        %3498 = vmatprep.subr.mxu0 0.0
        %3499 = vmatpush1.msra.mxu0 0.0
        %3500 = vmatprep.subr.mxu0 0.0
        %3501 = vmatpush1.msra.mxu0 0.0
        %3502 = vmatprep.subr.mxu0 0.0
        %3503 = vmatpush1.msra.mxu0 0.0
        %3504 = vmatprep.subr.mxu0 0.0
        %3505 = vmatpush1.msra.mxu0 0.0
        %3506 = vmatprep.subr.mxu0 0.0
        %3507 = vmatpush1.msra.mxu0 0.0
        %3508 = vmatprep.subr.mxu0 0.0
        %3509 = vmatpush1.msra.mxu0 0.0
        %3510 = vmatprep.subr.mxu0 0.0
        %3511 = vmatpush1.msra.mxu0 0.0
        %3512 = vmatprep.subr.mxu0 0.0
        %3513 = vmatpush1.msra.mxu0 0.0
        %3514 = vmatprep.subr.mxu0 0.0
        %3515 = vmatpush1.msra.mxu0 0.0
        %3516 = vmatprep.subr.mxu0 0.0
        %3517 = vmatpush1.msra.mxu0 0.0
        %3518 = vmatprep.subr.mxu0 0.0
        %3519 = vmatpush1.msra.mxu0 0.0
        %3520 = vmatprep.subr.mxu0 0.0
        %3521 = vmatpush1.msra.mxu0 0.0
        %3522 = vmatprep.subr.mxu0 0.0
        %3523 = vmatpush1.msra.mxu0 0.0
        %3524 = vmatprep.mubr.f32.mxu0 0.0
        %3525 = vmatmul.mubr.f32.gmra.mrb[0].mxu0 %v3458
        %v3526 = vpop.f32.mrb[0].mxu0
        %v3527 = vadd.f32 0.0, %v3526
        %v3528 = vpop.f32.mrb[0].mxu0
        %v3529 = vadd.f32 0.0, %v3528
        %3530 = vdwg.mxu0
        %v3531 = vadd.f32 %v3445, %v3527
        %v3532 = vadd.f32 %v3446, %v3529
        %3533 = vrot.lane.b32.xlu0 %v2855, 111
        %v3534 = vpop.permute.xlu0 %3533
        %3535 = vrot.lane.b32.xlu0 %v2856, 111
        %v3536 = vpop.permute.xlu0 %3535
        %v3537 = vsel %vm1024, %v3534, %v3536
        %v3538 = vsel %vm1024, %v3536, %v3534
        %v3539 = vmul.f32 %v3537, %v1033
        %v3540 = vmul.f32 %v3538, %v1037
        %s3541 = scalar_lea.vmem %s3, 560
        %v3542 = vld [vmem:[%s3541] sm:$0xff]
        %v3544 = vsel %vm293, %v3542, 0
        %3546 = vmatprep.subr.mxu0 %v3540
        %3547 = vmatpush1.msra.mxu0 %v3539
        %3548 = vmatprep.subr.mxu0 0.0
        %3549 = vmatpush1.msra.mxu0 0.0
        %3550 = vmatprep.subr.mxu0 0.0
        %3551 = vmatpush1.msra.mxu0 0.0
        %3552 = vmatprep.subr.mxu0 0.0
        %3553 = vmatpush1.msra.mxu0 0.0
        %3554 = vmatprep.subr.mxu0 0.0
        %3555 = vmatpush1.msra.mxu0 0.0
        %3556 = vmatprep.subr.mxu0 0.0
        %3557 = vmatpush1.msra.mxu0 0.0
        %3558 = vmatprep.subr.mxu0 0.0
        %3559 = vmatpush1.msra.mxu0 0.0
        %3560 = vmatprep.subr.mxu0 0.0
        %3561 = vmatpush1.msra.mxu0 0.0
        %3562 = vmatprep.subr.mxu0 0.0
        %3563 = vmatpush1.msra.mxu0 0.0
        %3564 = vmatprep.subr.mxu0 0.0
        %3565 = vmatpush1.msra.mxu0 0.0
        %3566 = vmatprep.subr.mxu0 0.0
        %3567 = vmatpush1.msra.mxu0 0.0
        %3568 = vmatprep.subr.mxu0 0.0
        %3569 = vmatpush1.msra.mxu0 0.0
        %3570 = vmatprep.subr.mxu0 0.0
        %3571 = vmatpush1.msra.mxu0 0.0
        %3572 = vmatprep.subr.mxu0 0.0
        %3573 = vmatpush1.msra.mxu0 0.0
        %3574 = vmatprep.subr.mxu0 0.0
        %3575 = vmatpush1.msra.mxu0 0.0
        %3576 = vmatprep.subr.mxu0 0.0
        %3577 = vmatpush1.msra.mxu0 0.0
        %3578 = vmatprep.subr.mxu0 0.0
        %3579 = vmatpush1.msra.mxu0 0.0
        %3580 = vmatprep.subr.mxu0 0.0
        %3581 = vmatpush1.msra.mxu0 0.0
        %3582 = vmatprep.subr.mxu0 0.0
        %3583 = vmatpush1.msra.mxu0 0.0
        %3584 = vmatprep.subr.mxu0 0.0
        %3585 = vmatpush1.msra.mxu0 0.0
        %3586 = vmatprep.subr.mxu0 0.0
        %3587 = vmatpush1.msra.mxu0 0.0
        %3588 = vmatprep.subr.mxu0 0.0
        %3589 = vmatpush1.msra.mxu0 0.0
        %3590 = vmatprep.subr.mxu0 0.0
        %3591 = vmatpush1.msra.mxu0 0.0
        %3592 = vmatprep.subr.mxu0 0.0
        %3593 = vmatpush1.msra.mxu0 0.0
        %3594 = vmatprep.subr.mxu0 0.0
        %3595 = vmatpush1.msra.mxu0 0.0
        %3596 = vmatprep.subr.mxu0 0.0
        %3597 = vmatpush1.msra.mxu0 0.0
        %3598 = vmatprep.subr.mxu0 0.0
        %3599 = vmatpush1.msra.mxu0 0.0
        %3600 = vmatprep.subr.mxu0 0.0
        %3601 = vmatpush1.msra.mxu0 0.0
        %3602 = vmatprep.subr.mxu0 0.0
        %3603 = vmatpush1.msra.mxu0 0.0
        %3604 = vmatprep.subr.mxu0 0.0
        %3605 = vmatpush1.msra.mxu0 0.0
        %3606 = vmatprep.subr.mxu0 0.0
        %3607 = vmatpush1.msra.mxu0 0.0
        %3608 = vmatprep.subr.mxu0 0.0
        %3609 = vmatpush1.msra.mxu0 0.0
        %3610 = vmatprep.mubr.f32.mxu0 0.0
        %3611 = vmatmul.mubr.f32.gmra.mrb[0].mxu0 %v3544
        %v3612 = vpop.f32.mrb[0].mxu0
        %v3613 = vadd.f32 0.0, %v3612
        %v3614 = vpop.f32.mrb[0].mxu0
        %v3615 = vadd.f32 0.0, %v3614
        %3616 = vdwg.mxu0
        %v3617 = vadd.f32 %v3531, %v3613
        %v3618 = vadd.f32 %v3532, %v3615
        %v3619 = vadd.f32 %v3617, %v3618
        %3620 = vadd.xlane.f32.xlu0 %v3619
        %v3621 = vpop.xlane.xlu0 %3620
        %v3622 = vrot.slane %v3621, 4
        %v3623 = vadd.f32 %v3621, %v3622
        %v3624 = vrot.slane %v3623, 2
        %v3625 = vadd.f32 %v3623, %v3624
        %v3626 = vrot.slane %v3625, 1
        %v3627 = vadd.f32 %v3625, %v3626
        %s3628 = vtos %v3627
        %v3629 = vstv %s3628
        %v3630 = vmul.f32 %v3617, %v3617
        %v3631 = vmul.f32 %v3618, %v3618
        %v3632 = vadd.f32 %v3630, %v3631
        %3633 = vadd.xlane.f32.xlu0 %v3632
        %v3634 = vpop.xlane.xlu0 %3633
        %v3635 = vrot.slane %v3634, 4
        %v3636 = vadd.f32 %v3634, %v3635
        %v3637 = vrot.slane %v3636, 2
        %v3638 = vadd.f32 %v3636, %v3637
        %v3639 = vrot.slane %v3638, 1
        %v3640 = vadd.f32 %v3638, %v3639
        %s3641 = vtos %v3640
        %v3642 = vstv %s3641
        %v3643 = vmul.f32 %v3629, 0.00048828125
        %v3644 = vmul.f32 %v3642, 0.00048828125
        %v3645 = vmul.f32 %v3643, %v3643
        %v3646 = vsub.f32 %v3644, %v3645
        %v3647 = vmax.f32 %v3646, 0.0
        %v3648 = vadd.f32 %v3647, 1e-05
        %v3649 = vrsqrt.pop %v3648
        %v3650 = vmul.f32 %v1120, %v3649
        %v3651 = vmul.f32 %v3643, %v3650
        %3653 = vrot.lane.b32.xlu0 %v3651, 1
        %v3654 = vpop.permute.xlu0 %3653
        %v3656 = vsub.f32 %v1120, %v3654
        %3658 = vset.pattern.permute.xlu0 6
        %3659 = vperm.xlu0 %3658, %v3650
        %v3660 = vpop.permute.xlu0 %3659
        %v3662 = vmul.f32 %v3617, %v3660
        %v3663 = vmul.f32 %v3618, %v3660
        %3665 = vset.pattern.permute.xlu0 7
        %3666 = vperm.xlu0 %3665, %v3656
        %v3667 = vpop.permute.xlu0 %3666
        %v3669 = vadd.f32 %v3662, %v3667
        %v3670 = vadd.f32 %v3663, %v3667
        %3671 = vrot.lane.b32.xlu0 %v3669, 17
        %v3672 = vpop.permute.xlu0 %3671
        %3673 = vrot.lane.b32.xlu0 %v3670, 17
        %v3674 = vpop.permute.xlu0 %3673
        %v3675 = vsel %vm251, %v3672, %v3674
        %v3676 = vsel %vm251, %v3674, %v3672
        %v3677 = vmul.f32 %v3676, %v259
        %v3678 = vmul.f32 %v3675, %v263
        %s3679 = scalar_lea.vmem %s3, 576
        %v3680 = vld [vmem:[%s3679] sm:$0xff]
        %v3681 = vld [vmem:[%s3679 + $0x8] sm:$0xff]
        %3682 = vrot.lane.b32.xlu0 %v3669, 16
        %v3683 = vpop.permute.xlu0 %3682
        %3684 = vrot.lane.b32.xlu0 %v3670, 16
        %v3685 = vpop.permute.xlu0 %3684
        %v3686 = vsel %vm273, %v3683, %v3685
        %v3687 = vsel %vm273, %v3685, %v3683
        %v3688 = vmul.f32 %v3687, %v282
        %v3689 = vmul.f32 %v3686, %v286
        %s3690 = scalar_lea.vmem %s3, 592
        %v3691 = vld [vmem:[%s3690] sm:$0xff]
        %v3692 = vld [vmem:[%s3690 + $0x8] sm:$0xff]
        %v3694 = vsel %vm293, %v3691, 0
        %v3697 = vsel %vm293, %v3692, 0
        %3699 = vmatprep.subr.mxu0 %v3689
        %3700 = vmatpush1.msra.mxu0 %v3688
        %3701 = vmatprep.subr.mxu0 0.0
        %3702 = vmatpush1.msra.mxu0 0.0
        %3703 = vmatprep.subr.mxu0 0.0
        %3704 = vmatpush1.msra.mxu0 0.0
        %3705 = vmatprep.subr.mxu0 0.0
        %3706 = vmatpush1.msra.mxu0 0.0
        %3707 = vmatprep.subr.mxu0 0.0
        %3708 = vmatpush1.msra.mxu0 0.0
        %3709 = vmatprep.subr.mxu0 0.0
        %3710 = vmatpush1.msra.mxu0 0.0
        %3711 = vmatprep.subr.mxu0 0.0
        %3712 = vmatpush1.msra.mxu0 0.0
        %3713 = vmatprep.subr.mxu0 0.0
        %3714 = vmatpush1.msra.mxu0 0.0
        %3715 = vmatprep.subr.mxu0 0.0
        %3716 = vmatpush1.msra.mxu0 0.0
        %3717 = vmatprep.subr.mxu0 0.0
        %3718 = vmatpush1.msra.mxu0 0.0
        %3719 = vmatprep.subr.mxu0 0.0
        %3720 = vmatpush1.msra.mxu0 0.0
        %3721 = vmatprep.subr.mxu0 0.0
        %3722 = vmatpush1.msra.mxu0 0.0
        %3723 = vmatprep.subr.mxu0 0.0
        %3724 = vmatpush1.msra.mxu0 0.0
        %3725 = vmatprep.subr.mxu0 0.0
        %3726 = vmatpush1.msra.mxu0 0.0
        %3727 = vmatprep.subr.mxu0 0.0
        %3728 = vmatpush1.msra.mxu0 0.0
        %3729 = vmatprep.subr.mxu0 0.0
        %3730 = vmatpush1.msra.mxu0 0.0
        %3731 = vmatprep.subr.mxu0 0.0
        %3732 = vmatpush1.msra.mxu0 0.0
        %3733 = vmatprep.subr.mxu0 0.0
        %3734 = vmatpush1.msra.mxu0 0.0
        %3735 = vmatprep.subr.mxu0 0.0
        %3736 = vmatpush1.msra.mxu0 0.0
        %3737 = vmatprep.subr.mxu0 0.0
        %3738 = vmatpush1.msra.mxu0 0.0
        %3739 = vmatprep.subr.mxu0 0.0
        %3740 = vmatpush1.msra.mxu0 0.0
        %3741 = vmatprep.subr.mxu0 0.0
        %3742 = vmatpush1.msra.mxu0 0.0
        %3743 = vmatprep.subr.mxu0 0.0
        %3744 = vmatpush1.msra.mxu0 0.0
        %3745 = vmatprep.subr.mxu0 0.0
        %3746 = vmatpush1.msra.mxu0 0.0
        %3747 = vmatprep.subr.mxu0 0.0
        %3748 = vmatpush1.msra.mxu0 0.0
        %3749 = vmatprep.subr.mxu0 0.0
        %3750 = vmatpush1.msra.mxu0 0.0
        %3751 = vmatprep.subr.mxu0 0.0
        %3752 = vmatpush1.msra.mxu0 0.0
        %3753 = vmatprep.subr.mxu0 0.0
        %3754 = vmatpush1.msra.mxu0 0.0
        %3755 = vmatprep.subr.mxu0 0.0
        %3756 = vmatpush1.msra.mxu0 0.0
        %3757 = vmatprep.subr.mxu0 0.0
        %3758 = vmatpush1.msra.mxu0 0.0
        %3759 = vmatprep.subr.mxu0 0.0
        %3760 = vmatpush1.msra.mxu0 0.0
        %3761 = vmatprep.subr.mxu0 0.0
        %3762 = vmatpush1.msra.mxu0 0.0
        %3763 = vmatprep.mubr.f32.mxu0 0.0
        %3764 = vmatmul.mubr.f32.gmra.mrb[0].mxu0 %v3694
        %v3765 = vpop.f32.mrb[0].mxu0
        %v3766 = vadd.f32 0.0, %v3765
        %v3767 = vpop.f32.mrb[0].mxu0
        %v3768 = vadd.f32 0.0, %v3767
        %3769 = vmatprep.mubr.f32.mxu0 0.0
        %3770 = vmatmul.mubr.f32.gmra.mrb[0].mxu0 %v3697
        %v3771 = vpop.f32.mrb[0].mxu0
        %v3772 = vadd.f32 0.0, %v3771
        %v3773 = vpop.f32.mrb[0].mxu0
        %v3774 = vadd.f32 0.0, %v3773
        %3775 = vdwg.mxu0
        %v3777 = vsel %vm293, %v3680, 0
        %v3780 = vsel %vm293, %v3681, 0
        %3782 = vmatprep.subr.mxu0 %v3678
        %3783 = vmatpush1.msra.mxu0 %v3677
        %3784 = vmatprep.subr.mxu0 0.0
        %3785 = vmatpush1.msra.mxu0 0.0
        %3786 = vmatprep.subr.mxu0 0.0
        %3787 = vmatpush1.msra.mxu0 0.0
        %3788 = vmatprep.subr.mxu0 0.0
        %3789 = vmatpush1.msra.mxu0 0.0
        %3790 = vmatprep.subr.mxu0 0.0
        %3791 = vmatpush1.msra.mxu0 0.0
        %3792 = vmatprep.subr.mxu0 0.0
        %3793 = vmatpush1.msra.mxu0 0.0
        %3794 = vmatprep.subr.mxu0 0.0
        %3795 = vmatpush1.msra.mxu0 0.0
        %3796 = vmatprep.subr.mxu0 0.0
        %3797 = vmatpush1.msra.mxu0 0.0
        %3798 = vmatprep.subr.mxu0 0.0
        %3799 = vmatpush1.msra.mxu0 0.0
        %3800 = vmatprep.subr.mxu0 0.0
        %3801 = vmatpush1.msra.mxu0 0.0
        %3802 = vmatprep.subr.mxu0 0.0
        %3803 = vmatpush1.msra.mxu0 0.0
        %3804 = vmatprep.subr.mxu0 0.0
        %3805 = vmatpush1.msra.mxu0 0.0
        %3806 = vmatprep.subr.mxu0 0.0
        %3807 = vmatpush1.msra.mxu0 0.0
        %3808 = vmatprep.subr.mxu0 0.0
        %3809 = vmatpush1.msra.mxu0 0.0
        %3810 = vmatprep.subr.mxu0 0.0
        %3811 = vmatpush1.msra.mxu0 0.0
        %3812 = vmatprep.subr.mxu0 0.0
        %3813 = vmatpush1.msra.mxu0 0.0
        %3814 = vmatprep.subr.mxu0 0.0
        %3815 = vmatpush1.msra.mxu0 0.0
        %3816 = vmatprep.subr.mxu0 0.0
        %3817 = vmatpush1.msra.mxu0 0.0
        %3818 = vmatprep.subr.mxu0 0.0
        %3819 = vmatpush1.msra.mxu0 0.0
        %3820 = vmatprep.subr.mxu0 0.0
        %3821 = vmatpush1.msra.mxu0 0.0
        %3822 = vmatprep.subr.mxu0 0.0
        %3823 = vmatpush1.msra.mxu0 0.0
        %3824 = vmatprep.subr.mxu0 0.0
        %3825 = vmatpush1.msra.mxu0 0.0
        %3826 = vmatprep.subr.mxu0 0.0
        %3827 = vmatpush1.msra.mxu0 0.0
        %3828 = vmatprep.subr.mxu0 0.0
        %3829 = vmatpush1.msra.mxu0 0.0
        %3830 = vmatprep.subr.mxu0 0.0
        %3831 = vmatpush1.msra.mxu0 0.0
        %3832 = vmatprep.subr.mxu0 0.0
        %3833 = vmatpush1.msra.mxu0 0.0
        %3834 = vmatprep.subr.mxu0 0.0
        %3835 = vmatpush1.msra.mxu0 0.0
        %3836 = vmatprep.subr.mxu0 0.0
        %3837 = vmatpush1.msra.mxu0 0.0
        %3838 = vmatprep.subr.mxu0 0.0
        %3839 = vmatpush1.msra.mxu0 0.0
        %3840 = vmatprep.subr.mxu0 0.0
        %3841 = vmatpush1.msra.mxu0 0.0
        %3842 = vmatprep.subr.mxu0 0.0
        %3843 = vmatpush1.msra.mxu0 0.0
        %3844 = vmatprep.subr.mxu0 0.0
        %3845 = vmatpush1.msra.mxu0 0.0
        %3846 = vmatprep.mubr.f32.mxu0 0.0
        %3847 = vmatmul.mubr.f32.gmra.mrb[0].mxu0 %v3777
        %v3848 = vpop.f32.mrb[0].mxu0
        %v3849 = vadd.f32 %v3766, %v3848
        %v3850 = vpop.f32.mrb[0].mxu0
        %v3851 = vadd.f32 %v3768, %v3850
        %3852 = vmatprep.mubr.f32.mxu0 0.0
        %3853 = vmatmul.mubr.f32.gmra.mrb[0].mxu0 %v3780
        %v3854 = vpop.f32.mrb[0].mxu0
        %v3855 = vadd.f32 %v3772, %v3854
        %v3856 = vpop.f32.mrb[0].mxu0
        %v3857 = vadd.f32 %v3774, %v3856
        %3858 = vdwg.mxu0
        %3859 = vrot.lane.b32.xlu0 %v3669, 15
        %v3860 = vpop.permute.xlu0 %3859
        %3861 = vrot.lane.b32.xlu0 %v3670, 15
        %v3862 = vpop.permute.xlu0 %3861
        %v3863 = vsel %vm446, %v3860, %v3862
        %v3864 = vsel %vm446, %v3862, %v3860
        %v3865 = vmul.f32 %v3864, %v455
        %v3866 = vmul.f32 %v3863, %v459
        %s3867 = scalar_lea.vmem %s3, 608
        %v3868 = vld [vmem:[%s3867] sm:$0xff]
        %v3869 = vld [vmem:[%s3867 + $0x8] sm:$0xff]
        %v3871 = vsel %vm293, %v3868, 0
        %v3874 = vsel %vm293, %v3869, 0
        %3876 = vmatprep.subr.mxu0 %v3866
        %3877 = vmatpush1.msra.mxu0 %v3865
        %3878 = vmatprep.subr.mxu0 0.0
        %3879 = vmatpush1.msra.mxu0 0.0
        %3880 = vmatprep.subr.mxu0 0.0
        %3881 = vmatpush1.msra.mxu0 0.0
        %3882 = vmatprep.subr.mxu0 0.0
        %3883 = vmatpush1.msra.mxu0 0.0
        %3884 = vmatprep.subr.mxu0 0.0
        %3885 = vmatpush1.msra.mxu0 0.0
        %3886 = vmatprep.subr.mxu0 0.0
        %3887 = vmatpush1.msra.mxu0 0.0
        %3888 = vmatprep.subr.mxu0 0.0
        %3889 = vmatpush1.msra.mxu0 0.0
        %3890 = vmatprep.subr.mxu0 0.0
        %3891 = vmatpush1.msra.mxu0 0.0
        %3892 = vmatprep.subr.mxu0 0.0
        %3893 = vmatpush1.msra.mxu0 0.0
        %3894 = vmatprep.subr.mxu0 0.0
        %3895 = vmatpush1.msra.mxu0 0.0
        %3896 = vmatprep.subr.mxu0 0.0
        %3897 = vmatpush1.msra.mxu0 0.0
        %3898 = vmatprep.subr.mxu0 0.0
        %3899 = vmatpush1.msra.mxu0 0.0
        %3900 = vmatprep.subr.mxu0 0.0
        %3901 = vmatpush1.msra.mxu0 0.0
        %3902 = vmatprep.subr.mxu0 0.0
        %3903 = vmatpush1.msra.mxu0 0.0
        %3904 = vmatprep.subr.mxu0 0.0
        %3905 = vmatpush1.msra.mxu0 0.0
        %3906 = vmatprep.subr.mxu0 0.0
        %3907 = vmatpush1.msra.mxu0 0.0
        %3908 = vmatprep.subr.mxu0 0.0
        %3909 = vmatpush1.msra.mxu0 0.0
        %3910 = vmatprep.subr.mxu0 0.0
        %3911 = vmatpush1.msra.mxu0 0.0
        %3912 = vmatprep.subr.mxu0 0.0
        %3913 = vmatpush1.msra.mxu0 0.0
        %3914 = vmatprep.subr.mxu0 0.0
        %3915 = vmatpush1.msra.mxu0 0.0
        %3916 = vmatprep.subr.mxu0 0.0
        %3917 = vmatpush1.msra.mxu0 0.0
        %3918 = vmatprep.subr.mxu0 0.0
        %3919 = vmatpush1.msra.mxu0 0.0
        %3920 = vmatprep.subr.mxu0 0.0
        %3921 = vmatpush1.msra.mxu0 0.0
        %3922 = vmatprep.subr.mxu0 0.0
        %3923 = vmatpush1.msra.mxu0 0.0
        %3924 = vmatprep.subr.mxu0 0.0
        %3925 = vmatpush1.msra.mxu0 0.0
        %3926 = vmatprep.subr.mxu0 0.0
        %3927 = vmatpush1.msra.mxu0 0.0
        %3928 = vmatprep.subr.mxu0 0.0
        %3929 = vmatpush1.msra.mxu0 0.0
        %3930 = vmatprep.subr.mxu0 0.0
        %3931 = vmatpush1.msra.mxu0 0.0
        %3932 = vmatprep.subr.mxu0 0.0
        %3933 = vmatpush1.msra.mxu0 0.0
        %3934 = vmatprep.subr.mxu0 0.0
        %3935 = vmatpush1.msra.mxu0 0.0
        %3936 = vmatprep.subr.mxu0 0.0
        %3937 = vmatpush1.msra.mxu0 0.0
        %3938 = vmatprep.subr.mxu0 0.0
        %3939 = vmatpush1.msra.mxu0 0.0
        %3940 = vmatprep.mubr.f32.mxu0 0.0
        %3941 = vmatmul.mubr.f32.gmra.mrb[0].mxu0 %v3871
        %v3942 = vpop.f32.mrb[0].mxu0
        %v3943 = vadd.f32 0.0, %v3942
        %v3944 = vpop.f32.mrb[0].mxu0
        %v3945 = vadd.f32 0.0, %v3944
        %3946 = vmatprep.mubr.f32.mxu0 0.0
        %3947 = vmatmul.mubr.f32.gmra.mrb[0].mxu0 %v3874
        %v3948 = vpop.f32.mrb[0].mxu0
        %v3949 = vadd.f32 0.0, %v3948
        %v3950 = vpop.f32.mrb[0].mxu0
        %v3951 = vadd.f32 0.0, %v3950
        %3952 = vdwg.mxu0
        %v3953 = vadd.f32 %v3849, %v3943
        %v3954 = vadd.f32 %v3851, %v3945
        %v3955 = vadd.f32 %v3855, %v3949
        %v3956 = vadd.f32 %v3857, %v3951
        %3957 = vrot.lane.b32.xlu0 %v3669, 1
        %v3958 = vpop.permute.xlu0 %3957
        %3959 = vrot.lane.b32.xlu0 %v3670, 1
        %v3960 = vpop.permute.xlu0 %3959
        %v3961 = vsel %vm546, %v3958, %v3960
        %v3962 = vsel %vm546, %v3960, %v3958
        %v3963 = vmul.f32 %v3962, %v555
        %v3964 = vmul.f32 %v3961, %v559
        %s3965 = scalar_lea.vmem %s3, 624
        %v3966 = vld [vmem:[%s3965] sm:$0xff]
        %v3967 = vld [vmem:[%s3965 + $0x8] sm:$0xff]
        %v3969 = vsel %vm293, %v3966, 0
        %v3972 = vsel %vm293, %v3967, 0
        %3974 = vmatprep.subr.mxu0 %v3964
        %3975 = vmatpush1.msra.mxu0 %v3963
        %3976 = vmatprep.subr.mxu0 0.0
        %3977 = vmatpush1.msra.mxu0 0.0
        %3978 = vmatprep.subr.mxu0 0.0
        %3979 = vmatpush1.msra.mxu0 0.0
        %3980 = vmatprep.subr.mxu0 0.0
        %3981 = vmatpush1.msra.mxu0 0.0
        %3982 = vmatprep.subr.mxu0 0.0
        %3983 = vmatpush1.msra.mxu0 0.0
        %3984 = vmatprep.subr.mxu0 0.0
        %3985 = vmatpush1.msra.mxu0 0.0
        %3986 = vmatprep.subr.mxu0 0.0
        %3987 = vmatpush1.msra.mxu0 0.0
        %3988 = vmatprep.subr.mxu0 0.0
        %3989 = vmatpush1.msra.mxu0 0.0
        %3990 = vmatprep.subr.mxu0 0.0
        %3991 = vmatpush1.msra.mxu0 0.0
        %3992 = vmatprep.subr.mxu0 0.0
        %3993 = vmatpush1.msra.mxu0 0.0
        %3994 = vmatprep.subr.mxu0 0.0
        %3995 = vmatpush1.msra.mxu0 0.0
        %3996 = vmatprep.subr.mxu0 0.0
        %3997 = vmatpush1.msra.mxu0 0.0
        %3998 = vmatprep.subr.mxu0 0.0
        %3999 = vmatpush1.msra.mxu0 0.0
        %4000 = vmatprep.subr.mxu0 0.0
        %4001 = vmatpush1.msra.mxu0 0.0
        %4002 = vmatprep.subr.mxu0 0.0
        %4003 = vmatpush1.msra.mxu0 0.0
        %4004 = vmatprep.subr.mxu0 0.0
        %4005 = vmatpush1.msra.mxu0 0.0
        %4006 = vmatprep.subr.mxu0 0.0
        %4007 = vmatpush1.msra.mxu0 0.0
        %4008 = vmatprep.subr.mxu0 0.0
        %4009 = vmatpush1.msra.mxu0 0.0
        %4010 = vmatprep.subr.mxu0 0.0
        %4011 = vmatpush1.msra.mxu0 0.0
        %4012 = vmatprep.subr.mxu0 0.0
        %4013 = vmatpush1.msra.mxu0 0.0
        %4014 = vmatprep.subr.mxu0 0.0
        %4015 = vmatpush1.msra.mxu0 0.0
        %4016 = vmatprep.subr.mxu0 0.0
        %4017 = vmatpush1.msra.mxu0 0.0
        %4018 = vmatprep.subr.mxu0 0.0
        %4019 = vmatpush1.msra.mxu0 0.0
        %4020 = vmatprep.subr.mxu0 0.0
        %4021 = vmatpush1.msra.mxu0 0.0
        %4022 = vmatprep.subr.mxu0 0.0
        %4023 = vmatpush1.msra.mxu0 0.0
        %4024 = vmatprep.subr.mxu0 0.0
        %4025 = vmatpush1.msra.mxu0 0.0
        %4026 = vmatprep.subr.mxu0 0.0
        %4027 = vmatpush1.msra.mxu0 0.0
        %4028 = vmatprep.subr.mxu0 0.0
        %4029 = vmatpush1.msra.mxu0 0.0
        %4030 = vmatprep.subr.mxu0 0.0
        %4031 = vmatpush1.msra.mxu0 0.0
        %4032 = vmatprep.subr.mxu0 0.0
        %4033 = vmatpush1.msra.mxu0 0.0
        %4034 = vmatprep.subr.mxu0 0.0
        %4035 = vmatpush1.msra.mxu0 0.0
        %4036 = vmatprep.subr.mxu0 0.0
        %4037 = vmatpush1.msra.mxu0 0.0
        %4038 = vmatprep.mubr.f32.mxu0 0.0
        %4039 = vmatmul.mubr.f32.gmra.mrb[0].mxu0 %v3969
        %v4040 = vpop.f32.mrb[0].mxu0
        %v4041 = vadd.f32 0.0, %v4040
        %v4042 = vpop.f32.mrb[0].mxu0
        %v4043 = vadd.f32 0.0, %v4042
        %4044 = vmatprep.mubr.f32.mxu0 0.0
        %4045 = vmatmul.mubr.f32.gmra.mrb[0].mxu0 %v3972
        %v4046 = vpop.f32.mrb[0].mxu0
        %v4047 = vadd.f32 0.0, %v4046
        %v4048 = vpop.f32.mrb[0].mxu0
        %v4049 = vadd.f32 0.0, %v4048
        %4050 = vdwg.mxu0
        %v4051 = vadd.f32 %v3953, %v4041
        %v4052 = vadd.f32 %v3954, %v4043
        %v4053 = vadd.f32 %v3955, %v4047
        %v4054 = vadd.f32 %v3956, %v4049
        %s4055 = scalar_lea.vmem %s3, 640
        %v4056 = vld [vmem:[%s4055] sm:$0xff]
        %v4057 = vld [vmem:[%s4055 + $0x8] sm:$0xff]
        %v4059 = vsel %vm293, %v4056, 0
        %v4062 = vsel %vm293, %v4057, 0
        %4064 = vmatprep.subr.mxu0 %v3670
        %4065 = vmatpush1.msra.mxu0 %v3669
        %4066 = vmatprep.subr.mxu0 0.0
        %4067 = vmatpush1.msra.mxu0 0.0
        %4068 = vmatprep.subr.mxu0 0.0
        %4069 = vmatpush1.msra.mxu0 0.0
        %4070 = vmatprep.subr.mxu0 0.0
        %4071 = vmatpush1.msra.mxu0 0.0
        %4072 = vmatprep.subr.mxu0 0.0
        %4073 = vmatpush1.msra.mxu0 0.0
        %4074 = vmatprep.subr.mxu0 0.0
        %4075 = vmatpush1.msra.mxu0 0.0
        %4076 = vmatprep.subr.mxu0 0.0
        %4077 = vmatpush1.msra.mxu0 0.0
        %4078 = vmatprep.subr.mxu0 0.0
        %4079 = vmatpush1.msra.mxu0 0.0
        %4080 = vmatprep.subr.mxu0 0.0
        %4081 = vmatpush1.msra.mxu0 0.0
        %4082 = vmatprep.subr.mxu0 0.0
        %4083 = vmatpush1.msra.mxu0 0.0
        %4084 = vmatprep.subr.mxu0 0.0
        %4085 = vmatpush1.msra.mxu0 0.0
        %4086 = vmatprep.subr.mxu0 0.0
        %4087 = vmatpush1.msra.mxu0 0.0
        %4088 = vmatprep.subr.mxu0 0.0
        %4089 = vmatpush1.msra.mxu0 0.0
        %4090 = vmatprep.subr.mxu0 0.0
        %4091 = vmatpush1.msra.mxu0 0.0
        %4092 = vmatprep.subr.mxu0 0.0
        %4093 = vmatpush1.msra.mxu0 0.0
        %4094 = vmatprep.subr.mxu0 0.0
        %4095 = vmatpush1.msra.mxu0 0.0
        %4096 = vmatprep.subr.mxu0 0.0
        %4097 = vmatpush1.msra.mxu0 0.0
        %4098 = vmatprep.subr.mxu0 0.0
        %4099 = vmatpush1.msra.mxu0 0.0
        %4100 = vmatprep.subr.mxu0 0.0
        %4101 = vmatpush1.msra.mxu0 0.0
        %4102 = vmatprep.subr.mxu0 0.0
        %4103 = vmatpush1.msra.mxu0 0.0
        %4104 = vmatprep.subr.mxu0 0.0
        %4105 = vmatpush1.msra.mxu0 0.0
        %4106 = vmatprep.subr.mxu0 0.0
        %4107 = vmatpush1.msra.mxu0 0.0
        %4108 = vmatprep.subr.mxu0 0.0
        %4109 = vmatpush1.msra.mxu0 0.0
        %4110 = vmatprep.subr.mxu0 0.0
        %4111 = vmatpush1.msra.mxu0 0.0
        %4112 = vmatprep.subr.mxu0 0.0
        %4113 = vmatpush1.msra.mxu0 0.0
        %4114 = vmatprep.subr.mxu0 0.0
        %4115 = vmatpush1.msra.mxu0 0.0
        %4116 = vmatprep.subr.mxu0 0.0
        %4117 = vmatpush1.msra.mxu0 0.0
        %4118 = vmatprep.subr.mxu0 0.0
        %4119 = vmatpush1.msra.mxu0 0.0
        %4120 = vmatprep.subr.mxu0 0.0
        %4121 = vmatpush1.msra.mxu0 0.0
        %4122 = vmatprep.subr.mxu0 0.0
        %4123 = vmatpush1.msra.mxu0 0.0
        %4124 = vmatprep.subr.mxu0 0.0
        %4125 = vmatpush1.msra.mxu0 0.0
        %4126 = vmatprep.subr.mxu0 0.0
        %4127 = vmatpush1.msra.mxu0 0.0
        %4128 = vmatprep.mubr.f32.mxu0 0.0
        %4129 = vmatmul.mubr.f32.gmra.mrb[0].mxu0 %v4059
        %v4130 = vpop.f32.mrb[0].mxu0
        %v4131 = vadd.f32 0.0, %v4130
        %v4132 = vpop.f32.mrb[0].mxu0
        %v4133 = vadd.f32 0.0, %v4132
        %4134 = vmatprep.mubr.f32.mxu0 0.0
        %4135 = vmatmul.mubr.f32.gmra.mrb[0].mxu0 %v4062
        %v4136 = vpop.f32.mrb[0].mxu0
        %v4137 = vadd.f32 0.0, %v4136
        %v4138 = vpop.f32.mrb[0].mxu0
        %v4139 = vadd.f32 0.0, %v4138
        %4140 = vdwg.mxu0
        %v4141 = vadd.f32 %v4051, %v4131
        %v4142 = vadd.f32 %v4052, %v4133
        %v4143 = vadd.f32 %v4053, %v4137
        %v4144 = vadd.f32 %v4054, %v4139
        %4145 = vrot.lane.b32.xlu0 %v3669, 127
        %v4146 = vpop.permute.xlu0 %4145
        %4147 = vrot.lane.b32.xlu0 %v3670, 127
        %v4148 = vpop.permute.xlu0 %4147
        %v4149 = vsel %vm724, %v4146, %v4148
        %v4150 = vsel %vm724, %v4148, %v4146
        %v4151 = vmul.f32 %v4149, %v733
        %v4152 = vmul.f32 %v4150, %v737
        %s4153 = scalar_lea.vmem %s3, 656
        %v4154 = vld [vmem:[%s4153] sm:$0xff]
        %v4155 = vld [vmem:[%s4153 + $0x8] sm:$0xff]
        %v4157 = vsel %vm293, %v4154, 0
        %v4160 = vsel %vm293, %v4155, 0
        %4162 = vmatprep.subr.mxu0 %v4152
        %4163 = vmatpush1.msra.mxu0 %v4151
        %4164 = vmatprep.subr.mxu0 0.0
        %4165 = vmatpush1.msra.mxu0 0.0
        %4166 = vmatprep.subr.mxu0 0.0
        %4167 = vmatpush1.msra.mxu0 0.0
        %4168 = vmatprep.subr.mxu0 0.0
        %4169 = vmatpush1.msra.mxu0 0.0
        %4170 = vmatprep.subr.mxu0 0.0
        %4171 = vmatpush1.msra.mxu0 0.0
        %4172 = vmatprep.subr.mxu0 0.0
        %4173 = vmatpush1.msra.mxu0 0.0
        %4174 = vmatprep.subr.mxu0 0.0
        %4175 = vmatpush1.msra.mxu0 0.0
        %4176 = vmatprep.subr.mxu0 0.0
        %4177 = vmatpush1.msra.mxu0 0.0
        %4178 = vmatprep.subr.mxu0 0.0
        %4179 = vmatpush1.msra.mxu0 0.0
        %4180 = vmatprep.subr.mxu0 0.0
        %4181 = vmatpush1.msra.mxu0 0.0
        %4182 = vmatprep.subr.mxu0 0.0
        %4183 = vmatpush1.msra.mxu0 0.0
        %4184 = vmatprep.subr.mxu0 0.0
        %4185 = vmatpush1.msra.mxu0 0.0
        %4186 = vmatprep.subr.mxu0 0.0
        %4187 = vmatpush1.msra.mxu0 0.0
        %4188 = vmatprep.subr.mxu0 0.0
        %4189 = vmatpush1.msra.mxu0 0.0
        %4190 = vmatprep.subr.mxu0 0.0
        %4191 = vmatpush1.msra.mxu0 0.0
        %4192 = vmatprep.subr.mxu0 0.0
        %4193 = vmatpush1.msra.mxu0 0.0
        %4194 = vmatprep.subr.mxu0 0.0
        %4195 = vmatpush1.msra.mxu0 0.0
        %4196 = vmatprep.subr.mxu0 0.0
        %4197 = vmatpush1.msra.mxu0 0.0
        %4198 = vmatprep.subr.mxu0 0.0
        %4199 = vmatpush1.msra.mxu0 0.0
        %4200 = vmatprep.subr.mxu0 0.0
        %4201 = vmatpush1.msra.mxu0 0.0
        %4202 = vmatprep.subr.mxu0 0.0
        %4203 = vmatpush1.msra.mxu0 0.0
        %4204 = vmatprep.subr.mxu0 0.0
        %4205 = vmatpush1.msra.mxu0 0.0
        %4206 = vmatprep.subr.mxu0 0.0
        %4207 = vmatpush1.msra.mxu0 0.0
        %4208 = vmatprep.subr.mxu0 0.0
        %4209 = vmatpush1.msra.mxu0 0.0
        %4210 = vmatprep.subr.mxu0 0.0
        %4211 = vmatpush1.msra.mxu0 0.0
        %4212 = vmatprep.subr.mxu0 0.0
        %4213 = vmatpush1.msra.mxu0 0.0
        %4214 = vmatprep.subr.mxu0 0.0
        %4215 = vmatpush1.msra.mxu0 0.0
        %4216 = vmatprep.subr.mxu0 0.0
        %4217 = vmatpush1.msra.mxu0 0.0
        %4218 = vmatprep.subr.mxu0 0.0
        %4219 = vmatpush1.msra.mxu0 0.0
        %4220 = vmatprep.subr.mxu0 0.0
        %4221 = vmatpush1.msra.mxu0 0.0
        %4222 = vmatprep.subr.mxu0 0.0
        %4223 = vmatpush1.msra.mxu0 0.0
        %4224 = vmatprep.subr.mxu0 0.0
        %4225 = vmatpush1.msra.mxu0 0.0
        %4226 = vmatprep.mubr.f32.mxu0 0.0
        %4227 = vmatmul.mubr.f32.gmra.mrb[0].mxu0 %v4157
        %v4228 = vpop.f32.mrb[0].mxu0
        %v4229 = vadd.f32 0.0, %v4228
        %v4230 = vpop.f32.mrb[0].mxu0
        %v4231 = vadd.f32 0.0, %v4230
        %4232 = vmatprep.mubr.f32.mxu0 0.0
        %4233 = vmatmul.mubr.f32.gmra.mrb[0].mxu0 %v4160
        %v4234 = vpop.f32.mrb[0].mxu0
        %v4235 = vadd.f32 0.0, %v4234
        %v4236 = vpop.f32.mrb[0].mxu0
        %v4237 = vadd.f32 0.0, %v4236
        %4238 = vdwg.mxu0
        %v4239 = vadd.f32 %v4141, %v4229
        %v4240 = vadd.f32 %v4142, %v4231
        %v4241 = vadd.f32 %v4143, %v4235
        %v4242 = vadd.f32 %v4144, %v4237
        %4243 = vrot.lane.b32.xlu0 %v3669, 113
        %v4244 = vpop.permute.xlu0 %4243
        %4245 = vrot.lane.b32.xlu0 %v3670, 113
        %v4246 = vpop.permute.xlu0 %4245
        %v4247 = vsel %vm824, %v4244, %v4246
        %v4248 = vsel %vm824, %v4246, %v4244
        %v4249 = vmul.f32 %v4247, %v833
        %v4250 = vmul.f32 %v4248, %v837
        %s4251 = scalar_lea.vmem %s3, 672
        %v4252 = vld [vmem:[%s4251] sm:$0xff]
        %v4253 = vld [vmem:[%s4251 + $0x8] sm:$0xff]
        %v4255 = vsel %vm293, %v4252, 0
        %v4258 = vsel %vm293, %v4253, 0
        %4260 = vmatprep.subr.mxu0 %v4250
        %4261 = vmatpush1.msra.mxu0 %v4249
        %4262 = vmatprep.subr.mxu0 0.0
        %4263 = vmatpush1.msra.mxu0 0.0
        %4264 = vmatprep.subr.mxu0 0.0
        %4265 = vmatpush1.msra.mxu0 0.0
        %4266 = vmatprep.subr.mxu0 0.0
        %4267 = vmatpush1.msra.mxu0 0.0
        %4268 = vmatprep.subr.mxu0 0.0
        %4269 = vmatpush1.msra.mxu0 0.0
        %4270 = vmatprep.subr.mxu0 0.0
        %4271 = vmatpush1.msra.mxu0 0.0
        %4272 = vmatprep.subr.mxu0 0.0
        %4273 = vmatpush1.msra.mxu0 0.0
        %4274 = vmatprep.subr.mxu0 0.0
        %4275 = vmatpush1.msra.mxu0 0.0
        %4276 = vmatprep.subr.mxu0 0.0
        %4277 = vmatpush1.msra.mxu0 0.0
        %4278 = vmatprep.subr.mxu0 0.0
        %4279 = vmatpush1.msra.mxu0 0.0
        %4280 = vmatprep.subr.mxu0 0.0
        %4281 = vmatpush1.msra.mxu0 0.0
        %4282 = vmatprep.subr.mxu0 0.0
        %4283 = vmatpush1.msra.mxu0 0.0
        %4284 = vmatprep.subr.mxu0 0.0
        %4285 = vmatpush1.msra.mxu0 0.0
        %4286 = vmatprep.subr.mxu0 0.0
        %4287 = vmatpush1.msra.mxu0 0.0
        %4288 = vmatprep.subr.mxu0 0.0
        %4289 = vmatpush1.msra.mxu0 0.0
        %4290 = vmatprep.subr.mxu0 0.0
        %4291 = vmatpush1.msra.mxu0 0.0
        %4292 = vmatprep.subr.mxu0 0.0
        %4293 = vmatpush1.msra.mxu0 0.0
        %4294 = vmatprep.subr.mxu0 0.0
        %4295 = vmatpush1.msra.mxu0 0.0
        %4296 = vmatprep.subr.mxu0 0.0
        %4297 = vmatpush1.msra.mxu0 0.0
        %4298 = vmatprep.subr.mxu0 0.0
        %4299 = vmatpush1.msra.mxu0 0.0
        %4300 = vmatprep.subr.mxu0 0.0
        %4301 = vmatpush1.msra.mxu0 0.0
        %4302 = vmatprep.subr.mxu0 0.0
        %4303 = vmatpush1.msra.mxu0 0.0
        %4304 = vmatprep.subr.mxu0 0.0
        %4305 = vmatpush1.msra.mxu0 0.0
        %4306 = vmatprep.subr.mxu0 0.0
        %4307 = vmatpush1.msra.mxu0 0.0
        %4308 = vmatprep.subr.mxu0 0.0
        %4309 = vmatpush1.msra.mxu0 0.0
        %4310 = vmatprep.subr.mxu0 0.0
        %4311 = vmatpush1.msra.mxu0 0.0
        %4312 = vmatprep.subr.mxu0 0.0
        %4313 = vmatpush1.msra.mxu0 0.0
        %4314 = vmatprep.subr.mxu0 0.0
        %4315 = vmatpush1.msra.mxu0 0.0
        %4316 = vmatprep.subr.mxu0 0.0
        %4317 = vmatpush1.msra.mxu0 0.0
        %4318 = vmatprep.subr.mxu0 0.0
        %4319 = vmatpush1.msra.mxu0 0.0
        %4320 = vmatprep.subr.mxu0 0.0
        %4321 = vmatpush1.msra.mxu0 0.0
        %4322 = vmatprep.subr.mxu0 0.0
        %4323 = vmatpush1.msra.mxu0 0.0
        %4324 = vmatprep.mubr.f32.mxu0 0.0
        %4325 = vmatmul.mubr.f32.gmra.mrb[0].mxu0 %v4255
        %v4326 = vpop.f32.mrb[0].mxu0
        %v4327 = vadd.f32 0.0, %v4326
        %v4328 = vpop.f32.mrb[0].mxu0
        %v4329 = vadd.f32 0.0, %v4328
        %4330 = vmatprep.mubr.f32.mxu0 0.0
        %4331 = vmatmul.mubr.f32.gmra.mrb[0].mxu0 %v4258
        %v4332 = vpop.f32.mrb[0].mxu0
        %v4333 = vadd.f32 0.0, %v4332
        %v4334 = vpop.f32.mrb[0].mxu0
        %v4335 = vadd.f32 0.0, %v4334
        %4336 = vdwg.mxu0
        %v4337 = vadd.f32 %v4239, %v4327
        %v4338 = vadd.f32 %v4240, %v4329
        %v4339 = vadd.f32 %v4241, %v4333
        %v4340 = vadd.f32 %v4242, %v4335
        %4341 = vrot.lane.b32.xlu0 %v3669, 112
        %v4342 = vpop.permute.xlu0 %4341
        %4343 = vrot.lane.b32.xlu0 %v3670, 112
        %v4344 = vpop.permute.xlu0 %4343
        %v4345 = vsel %vm924, %v4342, %v4344
        %v4346 = vsel %vm924, %v4344, %v4342
        %v4347 = vmul.f32 %v4345, %v933
        %v4348 = vmul.f32 %v4346, %v937
        %s4349 = scalar_lea.vmem %s3, 688
        %v4350 = vld [vmem:[%s4349] sm:$0xff]
        %v4351 = vld [vmem:[%s4349 + $0x8] sm:$0xff]
        %v4353 = vsel %vm293, %v4350, 0
        %v4356 = vsel %vm293, %v4351, 0
        %4358 = vmatprep.subr.mxu0 %v4348
        %4359 = vmatpush1.msra.mxu0 %v4347
        %4360 = vmatprep.subr.mxu0 0.0
        %4361 = vmatpush1.msra.mxu0 0.0
        %4362 = vmatprep.subr.mxu0 0.0
        %4363 = vmatpush1.msra.mxu0 0.0
        %4364 = vmatprep.subr.mxu0 0.0
        %4365 = vmatpush1.msra.mxu0 0.0
        %4366 = vmatprep.subr.mxu0 0.0
        %4367 = vmatpush1.msra.mxu0 0.0
        %4368 = vmatprep.subr.mxu0 0.0
        %4369 = vmatpush1.msra.mxu0 0.0
        %4370 = vmatprep.subr.mxu0 0.0
        %4371 = vmatpush1.msra.mxu0 0.0
        %4372 = vmatprep.subr.mxu0 0.0
        %4373 = vmatpush1.msra.mxu0 0.0
        %4374 = vmatprep.subr.mxu0 0.0
        %4375 = vmatpush1.msra.mxu0 0.0
        %4376 = vmatprep.subr.mxu0 0.0
        %4377 = vmatpush1.msra.mxu0 0.0
        %4378 = vmatprep.subr.mxu0 0.0
        %4379 = vmatpush1.msra.mxu0 0.0
        %4380 = vmatprep.subr.mxu0 0.0
        %4381 = vmatpush1.msra.mxu0 0.0
        %4382 = vmatprep.subr.mxu0 0.0
        %4383 = vmatpush1.msra.mxu0 0.0
        %4384 = vmatprep.subr.mxu0 0.0
        %4385 = vmatpush1.msra.mxu0 0.0
        %4386 = vmatprep.subr.mxu0 0.0
        %4387 = vmatpush1.msra.mxu0 0.0
        %4388 = vmatprep.subr.mxu0 0.0
        %4389 = vmatpush1.msra.mxu0 0.0
        %4390 = vmatprep.subr.mxu0 0.0
        %4391 = vmatpush1.msra.mxu0 0.0
        %4392 = vmatprep.subr.mxu0 0.0
        %4393 = vmatpush1.msra.mxu0 0.0
        %4394 = vmatprep.subr.mxu0 0.0
        %4395 = vmatpush1.msra.mxu0 0.0
        %4396 = vmatprep.subr.mxu0 0.0
        %4397 = vmatpush1.msra.mxu0 0.0
        %4398 = vmatprep.subr.mxu0 0.0
        %4399 = vmatpush1.msra.mxu0 0.0
        %4400 = vmatprep.subr.mxu0 0.0
        %4401 = vmatpush1.msra.mxu0 0.0
        %4402 = vmatprep.subr.mxu0 0.0
        %4403 = vmatpush1.msra.mxu0 0.0
        %4404 = vmatprep.subr.mxu0 0.0
        %4405 = vmatpush1.msra.mxu0 0.0
        %4406 = vmatprep.subr.mxu0 0.0
        %4407 = vmatpush1.msra.mxu0 0.0
        %4408 = vmatprep.subr.mxu0 0.0
        %4409 = vmatpush1.msra.mxu0 0.0
        %4410 = vmatprep.subr.mxu0 0.0
        %4411 = vmatpush1.msra.mxu0 0.0
        %4412 = vmatprep.subr.mxu0 0.0
        %4413 = vmatpush1.msra.mxu0 0.0
        %4414 = vmatprep.subr.mxu0 0.0
        %4415 = vmatpush1.msra.mxu0 0.0
        %4416 = vmatprep.subr.mxu0 0.0
        %4417 = vmatpush1.msra.mxu0 0.0
        %4418 = vmatprep.subr.mxu0 0.0
        %4419 = vmatpush1.msra.mxu0 0.0
        %4420 = vmatprep.subr.mxu0 0.0
        %4421 = vmatpush1.msra.mxu0 0.0
        %4422 = vmatprep.mubr.f32.mxu0 0.0
        %4423 = vmatmul.mubr.f32.gmra.mrb[0].mxu0 %v4353
        %v4424 = vpop.f32.mrb[0].mxu0
        %v4425 = vadd.f32 0.0, %v4424
        %v4426 = vpop.f32.mrb[0].mxu0
        %v4427 = vadd.f32 0.0, %v4426
        %4428 = vmatprep.mubr.f32.mxu0 0.0
        %4429 = vmatmul.mubr.f32.gmra.mrb[0].mxu0 %v4356
        %v4430 = vpop.f32.mrb[0].mxu0
        %v4431 = vadd.f32 0.0, %v4430
        %v4432 = vpop.f32.mrb[0].mxu0
        %v4433 = vadd.f32 0.0, %v4432
        %4434 = vdwg.mxu0
        %v4435 = vadd.f32 %v4337, %v4425
        %v4436 = vadd.f32 %v4338, %v4427
        %v4437 = vadd.f32 %v4339, %v4431
        %v4438 = vadd.f32 %v4340, %v4433
        %4439 = vrot.lane.b32.xlu0 %v3669, 111
        %v4440 = vpop.permute.xlu0 %4439
        %4441 = vrot.lane.b32.xlu0 %v3670, 111
        %v4442 = vpop.permute.xlu0 %4441
        %v4443 = vsel %vm1024, %v4440, %v4442
        %v4444 = vsel %vm1024, %v4442, %v4440
        %v4445 = vmul.f32 %v4443, %v1033
        %v4446 = vmul.f32 %v4444, %v1037
        %s4447 = scalar_lea.vmem %s3, 704
        %v4448 = vld [vmem:[%s4447] sm:$0xff]
        %v4449 = vld [vmem:[%s4447 + $0x8] sm:$0xff]
        %v4451 = vsel %vm293, %v4448, 0
        %v4454 = vsel %vm293, %v4449, 0
        %4456 = vmatprep.subr.mxu0 %v4446
        %4457 = vmatpush1.msra.mxu0 %v4445
        %4458 = vmatprep.subr.mxu0 0.0
        %4459 = vmatpush1.msra.mxu0 0.0
        %4460 = vmatprep.subr.mxu0 0.0
        %4461 = vmatpush1.msra.mxu0 0.0
        %4462 = vmatprep.subr.mxu0 0.0
        %4463 = vmatpush1.msra.mxu0 0.0
        %4464 = vmatprep.subr.mxu0 0.0
        %4465 = vmatpush1.msra.mxu0 0.0
        %4466 = vmatprep.subr.mxu0 0.0
        %4467 = vmatpush1.msra.mxu0 0.0
        %4468 = vmatprep.subr.mxu0 0.0
        %4469 = vmatpush1.msra.mxu0 0.0
        %4470 = vmatprep.subr.mxu0 0.0
        %4471 = vmatpush1.msra.mxu0 0.0
        %4472 = vmatprep.subr.mxu0 0.0
        %4473 = vmatpush1.msra.mxu0 0.0
        %4474 = vmatprep.subr.mxu0 0.0
        %4475 = vmatpush1.msra.mxu0 0.0
        %4476 = vmatprep.subr.mxu0 0.0
        %4477 = vmatpush1.msra.mxu0 0.0
        %4478 = vmatprep.subr.mxu0 0.0
        %4479 = vmatpush1.msra.mxu0 0.0
        %4480 = vmatprep.subr.mxu0 0.0
        %4481 = vmatpush1.msra.mxu0 0.0
        %4482 = vmatprep.subr.mxu0 0.0
        %4483 = vmatpush1.msra.mxu0 0.0
        %4484 = vmatprep.subr.mxu0 0.0
        %4485 = vmatpush1.msra.mxu0 0.0
        %4486 = vmatprep.subr.mxu0 0.0
        %4487 = vmatpush1.msra.mxu0 0.0
        %4488 = vmatprep.subr.mxu0 0.0
        %4489 = vmatpush1.msra.mxu0 0.0
        %4490 = vmatprep.subr.mxu0 0.0
        %4491 = vmatpush1.msra.mxu0 0.0
        %4492 = vmatprep.subr.mxu0 0.0
        %4493 = vmatpush1.msra.mxu0 0.0
        %4494 = vmatprep.subr.mxu0 0.0
        %4495 = vmatpush1.msra.mxu0 0.0
        %4496 = vmatprep.subr.mxu0 0.0
        %4497 = vmatpush1.msra.mxu0 0.0
        %4498 = vmatprep.subr.mxu0 0.0
        %4499 = vmatpush1.msra.mxu0 0.0
        %4500 = vmatprep.subr.mxu0 0.0
        %4501 = vmatpush1.msra.mxu0 0.0
        %4502 = vmatprep.subr.mxu0 0.0
        %4503 = vmatpush1.msra.mxu0 0.0
        %4504 = vmatprep.subr.mxu0 0.0
        %4505 = vmatpush1.msra.mxu0 0.0
        %4506 = vmatprep.subr.mxu0 0.0
        %4507 = vmatpush1.msra.mxu0 0.0
        %4508 = vmatprep.subr.mxu0 0.0
        %4509 = vmatpush1.msra.mxu0 0.0
        %4510 = vmatprep.subr.mxu0 0.0
        %4511 = vmatpush1.msra.mxu0 0.0
        %4512 = vmatprep.subr.mxu0 0.0
        %4513 = vmatpush1.msra.mxu0 0.0
        %4514 = vmatprep.subr.mxu0 0.0
        %4515 = vmatpush1.msra.mxu0 0.0
        %4516 = vmatprep.subr.mxu0 0.0
        %4517 = vmatpush1.msra.mxu0 0.0
        %4518 = vmatprep.subr.mxu0 0.0
        %4519 = vmatpush1.msra.mxu0 0.0
        %4520 = vmatprep.mubr.f32.mxu0 0.0
        %4521 = vmatmul.mubr.f32.gmra.mrb[0].mxu0 %v4451
        %v4522 = vpop.f32.mrb[0].mxu0
        %v4523 = vadd.f32 0.0, %v4522
        %v4524 = vpop.f32.mrb[0].mxu0
        %v4525 = vadd.f32 0.0, %v4524
        %4526 = vmatprep.mubr.f32.mxu0 0.0
        %4527 = vmatmul.mubr.f32.gmra.mrb[0].mxu0 %v4454
        %v4528 = vpop.f32.mrb[0].mxu0
        %v4529 = vadd.f32 0.0, %v4528
        %v4530 = vpop.f32.mrb[0].mxu0
        %v4531 = vadd.f32 0.0, %v4530
        %4532 = vdwg.mxu0
        %v4533 = vadd.f32 %v4435, %v4523
        %v4534 = vadd.f32 %v4436, %v4525
        %v4535 = vadd.f32 %v4437, %v4529
        %v4536 = vadd.f32 %v4438, %v4531
        %v4537 = vld [vmem:[%s4] sm:$0xff]
        %v4538 = vld [vmem:[%s4 + $0x8] sm:$0xff]
        %v4539 = vadd.f32 %v4533, %v4534
        %v4540 = vadd.f32 %v4539, %v4535
        %v4541 = vadd.f32 %v4540, %v4536
        %4542 = vadd.xlane.f32.xlu0 %v4541
        %v4543 = vpop.xlane.xlu0 %4542
        %v4544 = vrot.slane %v4543, 4
        %v4545 = vadd.f32 %v4543, %v4544
        %v4546 = vrot.slane %v4545, 2
        %v4547 = vadd.f32 %v4545, %v4546
        %v4548 = vrot.slane %v4547, 1
        %v4549 = vadd.f32 %v4547, %v4548
        %s4550 = vtos %v4549
        %v4551 = vstv %s4550
        %v4552 = vmul.f32 %v4533, %v4533
        %v4553 = vmul.f32 %v4534, %v4534
        %v4554 = vmul.f32 %v4535, %v4535
        %v4555 = vmul.f32 %v4536, %v4536
        %v4556 = vadd.f32 %v4552, %v4553
        %v4557 = vadd.f32 %v4556, %v4554
        %v4558 = vadd.f32 %v4557, %v4555
        %4559 = vadd.xlane.f32.xlu0 %v4558
        %v4560 = vpop.xlane.xlu0 %4559
        %v4561 = vrot.slane %v4560, 4
        %v4562 = vadd.f32 %v4560, %v4561
        %v4563 = vrot.slane %v4562, 2
        %v4564 = vadd.f32 %v4562, %v4563
        %v4565 = vrot.slane %v4564, 1
        %v4566 = vadd.f32 %v4564, %v4565
        %s4567 = vtos %v4566
        %v4568 = vstv %s4567
        %v4569 = vmul.f32 %v4551, 0.00024414063
        %v4570 = vmul.f32 %v4568, 0.00024414063
        %v4571 = vmul.f32 %v4569, %v4569
        %v4572 = vsub.f32 %v4570, %v4571
        %v4573 = vmax.f32 %v4572, 0.0
        %v4574 = vadd.f32 %v4573, 1e-05
        %v4575 = vrsqrt.pop %v4574
        %v4576 = vmul.f32 %v4537, %v4575
        %v4577 = vmul.f32 %v4538, %v4575
        %v4578 = vmul.f32 %v4569, %v4576
        %v4579 = vmul.f32 %v4569, %v4577
        %4582 = vrot.lane.b32.xlu0 %v4578, 1
        %v4583 = vpop.permute.xlu0 %4582
        %4584 = vrot.lane.b32.xlu0 %v4579, 1
        %v4585 = vpop.permute.xlu0 %4584
        %v4588 = vsub.f32 %v4537, %v4583
        %v4589 = vsub.f32 %v4538, %v4585
        %4591 = vset.pattern.permute.xlu0 8
        %4592 = vperm.xlu0 %4591, %v4576
        %v4593 = vpop.permute.xlu0 %4592
        %4596 = vset.pattern.permute.xlu0 8
        %4597 = vperm.xlu0 %4596, %v4577
        %v4598 = vpop.permute.xlu0 %4597
        %v4600 = vmul.f32 %v4533, %v4593
        %v4601 = vmul.f32 %v4534, %v4593
        %v4602 = vmul.f32 %v4535, %v4598
        %v4603 = vmul.f32 %v4536, %v4598
        %4605 = vset.pattern.permute.xlu0 9
        %4606 = vperm.xlu0 %4605, %v4588
        %v4607 = vpop.permute.xlu0 %4606
        %4610 = vset.pattern.permute.xlu0 9
        %4611 = vperm.xlu0 %4610, %v4589
        %v4612 = vpop.permute.xlu0 %4611
        %v4614 = vadd.f32 %v4600, %v4607
        %v4615 = vadd.f32 %v4601, %v4607
        %v4616 = vadd.f32 %v4602, %v4612
        %v4617 = vadd.f32 %v4603, %v4612
        %v4618 = vmul.f32 %v4614, %v4614
        %v4619 = vmul.f32 %v4615, %v4615
        %v4620 = vmul.f32 %v4616, %v4616
        %v4621 = vmul.f32 %v4617, %v4617
        %v4622 = vmul.f32 %v4614, %v4618
        %v4623 = vmul.f32 %v4615, %v4619
        %v4624 = vmul.f32 %v4616, %v4620
        %v4625 = vmul.f32 %v4617, %v4621
        %v4626 = vmul.f32 %v4622, 0.044715
        %v4627 = vmul.f32 %v4623, 0.044715
        %v4628 = vmul.f32 %v4624, 0.044715
        %v4629 = vmul.f32 %v4625, 0.044715
        %v4630 = vadd.f32 %v4614, %v4626
        %v4631 = vadd.f32 %v4615, %v4627
        %v4632 = vadd.f32 %v4616, %v4628
        %v4633 = vadd.f32 %v4617, %v4629
        %v4634 = vmul.f32 %v4630, 0.7978846
        %v4635 = vmul.f32 %v4631, 0.7978846
        %v4636 = vmul.f32 %v4632, 0.7978846
        %v4637 = vmul.f32 %v4633, 0.7978846
        %v4638 = vtanh.pop %v4634
        %v4639 = vtanh.pop %v4635
        %v4640 = vtanh.pop %v4636
        %v4641 = vtanh.pop %v4637
        %v4642 = vadd.f32 %v4638, 1.0
        %v4643 = vadd.f32 %v4639, 1.0
        %v4644 = vadd.f32 %v4640, 1.0
        %v4645 = vadd.f32 %v4641, 1.0
        %v4646 = vmul.f32 %v4642, 0.5
        %v4647 = vmul.f32 %v4643, 0.5
        %v4648 = vmul.f32 %v4644, 0.5
        %v4649 = vmul.f32 %v4645, 0.5
        %v4650 = vmul.f32 %v4614, %v4646
        %v4651 = vmul.f32 %v4615, %v4647
        %v4652 = vmul.f32 %v4616, %v4648
        %v4653 = vmul.f32 %v4617, %v4649
        %4654 = vrot.lane.b32.xlu0 %v4650, 17
        %v4655 = vpop.permute.xlu0 %4654
        %4656 = vrot.lane.b32.xlu0 %v4652, 17
        %v4657 = vpop.permute.xlu0 %4656
        %4658 = vrot.lane.b32.xlu0 %v4651, 17
        %v4659 = vpop.permute.xlu0 %4658
        %4660 = vrot.lane.b32.xlu0 %v4653, 17
        %v4661 = vpop.permute.xlu0 %4660
        %v4662 = vsel %vm251, %v4655, %v4659
        %v4663 = vsel %vm251, %v4657, %v4661
        %v4664 = vsel %vm251, %v4659, %v4655
        %v4665 = vsel %vm251, %v4661, %v4657
        %v4666 = vmul.f32 %v4664, %v259
        %v4667 = vmul.f32 %v4662, %v263
        %v4668 = vmul.f32 %v4665, %v259
        %v4669 = vmul.f32 %v4663, %v263
        %s4670 = scalar_lea.vmem %s3, 720
        %v4671 = vld [vmem:[%s4670] sm:$0xff]
        %v4672 = vld [vmem:[%s4670 + $0x8] sm:$0xff]
        %4673 = vrot.lane.b32.xlu0 %v4650, 16
        %v4674 = vpop.permute.xlu0 %4673
        %4675 = vrot.lane.b32.xlu0 %v4652, 16
        %v4676 = vpop.permute.xlu0 %4675
        %4677 = vrot.lane.b32.xlu0 %v4651, 16
        %v4678 = vpop.permute.xlu0 %4677
        %4679 = vrot.lane.b32.xlu0 %v4653, 16
        %v4680 = vpop.permute.xlu0 %4679
        %v4681 = vsel %vm273, %v4674, %v4678
        %v4682 = vsel %vm273, %v4676, %v4680
        %v4683 = vsel %vm273, %v4678, %v4674
        %v4684 = vsel %vm273, %v4680, %v4676
        %v4685 = vmul.f32 %v4683, %v282
        %v4686 = vmul.f32 %v4681, %v286
        %v4687 = vmul.f32 %v4684, %v282
        %v4688 = vmul.f32 %v4682, %v286
        %s4689 = scalar_lea.vmem %s3, 736
        %v4690 = vld [vmem:[%s4689] sm:$0xff]
        %v4691 = vld [vmem:[%s4689 + $0x8] sm:$0xff]
        %vm4692 = vcmask 130048
        %v4694 = vsel %vm4692, %v4690, 0
        %v4697 = vsel %vm4692, %v4691, 0
        %4699 = vmatprep.subr.mxu0 %v4686
        %4700 = vmatpush1.msra.mxu0 %v4685
        %4701 = vmatprep.subr.mxu0 %v4688
        %4702 = vmatpush1.msra.mxu0 %v4687
        %4703 = vmatprep.subr.mxu0 0.0
        %4704 = vmatpush1.msra.mxu0 0.0
        %4705 = vmatprep.subr.mxu0 0.0
        %4706 = vmatpush1.msra.mxu0 0.0
        %4707 = vmatprep.subr.mxu0 0.0
        %4708 = vmatpush1.msra.mxu0 0.0
        %4709 = vmatprep.subr.mxu0 0.0
        %4710 = vmatpush1.msra.mxu0 0.0
        %4711 = vmatprep.subr.mxu0 0.0
        %4712 = vmatpush1.msra.mxu0 0.0
        %4713 = vmatprep.subr.mxu0 0.0
        %4714 = vmatpush1.msra.mxu0 0.0
        %4715 = vmatprep.subr.mxu0 0.0
        %4716 = vmatpush1.msra.mxu0 0.0
        %4717 = vmatprep.subr.mxu0 0.0
        %4718 = vmatpush1.msra.mxu0 0.0
        %4719 = vmatprep.subr.mxu0 0.0
        %4720 = vmatpush1.msra.mxu0 0.0
        %4721 = vmatprep.subr.mxu0 0.0
        %4722 = vmatpush1.msra.mxu0 0.0
        %4723 = vmatprep.subr.mxu0 0.0
        %4724 = vmatpush1.msra.mxu0 0.0
        %4725 = vmatprep.subr.mxu0 0.0
        %4726 = vmatpush1.msra.mxu0 0.0
        %4727 = vmatprep.subr.mxu0 0.0
        %4728 = vmatpush1.msra.mxu0 0.0
        %4729 = vmatprep.subr.mxu0 0.0
        %4730 = vmatpush1.msra.mxu0 0.0
        %4731 = vmatprep.subr.mxu0 0.0
        %4732 = vmatpush1.msra.mxu0 0.0
        %4733 = vmatprep.subr.mxu0 0.0
        %4734 = vmatpush1.msra.mxu0 0.0
        %4735 = vmatprep.subr.mxu0 0.0
        %4736 = vmatpush1.msra.mxu0 0.0
        %4737 = vmatprep.subr.mxu0 0.0
        %4738 = vmatpush1.msra.mxu0 0.0
        %4739 = vmatprep.subr.mxu0 0.0
        %4740 = vmatpush1.msra.mxu0 0.0
        %4741 = vmatprep.subr.mxu0 0.0
        %4742 = vmatpush1.msra.mxu0 0.0
        %4743 = vmatprep.subr.mxu0 0.0
        %4744 = vmatpush1.msra.mxu0 0.0
        %4745 = vmatprep.subr.mxu0 0.0
        %4746 = vmatpush1.msra.mxu0 0.0
        %4747 = vmatprep.subr.mxu0 0.0
        %4748 = vmatpush1.msra.mxu0 0.0
        %4749 = vmatprep.subr.mxu0 0.0
        %4750 = vmatpush1.msra.mxu0 0.0
        %4751 = vmatprep.subr.mxu0 0.0
        %4752 = vmatpush1.msra.mxu0 0.0
        %4753 = vmatprep.subr.mxu0 0.0
        %4754 = vmatpush1.msra.mxu0 0.0
        %4755 = vmatprep.subr.mxu0 0.0
        %4756 = vmatpush1.msra.mxu0 0.0
        %4757 = vmatprep.subr.mxu0 0.0
        %4758 = vmatpush1.msra.mxu0 0.0
        %4759 = vmatprep.subr.mxu0 0.0
        %4760 = vmatpush1.msra.mxu0 0.0
        %4761 = vmatprep.subr.mxu0 0.0
        %4762 = vmatpush1.msra.mxu0 0.0
        %4763 = vmatprep.mubr.f32.mxu0 0.0
        %4764 = vmatmul.mubr.f32.gmra.mrb[0].mxu0 %v4694
        %v4765 = vpop.f32.mrb[0].mxu0
        %v4766 = vadd.f32 0.0, %v4765
        %v4767 = vpop.f32.mrb[0].mxu0
        %v4768 = vadd.f32 0.0, %v4767
        %4769 = vmatprep.mubr.f32.mxu0 0.0
        %4770 = vmatmul.mubr.f32.gmra.mrb[0].mxu0 %v4697
        %v4771 = vpop.f32.mrb[0].mxu0
        %v4772 = vadd.f32 0.0, %v4771
        %v4773 = vpop.f32.mrb[0].mxu0
        %v4774 = vadd.f32 0.0, %v4773
        %4775 = vdwg.mxu0
        %v4777 = vsel %vm4692, %v4671, 0
        %v4780 = vsel %vm4692, %v4672, 0
        %4782 = vmatprep.subr.mxu0 %v4667
        %4783 = vmatpush1.msra.mxu0 %v4666
        %4784 = vmatprep.subr.mxu0 %v4669
        %4785 = vmatpush1.msra.mxu0 %v4668
        %4786 = vmatprep.subr.mxu0 0.0
        %4787 = vmatpush1.msra.mxu0 0.0
        %4788 = vmatprep.subr.mxu0 0.0
        %4789 = vmatpush1.msra.mxu0 0.0
        %4790 = vmatprep.subr.mxu0 0.0
        %4791 = vmatpush1.msra.mxu0 0.0
        %4792 = vmatprep.subr.mxu0 0.0
        %4793 = vmatpush1.msra.mxu0 0.0
        %4794 = vmatprep.subr.mxu0 0.0
        %4795 = vmatpush1.msra.mxu0 0.0
        %4796 = vmatprep.subr.mxu0 0.0
        %4797 = vmatpush1.msra.mxu0 0.0
        %4798 = vmatprep.subr.mxu0 0.0
        %4799 = vmatpush1.msra.mxu0 0.0
        %4800 = vmatprep.subr.mxu0 0.0
        %4801 = vmatpush1.msra.mxu0 0.0
        %4802 = vmatprep.subr.mxu0 0.0
        %4803 = vmatpush1.msra.mxu0 0.0
        %4804 = vmatprep.subr.mxu0 0.0
        %4805 = vmatpush1.msra.mxu0 0.0
        %4806 = vmatprep.subr.mxu0 0.0
        %4807 = vmatpush1.msra.mxu0 0.0
        %4808 = vmatprep.subr.mxu0 0.0
        %4809 = vmatpush1.msra.mxu0 0.0
        %4810 = vmatprep.subr.mxu0 0.0
        %4811 = vmatpush1.msra.mxu0 0.0
        %4812 = vmatprep.subr.mxu0 0.0
        %4813 = vmatpush1.msra.mxu0 0.0
        %4814 = vmatprep.subr.mxu0 0.0
        %4815 = vmatpush1.msra.mxu0 0.0
        %4816 = vmatprep.subr.mxu0 0.0
        %4817 = vmatpush1.msra.mxu0 0.0
        %4818 = vmatprep.subr.mxu0 0.0
        %4819 = vmatpush1.msra.mxu0 0.0
        %4820 = vmatprep.subr.mxu0 0.0
        %4821 = vmatpush1.msra.mxu0 0.0
        %4822 = vmatprep.subr.mxu0 0.0
        %4823 = vmatpush1.msra.mxu0 0.0
        %4824 = vmatprep.subr.mxu0 0.0
        %4825 = vmatpush1.msra.mxu0 0.0
        %4826 = vmatprep.subr.mxu0 0.0
        %4827 = vmatpush1.msra.mxu0 0.0
        %4828 = vmatprep.subr.mxu0 0.0
        %4829 = vmatpush1.msra.mxu0 0.0
        %4830 = vmatprep.subr.mxu0 0.0
        %4831 = vmatpush1.msra.mxu0 0.0
        %4832 = vmatprep.subr.mxu0 0.0
        %4833 = vmatpush1.msra.mxu0 0.0
        %4834 = vmatprep.subr.mxu0 0.0
        %4835 = vmatpush1.msra.mxu0 0.0
        %4836 = vmatprep.subr.mxu0 0.0
        %4837 = vmatpush1.msra.mxu0 0.0
        %4838 = vmatprep.subr.mxu0 0.0
        %4839 = vmatpush1.msra.mxu0 0.0
        %4840 = vmatprep.subr.mxu0 0.0
        %4841 = vmatpush1.msra.mxu0 0.0
        %4842 = vmatprep.subr.mxu0 0.0
        %4843 = vmatpush1.msra.mxu0 0.0
        %4844 = vmatprep.subr.mxu0 0.0
        %4845 = vmatpush1.msra.mxu0 0.0
        %4846 = vmatprep.mubr.f32.mxu0 0.0
        %4847 = vmatmul.mubr.f32.gmra.mrb[0].mxu0 %v4777
        %v4848 = vpop.f32.mrb[0].mxu0
        %v4849 = vadd.f32 %v4766, %v4848
        %v4850 = vpop.f32.mrb[0].mxu0
        %v4851 = vadd.f32 %v4768, %v4850
        %4852 = vmatprep.mubr.f32.mxu0 0.0
        %4853 = vmatmul.mubr.f32.gmra.mrb[0].mxu0 %v4780
        %v4854 = vpop.f32.mrb[0].mxu0
        %v4855 = vadd.f32 %v4772, %v4854
        %v4856 = vpop.f32.mrb[0].mxu0
        %v4857 = vadd.f32 %v4774, %v4856
        %4858 = vdwg.mxu0
        %4859 = vrot.lane.b32.xlu0 %v4650, 15
        %v4860 = vpop.permute.xlu0 %4859
        %4861 = vrot.lane.b32.xlu0 %v4652, 15
        %v4862 = vpop.permute.xlu0 %4861
        %4863 = vrot.lane.b32.xlu0 %v4651, 15
        %v4864 = vpop.permute.xlu0 %4863
        %4865 = vrot.lane.b32.xlu0 %v4653, 15
        %v4866 = vpop.permute.xlu0 %4865
        %v4867 = vsel %vm446, %v4860, %v4864
        %v4868 = vsel %vm446, %v4862, %v4866
        %v4869 = vsel %vm446, %v4864, %v4860
        %v4870 = vsel %vm446, %v4866, %v4862
        %v4871 = vmul.f32 %v4869, %v455
        %v4872 = vmul.f32 %v4867, %v459
        %v4873 = vmul.f32 %v4870, %v455
        %v4874 = vmul.f32 %v4868, %v459
        %s4875 = scalar_lea.vmem %s3, 752
        %v4876 = vld [vmem:[%s4875] sm:$0xff]
        %v4877 = vld [vmem:[%s4875 + $0x8] sm:$0xff]
        %v4879 = vsel %vm4692, %v4876, 0
        %v4882 = vsel %vm4692, %v4877, 0
        %4884 = vmatprep.subr.mxu0 %v4872
        %4885 = vmatpush1.msra.mxu0 %v4871
        %4886 = vmatprep.subr.mxu0 %v4874
        %4887 = vmatpush1.msra.mxu0 %v4873
        %4888 = vmatprep.subr.mxu0 0.0
        %4889 = vmatpush1.msra.mxu0 0.0
        %4890 = vmatprep.subr.mxu0 0.0
        %4891 = vmatpush1.msra.mxu0 0.0
        %4892 = vmatprep.subr.mxu0 0.0
        %4893 = vmatpush1.msra.mxu0 0.0
        %4894 = vmatprep.subr.mxu0 0.0
        %4895 = vmatpush1.msra.mxu0 0.0
        %4896 = vmatprep.subr.mxu0 0.0
        %4897 = vmatpush1.msra.mxu0 0.0
        %4898 = vmatprep.subr.mxu0 0.0
        %4899 = vmatpush1.msra.mxu0 0.0
        %4900 = vmatprep.subr.mxu0 0.0
        %4901 = vmatpush1.msra.mxu0 0.0
        %4902 = vmatprep.subr.mxu0 0.0
        %4903 = vmatpush1.msra.mxu0 0.0
        %4904 = vmatprep.subr.mxu0 0.0
        %4905 = vmatpush1.msra.mxu0 0.0
        %4906 = vmatprep.subr.mxu0 0.0
        %4907 = vmatpush1.msra.mxu0 0.0
        %4908 = vmatprep.subr.mxu0 0.0
        %4909 = vmatpush1.msra.mxu0 0.0
        %4910 = vmatprep.subr.mxu0 0.0
        %4911 = vmatpush1.msra.mxu0 0.0
        %4912 = vmatprep.subr.mxu0 0.0
        %4913 = vmatpush1.msra.mxu0 0.0
        %4914 = vmatprep.subr.mxu0 0.0
        %4915 = vmatpush1.msra.mxu0 0.0
        %4916 = vmatprep.subr.mxu0 0.0
        %4917 = vmatpush1.msra.mxu0 0.0
        %4918 = vmatprep.subr.mxu0 0.0
        %4919 = vmatpush1.msra.mxu0 0.0
        %4920 = vmatprep.subr.mxu0 0.0
        %4921 = vmatpush1.msra.mxu0 0.0
        %4922 = vmatprep.subr.mxu0 0.0
        %4923 = vmatpush1.msra.mxu0 0.0
        %4924 = vmatprep.subr.mxu0 0.0
        %4925 = vmatpush1.msra.mxu0 0.0
        %4926 = vmatprep.subr.mxu0 0.0
        %4927 = vmatpush1.msra.mxu0 0.0
        %4928 = vmatprep.subr.mxu0 0.0
        %4929 = vmatpush1.msra.mxu0 0.0
        %4930 = vmatprep.subr.mxu0 0.0
        %4931 = vmatpush1.msra.mxu0 0.0
        %4932 = vmatprep.subr.mxu0 0.0
        %4933 = vmatpush1.msra.mxu0 0.0
        %4934 = vmatprep.subr.mxu0 0.0
        %4935 = vmatpush1.msra.mxu0 0.0
        %4936 = vmatprep.subr.mxu0 0.0
        %4937 = vmatpush1.msra.mxu0 0.0
        %4938 = vmatprep.subr.mxu0 0.0
        %4939 = vmatpush1.msra.mxu0 0.0
        %4940 = vmatprep.subr.mxu0 0.0
        %4941 = vmatpush1.msra.mxu0 0.0
        %4942 = vmatprep.subr.mxu0 0.0
        %4943 = vmatpush1.msra.mxu0 0.0
        %4944 = vmatprep.subr.mxu0 0.0
        %4945 = vmatpush1.msra.mxu0 0.0
        %4946 = vmatprep.subr.mxu0 0.0
        %4947 = vmatpush1.msra.mxu0 0.0
        %4948 = vmatprep.mubr.f32.mxu0 0.0
        %4949 = vmatmul.mubr.f32.gmra.mrb[0].mxu0 %v4879
        %v4950 = vpop.f32.mrb[0].mxu0
        %v4951 = vadd.f32 0.0, %v4950
        %v4952 = vpop.f32.mrb[0].mxu0
        %v4953 = vadd.f32 0.0, %v4952
        %4954 = vmatprep.mubr.f32.mxu0 0.0
        %4955 = vmatmul.mubr.f32.gmra.mrb[0].mxu0 %v4882
        %v4956 = vpop.f32.mrb[0].mxu0
        %v4957 = vadd.f32 0.0, %v4956
        %v4958 = vpop.f32.mrb[0].mxu0
        %v4959 = vadd.f32 0.0, %v4958
        %4960 = vdwg.mxu0
        %v4961 = vadd.f32 %v4849, %v4951
        %v4962 = vadd.f32 %v4851, %v4953
        %v4963 = vadd.f32 %v4855, %v4957
        %v4964 = vadd.f32 %v4857, %v4959
        %4965 = vrot.lane.b32.xlu0 %v4650, 1
        %v4966 = vpop.permute.xlu0 %4965
        %4967 = vrot.lane.b32.xlu0 %v4652, 1
        %v4968 = vpop.permute.xlu0 %4967
        %4969 = vrot.lane.b32.xlu0 %v4651, 1
        %v4970 = vpop.permute.xlu0 %4969
        %4971 = vrot.lane.b32.xlu0 %v4653, 1
        %v4972 = vpop.permute.xlu0 %4971
        %v4973 = vsel %vm546, %v4966, %v4970
        %v4974 = vsel %vm546, %v4968, %v4972
        %v4975 = vsel %vm546, %v4970, %v4966
        %v4976 = vsel %vm546, %v4972, %v4968
        %v4977 = vmul.f32 %v4975, %v555
        %v4978 = vmul.f32 %v4973, %v559
        %v4979 = vmul.f32 %v4976, %v555
        %v4980 = vmul.f32 %v4974, %v559
        %s4981 = scalar_lea.vmem %s3, 768
        %v4982 = vld [vmem:[%s4981] sm:$0xff]
        %v4983 = vld [vmem:[%s4981 + $0x8] sm:$0xff]
        %v4985 = vsel %vm4692, %v4982, 0
        %v4988 = vsel %vm4692, %v4983, 0
        %4990 = vmatprep.subr.mxu0 %v4978
        %4991 = vmatpush1.msra.mxu0 %v4977
        %4992 = vmatprep.subr.mxu0 %v4980
        %4993 = vmatpush1.msra.mxu0 %v4979
        %4994 = vmatprep.subr.mxu0 0.0
        %4995 = vmatpush1.msra.mxu0 0.0
        %4996 = vmatprep.subr.mxu0 0.0
        %4997 = vmatpush1.msra.mxu0 0.0
        %4998 = vmatprep.subr.mxu0 0.0
        %4999 = vmatpush1.msra.mxu0 0.0
        %5000 = vmatprep.subr.mxu0 0.0
        %5001 = vmatpush1.msra.mxu0 0.0
        %5002 = vmatprep.subr.mxu0 0.0
        %5003 = vmatpush1.msra.mxu0 0.0
        %5004 = vmatprep.subr.mxu0 0.0
        %5005 = vmatpush1.msra.mxu0 0.0
        %5006 = vmatprep.subr.mxu0 0.0
        %5007 = vmatpush1.msra.mxu0 0.0
        %5008 = vmatprep.subr.mxu0 0.0
        %5009 = vmatpush1.msra.mxu0 0.0
        %5010 = vmatprep.subr.mxu0 0.0
        %5011 = vmatpush1.msra.mxu0 0.0
        %5012 = vmatprep.subr.mxu0 0.0
        %5013 = vmatpush1.msra.mxu0 0.0
        %5014 = vmatprep.subr.mxu0 0.0
        %5015 = vmatpush1.msra.mxu0 0.0
        %5016 = vmatprep.subr.mxu0 0.0
        %5017 = vmatpush1.msra.mxu0 0.0
        %5018 = vmatprep.subr.mxu0 0.0
        %5019 = vmatpush1.msra.mxu0 0.0
        %5020 = vmatprep.subr.mxu0 0.0
        %5021 = vmatpush1.msra.mxu0 0.0
        %5022 = vmatprep.subr.mxu0 0.0
        %5023 = vmatpush1.msra.mxu0 0.0
        %5024 = vmatprep.subr.mxu0 0.0
        %5025 = vmatpush1.msra.mxu0 0.0
        %5026 = vmatprep.subr.mxu0 0.0
        %5027 = vmatpush1.msra.mxu0 0.0
        %5028 = vmatprep.subr.mxu0 0.0
        %5029 = vmatpush1.msra.mxu0 0.0
        %5030 = vmatprep.subr.mxu0 0.0
        %5031 = vmatpush1.msra.mxu0 0.0
        %5032 = vmatprep.subr.mxu0 0.0
        %5033 = vmatpush1.msra.mxu0 0.0
        %5034 = vmatprep.subr.mxu0 0.0
        %5035 = vmatpush1.msra.mxu0 0.0
        %5036 = vmatprep.subr.mxu0 0.0
        %5037 = vmatpush1.msra.mxu0 0.0
        %5038 = vmatprep.subr.mxu0 0.0
        %5039 = vmatpush1.msra.mxu0 0.0
        %5040 = vmatprep.subr.mxu0 0.0
        %5041 = vmatpush1.msra.mxu0 0.0
        %5042 = vmatprep.subr.mxu0 0.0
        %5043 = vmatpush1.msra.mxu0 0.0
        %5044 = vmatprep.subr.mxu0 0.0
        %5045 = vmatpush1.msra.mxu0 0.0
        %5046 = vmatprep.subr.mxu0 0.0
        %5047 = vmatpush1.msra.mxu0 0.0
        %5048 = vmatprep.subr.mxu0 0.0
        %5049 = vmatpush1.msra.mxu0 0.0
        %5050 = vmatprep.subr.mxu0 0.0
        %5051 = vmatpush1.msra.mxu0 0.0
        %5052 = vmatprep.subr.mxu0 0.0
        %5053 = vmatpush1.msra.mxu0 0.0
        %5054 = vmatprep.mubr.f32.mxu0 0.0
        %5055 = vmatmul.mubr.f32.gmra.mrb[0].mxu0 %v4985
        %v5056 = vpop.f32.mrb[0].mxu0
        %v5057 = vadd.f32 0.0, %v5056
        %v5058 = vpop.f32.mrb[0].mxu0
        %v5059 = vadd.f32 0.0, %v5058
        %5060 = vmatprep.mubr.f32.mxu0 0.0
        %5061 = vmatmul.mubr.f32.gmra.mrb[0].mxu0 %v4988
        %v5062 = vpop.f32.mrb[0].mxu0
        %v5063 = vadd.f32 0.0, %v5062
        %v5064 = vpop.f32.mrb[0].mxu0
        %v5065 = vadd.f32 0.0, %v5064
        %5066 = vdwg.mxu0
        %v5067 = vadd.f32 %v4961, %v5057
        %v5068 = vadd.f32 %v4962, %v5059
        %v5069 = vadd.f32 %v4963, %v5063
        %v5070 = vadd.f32 %v4964, %v5065
        %s5071 = scalar_lea.vmem %s3, 784
        %v5072 = vld [vmem:[%s5071] sm:$0xff]
        %v5073 = vld [vmem:[%s5071 + $0x8] sm:$0xff]
        %v5075 = vsel %vm4692, %v5072, 0
        %v5078 = vsel %vm4692, %v5073, 0
        %5080 = vmatprep.subr.mxu0 %v4651
        %5081 = vmatpush1.msra.mxu0 %v4650
        %5082 = vmatprep.subr.mxu0 %v4653
        %5083 = vmatpush1.msra.mxu0 %v4652
        %5084 = vmatprep.subr.mxu0 0.0
        %5085 = vmatpush1.msra.mxu0 0.0
        %5086 = vmatprep.subr.mxu0 0.0
        %5087 = vmatpush1.msra.mxu0 0.0
        %5088 = vmatprep.subr.mxu0 0.0
        %5089 = vmatpush1.msra.mxu0 0.0
        %5090 = vmatprep.subr.mxu0 0.0
        %5091 = vmatpush1.msra.mxu0 0.0
        %5092 = vmatprep.subr.mxu0 0.0
        %5093 = vmatpush1.msra.mxu0 0.0
        %5094 = vmatprep.subr.mxu0 0.0
        %5095 = vmatpush1.msra.mxu0 0.0
        %5096 = vmatprep.subr.mxu0 0.0
        %5097 = vmatpush1.msra.mxu0 0.0
        %5098 = vmatprep.subr.mxu0 0.0
        %5099 = vmatpush1.msra.mxu0 0.0
        %5100 = vmatprep.subr.mxu0 0.0
        %5101 = vmatpush1.msra.mxu0 0.0
        %5102 = vmatprep.subr.mxu0 0.0
        %5103 = vmatpush1.msra.mxu0 0.0
        %5104 = vmatprep.subr.mxu0 0.0
        %5105 = vmatpush1.msra.mxu0 0.0
        %5106 = vmatprep.subr.mxu0 0.0
        %5107 = vmatpush1.msra.mxu0 0.0
        %5108 = vmatprep.subr.mxu0 0.0
        %5109 = vmatpush1.msra.mxu0 0.0
        %5110 = vmatprep.subr.mxu0 0.0
        %5111 = vmatpush1.msra.mxu0 0.0
        %5112 = vmatprep.subr.mxu0 0.0
        %5113 = vmatpush1.msra.mxu0 0.0
        %5114 = vmatprep.subr.mxu0 0.0
        %5115 = vmatpush1.msra.mxu0 0.0
        %5116 = vmatprep.subr.mxu0 0.0
        %5117 = vmatpush1.msra.mxu0 0.0
        %5118 = vmatprep.subr.mxu0 0.0
        %5119 = vmatpush1.msra.mxu0 0.0
        %5120 = vmatprep.subr.mxu0 0.0
        %5121 = vmatpush1.msra.mxu0 0.0
        %5122 = vmatprep.subr.mxu0 0.0
        %5123 = vmatpush1.msra.mxu0 0.0
        %5124 = vmatprep.subr.mxu0 0.0
        %5125 = vmatpush1.msra.mxu0 0.0
        %5126 = vmatprep.subr.mxu0 0.0
        %5127 = vmatpush1.msra.mxu0 0.0
        %5128 = vmatprep.subr.mxu0 0.0
        %5129 = vmatpush1.msra.mxu0 0.0
        %5130 = vmatprep.subr.mxu0 0.0
        %5131 = vmatpush1.msra.mxu0 0.0
        %5132 = vmatprep.subr.mxu0 0.0
        %5133 = vmatpush1.msra.mxu0 0.0
        %5134 = vmatprep.subr.mxu0 0.0
        %5135 = vmatpush1.msra.mxu0 0.0
        %5136 = vmatprep.subr.mxu0 0.0
        %5137 = vmatpush1.msra.mxu0 0.0
        %5138 = vmatprep.subr.mxu0 0.0
        %5139 = vmatpush1.msra.mxu0 0.0
        %5140 = vmatprep.subr.mxu0 0.0
        %5141 = vmatpush1.msra.mxu0 0.0
        %5142 = vmatprep.subr.mxu0 0.0
        %5143 = vmatpush1.msra.mxu0 0.0
        %5144 = vmatprep.mubr.f32.mxu0 0.0
        %5145 = vmatmul.mubr.f32.gmra.mrb[0].mxu0 %v5075
        %v5146 = vpop.f32.mrb[0].mxu0
        %v5147 = vadd.f32 0.0, %v5146
        %v5148 = vpop.f32.mrb[0].mxu0
        %v5149 = vadd.f32 0.0, %v5148
        %5150 = vmatprep.mubr.f32.mxu0 0.0
        %5151 = vmatmul.mubr.f32.gmra.mrb[0].mxu0 %v5078
        %v5152 = vpop.f32.mrb[0].mxu0
        %v5153 = vadd.f32 0.0, %v5152
        %v5154 = vpop.f32.mrb[0].mxu0
        %v5155 = vadd.f32 0.0, %v5154
        %5156 = vdwg.mxu0
        %v5157 = vadd.f32 %v5067, %v5147
        %v5158 = vadd.f32 %v5068, %v5149
        %v5159 = vadd.f32 %v5069, %v5153
        %v5160 = vadd.f32 %v5070, %v5155
        %5161 = vrot.lane.b32.xlu0 %v4650, 127
        %v5162 = vpop.permute.xlu0 %5161
        %5163 = vrot.lane.b32.xlu0 %v4652, 127
        %v5164 = vpop.permute.xlu0 %5163
        %5165 = vrot.lane.b32.xlu0 %v4651, 127
        %v5166 = vpop.permute.xlu0 %5165
        %5167 = vrot.lane.b32.xlu0 %v4653, 127
        %v5168 = vpop.permute.xlu0 %5167
        %v5169 = vsel %vm724, %v5162, %v5166
        %v5170 = vsel %vm724, %v5164, %v5168
        %v5171 = vsel %vm724, %v5166, %v5162
        %v5172 = vsel %vm724, %v5168, %v5164
        %v5173 = vmul.f32 %v5169, %v733
        %v5174 = vmul.f32 %v5171, %v737
        %v5175 = vmul.f32 %v5170, %v733
        %v5176 = vmul.f32 %v5172, %v737
        %s5177 = scalar_lea.vmem %s3, 800
        %v5178 = vld [vmem:[%s5177] sm:$0xff]
        %v5179 = vld [vmem:[%s5177 + $0x8] sm:$0xff]
        %v5181 = vsel %vm4692, %v5178, 0
        %v5184 = vsel %vm4692, %v5179, 0
        %5186 = vmatprep.subr.mxu0 %v5174
        %5187 = vmatpush1.msra.mxu0 %v5173
        %5188 = vmatprep.subr.mxu0 %v5176
        %5189 = vmatpush1.msra.mxu0 %v5175
        %5190 = vmatprep.subr.mxu0 0.0
        %5191 = vmatpush1.msra.mxu0 0.0
        %5192 = vmatprep.subr.mxu0 0.0
        %5193 = vmatpush1.msra.mxu0 0.0
        %5194 = vmatprep.subr.mxu0 0.0
        %5195 = vmatpush1.msra.mxu0 0.0
        %5196 = vmatprep.subr.mxu0 0.0
        %5197 = vmatpush1.msra.mxu0 0.0
        %5198 = vmatprep.subr.mxu0 0.0
        %5199 = vmatpush1.msra.mxu0 0.0
        %5200 = vmatprep.subr.mxu0 0.0
        %5201 = vmatpush1.msra.mxu0 0.0
        %5202 = vmatprep.subr.mxu0 0.0
        %5203 = vmatpush1.msra.mxu0 0.0
        %5204 = vmatprep.subr.mxu0 0.0
        %5205 = vmatpush1.msra.mxu0 0.0
        %5206 = vmatprep.subr.mxu0 0.0
        %5207 = vmatpush1.msra.mxu0 0.0
        %5208 = vmatprep.subr.mxu0 0.0
        %5209 = vmatpush1.msra.mxu0 0.0
        %5210 = vmatprep.subr.mxu0 0.0
        %5211 = vmatpush1.msra.mxu0 0.0
        %5212 = vmatprep.subr.mxu0 0.0
        %5213 = vmatpush1.msra.mxu0 0.0
        %5214 = vmatprep.subr.mxu0 0.0
        %5215 = vmatpush1.msra.mxu0 0.0
        %5216 = vmatprep.subr.mxu0 0.0
        %5217 = vmatpush1.msra.mxu0 0.0
        %5218 = vmatprep.subr.mxu0 0.0
        %5219 = vmatpush1.msra.mxu0 0.0
        %5220 = vmatprep.subr.mxu0 0.0
        %5221 = vmatpush1.msra.mxu0 0.0
        %5222 = vmatprep.subr.mxu0 0.0
        %5223 = vmatpush1.msra.mxu0 0.0
        %5224 = vmatprep.subr.mxu0 0.0
        %5225 = vmatpush1.msra.mxu0 0.0
        %5226 = vmatprep.subr.mxu0 0.0
        %5227 = vmatpush1.msra.mxu0 0.0
        %5228 = vmatprep.subr.mxu0 0.0
        %5229 = vmatpush1.msra.mxu0 0.0
        %5230 = vmatprep.subr.mxu0 0.0
        %5231 = vmatpush1.msra.mxu0 0.0
        %5232 = vmatprep.subr.mxu0 0.0
        %5233 = vmatpush1.msra.mxu0 0.0
        %5234 = vmatprep.subr.mxu0 0.0
        %5235 = vmatpush1.msra.mxu0 0.0
        %5236 = vmatprep.subr.mxu0 0.0
        %5237 = vmatpush1.msra.mxu0 0.0
        %5238 = vmatprep.subr.mxu0 0.0
        %5239 = vmatpush1.msra.mxu0 0.0
        %5240 = vmatprep.subr.mxu0 0.0
        %5241 = vmatpush1.msra.mxu0 0.0
        %5242 = vmatprep.subr.mxu0 0.0
        %5243 = vmatpush1.msra.mxu0 0.0
        %5244 = vmatprep.subr.mxu0 0.0
        %5245 = vmatpush1.msra.mxu0 0.0
        %5246 = vmatprep.subr.mxu0 0.0
        %5247 = vmatpush1.msra.mxu0 0.0
        %5248 = vmatprep.subr.mxu0 0.0
        %5249 = vmatpush1.msra.mxu0 0.0
        %5250 = vmatprep.mubr.f32.mxu0 0.0
        %5251 = vmatmul.mubr.f32.gmra.mrb[0].mxu0 %v5181
        %v5252 = vpop.f32.mrb[0].mxu0
        %v5253 = vadd.f32 0.0, %v5252
        %v5254 = vpop.f32.mrb[0].mxu0
        %v5255 = vadd.f32 0.0, %v5254
        %5256 = vmatprep.mubr.f32.mxu0 0.0
        %5257 = vmatmul.mubr.f32.gmra.mrb[0].mxu0 %v5184
        %v5258 = vpop.f32.mrb[0].mxu0
        %v5259 = vadd.f32 0.0, %v5258
        %v5260 = vpop.f32.mrb[0].mxu0
        %v5261 = vadd.f32 0.0, %v5260
        %5262 = vdwg.mxu0
        %v5263 = vadd.f32 %v5157, %v5253
        %v5264 = vadd.f32 %v5158, %v5255
        %v5265 = vadd.f32 %v5159, %v5259
        %v5266 = vadd.f32 %v5160, %v5261
        %5267 = vrot.lane.b32.xlu0 %v4650, 113
        %v5268 = vpop.permute.xlu0 %5267
        %5269 = vrot.lane.b32.xlu0 %v4652, 113
        %v5270 = vpop.permute.xlu0 %5269
        %5271 = vrot.lane.b32.xlu0 %v4651, 113
        %v5272 = vpop.permute.xlu0 %5271
        %5273 = vrot.lane.b32.xlu0 %v4653, 113
        %v5274 = vpop.permute.xlu0 %5273
        %v5275 = vsel %vm824, %v5268, %v5272
        %v5276 = vsel %vm824, %v5270, %v5274
        %v5277 = vsel %vm824, %v5272, %v5268
        %v5278 = vsel %vm824, %v5274, %v5270
        %v5279 = vmul.f32 %v5275, %v833
        %v5280 = vmul.f32 %v5277, %v837
        %v5281 = vmul.f32 %v5276, %v833
        %v5282 = vmul.f32 %v5278, %v837
        %s5283 = scalar_lea.vmem %s3, 816
        %v5284 = vld [vmem:[%s5283] sm:$0xff]
        %v5285 = vld [vmem:[%s5283 + $0x8] sm:$0xff]
        %v5287 = vsel %vm4692, %v5284, 0
        %v5290 = vsel %vm4692, %v5285, 0
        %5292 = vmatprep.subr.mxu0 %v5280
        %5293 = vmatpush1.msra.mxu0 %v5279
        %5294 = vmatprep.subr.mxu0 %v5282
        %5295 = vmatpush1.msra.mxu0 %v5281
        %5296 = vmatprep.subr.mxu0 0.0
        %5297 = vmatpush1.msra.mxu0 0.0
        %5298 = vmatprep.subr.mxu0 0.0
        %5299 = vmatpush1.msra.mxu0 0.0
        %5300 = vmatprep.subr.mxu0 0.0
        %5301 = vmatpush1.msra.mxu0 0.0
        %5302 = vmatprep.subr.mxu0 0.0
        %5303 = vmatpush1.msra.mxu0 0.0
        %5304 = vmatprep.subr.mxu0 0.0
        %5305 = vmatpush1.msra.mxu0 0.0
        %5306 = vmatprep.subr.mxu0 0.0
        %5307 = vmatpush1.msra.mxu0 0.0
        %5308 = vmatprep.subr.mxu0 0.0
        %5309 = vmatpush1.msra.mxu0 0.0
        %5310 = vmatprep.subr.mxu0 0.0
        %5311 = vmatpush1.msra.mxu0 0.0
        %5312 = vmatprep.subr.mxu0 0.0
        %5313 = vmatpush1.msra.mxu0 0.0
        %5314 = vmatprep.subr.mxu0 0.0
        %5315 = vmatpush1.msra.mxu0 0.0
        %5316 = vmatprep.subr.mxu0 0.0
        %5317 = vmatpush1.msra.mxu0 0.0
        %5318 = vmatprep.subr.mxu0 0.0
        %5319 = vmatpush1.msra.mxu0 0.0
        %5320 = vmatprep.subr.mxu0 0.0
        %5321 = vmatpush1.msra.mxu0 0.0
        %5322 = vmatprep.subr.mxu0 0.0
        %5323 = vmatpush1.msra.mxu0 0.0
        %5324 = vmatprep.subr.mxu0 0.0
        %5325 = vmatpush1.msra.mxu0 0.0
        %5326 = vmatprep.subr.mxu0 0.0
        %5327 = vmatpush1.msra.mxu0 0.0
        %5328 = vmatprep.subr.mxu0 0.0
        %5329 = vmatpush1.msra.mxu0 0.0
        %5330 = vmatprep.subr.mxu0 0.0
        %5331 = vmatpush1.msra.mxu0 0.0
        %5332 = vmatprep.subr.mxu0 0.0
        %5333 = vmatpush1.msra.mxu0 0.0
        %5334 = vmatprep.subr.mxu0 0.0
        %5335 = vmatpush1.msra.mxu0 0.0
        %5336 = vmatprep.subr.mxu0 0.0
        %5337 = vmatpush1.msra.mxu0 0.0
        %5338 = vmatprep.subr.mxu0 0.0
        %5339 = vmatpush1.msra.mxu0 0.0
        %5340 = vmatprep.subr.mxu0 0.0
        %5341 = vmatpush1.msra.mxu0 0.0
        %5342 = vmatprep.subr.mxu0 0.0
        %5343 = vmatpush1.msra.mxu0 0.0
        %5344 = vmatprep.subr.mxu0 0.0
        %5345 = vmatpush1.msra.mxu0 0.0
        %5346 = vmatprep.subr.mxu0 0.0
        %5347 = vmatpush1.msra.mxu0 0.0
        %5348 = vmatprep.subr.mxu0 0.0
        %5349 = vmatpush1.msra.mxu0 0.0
        %5350 = vmatprep.subr.mxu0 0.0
        %5351 = vmatpush1.msra.mxu0 0.0
        %5352 = vmatprep.subr.mxu0 0.0
        %5353 = vmatpush1.msra.mxu0 0.0
        %5354 = vmatprep.subr.mxu0 0.0
        %5355 = vmatpush1.msra.mxu0 0.0
        %5356 = vmatprep.mubr.f32.mxu0 0.0
        %5357 = vmatmul.mubr.f32.gmra.mrb[0].mxu0 %v5287
        %v5358 = vpop.f32.mrb[0].mxu0
        %v5359 = vadd.f32 0.0, %v5358
        %v5360 = vpop.f32.mrb[0].mxu0
        %v5361 = vadd.f32 0.0, %v5360
        %5362 = vmatprep.mubr.f32.mxu0 0.0
        %5363 = vmatmul.mubr.f32.gmra.mrb[0].mxu0 %v5290
        %v5364 = vpop.f32.mrb[0].mxu0
        %v5365 = vadd.f32 0.0, %v5364
        %v5366 = vpop.f32.mrb[0].mxu0
        %v5367 = vadd.f32 0.0, %v5366
        %5368 = vdwg.mxu0
        %v5369 = vadd.f32 %v5263, %v5359
        %v5370 = vadd.f32 %v5264, %v5361
        %v5371 = vadd.f32 %v5265, %v5365
        %v5372 = vadd.f32 %v5266, %v5367
        %5373 = vrot.lane.b32.xlu0 %v4650, 112
        %v5374 = vpop.permute.xlu0 %5373
        %5375 = vrot.lane.b32.xlu0 %v4652, 112
        %v5376 = vpop.permute.xlu0 %5375
        %5377 = vrot.lane.b32.xlu0 %v4651, 112
        %v5378 = vpop.permute.xlu0 %5377
        %5379 = vrot.lane.b32.xlu0 %v4653, 112
        %v5380 = vpop.permute.xlu0 %5379
        %v5381 = vsel %vm924, %v5374, %v5378
        %v5382 = vsel %vm924, %v5376, %v5380
        %v5383 = vsel %vm924, %v5378, %v5374
        %v5384 = vsel %vm924, %v5380, %v5376
        %v5385 = vmul.f32 %v5381, %v933
        %v5386 = vmul.f32 %v5383, %v937
        %v5387 = vmul.f32 %v5382, %v933
        %v5388 = vmul.f32 %v5384, %v937
        %s5389 = scalar_lea.vmem %s3, 832
        %v5390 = vld [vmem:[%s5389] sm:$0xff]
        %v5391 = vld [vmem:[%s5389 + $0x8] sm:$0xff]
        %v5393 = vsel %vm4692, %v5390, 0
        %v5396 = vsel %vm4692, %v5391, 0
        %5398 = vmatprep.subr.mxu0 %v5386
        %5399 = vmatpush1.msra.mxu0 %v5385
        %5400 = vmatprep.subr.mxu0 %v5388
        %5401 = vmatpush1.msra.mxu0 %v5387
        %5402 = vmatprep.subr.mxu0 0.0
        %5403 = vmatpush1.msra.mxu0 0.0
        %5404 = vmatprep.subr.mxu0 0.0
        %5405 = vmatpush1.msra.mxu0 0.0
        %5406 = vmatprep.subr.mxu0 0.0
        %5407 = vmatpush1.msra.mxu0 0.0
        %5408 = vmatprep.subr.mxu0 0.0
        %5409 = vmatpush1.msra.mxu0 0.0
        %5410 = vmatprep.subr.mxu0 0.0
        %5411 = vmatpush1.msra.mxu0 0.0
        %5412 = vmatprep.subr.mxu0 0.0
        %5413 = vmatpush1.msra.mxu0 0.0
        %5414 = vmatprep.subr.mxu0 0.0
        %5415 = vmatpush1.msra.mxu0 0.0
        %5416 = vmatprep.subr.mxu0 0.0
        %5417 = vmatpush1.msra.mxu0 0.0
        %5418 = vmatprep.subr.mxu0 0.0
        %5419 = vmatpush1.msra.mxu0 0.0
        %5420 = vmatprep.subr.mxu0 0.0
        %5421 = vmatpush1.msra.mxu0 0.0
        %5422 = vmatprep.subr.mxu0 0.0
        %5423 = vmatpush1.msra.mxu0 0.0
        %5424 = vmatprep.subr.mxu0 0.0
        %5425 = vmatpush1.msra.mxu0 0.0
        %5426 = vmatprep.subr.mxu0 0.0
        %5427 = vmatpush1.msra.mxu0 0.0
        %5428 = vmatprep.subr.mxu0 0.0
        %5429 = vmatpush1.msra.mxu0 0.0
        %5430 = vmatprep.subr.mxu0 0.0
        %5431 = vmatpush1.msra.mxu0 0.0
        %5432 = vmatprep.subr.mxu0 0.0
        %5433 = vmatpush1.msra.mxu0 0.0
        %5434 = vmatprep.subr.mxu0 0.0
        %5435 = vmatpush1.msra.mxu0 0.0
        %5436 = vmatprep.subr.mxu0 0.0
        %5437 = vmatpush1.msra.mxu0 0.0
        %5438 = vmatprep.subr.mxu0 0.0
        %5439 = vmatpush1.msra.mxu0 0.0
        %5440 = vmatprep.subr.mxu0 0.0
        %5441 = vmatpush1.msra.mxu0 0.0
        %5442 = vmatprep.subr.mxu0 0.0
        %5443 = vmatpush1.msra.mxu0 0.0
        %5444 = vmatprep.subr.mxu0 0.0
        %5445 = vmatpush1.msra.mxu0 0.0
        %5446 = vmatprep.subr.mxu0 0.0
        %5447 = vmatpush1.msra.mxu0 0.0
        %5448 = vmatprep.subr.mxu0 0.0
        %5449 = vmatpush1.msra.mxu0 0.0
        %5450 = vmatprep.subr.mxu0 0.0
        %5451 = vmatpush1.msra.mxu0 0.0
        %5452 = vmatprep.subr.mxu0 0.0
        %5453 = vmatpush1.msra.mxu0 0.0
        %5454 = vmatprep.subr.mxu0 0.0
        %5455 = vmatpush1.msra.mxu0 0.0
        %5456 = vmatprep.subr.mxu0 0.0
        %5457 = vmatpush1.msra.mxu0 0.0
        %5458 = vmatprep.subr.mxu0 0.0
        %5459 = vmatpush1.msra.mxu0 0.0
        %5460 = vmatprep.subr.mxu0 0.0
        %5461 = vmatpush1.msra.mxu0 0.0
        %5462 = vmatprep.mubr.f32.mxu0 0.0
        %5463 = vmatmul.mubr.f32.gmra.mrb[0].mxu0 %v5393
        %v5464 = vpop.f32.mrb[0].mxu0
        %v5465 = vadd.f32 0.0, %v5464
        %v5466 = vpop.f32.mrb[0].mxu0
        %v5467 = vadd.f32 0.0, %v5466
        %5468 = vmatprep.mubr.f32.mxu0 0.0
        %5469 = vmatmul.mubr.f32.gmra.mrb[0].mxu0 %v5396
        %v5470 = vpop.f32.mrb[0].mxu0
        %v5471 = vadd.f32 0.0, %v5470
        %v5472 = vpop.f32.mrb[0].mxu0
        %v5473 = vadd.f32 0.0, %v5472
        %5474 = vdwg.mxu0
        %v5475 = vadd.f32 %v5369, %v5465
        %v5476 = vadd.f32 %v5370, %v5467
        %v5477 = vadd.f32 %v5371, %v5471
        %v5478 = vadd.f32 %v5372, %v5473
        %5479 = vrot.lane.b32.xlu0 %v4650, 111
        %v5480 = vpop.permute.xlu0 %5479
        %5481 = vrot.lane.b32.xlu0 %v4652, 111
        %v5482 = vpop.permute.xlu0 %5481
        %5483 = vrot.lane.b32.xlu0 %v4651, 111
        %v5484 = vpop.permute.xlu0 %5483
        %5485 = vrot.lane.b32.xlu0 %v4653, 111
        %v5486 = vpop.permute.xlu0 %5485
        %v5487 = vsel %vm1024, %v5480, %v5484
        %v5488 = vsel %vm1024, %v5482, %v5486
        %v5489 = vsel %vm1024, %v5484, %v5480
        %v5490 = vsel %vm1024, %v5486, %v5482
        %v5491 = vmul.f32 %v5487, %v1033
        %v5492 = vmul.f32 %v5489, %v1037
        %v5493 = vmul.f32 %v5488, %v1033
        %v5494 = vmul.f32 %v5490, %v1037
        %s5495 = scalar_lea.vmem %s3, 848
        %v5496 = vld [vmem:[%s5495] sm:$0xff]
        %v5497 = vld [vmem:[%s5495 + $0x8] sm:$0xff]
        %v5499 = vsel %vm4692, %v5496, 0
        %v5502 = vsel %vm4692, %v5497, 0
        %5504 = vmatprep.subr.mxu0 %v5492
        %5505 = vmatpush1.msra.mxu0 %v5491
        %5506 = vmatprep.subr.mxu0 %v5494
        %5507 = vmatpush1.msra.mxu0 %v5493
        %5508 = vmatprep.subr.mxu0 0.0
        %5509 = vmatpush1.msra.mxu0 0.0
        %5510 = vmatprep.subr.mxu0 0.0
        %5511 = vmatpush1.msra.mxu0 0.0
        %5512 = vmatprep.subr.mxu0 0.0
        %5513 = vmatpush1.msra.mxu0 0.0
        %5514 = vmatprep.subr.mxu0 0.0
        %5515 = vmatpush1.msra.mxu0 0.0
        %5516 = vmatprep.subr.mxu0 0.0
        %5517 = vmatpush1.msra.mxu0 0.0
        %5518 = vmatprep.subr.mxu0 0.0
        %5519 = vmatpush1.msra.mxu0 0.0
        %5520 = vmatprep.subr.mxu0 0.0
        %5521 = vmatpush1.msra.mxu0 0.0
        %5522 = vmatprep.subr.mxu0 0.0
        %5523 = vmatpush1.msra.mxu0 0.0
        %5524 = vmatprep.subr.mxu0 0.0
        %5525 = vmatpush1.msra.mxu0 0.0
        %5526 = vmatprep.subr.mxu0 0.0
        %5527 = vmatpush1.msra.mxu0 0.0
        %5528 = vmatprep.subr.mxu0 0.0
        %5529 = vmatpush1.msra.mxu0 0.0
        %5530 = vmatprep.subr.mxu0 0.0
        %5531 = vmatpush1.msra.mxu0 0.0
        %5532 = vmatprep.subr.mxu0 0.0
        %5533 = vmatpush1.msra.mxu0 0.0
        %5534 = vmatprep.subr.mxu0 0.0
        %5535 = vmatpush1.msra.mxu0 0.0
        %5536 = vmatprep.subr.mxu0 0.0
        %5537 = vmatpush1.msra.mxu0 0.0
        %5538 = vmatprep.subr.mxu0 0.0
        %5539 = vmatpush1.msra.mxu0 0.0
        %5540 = vmatprep.subr.mxu0 0.0
        %5541 = vmatpush1.msra.mxu0 0.0
        %5542 = vmatprep.subr.mxu0 0.0
        %5543 = vmatpush1.msra.mxu0 0.0
        %5544 = vmatprep.subr.mxu0 0.0
        %5545 = vmatpush1.msra.mxu0 0.0
        %5546 = vmatprep.subr.mxu0 0.0
        %5547 = vmatpush1.msra.mxu0 0.0
        %5548 = vmatprep.subr.mxu0 0.0
        %5549 = vmatpush1.msra.mxu0 0.0
        %5550 = vmatprep.subr.mxu0 0.0
        %5551 = vmatpush1.msra.mxu0 0.0
        %5552 = vmatprep.subr.mxu0 0.0
        %5553 = vmatpush1.msra.mxu0 0.0
        %5554 = vmatprep.subr.mxu0 0.0
        %5555 = vmatpush1.msra.mxu0 0.0
        %5556 = vmatprep.subr.mxu0 0.0
        %5557 = vmatpush1.msra.mxu0 0.0
        %5558 = vmatprep.subr.mxu0 0.0
        %5559 = vmatpush1.msra.mxu0 0.0
        %5560 = vmatprep.subr.mxu0 0.0
        %5561 = vmatpush1.msra.mxu0 0.0
        %5562 = vmatprep.subr.mxu0 0.0
        %5563 = vmatpush1.msra.mxu0 0.0
        %5564 = vmatprep.subr.mxu0 0.0
        %5565 = vmatpush1.msra.mxu0 0.0
        %5566 = vmatprep.subr.mxu0 0.0
        %5567 = vmatpush1.msra.mxu0 0.0
        %5568 = vmatprep.mubr.f32.mxu0 0.0
        %5569 = vmatmul.mubr.f32.gmra.mrb[0].mxu0 %v5499
        %v5570 = vpop.f32.mrb[0].mxu0
        %v5571 = vadd.f32 0.0, %v5570
        %v5572 = vpop.f32.mrb[0].mxu0
        %v5573 = vadd.f32 0.0, %v5572
        %5574 = vmatprep.mubr.f32.mxu0 0.0
        %5575 = vmatmul.mubr.f32.gmra.mrb[0].mxu0 %v5502
        %v5576 = vpop.f32.mrb[0].mxu0
        %v5577 = vadd.f32 0.0, %v5576
        %v5578 = vpop.f32.mrb[0].mxu0
        %v5579 = vadd.f32 0.0, %v5578
        %5580 = vdwg.mxu0
        %v5581 = vadd.f32 %v5475, %v5571
        %v5582 = vadd.f32 %v5476, %v5573
        %v5583 = vadd.f32 %v5477, %v5577
        %v5584 = vadd.f32 %v5478, %v5579
        %v5585 = vadd.f32 %v5581, %v5582
        %v5586 = vadd.f32 %v5585, %v5583
        %v5587 = vadd.f32 %v5586, %v5584
        %5588 = vadd.xlane.f32.xlu0 %v5587
        %v5589 = vpop.xlane.xlu0 %5588
        %v5590 = vrot.slane %v5589, 4
        %v5591 = vadd.f32 %v5589, %v5590
        %v5592 = vrot.slane %v5591, 2
        %v5593 = vadd.f32 %v5591, %v5592
        %v5594 = vrot.slane %v5593, 1
        %v5595 = vadd.f32 %v5593, %v5594
        %s5596 = vtos %v5595
        %v5597 = vstv %s5596
        %v5598 = vmul.f32 %v5581, %v5581
        %v5599 = vmul.f32 %v5582, %v5582
        %v5600 = vmul.f32 %v5583, %v5583
        %v5601 = vmul.f32 %v5584, %v5584
        %v5602 = vadd.f32 %v5598, %v5599
        %v5603 = vadd.f32 %v5602, %v5600
        %v5604 = vadd.f32 %v5603, %v5601
        %5605 = vadd.xlane.f32.xlu0 %v5604
        %v5606 = vpop.xlane.xlu0 %5605
        %v5607 = vrot.slane %v5606, 4
        %v5608 = vadd.f32 %v5606, %v5607
        %v5609 = vrot.slane %v5608, 2
        %v5610 = vadd.f32 %v5608, %v5609
        %v5611 = vrot.slane %v5610, 1
        %v5612 = vadd.f32 %v5610, %v5611
        %s5613 = vtos %v5612
        %v5614 = vstv %s5613
        %v5615 = vmul.f32 %v5597, 0.00024414063
        %v5616 = vmul.f32 %v5614, 0.00024414063
        %v5617 = vmul.f32 %v5615, %v5615
        %v5618 = vsub.f32 %v5616, %v5617
        %v5619 = vmax.f32 %v5618, 0.0
        %v5620 = vadd.f32 %v5619, 1e-05
        %v5621 = vrsqrt.pop %v5620
        %v5622 = vmul.f32 %v4537, %v5621
        %v5623 = vmul.f32 %v4538, %v5621
        %v5624 = vmul.f32 %v5615, %v5622
        %v5625 = vmul.f32 %v5615, %v5623
        %5628 = vrot.lane.b32.xlu0 %v5624, 1
        %v5629 = vpop.permute.xlu0 %5628
        %5630 = vrot.lane.b32.xlu0 %v5625, 1
        %v5631 = vpop.permute.xlu0 %5630
        %v5634 = vsub.f32 %v4537, %v5629
        %v5635 = vsub.f32 %v4538, %v5631
        %v5636 = vld [vmem:[%s242] sm:$0xff]
        %v5637 = vld [vmem:[%s242 + $0x8] sm:$0xff]
        %5640 = vrot.lane.b32.xlu0 %v5622, 118
        %v5641 = vpop.permute.xlu0 %5640
        %5642 = vrot.lane.b32.xlu0 %v5623, 118
        %v5643 = vpop.permute.xlu0 %5642
        %v5646 = vmul.f32 %v5636, %v5641
        %v5647 = vmul.f32 %v5637, %v5643
        %5649 = vset.pattern.permute.xlu0 0
        %5650 = vperm.xlu0 %5649, %v5646
        %v5651 = vpop.permute.xlu0 %5650
        %5654 = vset.pattern.permute.xlu0 0
        %5655 = vperm.xlu0 %5654, %v5647
        %v5656 = vpop.permute.xlu0 %5655
        %v5658 = vmul.f32 %v5581, %v5651
        %v5659 = vmul.f32 %v5582, %v5651
        %v5660 = vmul.f32 %v5583, %v5656
        %v5661 = vmul.f32 %v5584, %v5656
        %5664 = vrot.lane.b32.xlu0 %v5634, 117
        %v5665 = vpop.permute.xlu0 %5664
        %5666 = vrot.lane.b32.xlu0 %v5635, 117
        %v5667 = vpop.permute.xlu0 %5666
        %v5670 = vmul.f32 %v5636, %v5665
        %v5671 = vmul.f32 %v5637, %v5667
        %5674 = vrot.lane.b32.xlu0 %v5636, 127
        %v5675 = vpop.permute.xlu0 %5674
        %5676 = vrot.lane.b32.xlu0 %v5637, 127
        %v5677 = vpop.permute.xlu0 %5676
        %v5680 = vadd.f32 %v5670, %v5675
        %v5681 = vadd.f32 %v5671, %v5677
        %5683 = vset.pattern.permute.xlu0 0
        %5684 = vperm.xlu0 %5683, %v5680
        %v5685 = vpop.permute.xlu0 %5684
        %5688 = vset.pattern.permute.xlu0 0
        %5689 = vperm.xlu0 %5688, %v5681
        %v5690 = vpop.permute.xlu0 %5689
        %v5692 = vadd.f32 %v5658, %v5685
        %v5693 = vadd.f32 %v5659, %v5685
        %v5694 = vadd.f32 %v5660, %v5690
        %v5695 = vadd.f32 %v5661, %v5690
        %5696 = vst [vmem:[%s232] sm:$0xff] %v5692
        %5697 = vst [vmem:[%s232 + $0x8] sm:$0xff] %v5693
        %5698 = vst [vmem:[%s232 + $0x10] sm:$0xff] %v5694
        %5699 = vst [vmem:[%s232 + $0x18] sm:$0xff] %v5695
        %s5700 = sand.u32 %s142, 1
        %s5701 = scalar_lea.sflag [#allocation3], %s5700
        %s5702 = sand.u32 %s142, 1
        %s5703 = smul.addr %s5702, 32
        %s5704 = scalar_lea.vmem [#allocation2], %s5703
        // Predicated region
        $region41: #{tpu_custom_call.1} parent=39 // pred_check
          %p5705 = pneg %p152
        $region42: #{tpu_custom_call.1} parent=39 // pred_check_branch
          %5707 = sbr.rel (%p5705) target = $region44
        $region43: #{tpu_custom_call.1} parent=39 // pred_region
          %s5709 = ssub.s32 512, 512
          %5710 = vsyncadd %s5701, %s5709
          %s5711 = smul.addr %s19, 4
          %s5712 = smul.addr %s5711, 128
          %s5713 = scalar_lea.hbm %s5, %s5712
          %s5714 = sshll.u32 %s5704, 4
          %s5715 = int_to_ptr.vmem [resolvable:$true] %s5714
          %5720 = dma.vmem_to_hbm [thread:$0]  %s5715, 512, %s5713, %s5701, 256, 256, 16
        $region44: #{tpu_custom_call.1} parent=39 // pred_fallthru
          _
      $region40: #{tpu_custom_call.1} parent=5 // pred_fallthru
        _
      %p5721 = scmp.le.s32.totalorder 2, %s14
      // Predicated region
      $region45: #{tpu_custom_call.1} parent=5 // pred_check
        %p5722 = pneg %p5721
      $region46: #{tpu_custom_call.1} parent=5 // pred_check_branch
        %5724 = sbr.rel (%p5722) target = $region48
      $region47: #{tpu_custom_call.1} parent=5 // pred_region
        %s5725 = ssub.s32 %s14, 2
        // Predicated region
        $region49: #{tpu_custom_call.1} parent=47 // pred_check
          %p5726 = pneg %p158
        $region50: #{tpu_custom_call.1} parent=47 // pred_check_branch
          %5728 = sbr.rel (%p5726) target = $region52
        $region51: #{tpu_custom_call.1} parent=47 // pred_region
          %s5729 = sand.u32 %s143, 1
          %s5730 = scalar_lea.sflag [#allocation3], %s5729
          %s5731 = sand.u32 %s143, 1
          %s5732 = smul.addr %s5731, 32
          %s5733 = scalar_lea.vmem [#allocation2], %s5732
          %5734 = dma.done %s5730, 512
        $region52: #{tpu_custom_call.1} parent=47 // pred_fallthru
          _
      $region48: #{tpu_custom_call.1} parent=5 // pred_fallthru
        _
    $region6: #{tpu_custom_call.1} parent=1 // loop_footer
      %s18 = sadd.s32 1, %s14
    $region7: #{tpu_custom_call.1} parent=1 // loop_footer_branch
      %13 = sbr.rel target = $region3
    $region8: #{tpu_custom_call.1} parent=1 // loop_exit
      _
    %5735 = vsyncpa [#allocation3], 1
    %s5736 = scalar_lea.sflag [#allocation3], 1
    %5737 = vsyncpa %s5736, 1

</llo_original>
